<compile_context>
chip_gen: v5e
topology: v5e:2x2
jax: 0.10.0
libtpu: 0.0.40
codegen_flags: <defaults>
</compile_context>

<pallas_src>
import math
from functools import partial

import jax
import jax.numpy as jnp
from jax.experimental import pallas as pl
from jax.experimental.pallas import tpu as pltpu


_TM_MAX = 256                       # row-tile upper bound for row-gridded kernels
_VMEM_LIMIT = 32 * 1024 * 1024      # explicit scoped-VMEM limit (safe on v5e/v6e/v7x)


def _cparams(ngrid=1):
    return pltpu.CompilerParams(
        dimension_semantics=("parallel",) * ngrid,
        vmem_limit_bytes=_VMEM_LIMIT)


def _const_spec(shape):
    zeros = (0,) * len(shape)
    return pl.BlockSpec(tuple(shape), lambda i: zeros)


def _row_tiles(M):
    if M <= _TM_MAX:
        return M, 1                  # full-dim block, no padding / slicing copies
    return _TM_MAX, pl.cdiv(M, _TM_MAX)   # ragged last block handled by Pallas


def _bf16(x):
    return x.astype(jnp.bfloat16)


def _layernorm(x, g, b, eps):
    mu = jnp.mean(x, axis=-1, keepdims=True)
    var = jnp.mean((x - mu) ** 2, axis=-1, keepdims=True)
    return (x - mu) * jax.lax.rsqrt(var + eps) * g + b


# --------------------------------------------------------------------------
# Pallas kernels
# --------------------------------------------------------------------------

def _encoder_kernel(patch_ref, cam_ref, wc1_ref, bc1_ref, wc2_ref, bc2_ref,
                    wmod_ref, bmod_ref, wp_ref, bp_ref, g_ref, beta_ref,
                    o_ref, *, eps):
    """Per-view: camera embedder -> modulation -> patch embed -> +mod -> LN."""
    cam = cam_ref[0]                                             # (1, 16) bf16
    ce = jnp.dot(cam, wc1_ref[...], preferred_element_type=jnp.float32) + bc1_ref[...]
    ce = ce * jax.nn.sigmoid(ce)                                 # SiLU in f32
    cam_emb = (jnp.dot(_bf16(ce), wc2_ref[...],
                       preferred_element_type=jnp.float32) + bc2_ref[...])
    mod = (jnp.dot(_bf16(cam_emb), wmod_ref[...],
                   preferred_element_type=jnp.float32) + bmod_ref[...])   # (1, Dc)
    feats = jnp.dot(patch_ref[0], wp_ref[...],
                    preferred_element_type=jnp.float32)          # (L, Dc) f32
    feats = feats + bp_ref[...] + mod                            # mod-add fused here
    feats = _layernorm(feats, g_ref[...], beta_ref[...], eps)
    o_ref[0] = feats.astype(o_ref.dtype)


def _cross_attn_kernel(x_ref, ctx_ref, wq_ref, bq_ref, wkv_ref, bkv_ref,
                       wo_ref, bo_ref, g_ref, beta_ref, o_ref, *, num_heads, eps):
    """Per-batch: x <- x + WO(SDPA(WQ(LN1(x)), WK(ctx), WV(ctx))), all fused."""
    x = x_ref[0].astype(jnp.float32)                             # (Lq, D)
    Lq, D = x.shape
    dh = D // num_heads
    scale = 1.0 / math.sqrt(dh)
    xn = _layernorm(x, g_ref[...], beta_ref[...], eps)
    q = (jnp.dot(_bf16(xn), wq_ref[...],
                 preferred_element_type=jnp.float32) + bq_ref[...])       # (Lq, D)
    kv = (jnp.dot(ctx_ref[0], wkv_ref[...],
                  preferred_element_type=jnp.float32) + bkv_ref[...])     # (Lk, 2D)
    wo = wo_ref[...]                                             # (D, D) bf16
    acc = jnp.zeros((Lq, D), jnp.float32)
    for h in range(num_heads):                                   # static small loop
        qh = q[:, h * dh:(h + 1) * dh]                           # lane slices
        kh = kv[:, h * dh:(h + 1) * dh]
        vh = kv[:, D + h * dh:D + (h + 1) * dh]
        s = jax.lax.dot_general(_bf16(qh), _bf16(kh), (((1,), (1,)), ((), ())),
                                preferred_element_type=jnp.float32) * scale
        m = jnp.max(s, axis=-1, keepdims=True)
        p = jnp.exp(s - m)
        p = p * pl.reciprocal(jnp.sum(p, axis=-1, keepdims=True), approx=True)
        o_h = jnp.dot(_bf16(p), _bf16(vh), preferred_element_type=jnp.float32)
        # accumulate each head directly through its WO row-slice (no concat)
        acc = acc + jnp.dot(_bf16(o_h), wo[h * dh:(h + 1) * dh, :],
                            preferred_element_type=jnp.float32)
    out = acc + bo_ref[...] + x                                  # residual fused
    o_ref[0] = out.astype(o_ref.dtype)


def _self_attn_kernel(x_ref, wqkv_ref, bqkv_ref, wo_ref, bo_ref, g_ref, beta_ref,
                      o_ref, *, num_heads, eps):
    """Per-batch: x <- x + WO(SDPA over heads of LN2(x) @ [WQ|WK|WV]), all fused."""
    x = x_ref[0].astype(jnp.float32)                             # (L, D)
    L, D = x.shape
    dh = D // num_heads
    scale = 1.0 / math.sqrt(dh)
    xn = _layernorm(x, g_ref[...], beta_ref[...], eps)
    qkv = (jnp.dot(_bf16(xn), wqkv_ref[...],
                   preferred_element_type=jnp.float32) + bqkv_ref[...])   # (L, 3D)
    wo = wo_ref[...]
    acc = jnp.zeros((L, D), jnp.float32)
    for h in range(num_heads):
        q = qkv[:, h * dh:(h + 1) * dh]
        k = qkv[:, D + h * dh:D + (h + 1) * dh]
        v = qkv[:, 2 * D + h * dh:2 * D + (h + 1) * dh]
        s = jax.lax.dot_general(_bf16(q), _bf16(k), (((1,), (1,)), ((), ())),
                                preferred_element_type=jnp.float32) * scale
        m = jnp.max(s, axis=-1, keepdims=True)
        p = jnp.exp(s - m)
        p = p * pl.reciprocal(jnp.sum(p, axis=-1, keepdims=True), approx=True)
        o_h = jnp.dot(_bf16(p), _bf16(v), preferred_element_type=jnp.float32)
        acc = acc + jnp.dot(_bf16(o_h), wo[h * dh:(h + 1) * dh, :],
                            preferred_element_type=jnp.float32)
    out = acc + bo_ref[...] + x
    o_ref[0] = out.astype(o_ref.dtype)


def _mlp_kernel(x_ref, w1_ref, b1_ref, w2_ref, b2_ref, g_ref, beta_ref, o_ref, *, eps):
    """Row tile: x <- x + FC2(GELU(FC1(LN3(x)))); 4D hidden stays in VMEM."""
    x = x_ref[...].astype(jnp.float32)                           # (tm, D)
    xn = _layernorm(x, g_ref[...], beta_ref[...], eps)
    h = (jnp.dot(_bf16(xn), w1_ref[...],
                 preferred_element_type=jnp.float32) + b1_ref[...])
    # TODO(synk): PyTorch nn.GELU defaults to exact erf; tanh approx kept here
    # (guaranteed Mosaic lowering), differs at ~1e-3.
    h = jax.nn.gelu(h, approximate=True)
    out = (jnp.dot(_bf16(h), w2_ref[...],
                   preferred_element_type=jnp.float32) + b2_ref[...]) + x
    o_ref[...] = out.astype(o_ref.dtype)


def _ln_linear_kernel(x_ref, w_ref, b_ref, g_ref, beta_ref, o_ref, *, eps):
    """Row tile: LayerNorm prologue -> bf16 matmul (f32 acc) -> +bias."""
    x = x_ref[...].astype(jnp.float32)
    xn = _layernorm(x, g_ref[...], beta_ref[...], eps)
    y = jnp.dot(_bf16(xn), w_ref[...], preferred_element_type=jnp.float32) + b_ref[...]
    o_ref[...] = y.astype(o_ref.dtype)


# --------------------------------------------------------------------------
# Pallas wrappers
# --------------------------------------------------------------------------

def encoder_block(patches, cam, p, eps=1e-5):
    NV, L, Cp = patches.shape
    Dc = p["wp"].shape[1]
    return pl.pallas_call(
        partial(_encoder_kernel, eps=eps),
        out_shape=jax.ShapeDtypeStruct((NV, L, Dc), jnp.bfloat16),
        grid=(NV,),
        in_specs=[pl.BlockSpec((1, L, Cp), lambda i: (i, 0, 0)),
                  pl.BlockSpec((1, 1, cam.shape[-1]), lambda i: (i, 0, 0)),
                  _const_spec(p["wc1"].shape), _const_spec(p["bc1"].shape),
                  _const_spec(p["wc2"].shape), _const_spec(p["bc2"].shape),
                  _const_spec(p["wmod"].shape), _const_spec(p["bmod"].shape),
                  _const_spec(p["wp"].shape), _const_spec(p["bp"].shape),
                  _const_spec(p["g"].shape), _const_spec(p["beta"].shape)],
        out_specs=pl.BlockSpec((1, L, Dc), lambda i: (i, 0, 0)),
        compiler_params=_cparams(1),
    )(patches, cam, p["wc1"], p["bc1"], p["wc2"], p["bc2"],
      p["wmod"], p["bmod"], p["wp"], p["bp"], p["g"], p["beta"])


def cross_attn_block(x, ctx, p, num_heads, eps=1e-5):
    N, Lq, D = x.shape
    _, Lk, Dc = ctx.shape
    # TODO(synk): for production Lq/Lk/D, tile over (batch, q-rows, heads) and the
    # context (flash-style) so v7x's two TensorCores both get work.
    return pl.pallas_call(
        partial(_cross_attn_kernel, num_heads=num_heads, eps=eps),
        out_shape=jax.ShapeDtypeStruct((N, Lq, D), jnp.bfloat16),
        grid=(N,),
        in_specs=[pl.BlockSpec((1, Lq, D), lambda b: (b, 0, 0)),
                  pl.BlockSpec((1, Lk, Dc), lambda b: (b, 0, 0)),
                  _const_spec(p["wq"].shape), _const_spec(p["bq"].shape),
                  _const_spec(p["wkv"].shape), _const_spec(p["bkv"].shape),
                  _const_spec(p["wo"].shape), _const_spec(p["bo"].shape),
                  _const_spec(p["g"].shape), _const_spec(p["beta"].shape)],
        out_specs=pl.BlockSpec((1, Lq, D), lambda b: (b, 0, 0)),
        compiler_params=_cparams(1),
    )(x, ctx, p["wq"], p["bq"], p["wkv"], p["bkv"],
      p["wo"], p["bo"], p["g"], p["beta"])


def self_attn_block(x, p, num_heads, eps=1e-5):
    N, L, D = x.shape
    return pl.pallas_call(
        partial(_self_attn_kernel, num_heads=num_heads, eps=eps),
        out_shape=jax.ShapeDtypeStruct((N, L, D), jnp.bfloat16),
        grid=(N,),
        in_specs=[pl.BlockSpec((1, L, D), lambda b: (b, 0, 0)),
                  _const_spec(p["wqkv"].shape), _const_spec(p["bqkv"].shape),
                  _const_spec(p["wo"].shape), _const_spec(p["bo"].shape),
                  _const_spec(p["g"].shape), _const_spec(p["beta"].shape)],
        out_specs=pl.BlockSpec((1, L, D), lambda b: (b, 0, 0)),
        compiler_params=_cparams(1),
    )(x, p["wqkv"], p["bqkv"], p["wo"], p["bo"], p["g"], p["beta"])


def mlp_block(x2, p, eps=1e-5):
    M, D = x2.shape
    tm, nblk = _row_tiles(M)
    # TODO(synk): for production D, add K/N tiling with an f32 VMEM accumulator so
    # the (D,4D) weight + (tm,4D) hidden stay within v7x's 64 MiB VMEM.
    return pl.pallas_call(
        partial(_mlp_kernel, eps=eps),
        out_shape=jax.ShapeDtypeStruct((M, D), jnp.bfloat16),
        grid=(nblk,),
        in_specs=[pl.BlockSpec((tm, D), lambda i: (i, 0)),
                  _const_spec(p["w1"].shape), _const_spec(p["b1"].shape),
                  _const_spec(p["w2"].shape), _const_spec(p["b2"].shape),
                  _const_spec(p["g"].shape), _const_spec(p["beta"].shape)],
        out_specs=pl.BlockSpec((tm, D), lambda i: (i, 0)),
        compiler_params=_cparams(1),
    )(x2, p["w1"], p["b1"], p["w2"], p["b2"], p["g"], p["beta"])


def ln_linear(x2, p, eps=1e-5):
    M, D = x2.shape
    Nc = p["w"].shape[1]
    tm, nblk = _row_tiles(M)
    return pl.pallas_call(
        partial(_ln_linear_kernel, eps=eps),
        out_shape=jax.ShapeDtypeStruct((M, Nc), jnp.float32),
        grid=(nblk,),
        in_specs=[pl.BlockSpec((tm, D), lambda i: (i, 0)),
                  _const_spec(p["w"].shape), _const_spec(p["b"].shape),
                  _const_spec(p["g"].shape), _const_spec(p["beta"].shape)],
        out_specs=pl.BlockSpec((tm, Nc), lambda i: (i, 0)),
        compiler_params=_cparams(1),
    )(x2, p["w"], p["b"], p["g"], p["beta"])


# --------------------------------------------------------------------------
# Parameters
# --------------------------------------------------------------------------

def init_params(key, cfg):
    D = cfg["transformer_dim"]
    Dc = cfg["encoder_feat_dim"]
    Dcam = cfg["camera_embed_dim"]
    H = cfg["triplane_low_res"]
    P = cfg["app_n_comp"] + cfg["density_n_comp"]
    ps = cfg["patch_size"]
    keys = iter(jax.random.split(key, 256))

    def lin(fi, fo, scale=0.02):
        return {"w": jax.random.normal(next(keys), (fi, fo), jnp.float32) * scale,
                "b": jnp.zeros((fo,), jnp.float32)}

    def ln(d):
        return {"g": jnp.ones((d,), jnp.float32), "b": jnp.zeros((d,), jnp.float32)}

    params = {}
    params["pos_embed"] = (jax.random.normal(next(keys), (1, 3 * H * H + 3 * H, D),
                                             jnp.float32) * (1.0 / D) ** 0.5)
    # CameraEmbedder: Linear(16, Dcam) -> SiLU -> Linear(Dcam, Dcam)
    params["cam"] = {"fc1": lin(12 + 4, Dcam), "fc2": lin(Dcam, Dcam)}
    # Encoder stand-in: patch-embed + camera modulation + LayerNorm
    # TODO(synk): pretrained DINO ViT backbone replaced by a deterministic
    # patch-embed + camera-modulation + LayerNorm stand-in (same output shape).
    params["enc"] = {"patch": lin(3 * ps * ps, Dc), "mod": lin(Dcam, Dc), "ln": ln(Dc)}
    layers = []
    for _ in range(cfg["transformer_layers"]):
        layers.append({
            "ln1": ln(D),
            "cross": {"wq": lin(D, D), "wk": lin(Dc, D), "wv": lin(Dc, D), "wo": lin(D, D)},
            "ln2": ln(D),
            "self": {"wq": lin(D, D), "wk": lin(D, D), "wv": lin(D, D), "wo": lin(D, D)},
            "ln3": ln(D),
            "mlp": {"fc1": lin(D, 4 * D), "fc2": lin(4 * D, D)},
        })
    params["layers"] = layers
    params["ln_f"] = ln(D)
    # ConvTranspose2d(D, P, kernel=2, stride=2): weight (in, out, kh, kw)
    params["upsampler"] = {
        "w": jax.random.normal(next(keys), (D, P, 2, 2), jnp.float32) * 0.02,
        "b": jnp.zeros((P,), jnp.float32),
    }
    params["dim_map"] = lin(D, P)
    params["up_line"] = lin(H, 2 * H)
    return params


def prepare_params(params, cfg):
    """One-time weight preprocessing (bf16 casts, QKV/KV concat, ConvT+dim_map
    fusion, bias reshapes) hoisted OUT of forward()/jit so it never re-runs."""
    D = cfg["transformer_dim"]
    P = cfg["app_n_comp"] + cfg["density_n_comp"]
    bf = jnp.bfloat16

    def row(v):
        return v.astype(jnp.float32).reshape(1, -1)

    pp = {"pos_embed": params["pos_embed"].astype(bf)}
    pp["enc"] = {
        "wc1": params["cam"]["fc1"]["w"].astype(bf), "bc1": row(params["cam"]["fc1"]["b"]),
        "wc2": params["cam"]["fc2"]["w"].astype(bf), "bc2": row(params["cam"]["fc2"]["b"]),
        "wmod": params["enc"]["mod"]["w"].astype(bf), "bmod": row(params["enc"]["mod"]["b"]),
        "wp": params["enc"]["patch"]["w"].astype(bf), "bp": row(params["enc"]["patch"]["b"]),
        "g": row(params["enc"]["ln"]["g"]), "beta": row(params["enc"]["ln"]["b"]),
    }
    layers = []
    for lp in params["layers"]:
        c, s, m = lp["cross"], lp["self"], lp["mlp"]
        layers.append({
            "cross": {
                "wq": c["wq"]["w"].astype(bf), "bq": row(c["wq"]["b"]),
                "wkv": jnp.concatenate([c["wk"]["w"], c["wv"]["w"]], axis=1).astype(bf),
                "bkv": row(jnp.concatenate([c["wk"]["b"], c["wv"]["b"]], axis=0)),
                "wo": c["wo"]["w"].astype(bf), "bo": row(c["wo"]["b"]),
                "g": row(lp["ln1"]["g"]), "beta": row(lp["ln1"]["b"]),
            },
            "self": {
                "wqkv": jnp.concatenate([s["wq"]["w"], s["wk"]["w"], s["wv"]["w"]],
                                        axis=1).astype(bf),
                "bqkv": row(jnp.concatenate([s["wq"]["b"], s["wk"]["b"], s["wv"]["b"]],
                                            axis=0)),
                "wo": s["wo"]["w"].astype(bf), "bo": row(s["wo"]["b"]),
                "g": row(lp["ln2"]["g"]), "beta": row(lp["ln2"]["b"]),
            },
            "mlp": {
                "w1": m["fc1"]["w"].astype(bf), "b1": row(m["fc1"]["b"]),
                "w2": m["fc2"]["w"].astype(bf), "b2": row(m["fc2"]["b"]),
                "g": row(lp["ln3"]["g"]), "beta": row(lp["ln3"]["b"]),
            },
        })
    pp["layers"] = layers
    # Final LayerNorm + ConvTranspose2d(D,P,k=2,s=2) + dim_map fused into a
    # single (D, 5P) matmul (column order p*4 + kh*2 + kw for the ConvT part).
    w_ct = params["upsampler"]["w"].reshape(D, P * 4)
    b_ct = jnp.repeat(params["upsampler"]["b"], 4)
    pp["final"] = {
        "w": jnp.concatenate([w_ct, params["dim_map"]["w"]], axis=1).astype(bf),
        "b": row(jnp.concatenate([b_ct, params["dim_map"]["b"]], axis=0)),
        "g": row(params["ln_f"]["g"]), "beta": row(params["ln_f"]["b"]),
    }
    # up_line (H=4 -> 8 lanes) is below MXU/(8,128) granularity -> stays in XLA.
    pp["up_line"] = {"w": params["up_line"]["w"].astype(jnp.float32),
                     "b": params["up_line"]["b"].astype(jnp.float32)}
    return pp


# --------------------------------------------------------------------------
# Forward
# --------------------------------------------------------------------------

def forward(pp, image, camera, cfg):
    D = cfg["transformer_dim"]
    Dc = cfg["encoder_feat_dim"]
    H = W = cfg["triplane_low_res"]
    P = cfg["app_n_comp"] + cfg["density_n_comp"]
    nH = cfg["transformer_heads"]
    ps = cfg["patch_size"]

    N, V, C, Hi, Wi = image.shape
    assert image.shape[0] == camera.shape[0], "Batch size mismatch"
    NV = N * V
    img = image.reshape(NV, C, Hi, Wi)
    cam = camera.reshape(NV, 1, -1).astype(jnp.bfloat16)

    # patchify (layout glue only); activations stream HBM as bf16 from here on.
    patches = img.reshape(NV, C, Hi // ps, ps, Wi // ps, ps)
    patches = patches.transpose(0, 2, 4, 1, 3, 5).reshape(
        NV, (Hi // ps) * (Wi // ps), C * ps * ps).astype(jnp.bfloat16)
    L = patches.shape[1]

    # encoder stand-in: one fused kernel per view
    feats = encoder_block(patches, cam, pp["enc"])               # (NV, L, Dc) bf16
    image_feats = feats.reshape(N, V * L, Dc)

    # transformer decoder ('cond' blocks: cross-attn, self-attn, MLP), 3 fused
    # pallas_calls per layer.
    T = 3 * H * W + 3 * H
    x = jnp.broadcast_to(pp["pos_embed"], (N, T, D)).astype(jnp.bfloat16)
    for lp in pp["layers"]:
        x = cross_attn_block(x, image_feats, lp["cross"], nH)
        x = self_attn_block(x, lp["self"], nH)
        x = mlp_block(x.reshape(N * T, D), lp["mlp"]).reshape(N, T, D)

    # reshape_upsample: LN_f + ConvT + dim_map as one lane-dense 160-wide matmul
    big = ln_linear(x.reshape(N * T, D), pp["final"])            # (N*T, 5P) f32
    big = big.reshape(N, T, 5 * P)

    # plane tokens: (N, 3HW, 4P) -> pixel-shuffle to (N, 3P, 2H, 2W)
    up = big[:, :3 * H * W, :4 * P].reshape(N, H, W, 3, P, 2, 2)
    plane = up.transpose(0, 3, 4, 1, 5, 2, 6).reshape(N, 3 * P, 2 * H, 2 * W)

    # line tokens: (N, 3H, P) -> up_line over spatial axis -> (N, 3P, 2H, 1)
    lt = big[:, 3 * H * W:, 4 * P:].reshape(N, H, 3, P)
    lt = jnp.einsum("nhip->npih", lt)                            # (N, P, 3, H)
    lt2 = lt @ pp["up_line"]["w"] + pp["up_line"]["b"]           # XLA (tiny matmul)
    lt2 = jnp.einsum("npih->niph", lt2).reshape(N, 3 * P, 2 * H, 1)

    a3 = cfg["app_n_comp"] * 3
    return (plane[:, :a3, :, :], lt2[:, :a3, :, :],
            plane[:, a3:, :, :], lt2[:, a3:, :, :])


# --------------------------------------------------------------------------
# Driver
# --------------------------------------------------------------------------

if __name__ == "__main__":
    cfg = dict(
        camera_embed_dim=16,
        transformer_dim=32,
        transformer_layers=2,
        transformer_heads=2,
        triplane_low_res=4,
        triplane_high_res=8,
        encoder_feat_dim=32,
        app_n_comp=24,
        density_n_comp=8,
        patch_size=16,
    )
    key = jax.random.PRNGKey(0)
    kp, ki, kc = jax.random.split(key, 3)
    params = init_params(kp, cfg)
    prepped = prepare_params(params, cfg)      # one-time weight prep (outside jit)

    N, V, Hi, Wi = 1, 2, 32, 32
    image = jax.random.normal(ki, (N, V, 3, Hi, Wi), jnp.float32)
    source_camera = jax.random.normal(kc, (N, V, 12 + 4), jnp.float32)

    fwd = jax.jit(lambda p, im, cam: forward(p, im, cam, cfg))
    outs = jax.block_until_ready(fwd(prepped, image, source_camera))
    app_planes, app_lines, density_planes, density_lines = outs

    assert app_planes.shape == (N, cfg["app_n_comp"] * 3, 8, 8)
    assert app_lines.shape == (N, cfg["app_n_comp"] * 3, 8, 1)
    assert density_planes.shape == (N, cfg["density_n_comp"] * 3, 8, 8)
    assert density_lines.shape == (N, cfg["density_n_comp"] * 3, 8, 1)
    for o in outs:
        assert bool(jnp.all(jnp.isfinite(o)))
    print("KERNEL_OK")
</pallas_src>

<mosaic_0001>
module attributes {stable_mosaic.version = 11 : i64} {
  func.func @_encoder_kernel(%arg0: i32, %arg1: memref<1x4x768xbf16, #tpu.memory_space<vmem>>, %arg2: memref<1x1x16xbf16, #tpu.memory_space<vmem>>, %arg3: memref<16x16xbf16, #tpu.memory_space<vmem>>, %arg4: memref<1x16xf32, #tpu.memory_space<vmem>>, %arg5: memref<16x16xbf16, #tpu.memory_space<vmem>>, %arg6: memref<1x16xf32, #tpu.memory_space<vmem>>, %arg7: memref<16x32xbf16, #tpu.memory_space<vmem>>, %arg8: memref<1x32xf32, #tpu.memory_space<vmem>>, %arg9: memref<768x32xbf16, #tpu.memory_space<vmem>>, %arg10: memref<1x32xf32, #tpu.memory_space<vmem>>, %arg11: memref<1x32xf32, #tpu.memory_space<vmem>>, %arg12: memref<1x32xf32, #tpu.memory_space<vmem>>, %arg13: memref<1x4x32xbf16, #tpu.memory_space<vmem>>) attributes {dimension_semantics = [#tpu.dimension_semantics<parallel>], iteration_bounds = array<i64: 2>, scalar_prefetch = 0 : i64, scratch_operands = 0 : i64, tpu.core_type = #tpu.core_type<tc>, window_params = [{transform_indices = @transform_0, window_bounds = array<i64: 1, 4, 768>}, {transform_indices = @transform_1, window_bounds = array<i64: 1, 1, 16>}, {pipeline_mode = #tpu.pipeline_mode<synchronous>, transform_indices = @transform_2, window_bounds = array<i64: 16, 16>}, {pipeline_mode = #tpu.pipeline_mode<synchronous>, transform_indices = @transform_3, window_bounds = array<i64: 1, 16>}, {pipeline_mode = #tpu.pipeline_mode<synchronous>, transform_indices = @transform_4, window_bounds = array<i64: 16, 16>}, {pipeline_mode = #tpu.pipeline_mode<synchronous>, transform_indices = @transform_5, window_bounds = array<i64: 1, 16>}, {pipeline_mode = #tpu.pipeline_mode<synchronous>, transform_indices = @transform_6, window_bounds = array<i64: 16, 32>}, {pipeline_mode = #tpu.pipeline_mode<synchronous>, transform_indices = @transform_7, window_bounds = array<i64: 1, 32>}, {pipeline_mode = #tpu.pipeline_mode<synchronous>, transform_indices = @transform_8, window_bounds = array<i64: 768, 32>}, {pipeline_mode = #tpu.pipeline_mode<synchronous>, transform_indices = @transform_9, window_bounds = array<i64: 1, 32>}, {pipeline_mode = #tpu.pipeline_mode<synchronous>, transform_indices = @transform_10, window_bounds = array<i64: 1, 32>}, {pipeline_mode = #tpu.pipeline_mode<synchronous>, transform_indices = @transform_11, window_bounds = array<i64: 1, 32>}, {transform_indices = @transform_12, window_bounds = array<i64: 1, 4, 32>}]} {
    %c0 = arith.constant 0 : index
    %c0_0 = arith.constant 0 : index
    %c0_1 = arith.constant 0 : index
    %0 = vector.load %arg2[%c0, %c0_0, %c0_1] : memref<1x1x16xbf16, #tpu.memory_space<vmem>>, vector<1x1x16xbf16>
    %1 = vector.shape_cast %0 : vector<1x1x16xbf16> to vector<1x16xbf16>
    %c0_2 = arith.constant 0 : index
    %c0_3 = arith.constant 0 : index
    %2 = vector.load %arg3[%c0_2, %c0_3] : memref<16x16xbf16, #tpu.memory_space<vmem>>, vector<16x16xbf16>
    %cst = arith.constant dense<0.000000e+00> : vector<1x16xf32>
    %3 = tpu.matmul %1, %2, %cst {dimension_numbers = #tpu.dot_dimension_numbers<[1], [0], [0], [1], [0, 0, 1, 1], [], []>} : vector<1x16xbf16>, vector<16x16xbf16>, vector<1x16xf32> -> vector<1x16xf32>
    %c0_4 = arith.constant 0 : index
    %c0_5 = arith.constant 0 : index
    %4 = vector.load %arg4[%c0_4, %c0_5] : memref<1x16xf32, #tpu.memory_space<vmem>>, vector<1x16xf32>
    %5 = arith.addf %3, %4 : vector<1x16xf32>
    %6 = arith.negf %5 : vector<1x16xf32>
    %7 = math.exp %6 : vector<1x16xf32>
    %cst_6 = arith.constant 1.000000e+00 : f32
    %8 = vector.broadcast %cst_6 : f32 to vector<1x16xf32>
    %9 = arith.addf %8, %7 : vector<1x16xf32>
    %10 = arith.divf %8, %9 : vector<1x16xf32>
    %11 = arith.mulf %5, %10 : vector<1x16xf32>
    %12 = arith.truncf %11 : vector<1x16xf32> to vector<1x16xbf16>
    %c0_7 = arith.constant 0 : index
    %c0_8 = arith.constant 0 : index
    %13 = vector.load %arg5[%c0_7, %c0_8] : memref<16x16xbf16, #tpu.memory_space<vmem>>, vector<16x16xbf16>
    %cst_9 = arith.constant dense<0.000000e+00> : vector<1x16xf32>
    %14 = tpu.matmul %12, %13, %cst_9 {dimension_numbers = #tpu.dot_dimension_numbers<[1], [0], [0], [1], [0, 0, 1, 1], [], []>} : vector<1x16xbf16>, vector<16x16xbf16>, vector<1x16xf32> -> vector<1x16xf32>
    %c0_10 = arith.constant 0 : index
    %c0_11 = arith.constant 0 : index
    %15 = vector.load %arg6[%c0_10, %c0_11] : memref<1x16xf32, #tpu.memory_space<vmem>>, vector<1x16xf32>
    %16 = arith.addf %14, %15 : vector<1x16xf32>
    %17 = arith.truncf %16 : vector<1x16xf32> to vector<1x16xbf16>
    %c0_12 = arith.constant 0 : index
    %c0_13 = arith.constant 0 : index
    %18 = vector.load %arg7[%c0_12, %c0_13] : memref<16x32xbf16, #tpu.memory_space<vmem>>, vector<16x32xbf16>
    %cst_14 = arith.constant dense<0.000000e+00> : vector<1x32xf32>
    %19 = tpu.matmul %17, %18, %cst_14 {dimension_numbers = #tpu.dot_dimension_numbers<[1], [0], [0], [1], [0, 0, 1, 1], [], []>} : vector<1x16xbf16>, vector<16x32xbf16>, vector<1x32xf32> -> vector<1x32xf32>
    %c0_15 = arith.constant 0 : index
    %c0_16 = arith.constant 0 : index
    %20 = vector.load %arg8[%c0_15, %c0_16] : memref<1x32xf32, #tpu.memory_space<vmem>>, vector<1x32xf32>
    %21 = arith.addf %19, %20 : vector<1x32xf32>
    %c0_17 = arith.constant 0 : index
    %c0_18 = arith.constant 0 : index
    %c0_19 = arith.constant 0 : index
    %22 = vector.load %arg1[%c0_17, %c0_18, %c0_19] : memref<1x4x768xbf16, #tpu.memory_space<vmem>>, vector<1x4x768xbf16>
    %23 = vector.shape_cast %22 : vector<1x4x768xbf16> to vector<4x768xbf16>
    %c0_20 = arith.constant 0 : index
    %c0_21 = arith.constant 0 : index
    %24 = vector.load %arg9[%c0_20, %c0_21] : memref<768x32xbf16, #tpu.memory_space<vmem>>, vector<768x32xbf16>
    %cst_22 = arith.constant dense<0.000000e+00> : vector<4x32xf32>
    %25 = tpu.matmul %23, %24, %cst_22 {dimension_numbers = #tpu.dot_dimension_numbers<[1], [0], [0], [1], [0, 0, 1, 1], [], []>} : vector<4x768xbf16>, vector<768x32xbf16>, vector<4x32xf32> -> vector<4x32xf32>
    %c0_23 = arith.constant 0 : index
    %c0_24 = arith.constant 0 : index
    %26 = vector.load %arg10[%c0_23, %c0_24] : memref<1x32xf32, #tpu.memory_space<vmem>>, vector<1x32xf32>
    %27 = vector.broadcast %26 : vector<1x32xf32> to vector<4x32xf32>
    %28 = arith.addf %25, %27 : vector<4x32xf32>
    %29 = vector.broadcast %21 : vector<1x32xf32> to vector<4x32xf32>
    %30 = arith.addf %28, %29 : vector<4x32xf32>
    %c0_25 = arith.constant 0 : index
    %c0_26 = arith.constant 0 : index
    %31 = vector.load %arg11[%c0_25, %c0_26] : memref<1x32xf32, #tpu.memory_space<vmem>>, vector<1x32xf32>
    %c0_27 = arith.constant 0 : index
    %c0_28 = arith.constant 0 : index
    %32 = vector.load %arg12[%c0_27, %c0_28] : memref<1x32xf32, #tpu.memory_space<vmem>>, vector<1x32xf32>
    %cst_29 = arith.constant dense<0.000000e+00> : vector<4xf32>
    %33 = vector.multi_reduction <add>, %30, %cst_29 [1] : vector<4x32xf32> to vector<4xf32>
    %34 = vector.shape_cast %33 : vector<4xf32> to vector<4x1xf32>
    %cst_30 = arith.constant 3.200000e+01 : f32
    %35 = vector.broadcast %cst_30 : f32 to vector<4x1xf32>
    %36 = arith.divf %34, %35 : vector<4x1xf32>
    %37 = vector.broadcast %36 : vector<4x1xf32> to vector<4x32xf32>
    %38 = arith.subf %30, %37 : vector<4x32xf32>
    %39 = arith.mulf %38, %38 : vector<4x32xf32>
    %cst_31 = arith.constant dense<0.000000e+00> : vector<4xf32>
    %40 = vector.multi_reduction <add>, %39, %cst_31 [1] : vector<4x32xf32> to vector<4xf32>
    %41 = vector.shape_cast %40 : vector<4xf32> to vector<4x1xf32>
    %cst_32 = arith.constant 3.200000e+01 : f32
    %42 = vector.broadcast %cst_32 : f32 to vector<4x1xf32>
    %43 = arith.divf %41, %42 : vector<4x1xf32>
    %44 = vector.broadcast %36 : vector<4x1xf32> to vector<4x32xf32>
    %45 = arith.subf %30, %44 : vector<4x32xf32>
    %cst_33 = arith.constant 9.99999974E-6 : f32
    %46 = vector.broadcast %cst_33 : f32 to vector<4x1xf32>
    %47 = arith.addf %43, %46 : vector<4x1xf32>
    %48 = math.rsqrt %47 : vector<4x1xf32>
    %49 = vector.broadcast %48 : vector<4x1xf32> to vector<4x32xf32>
    %50 = arith.mulf %45, %49 : vector<4x32xf32>
    %51 = vector.broadcast %31 : vector<1x32xf32> to vector<4x32xf32>
    %52 = arith.mulf %50, %51 : vector<4x32xf32>
    %53 = vector.broadcast %32 : vector<1x32xf32> to vector<4x32xf32>
    %54 = arith.addf %52, %53 : vector<4x32xf32>
    %55 = arith.truncf %54 : vector<4x32xf32> to vector<4x32xbf16>
    %c0_34 = arith.constant 0 : index
    %c0_35 = arith.constant 0 : index
    %c0_36 = arith.constant 0 : index
    %56 = vector.load %arg13[%c0_34, %c0_35, %c0_36] : memref<1x4x32xbf16, #tpu.memory_space<vmem>>, vector<1x4x32xbf16>
    %57 = vector.shape_cast %56 : vector<1x4x32xbf16> to vector<4x32xbf16>
    %58 = vector.shape_cast %55 : vector<4x32xbf16> to vector<1x4x32xbf16>
    tpu.vector_store %arg13[%c0_34, %c0_35, %c0_36], %58 {strides = array<i32>} : memref<1x4x32xbf16, #tpu.memory_space<vmem>>, vector<1x4x32xbf16>,
    return
  }
  func.func @transform_0(%arg0: i32) -> (i32, i32, i32) {
    %c0_i32 = arith.constant 0 : i32
    %c0_i32_0 = arith.constant 0 : i32
    %c0_i32_1 = arith.constant 0 : i32
    return %arg0, %c0_i32, %c0_i32_0 : i32, i32, i32
  }
  func.func @transform_1(%arg0: i32) -> (i32, i32, i32) {
    %c0_i32 = arith.constant 0 : i32
    %c0_i32_0 = arith.constant 0 : i32
    %c0_i32_1 = arith.constant 0 : i32
    return %arg0, %c0_i32, %c0_i32_0 : i32, i32, i32
  }
  func.func @transform_2(%arg0: i32) -> (i32, i32) {
    %c0_i32 = arith.constant 0 : i32
    %c0_i32_0 = arith.constant 0 : i32
    %c0_i32_1 = arith.constant 0 : i32
    return %c0_i32, %c0_i32_0 : i32, i32
  }
  func.func @transform_3(%arg0: i32) -> (i32, i32) {
    %c0_i32 = arith.constant 0 : i32
    %c0_i32_0 = arith.constant 0 : i32
    %c0_i32_1 = arith.constant 0 : i32
    return %c0_i32, %c0_i32_0 : i32, i32
  }
  func.func @transform_4(%arg0: i32) -> (i32, i32) {
    %c0_i32 = arith.constant 0 : i32
    %c0_i32_0 = arith.constant 0 : i32
    %c0_i32_1 = arith.constant 0 : i32
    return %c0_i32, %c0_i32_0 : i32, i32
  }
  func.func @transform_5(%arg0: i32) -> (i32, i32) {
    %c0_i32 = arith.constant 0 : i32
    %c0_i32_0 = arith.constant 0 : i32
    %c0_i32_1 = arith.constant 0 : i32
    return %c0_i32, %c0_i32_0 : i32, i32
  }
  func.func @transform_6(%arg0: i32) -> (i32, i32) {
    %c0_i32 = arith.constant 0 : i32
    %c0_i32_0 = arith.constant 0 : i32
    %c0_i32_1 = arith.constant 0 : i32
    return %c0_i32, %c0_i32_0 : i32, i32
  }
  func.func @transform_7(%arg0: i32) -> (i32, i32) {
    %c0_i32 = arith.constant 0 : i32
    %c0_i32_0 = arith.constant 0 : i32
    %c0_i32_1 = arith.constant 0 : i32
    return %c0_i32, %c0_i32_0 : i32, i32
  }
  func.func @transform_8(%arg0: i32) -> (i32, i32) {
    %c0_i32 = arith.constant 0 : i32
    %c0_i32_0 = arith.constant 0 : i32
    %c0_i32_1 = arith.constant 0 : i32
    return %c0_i32, %c0_i32_0 : i32, i32
  }
  func.func @transform_9(%arg0: i32) -> (i32, i32) {
    %c0_i32 = arith.constant 0 : i32
    %c0_i32_0 = arith.constant 0 : i32
    %c0_i32_1 = arith.constant 0 : i32
    return %c0_i32, %c0_i32_0 : i32, i32
  }
  func.func @transform_10(%arg0: i32) -> (i32, i32) {
    %c0_i32 = arith.constant 0 : i32
    %c0_i32_0 = arith.constant 0 : i32
    %c0_i32_1 = arith.constant 0 : i32
    return %c0_i32, %c0_i32_0 : i32, i32
  }
  func.func @transform_11(%arg0: i32) -> (i32, i32) {
    %c0_i32 = arith.constant 0 : i32
    %c0_i32_0 = arith.constant 0 : i32
    %c0_i32_1 = arith.constant 0 : i32
    return %c0_i32, %c0_i32_0 : i32, i32
  }
  func.func @transform_12(%arg0: i32) -> (i32, i32, i32) {
    %c0_i32 = arith.constant 0 : i32
    %c0_i32_0 = arith.constant 0 : i32
    %c0_i32_1 = arith.constant 0 : i32
    return %arg0, %c0_i32, %c0_i32_0 : i32, i32, i32
  }
}

module attributes {stable_mosaic.version = 11 : i64} {
  func.func @_self_attn_kernel(%arg0: i32, %arg1: memref<1x60x32xbf16, #tpu.memory_space<vmem>>, %arg2: memref<32x96xbf16, #tpu.memory_space<vmem>>, %arg3: memref<1x96xf32, #tpu.memory_space<vmem>>, %arg4: memref<32x32xbf16, #tpu.memory_space<vmem>>, %arg5: memref<1x32xf32, #tpu.memory_space<vmem>>, %arg6: memref<1x32xf32, #tpu.memory_space<vmem>>, %arg7: memref<1x32xf32, #tpu.memory_space<vmem>>, %arg8: memref<1x60x32xbf16, #tpu.memory_space<vmem>>) attributes {dimension_semantics = [#tpu.dimension_semantics<parallel>], iteration_bounds = array<i64: 1>, scalar_prefetch = 0 : i64, scratch_operands = 0 : i64, tpu.core_type = #tpu.core_type<tc>, window_params = [{transform_indices = @transform_0, window_bounds = array<i64: 1, 60, 32>}, {pipeline_mode = #tpu.pipeline_mode<synchronous>, transform_indices = @transform_1, window_bounds = array<i64: 32, 96>}, {pipeline_mode = #tpu.pipeline_mode<synchronous>, transform_indices = @transform_2, window_bounds = array<i64: 1, 96>}, {pipeline_mode = #tpu.pipeline_mode<synchronous>, transform_indices = @transform_3, window_bounds = array<i64: 32, 32>}, {pipeline_mode = #tpu.pipeline_mode<synchronous>, transform_indices = @transform_4, window_bounds = array<i64: 1, 32>}, {pipeline_mode = #tpu.pipeline_mode<synchronous>, transform_indices = @transform_5, window_bounds = array<i64: 1, 32>}, {pipeline_mode = #tpu.pipeline_mode<synchronous>, transform_indices = @transform_6, window_bounds = array<i64: 1, 32>}, {transform_indices = @transform_7, window_bounds = array<i64: 1, 60, 32>}]} {
    %c0 = arith.constant 0 : index
    %c0_0 = arith.constant 0 : index
    %c0_1 = arith.constant 0 : index
    %0 = vector.load %arg1[%c0, %c0_0, %c0_1] : memref<1x60x32xbf16, #tpu.memory_space<vmem>>, vector<1x60x32xbf16>
    %1 = vector.shape_cast %0 : vector<1x60x32xbf16> to vector<60x32xbf16>
    %2 = arith.extf %1 : vector<60x32xbf16> to vector<60x32xf32>
    %c0_2 = arith.constant 0 : index
    %c0_3 = arith.constant 0 : index
    %3 = vector.load %arg6[%c0_2, %c0_3] : memref<1x32xf32, #tpu.memory_space<vmem>>, vector<1x32xf32>
    %c0_4 = arith.constant 0 : index
    %c0_5 = arith.constant 0 : index
    %4 = vector.load %arg7[%c0_4, %c0_5] : memref<1x32xf32, #tpu.memory_space<vmem>>, vector<1x32xf32>
    %cst = arith.constant dense<0.000000e+00> : vector<60xf32>
    %5 = vector.multi_reduction <add>, %2, %cst [1] : vector<60x32xf32> to vector<60xf32>
    %6 = vector.shape_cast %5 : vector<60xf32> to vector<60x1xf32>
    %cst_6 = arith.constant 3.200000e+01 : f32
    %7 = vector.broadcast %cst_6 : f32 to vector<60x1xf32>
    %8 = arith.divf %6, %7 : vector<60x1xf32>
    %9 = vector.broadcast %8 : vector<60x1xf32> to vector<60x32xf32>
    %10 = arith.subf %2, %9 : vector<60x32xf32>
    %11 = arith.mulf %10, %10 : vector<60x32xf32>
    %cst_7 = arith.constant dense<0.000000e+00> : vector<60xf32>
    %12 = vector.multi_reduction <add>, %11, %cst_7 [1] : vector<60x32xf32> to vector<60xf32>
    %13 = vector.shape_cast %12 : vector<60xf32> to vector<60x1xf32>
    %cst_8 = arith.constant 3.200000e+01 : f32
    %14 = vector.broadcast %cst_8 : f32 to vector<60x1xf32>
    %15 = arith.divf %13, %14 : vector<60x1xf32>
    %16 = vector.broadcast %8 : vector<60x1xf32> to vector<60x32xf32>
    %17 = arith.subf %2, %16 : vector<60x32xf32>
    %cst_9 = arith.constant 9.99999974E-6 : f32
    %18 = vector.broadcast %cst_9 : f32 to vector<60x1xf32>
    %19 = arith.addf %15, %18 : vector<60x1xf32>
    %20 = math.rsqrt %19 : vector<60x1xf32>
    %21 = vector.broadcast %20 : vector<60x1xf32> to vector<60x32xf32>
    %22 = arith.mulf %17, %21 : vector<60x32xf32>
    %23 = vector.broadcast %3 : vector<1x32xf32> to vector<60x32xf32>
    %24 = arith.mulf %22, %23 : vector<60x32xf32>
    %25 = vector.broadcast %4 : vector<1x32xf32> to vector<60x32xf32>
    %26 = arith.addf %24, %25 : vector<60x32xf32>
    %27 = arith.truncf %26 : vector<60x32xf32> to vector<60x32xbf16>
    %c0_10 = arith.constant 0 : index
    %c0_11 = arith.constant 0 : index
    %28 = vector.load %arg2[%c0_10, %c0_11] : memref<32x96xbf16, #tpu.memory_space<vmem>>, vector<32x96xbf16>
    %cst_12 = arith.constant dense<0.000000e+00> : vector<60x96xf32>
    %29 = tpu.matmul %27, %28, %cst_12 {dimension_numbers = #tpu.dot_dimension_numbers<[1], [0], [0], [1], [0, 0, 1, 1], [], []>} : vector<60x32xbf16>, vector<32x96xbf16>, vector<60x96xf32> -> vector<60x96xf32>
    %c0_13 = arith.constant 0 : index
    %c0_14 = arith.constant 0 : index
    %30 = vector.load %arg3[%c0_13, %c0_14] : memref<1x96xf32, #tpu.memory_space<vmem>>, vector<1x96xf32>
    %31 = vector.broadcast %30 : vector<1x96xf32> to vector<60x96xf32>
    %32 = arith.addf %29, %31 : vector<60x96xf32>
    %c0_15 = arith.constant 0 : index
    %c0_16 = arith.constant 0 : index
    %33 = vector.load %arg4[%c0_15, %c0_16] : memref<32x32xbf16, #tpu.memory_space<vmem>>, vector<32x32xbf16>
    %cst_17 = arith.constant 0.000000e+00 : f32
    %34 = vector.broadcast %cst_17 : f32 to vector<60x32xf32>
    %35 = vector.extract_strided_slice %32 {offsets = [0, 0], sizes = [60, 16], strides = [1, 1]} : vector<60x96xf32> to vector<60x16xf32>
    %36 = vector.extract_strided_slice %32 {offsets = [0, 32], sizes = [60, 16], strides = [1, 1]} : vector<60x96xf32> to vector<60x16xf32>
    %37 = vector.extract_strided_slice %32 {offsets = [0, 64], sizes = [60, 16], strides = [1, 1]} : vector<60x96xf32> to vector<60x16xf32>
    %38 = arith.truncf %35 : vector<60x16xf32> to vector<60x16xbf16>
    %39 = arith.truncf %36 : vector<60x16xf32> to vector<60x16xbf16>
    %cst_18 = arith.constant dense<0.000000e+00> : vector<60x60xf32>
    %40 = tpu.matmul %38, %39, %cst_18 {dimension_numbers = #tpu.dot_dimension_numbers<[1], [1], [0], [0], [0, 0, 1, 0], [], []>} : vector<60x16xbf16>, vector<60x16xbf16>, vector<60x60xf32> -> vector<60x60xf32>
    %cst_19 = arith.constant 2.500000e-01 : f32
    %41 = vector.broadcast %cst_19 : f32 to vector<60x60xf32>
    %42 = arith.mulf %40, %41 : vector<60x60xf32>
    %cst_20 = arith.constant dense<0xFF800000> : vector<60xf32>
    %43 = vector.multi_reduction <maximumf>, %42, %cst_20 [1] : vector<60x60xf32> to vector<60xf32>
    %44 = vector.shape_cast %43 : vector<60xf32> to vector<60x1xf32>
    %45 = vector.broadcast %44 : vector<60x1xf32> to vector<60x60xf32>
    %46 = arith.subf %42, %45 : vector<60x60xf32>
    %47 = math.exp %46 : vector<60x60xf32>
    %cst_21 = arith.constant dense<0.000000e+00> : vector<60xf32>
    %48 = vector.multi_reduction <add>, %47, %cst_21 [1] : vector<60x60xf32> to vector<60xf32>
    %49 = vector.shape_cast %48 : vector<60xf32> to vector<60x1xf32>
    %50 = tpu.reciprocal %49 {approx = true} : vector<60x1xf32> -> vector<60x1xf32>
    %51 = vector.broadcast %50 : vector<60x1xf32> to vector<60x60xf32>
    %52 = arith.mulf %47, %51 : vector<60x60xf32>
    %53 = arith.truncf %52 : vector<60x60xf32> to vector<60x60xbf16>
    %54 = arith.truncf %37 : vector<60x16xf32> to vector<60x16xbf16>
    %cst_22 = arith.constant dense<0.000000e+00> : vector<60x16xf32>
    %55 = tpu.matmul %53, %54, %cst_22 {dimension_numbers = #tpu.dot_dimension_numbers<[1], [0], [0], [1], [0, 0, 1, 1], [], []>} : vector<60x60xbf16>, vector<60x16xbf16>, vector<60x16xf32> -> vector<60x16xf32>
    %56 = arith.truncf %55 : vector<60x16xf32> to vector<60x16xbf16>
    %57 = vector.extract_strided_slice %33 {offsets = [0, 0], sizes = [16, 32], strides = [1, 1]} : vector<32x32xbf16> to vector<16x32xbf16>
    %cst_23 = arith.constant dense<0.000000e+00> : vector<60x32xf32>
    %58 = tpu.matmul %56, %57, %cst_23 {dimension_numbers = #tpu.dot_dimension_numbers<[1], [0], [0], [1], [0, 0, 1, 1], [], []>} : vector<60x16xbf16>, vector<16x32xbf16>, vector<60x32xf32> -> vector<60x32xf32>
    %59 = arith.addf %34, %58 : vector<60x32xf32>
    %60 = vector.extract_strided_slice %32 {offsets = [0, 16], sizes = [60, 16], strides = [1, 1]} : vector<60x96xf32> to vector<60x16xf32>
    %61 = vector.extract_strided_slice %32 {offsets = [0, 48], sizes = [60, 16], strides = [1, 1]} : vector<60x96xf32> to vector<60x16xf32>
    %62 = vector.extract_strided_slice %32 {offsets = [0, 80], sizes = [60, 16], strides = [1, 1]} : vector<60x96xf32> to vector<60x16xf32>
    %63 = arith.truncf %60 : vector<60x16xf32> to vector<60x16xbf16>
    %64 = arith.truncf %61 : vector<60x16xf32> to vector<60x16xbf16>
    %cst_24 = arith.constant dense<0.000000e+00> : vector<60x60xf32>
    %65 = tpu.matmul %63, %64, %cst_24 {dimension_numbers = #tpu.dot_dimension_numbers<[1], [1], [0], [0], [0, 0, 1, 0], [], []>} : vector<60x16xbf16>, vector<60x16xbf16>, vector<60x60xf32> -> vector<60x60xf32>
    %cst_25 = arith.constant 2.500000e-01 : f32
    %66 = vector.broadcast %cst_25 : f32 to vector<60x60xf32>
    %67 = arith.mulf %65, %66 : vector<60x60xf32>
    %cst_26 = arith.constant dense<0xFF800000> : vector<60xf32>
    %68 = vector.multi_reduction <maximumf>, %67, %cst_26 [1] : vector<60x60xf32> to vector<60xf32>
    %69 = vector.shape_cast %68 : vector<60xf32> to vector<60x1xf32>
    %70 = vector.broadcast %69 : vector<60x1xf32> to vector<60x60xf32>
    %71 = arith.subf %67, %70 : vector<60x60xf32>
    %72 = math.exp %71 : vector<60x60xf32>
    %cst_27 = arith.constant dense<0.000000e+00> : vector<60xf32>
    %73 = vector.multi_reduction <add>, %72, %cst_27 [1] : vector<60x60xf32> to vector<60xf32>
    %74 = vector.shape_cast %73 : vector<60xf32> to vector<60x1xf32>
    %75 = tpu.reciprocal %74 {approx = true} : vector<60x1xf32> -> vector<60x1xf32>
    %76 = vector.broadcast %75 : vector<60x1xf32> to vector<60x60xf32>
    %77 = arith.mulf %72, %76 : vector<60x60xf32>
    %78 = arith.truncf %77 : vector<60x60xf32> to vector<60x60xbf16>
    %79 = arith.truncf %62 : vector<60x16xf32> to vector<60x16xbf16>
    %cst_28 = arith.constant dense<0.000000e+00> : vector<60x16xf32>
    %80 = tpu.matmul %78, %79, %cst_28 {dimension_numbers = #tpu.dot_dimension_numbers<[1], [0], [0], [1], [0, 0, 1, 1], [], []>} : vector<60x60xbf16>, vector<60x16xbf16>, vector<60x16xf32> -> vector<60x16xf32>
    %81 = arith.truncf %80 : vector<60x16xf32> to vector<60x16xbf16>
    %82 = vector.extract_strided_slice %33 {offsets = [16, 0], sizes = [16, 32], strides = [1, 1]} : vector<32x32xbf16> to vector<16x32xbf16>
    %cst_29 = arith.constant dense<0.000000e+00> : vector<60x32xf32>
    %83 = tpu.matmul %81, %82, %cst_29 {dimension_numbers = #tpu.dot_dimension_numbers<[1], [0], [0], [1], [0, 0, 1, 1], [], []>} : vector<60x16xbf16>, vector<16x32xbf16>, vector<60x32xf32> -> vector<60x32xf32>
    %84 = arith.addf %59, %83 : vector<60x32xf32>
    %c0_30 = arith.constant 0 : index
    %c0_31 = arith.constant 0 : index
    %85 = vector.load %arg5[%c0_30, %c0_31] : memref<1x32xf32, #tpu.memory_space<vmem>>, vector<1x32xf32>
    %86 = vector.broadcast %85 : vector<1x32xf32> to vector<60x32xf32>
    %87 = arith.addf %84, %86 : vector<60x32xf32>
    %88 = arith.addf %87, %2 : vector<60x32xf32>
    %89 = arith.truncf %88 : vector<60x32xf32> to vector<60x32xbf16>
    %c0_32 = arith.constant 0 : index
    %c0_33 = arith.constant 0 : index
    %c0_34 = arith.constant 0 : index
    %90 = vector.load %arg8[%c0_32, %c0_33, %c0_34] : memref<1x60x32xbf16, #tpu.memory_space<vmem>>, vector<1x60x32xbf16>
    %91 = vector.shape_cast %90 : vector<1x60x32xbf16> to vector<60x32xbf16>
    %92 = vector.shape_cast %89 : vector<60x32xbf16> to vector<1x60x32xbf16>
    tpu.vector_store %arg8[%c0_32, %c0_33, %c0_34], %92 {strides = array<i32>} : memref<1x60x32xbf16, #tpu.memory_space<vmem>>, vector<1x60x32xbf16>,
    return
  }
  func.func @transform_0(%arg0: i32) -> (i32, i32, i32) {
    %c0_i32 = arith.constant 0 : i32
    %c0_i32_0 = arith.constant 0 : i32
    %c0_i32_1 = arith.constant 0 : i32
    return %arg0, %c0_i32, %c0_i32_0 : i32, i32, i32
  }
  func.func @transform_1(%arg0: i32) -> (i32, i32) {
    %c0_i32 = arith.constant 0 : i32
    %c0_i32_0 = arith.constant 0 : i32
    %c0_i32_1 = arith.constant 0 : i32
    return %c0_i32, %c0_i32_0 : i32, i32
  }
  func.func @transform_2(%arg0: i32) -> (i32, i32) {
    %c0_i32 = arith.constant 0 : i32
    %c0_i32_0 = arith.constant 0 : i32
    %c0_i32_1 = arith.constant 0 : i32
    return %c0_i32, %c0_i32_0 : i32, i32
  }
  func.func @transform_3(%arg0: i32) -> (i32, i32) {
    %c0_i32 = arith.constant 0 : i32
    %c0_i32_0 = arith.constant 0 : i32
    %c0_i32_1 = arith.constant 0 : i32
    return %c0_i32, %c0_i32_0 : i32, i32
  }
  func.func @transform_4(%arg0: i32) -> (i32, i32) {
    %c0_i32 = arith.constant 0 : i32
    %c0_i32_0 = arith.constant 0 : i32
    %c0_i32_1 = arith.constant 0 : i32
    return %c0_i32, %c0_i32_0 : i32, i32
  }
  func.func @transform_5(%arg0: i32) -> (i32, i32) {
    %c0_i32 = arith.constant 0 : i32
    %c0_i32_0 = arith.constant 0 : i32
    %c0_i32_1 = arith.constant 0 : i32
    return %c0_i32, %c0_i32_0 : i32, i32
  }
  func.func @transform_6(%arg0: i32) -> (i32, i32) {
    %c0_i32 = arith.constant 0 : i32
    %c0_i32_0 = arith.constant 0 : i32
    %c0_i32_1 = arith.constant 0 : i32
    return %c0_i32, %c0_i32_0 : i32, i32
  }
  func.func @transform_7(%arg0: i32) -> (i32, i32, i32) {
    %c0_i32 = arith.constant 0 : i32
    %c0_i32_0 = arith.constant 0 : i32
    %c0_i32_1 = arith.constant 0 : i32
    return %arg0, %c0_i32, %c0_i32_0 : i32, i32, i32
  }
}

module attributes {stable_mosaic.version = 11 : i64} {
  func.func @_cross_attn_kernel(%arg0: i32, %arg1: memref<1x60x32xbf16, #tpu.memory_space<vmem>>, %arg2: memref<1x8x32xbf16, #tpu.memory_space<vmem>>, %arg3: memref<32x32xbf16, #tpu.memory_space<vmem>>, %arg4: memref<1x32xf32, #tpu.memory_space<vmem>>, %arg5: memref<32x64xbf16, #tpu.memory_space<vmem>>, %arg6: memref<1x64xf32, #tpu.memory_space<vmem>>, %arg7: memref<32x32xbf16, #tpu.memory_space<vmem>>, %arg8: memref<1x32xf32, #tpu.memory_space<vmem>>, %arg9: memref<1x32xf32, #tpu.memory_space<vmem>>, %arg10: memref<1x32xf32, #tpu.memory_space<vmem>>, %arg11: memref<1x60x32xbf16, #tpu.memory_space<vmem>>) attributes {dimension_semantics = [#tpu.dimension_semantics<parallel>], iteration_bounds = array<i64: 1>, scalar_prefetch = 0 : i64, scratch_operands = 0 : i64, tpu.core_type = #tpu.core_type<tc>, window_params = [{transform_indices = @transform_0, window_bounds = array<i64: 1, 60, 32>}, {transform_indices = @transform_1, window_bounds = array<i64: 1, 8, 32>}, {pipeline_mode = #tpu.pipeline_mode<synchronous>, transform_indices = @transform_2, window_bounds = array<i64: 32, 32>}, {pipeline_mode = #tpu.pipeline_mode<synchronous>, transform_indices = @transform_3, window_bounds = array<i64: 1, 32>}, {pipeline_mode = #tpu.pipeline_mode<synchronous>, transform_indices = @transform_4, window_bounds = array<i64: 32, 64>}, {pipeline_mode = #tpu.pipeline_mode<synchronous>, transform_indices = @transform_5, window_bounds = array<i64: 1, 64>}, {pipeline_mode = #tpu.pipeline_mode<synchronous>, transform_indices = @transform_6, window_bounds = array<i64: 32, 32>}, {pipeline_mode = #tpu.pipeline_mode<synchronous>, transform_indices = @transform_7, window_bounds = array<i64: 1, 32>}, {pipeline_mode = #tpu.pipeline_mode<synchronous>, transform_indices = @transform_8, window_bounds = array<i64: 1, 32>}, {pipeline_mode = #tpu.pipeline_mode<synchronous>, transform_indices = @transform_9, window_bounds = array<i64: 1, 32>}, {transform_indices = @transform_10, window_bounds = array<i64: 1, 60, 32>}]} {
    %c0 = arith.constant 0 : index
    %c0_0 = arith.constant 0 : index
    %c0_1 = arith.constant 0 : index
    %0 = vector.load %arg1[%c0, %c0_0, %c0_1] : memref<1x60x32xbf16, #tpu.memory_space<vmem>>, vector<1x60x32xbf16>
    %1 = vector.shape_cast %0 : vector<1x60x32xbf16> to vector<60x32xbf16>
    %2 = arith.extf %1 : vector<60x32xbf16> to vector<60x32xf32>
    %c0_2 = arith.constant 0 : index
    %c0_3 = arith.constant 0 : index
    %3 = vector.load %arg9[%c0_2, %c0_3] : memref<1x32xf32, #tpu.memory_space<vmem>>, vector<1x32xf32>
    %c0_4 = arith.constant 0 : index
    %c0_5 = arith.constant 0 : index
    %4 = vector.load %arg10[%c0_4, %c0_5] : memref<1x32xf32, #tpu.memory_space<vmem>>, vector<1x32xf32>
    %cst = arith.constant dense<0.000000e+00> : vector<60xf32>
    %5 = vector.multi_reduction <add>, %2, %cst [1] : vector<60x32xf32> to vector<60xf32>
    %6 = vector.shape_cast %5 : vector<60xf32> to vector<60x1xf32>
    %cst_6 = arith.constant 3.200000e+01 : f32
    %7 = vector.broadcast %cst_6 : f32 to vector<60x1xf32>
    %8 = arith.divf %6, %7 : vector<60x1xf32>
    %9 = vector.broadcast %8 : vector<60x1xf32> to vector<60x32xf32>
    %10 = arith.subf %2, %9 : vector<60x32xf32>
    %11 = arith.mulf %10, %10 : vector<60x32xf32>
    %cst_7 = arith.constant dense<0.000000e+00> : vector<60xf32>
    %12 = vector.multi_reduction <add>, %11, %cst_7 [1] : vector<60x32xf32> to vector<60xf32>
    %13 = vector.shape_cast %12 : vector<60xf32> to vector<60x1xf32>
    %cst_8 = arith.constant 3.200000e+01 : f32
    %14 = vector.broadcast %cst_8 : f32 to vector<60x1xf32>
    %15 = arith.divf %13, %14 : vector<60x1xf32>
    %16 = vector.broadcast %8 : vector<60x1xf32> to vector<60x32xf32>
    %17 = arith.subf %2, %16 : vector<60x32xf32>
    %cst_9 = arith.constant 9.99999974E-6 : f32
    %18 = vector.broadcast %cst_9 : f32 to vector<60x1xf32>
    %19 = arith.addf %15, %18 : vector<60x1xf32>
    %20 = math.rsqrt %19 : vector<60x1xf32>
    %21 = vector.broadcast %20 : vector<60x1xf32> to vector<60x32xf32>
    %22 = arith.mulf %17, %21 : vector<60x32xf32>
    %23 = vector.broadcast %3 : vector<1x32xf32> to vector<60x32xf32>
    %24 = arith.mulf %22, %23 : vector<60x32xf32>
    %25 = vector.broadcast %4 : vector<1x32xf32> to vector<60x32xf32>
    %26 = arith.addf %24, %25 : vector<60x32xf32>
    %27 = arith.truncf %26 : vector<60x32xf32> to vector<60x32xbf16>
    %c0_10 = arith.constant 0 : index
    %c0_11 = arith.constant 0 : index
    %28 = vector.load %arg3[%c0_10, %c0_11] : memref<32x32xbf16, #tpu.memory_space<vmem>>, vector<32x32xbf16>
    %cst_12 = arith.constant dense<0.000000e+00> : vector<60x32xf32>
    %29 = tpu.matmul %27, %28, %cst_12 {dimension_numbers = #tpu.dot_dimension_numbers<[1], [0], [0], [1], [0, 0, 1, 1], [], []>} : vector<60x32xbf16>, vector<32x32xbf16>, vector<60x32xf32> -> vector<60x32xf32>
    %c0_13 = arith.constant 0 : index
    %c0_14 = arith.constant 0 : index
    %30 = vector.load %arg4[%c0_13, %c0_14] : memref<1x32xf32, #tpu.memory_space<vmem>>, vector<1x32xf32>
    %31 = vector.broadcast %30 : vector<1x32xf32> to vector<60x32xf32>
    %32 = arith.addf %29, %31 : vector<60x32xf32>
    %c0_15 = arith.constant 0 : index
    %c0_16 = arith.constant 0 : index
    %c0_17 = arith.constant 0 : index
    %33 = vector.load %arg2[%c0_15, %c0_16, %c0_17] : memref<1x8x32xbf16, #tpu.memory_space<vmem>>, vector<1x8x32xbf16>
    %34 = vector.shape_cast %33 : vector<1x8x32xbf16> to vector<8x32xbf16>
    %c0_18 = arith.constant 0 : index
    %c0_19 = arith.constant 0 : index
    %35 = vector.load %arg5[%c0_18, %c0_19] : memref<32x64xbf16, #tpu.memory_space<vmem>>, vector<32x64xbf16>
    %cst_20 = arith.constant dense<0.000000e+00> : vector<8x64xf32>
    %36 = tpu.matmul %34, %35, %cst_20 {dimension_numbers = #tpu.dot_dimension_numbers<[1], [0], [0], [1], [0, 0, 1, 1], [], []>} : vector<8x32xbf16>, vector<32x64xbf16>, vector<8x64xf32> -> vector<8x64xf32>
    %c0_21 = arith.constant 0 : index
    %c0_22 = arith.constant 0 : index
    %37 = vector.load %arg6[%c0_21, %c0_22] : memref<1x64xf32, #tpu.memory_space<vmem>>, vector<1x64xf32>
    %38 = vector.broadcast %37 : vector<1x64xf32> to vector<8x64xf32>
    %39 = arith.addf %36, %38 : vector<8x64xf32>
    %c0_23 = arith.constant 0 : index
    %c0_24 = arith.constant 0 : index
    %40 = vector.load %arg7[%c0_23, %c0_24] : memref<32x32xbf16, #tpu.memory_space<vmem>>, vector<32x32xbf16>
    %cst_25 = arith.constant 0.000000e+00 : f32
    %41 = vector.broadcast %cst_25 : f32 to vector<60x32xf32>
    %42 = vector.extract_strided_slice %32 {offsets = [0, 0], sizes = [60, 16], strides = [1, 1]} : vector<60x32xf32> to vector<60x16xf32>
    %43 = vector.extract_strided_slice %39 {offsets = [0, 0], sizes = [8, 16], strides = [1, 1]} : vector<8x64xf32> to vector<8x16xf32>
    %44 = vector.extract_strided_slice %39 {offsets = [0, 32], sizes = [8, 16], strides = [1, 1]} : vector<8x64xf32> to vector<8x16xf32>
    %45 = arith.truncf %42 : vector<60x16xf32> to vector<60x16xbf16>
    %46 = arith.truncf %43 : vector<8x16xf32> to vector<8x16xbf16>
    %cst_26 = arith.constant dense<0.000000e+00> : vector<60x8xf32>
    %47 = tpu.matmul %45, %46, %cst_26 {dimension_numbers = #tpu.dot_dimension_numbers<[1], [1], [0], [0], [0, 0, 1, 0], [], []>} : vector<60x16xbf16>, vector<8x16xbf16>, vector<60x8xf32> -> vector<60x8xf32>
    %cst_27 = arith.constant 2.500000e-01 : f32
    %48 = vector.broadcast %cst_27 : f32 to vector<60x8xf32>
    %49 = arith.mulf %47, %48 : vector<60x8xf32>
    %cst_28 = arith.constant dense<0xFF800000> : vector<60xf32>
    %50 = vector.multi_reduction <maximumf>, %49, %cst_28 [1] : vector<60x8xf32> to vector<60xf32>
    %51 = vector.shape_cast %50 : vector<60xf32> to vector<60x1xf32>
    %52 = vector.broadcast %51 : vector<60x1xf32> to vector<60x8xf32>
    %53 = arith.subf %49, %52 : vector<60x8xf32>
    %54 = math.exp %53 : vector<60x8xf32>
    %cst_29 = arith.constant dense<0.000000e+00> : vector<60xf32>
    %55 = vector.multi_reduction <add>, %54, %cst_29 [1] : vector<60x8xf32> to vector<60xf32>
    %56 = vector.shape_cast %55 : vector<60xf32> to vector<60x1xf32>
    %57 = tpu.reciprocal %56 {approx = true} : vector<60x1xf32> -> vector<60x1xf32>
    %58 = vector.broadcast %57 : vector<60x1xf32> to vector<60x8xf32>
    %59 = arith.mulf %54, %58 : vector<60x8xf32>
    %60 = arith.truncf %59 : vector<60x8xf32> to vector<60x8xbf16>
    %61 = arith.truncf %44 : vector<8x16xf32> to vector<8x16xbf16>
    %cst_30 = arith.constant dense<0.000000e+00> : vector<60x16xf32>
    %62 = tpu.matmul %60, %61, %cst_30 {dimension_numbers = #tpu.dot_dimension_numbers<[1], [0], [0], [1], [0, 0, 1, 1], [], []>} : vector<60x8xbf16>, vector<8x16xbf16>, vector<60x16xf32> -> vector<60x16xf32>
    %63 = arith.truncf %62 : vector<60x16xf32> to vector<60x16xbf16>
    %64 = vector.extract_strided_slice %40 {offsets = [0, 0], sizes = [16, 32], strides = [1, 1]} : vector<32x32xbf16> to vector<16x32xbf16>
    %cst_31 = arith.constant dense<0.000000e+00> : vector<60x32xf32>
    %65 = tpu.matmul %63, %64, %cst_31 {dimension_numbers = #tpu.dot_dimension_numbers<[1], [0], [0], [1], [0, 0, 1, 1], [], []>} : vector<60x16xbf16>, vector<16x32xbf16>, vector<60x32xf32> -> vector<60x32xf32>
    %66 = arith.addf %41, %65 : vector<60x32xf32>
    %67 = vector.extract_strided_slice %32 {offsets = [0, 16], sizes = [60, 16], strides = [1, 1]} : vector<60x32xf32> to vector<60x16xf32>
    %68 = vector.extract_strided_slice %39 {offsets = [0, 16], sizes = [8, 16], strides = [1, 1]} : vector<8x64xf32> to vector<8x16xf32>
    %69 = vector.extract_strided_slice %39 {offsets = [0, 48], sizes = [8, 16], strides = [1, 1]} : vector<8x64xf32> to vector<8x16xf32>
    %70 = arith.truncf %67 : vector<60x16xf32> to vector<60x16xbf16>
    %71 = arith.truncf %68 : vector<8x16xf32> to vector<8x16xbf16>
    %cst_32 = arith.constant dense<0.000000e+00> : vector<60x8xf32>
    %72 = tpu.matmul %70, %71, %cst_32 {dimension_numbers = #tpu.dot_dimension_numbers<[1], [1], [0], [0], [0, 0, 1, 0], [], []>} : vector<60x16xbf16>, vector<8x16xbf16>, vector<60x8xf32> -> vector<60x8xf32>
    %cst_33 = arith.constant 2.500000e-01 : f32
    %73 = vector.broadcast %cst_33 : f32 to vector<60x8xf32>
    %74 = arith.mulf %72, %73 : vector<60x8xf32>
    %cst_34 = arith.constant dense<0xFF800000> : vector<60xf32>
    %75 = vector.multi_reduction <maximumf>, %74, %cst_34 [1] : vector<60x8xf32> to vector<60xf32>
    %76 = vector.shape_cast %75 : vector<60xf32> to vector<60x1xf32>
    %77 = vector.broadcast %76 : vector<60x1xf32> to vector<60x8xf32>
    %78 = arith.subf %74, %77 : vector<60x8xf32>
    %79 = math.exp %78 : vector<60x8xf32>
    %cst_35 = arith.constant dense<0.000000e+00> : vector<60xf32>
    %80 = vector.multi_reduction <add>, %79, %cst_35 [1] : vector<60x8xf32> to vector<60xf32>
    %81 = vector.shape_cast %80 : vector<60xf32> to vector<60x1xf32>
    %82 = tpu.reciprocal %81 {approx = true} : vector<60x1xf32> -> vector<60x1xf32>
    %83 = vector.broadcast %82 : vector<60x1xf32> to vector<60x8xf32>
    %84 = arith.mulf %79, %83 : vector<60x8xf32>
    %85 = arith.truncf %84 : vector<60x8xf32> to vector<60x8xbf16>
    %86 = arith.truncf %69 : vector<8x16xf32> to vector<8x16xbf16>
    %cst_36 = arith.constant dense<0.000000e+00> : vector<60x16xf32>
    %87 = tpu.matmul %85, %86, %cst_36 {dimension_numbers = #tpu.dot_dimension_numbers<[1], [0], [0], [1], [0, 0, 1, 1], [], []>} : vector<60x8xbf16>, vector<8x16xbf16>, vector<60x16xf32> -> vector<60x16xf32>
    %88 = arith.truncf %87 : vector<60x16xf32> to vector<60x16xbf16>
    %89 = vector.extract_strided_slice %40 {offsets = [16, 0], sizes = [16, 32], strides = [1, 1]} : vector<32x32xbf16> to vector<16x32xbf16>
    %cst_37 = arith.constant dense<0.000000e+00> : vector<60x32xf32>
    %90 = tpu.matmul %88, %89, %cst_37 {dimension_numbers = #tpu.dot_dimension_numbers<[1], [0], [0], [1], [0, 0, 1, 1], [], []>} : vector<60x16xbf16>, vector<16x32xbf16>, vector<60x32xf32> -> vector<60x32xf32>
    %91 = arith.addf %66, %90 : vector<60x32xf32>
    %c0_38 = arith.constant 0 : index
    %c0_39 = arith.constant 0 : index
    %92 = vector.load %arg8[%c0_38, %c0_39] : memref<1x32xf32, #tpu.memory_space<vmem>>, vector<1x32xf32>
    %93 = vector.broadcast %92 : vector<1x32xf32> to vector<60x32xf32>
    %94 = arith.addf %91, %93 : vector<60x32xf32>
    %95 = arith.addf %94, %2 : vector<60x32xf32>
    %96 = arith.truncf %95 : vector<60x32xf32> to vector<60x32xbf16>
    %c0_40 = arith.constant 0 : index
    %c0_41 = arith.constant 0 : index
    %c0_42 = arith.constant 0 : index
    %97 = vector.load %arg11[%c0_40, %c0_41, %c0_42] : memref<1x60x32xbf16, #tpu.memory_space<vmem>>, vector<1x60x32xbf16>
    %98 = vector.shape_cast %97 : vector<1x60x32xbf16> to vector<60x32xbf16>
    %99 = vector.shape_cast %96 : vector<60x32xbf16> to vector<1x60x32xbf16>
    tpu.vector_store %arg11[%c0_40, %c0_41, %c0_42], %99 {strides = array<i32>} : memref<1x60x32xbf16, #tpu.memory_space<vmem>>, vector<1x60x32xbf16>,
    return
  }
  func.func @transform_0(%arg0: i32) -> (i32, i32, i32) {
    %c0_i32 = arith.constant 0 : i32
    %c0_i32_0 = arith.constant 0 : i32
    %c0_i32_1 = arith.constant 0 : i32
    return %arg0, %c0_i32, %c0_i32_0 : i32, i32, i32
  }
  func.func @transform_1(%arg0: i32) -> (i32, i32, i32) {
    %c0_i32 = arith.constant 0 : i32
    %c0_i32_0 = arith.constant 0 : i32
    %c0_i32_1 = arith.constant 0 : i32
    return %arg0, %c0_i32, %c0_i32_0 : i32, i32, i32
  }
  func.func @transform_2(%arg0: i32) -> (i32, i32) {
    %c0_i32 = arith.constant 0 : i32
    %c0_i32_0 = arith.constant 0 : i32
    %c0_i32_1 = arith.constant 0 : i32
    return %c0_i32, %c0_i32_0 : i32, i32
  }
  func.func @transform_3(%arg0: i32) -> (i32, i32) {
    %c0_i32 = arith.constant 0 : i32
    %c0_i32_0 = arith.constant 0 : i32
    %c0_i32_1 = arith.constant 0 : i32
    return %c0_i32, %c0_i32_0 : i32, i32
  }
  func.func @transform_4(%arg0: i32) -> (i32, i32) {
    %c0_i32 = arith.constant 0 : i32
    %c0_i32_0 = arith.constant 0 : i32
    %c0_i32_1 = arith.constant 0 : i32
    return %c0_i32, %c0_i32_0 : i32, i32
  }
  func.func @transform_5(%arg0: i32) -> (i32, i32) {
    %c0_i32 = arith.constant 0 : i32
    %c0_i32_0 = arith.constant 0 : i32
    %c0_i32_1 = arith.constant 0 : i32
    return %c0_i32, %c0_i32_0 : i32, i32
  }
  func.func @transform_6(%arg0: i32) -> (i32, i32) {
    %c0_i32 = arith.constant 0 : i32
    %c0_i32_0 = arith.constant 0 : i32
    %c0_i32_1 = arith.constant 0 : i32
    return %c0_i32, %c0_i32_0 : i32, i32
  }
  func.func @transform_7(%arg0: i32) -> (i32, i32) {
    %c0_i32 = arith.constant 0 : i32
    %c0_i32_0 = arith.constant 0 : i32
    %c0_i32_1 = arith.constant 0 : i32
    return %c0_i32, %c0_i32_0 : i32, i32
  }
  func.func @transform_8(%arg0: i32) -> (i32, i32) {
    %c0_i32 = arith.constant 0 : i32
    %c0_i32_0 = arith.constant 0 : i32
    %c0_i32_1 = arith.constant 0 : i32
    return %c0_i32, %c0_i32_0 : i32, i32
  }
  func.func @transform_9(%arg0: i32) -> (i32, i32) {
    %c0_i32 = arith.constant 0 : i32
    %c0_i32_0 = arith.constant 0 : i32
    %c0_i32_1 = arith.constant 0 : i32
    return %c0_i32, %c0_i32_0 : i32, i32
  }
  func.func @transform_10(%arg0: i32) -> (i32, i32, i32) {
    %c0_i32 = arith.constant 0 : i32
    %c0_i32_0 = arith.constant 0 : i32
    %c0_i32_1 = arith.constant 0 : i32
    return %arg0, %c0_i32, %c0_i32_0 : i32, i32, i32
  }
}

module attributes {stable_mosaic.version = 11 : i64} {
  func.func @_mlp_kernel(%arg0: i32, %arg1: memref<60x32xbf16, #tpu.memory_space<vmem>>, %arg2: memref<32x128xbf16, #tpu.memory_space<vmem>>, %arg3: memref<1x128xf32, #tpu.memory_space<vmem>>, %arg4: memref<128x32xbf16, #tpu.memory_space<vmem>>, %arg5: memref<1x32xf32, #tpu.memory_space<vmem>>, %arg6: memref<1x32xf32, #tpu.memory_space<vmem>>, %arg7: memref<1x32xf32, #tpu.memory_space<vmem>>, %arg8: memref<60x32xbf16, #tpu.memory_space<vmem>>) attributes {dimension_semantics = [#tpu.dimension_semantics<parallel>], iteration_bounds = array<i64: 1>, scalar_prefetch = 0 : i64, scratch_operands = 0 : i64, tpu.core_type = #tpu.core_type<tc>, window_params = [{transform_indices = @transform_0, window_bounds = array<i64: 60, 32>}, {pipeline_mode = #tpu.pipeline_mode<synchronous>, transform_indices = @transform_1, window_bounds = array<i64: 32, 128>}, {pipeline_mode = #tpu.pipeline_mode<synchronous>, transform_indices = @transform_2, window_bounds = array<i64: 1, 128>}, {pipeline_mode = #tpu.pipeline_mode<synchronous>, transform_indices = @transform_3, window_bounds = array<i64: 128, 32>}, {pipeline_mode = #tpu.pipeline_mode<synchronous>, transform_indices = @transform_4, window_bounds = array<i64: 1, 32>}, {pipeline_mode = #tpu.pipeline_mode<synchronous>, transform_indices = @transform_5, window_bounds = array<i64: 1, 32>}, {pipeline_mode = #tpu.pipeline_mode<synchronous>, transform_indices = @transform_6, window_bounds = array<i64: 1, 32>}, {transform_indices = @transform_7, window_bounds = array<i64: 60, 32>}]} {
    %c0 = arith.constant 0 : index
    %c0_0 = arith.constant 0 : index
    %0 = vector.load %arg1[%c0, %c0_0] : memref<60x32xbf16, #tpu.memory_space<vmem>>, vector<60x32xbf16>
    %1 = arith.extf %0 : vector<60x32xbf16> to vector<60x32xf32>
    %c0_1 = arith.constant 0 : index
    %c0_2 = arith.constant 0 : index
    %2 = vector.load %arg6[%c0_1, %c0_2] : memref<1x32xf32, #tpu.memory_space<vmem>>, vector<1x32xf32>
    %c0_3 = arith.constant 0 : index
    %c0_4 = arith.constant 0 : index
    %3 = vector.load %arg7[%c0_3, %c0_4] : memref<1x32xf32, #tpu.memory_space<vmem>>, vector<1x32xf32>
    %cst = arith.constant dense<0.000000e+00> : vector<60xf32>
    %4 = vector.multi_reduction <add>, %1, %cst [1] : vector<60x32xf32> to vector<60xf32>
    %5 = vector.shape_cast %4 : vector<60xf32> to vector<60x1xf32>
    %cst_5 = arith.constant 3.200000e+01 : f32
    %6 = vector.broadcast %cst_5 : f32 to vector<60x1xf32>
    %7 = arith.divf %5, %6 : vector<60x1xf32>
    %8 = vector.broadcast %7 : vector<60x1xf32> to vector<60x32xf32>
    %9 = arith.subf %1, %8 : vector<60x32xf32>
    %10 = arith.mulf %9, %9 : vector<60x32xf32>
    %cst_6 = arith.constant dense<0.000000e+00> : vector<60xf32>
    %11 = vector.multi_reduction <add>, %10, %cst_6 [1] : vector<60x32xf32> to vector<60xf32>
    %12 = vector.shape_cast %11 : vector<60xf32> to vector<60x1xf32>
    %cst_7 = arith.constant 3.200000e+01 : f32
    %13 = vector.broadcast %cst_7 : f32 to vector<60x1xf32>
    %14 = arith.divf %12, %13 : vector<60x1xf32>
    %15 = vector.broadcast %7 : vector<60x1xf32> to vector<60x32xf32>
    %16 = arith.subf %1, %15 : vector<60x32xf32>
    %cst_8 = arith.constant 9.99999974E-6 : f32
    %17 = vector.broadcast %cst_8 : f32 to vector<60x1xf32>
    %18 = arith.addf %14, %17 : vector<60x1xf32>
    %19 = math.rsqrt %18 : vector<60x1xf32>
    %20 = vector.broadcast %19 : vector<60x1xf32> to vector<60x32xf32>
    %21 = arith.mulf %16, %20 : vector<60x32xf32>
    %22 = vector.broadcast %2 : vector<1x32xf32> to vector<60x32xf32>
    %23 = arith.mulf %21, %22 : vector<60x32xf32>
    %24 = vector.broadcast %3 : vector<1x32xf32> to vector<60x32xf32>
    %25 = arith.addf %23, %24 : vector<60x32xf32>
    %26 = arith.truncf %25 : vector<60x32xf32> to vector<60x32xbf16>
    %c0_9 = arith.constant 0 : index
    %c0_10 = arith.constant 0 : index
    %27 = vector.load %arg2[%c0_9, %c0_10] : memref<32x128xbf16, #tpu.memory_space<vmem>>, vector<32x128xbf16>
    %cst_11 = arith.constant dense<0.000000e+00> : vector<60x128xf32>
    %28 = tpu.matmul %26, %27, %cst_11 {dimension_numbers = #tpu.dot_dimension_numbers<[1], [0], [0], [1], [0, 0, 1, 1], [], []>} : vector<60x32xbf16>, vector<32x128xbf16>, vector<60x128xf32> -> vector<60x128xf32>
    %c0_12 = arith.constant 0 : index
    %c0_13 = arith.constant 0 : index
    %29 = vector.load %arg3[%c0_12, %c0_13] : memref<1x128xf32, #tpu.memory_space<vmem>>, vector<1x128xf32>
    %30 = vector.broadcast %29 : vector<1x128xf32> to vector<60x128xf32>
    %31 = arith.addf %28, %30 : vector<60x128xf32>
    %32 = arith.mulf %31, %31 : vector<60x128xf32>
    %33 = arith.mulf %31, %32 : vector<60x128xf32>
    %cst_14 = arith.constant 4.471500e-02 : f32
    %34 = vector.broadcast %cst_14 : f32 to vector<60x128xf32>
    %35 = arith.mulf %34, %33 : vector<60x128xf32>
    %36 = arith.addf %31, %35 : vector<60x128xf32>
    %cst_15 = arith.constant 0.797884583 : f32
    %37 = vector.broadcast %cst_15 : f32 to vector<60x128xf32>
    %38 = arith.mulf %37, %36 : vector<60x128xf32>
    %39 = math.tanh %38 : vector<60x128xf32>
    %cst_16 = arith.constant 1.000000e+00 : f32
    %40 = vector.broadcast %cst_16 : f32 to vector<60x128xf32>
    %41 = arith.addf %40, %39 : vector<60x128xf32>
    %cst_17 = arith.constant 5.000000e-01 : f32
    %42 = vector.broadcast %cst_17 : f32 to vector<60x128xf32>
    %43 = arith.mulf %42, %41 : vector<60x128xf32>
    %44 = arith.mulf %31, %43 : vector<60x128xf32>
    %45 = arith.truncf %44 : vector<60x128xf32> to vector<60x128xbf16>
    %c0_18 = arith.constant 0 : index
    %c0_19 = arith.constant 0 : index
    %46 = vector.load %arg4[%c0_18, %c0_19] : memref<128x32xbf16, #tpu.memory_space<vmem>>, vector<128x32xbf16>
    %cst_20 = arith.constant dense<0.000000e+00> : vector<60x32xf32>
    %47 = tpu.matmul %45, %46, %cst_20 {dimension_numbers = #tpu.dot_dimension_numbers<[1], [0], [0], [1], [0, 0, 1, 1], [], []>} : vector<60x128xbf16>, vector<128x32xbf16>, vector<60x32xf32> -> vector<60x32xf32>
    %c0_21 = arith.constant 0 : index
    %c0_22 = arith.constant 0 : index
    %48 = vector.load %arg5[%c0_21, %c0_22] : memref<1x32xf32, #tpu.memory_space<vmem>>, vector<1x32xf32>
    %49 = vector.broadcast %48 : vector<1x32xf32> to vector<60x32xf32>
    %50 = arith.addf %47, %49 : vector<60x32xf32>
    %51 = arith.addf %50, %1 : vector<60x32xf32>
    %52 = arith.truncf %51 : vector<60x32xf32> to vector<60x32xbf16>
    %c0_23 = arith.constant 0 : index
    %c0_24 = arith.constant 0 : index
    %53 = vector.load %arg8[%c0_23, %c0_24] : memref<60x32xbf16, #tpu.memory_space<vmem>>, vector<60x32xbf16>
    tpu.vector_store %arg8[%c0_23, %c0_24], %52 {strides = array<i32>} : memref<60x32xbf16, #tpu.memory_space<vmem>>, vector<60x32xbf16>,
    return
  }
  func.func @transform_0(%arg0: i32) -> (i32, i32) {
    %c0_i32 = arith.constant 0 : i32
    %c0_i32_0 = arith.constant 0 : i32
    return %arg0, %c0_i32 : i32, i32
  }
  func.func @transform_1(%arg0: i32) -> (i32, i32) {
    %c0_i32 = arith.constant 0 : i32
    %c0_i32_0 = arith.constant 0 : i32
    %c0_i32_1 = arith.constant 0 : i32
    return %c0_i32, %c0_i32_0 : i32, i32
  }
  func.func @transform_2(%arg0: i32) -> (i32, i32) {
    %c0_i32 = arith.constant 0 : i32
    %c0_i32_0 = arith.constant 0 : i32
    %c0_i32_1 = arith.constant 0 : i32
    return %c0_i32, %c0_i32_0 : i32, i32
  }
  func.func @transform_3(%arg0: i32) -> (i32, i32) {
    %c0_i32 = arith.constant 0 : i32
    %c0_i32_0 = arith.constant 0 : i32
    %c0_i32_1 = arith.constant 0 : i32
    return %c0_i32, %c0_i32_0 : i32, i32
  }
  func.func @transform_4(%arg0: i32) -> (i32, i32) {
    %c0_i32 = arith.constant 0 : i32
    %c0_i32_0 = arith.constant 0 : i32
    %c0_i32_1 = arith.constant 0 : i32
    return %c0_i32, %c0_i32_0 : i32, i32
  }
  func.func @transform_5(%arg0: i32) -> (i32, i32) {
    %c0_i32 = arith.constant 0 : i32
    %c0_i32_0 = arith.constant 0 : i32
    %c0_i32_1 = arith.constant 0 : i32
    return %c0_i32, %c0_i32_0 : i32, i32
  }
  func.func @transform_6(%arg0: i32) -> (i32, i32) {
    %c0_i32 = arith.constant 0 : i32
    %c0_i32_0 = arith.constant 0 : i32
    %c0_i32_1 = arith.constant 0 : i32
    return %c0_i32, %c0_i32_0 : i32, i32
  }
  func.func @transform_7(%arg0: i32) -> (i32, i32) {
    %c0_i32 = arith.constant 0 : i32
    %c0_i32_0 = arith.constant 0 : i32
    return %arg0, %c0_i32 : i32, i32
  }
}

module attributes {stable_mosaic.version = 11 : i64} {
  func.func @_cross_attn_kernel(%arg0: i32, %arg1: memref<1x60x32xbf16, #tpu.memory_space<vmem>>, %arg2: memref<1x8x32xbf16, #tpu.memory_space<vmem>>, %arg3: memref<32x32xbf16, #tpu.memory_space<vmem>>, %arg4: memref<1x32xf32, #tpu.memory_space<vmem>>, %arg5: memref<32x64xbf16, #tpu.memory_space<vmem>>, %arg6: memref<1x64xf32, #tpu.memory_space<vmem>>, %arg7: memref<32x32xbf16, #tpu.memory_space<vmem>>, %arg8: memref<1x32xf32, #tpu.memory_space<vmem>>, %arg9: memref<1x32xf32, #tpu.memory_space<vmem>>, %arg10: memref<1x32xf32, #tpu.memory_space<vmem>>, %arg11: memref<1x60x32xbf16, #tpu.memory_space<vmem>>) attributes {dimension_semantics = [#tpu.dimension_semantics<parallel>], iteration_bounds = array<i64: 1>, scalar_prefetch = 0 : i64, scratch_operands = 0 : i64, tpu.core_type = #tpu.core_type<tc>, window_params = [{transform_indices = @transform_0, window_bounds = array<i64: 1, 60, 32>}, {transform_indices = @transform_1, window_bounds = array<i64: 1, 8, 32>}, {pipeline_mode = #tpu.pipeline_mode<synchronous>, transform_indices = @transform_2, window_bounds = array<i64: 32, 32>}, {pipeline_mode = #tpu.pipeline_mode<synchronous>, transform_indices = @transform_3, window_bounds = array<i64: 1, 32>}, {pipeline_mode = #tpu.pipeline_mode<synchronous>, transform_indices = @transform_4, window_bounds = array<i64: 32, 64>}, {pipeline_mode = #tpu.pipeline_mode<synchronous>, transform_indices = @transform_5, window_bounds = array<i64: 1, 64>}, {pipeline_mode = #tpu.pipeline_mode<synchronous>, transform_indices = @transform_6, window_bounds = array<i64: 32, 32>}, {pipeline_mode = #tpu.pipeline_mode<synchronous>, transform_indices = @transform_7, window_bounds = array<i64: 1, 32>}, {pipeline_mode = #tpu.pipeline_mode<synchronous>, transform_indices = @transform_8, window_bounds = array<i64: 1, 32>}, {pipeline_mode = #tpu.pipeline_mode<synchronous>, transform_indices = @transform_9, window_bounds = array<i64: 1, 32>}, {transform_indices = @transform_10, window_bounds = array<i64: 1, 60, 32>}]} {
    %c0 = arith.constant 0 : index
    %c0_0 = arith.constant 0 : index
    %c0_1 = arith.constant 0 : index
    %0 = vector.load %arg1[%c0, %c0_0, %c0_1] : memref<1x60x32xbf16, #tpu.memory_space<vmem>>, vector<1x60x32xbf16>
    %1 = vector.shape_cast %0 : vector<1x60x32xbf16> to vector<60x32xbf16>
    %2 = arith.extf %1 : vector<60x32xbf16> to vector<60x32xf32>
    %c0_2 = arith.constant 0 : index
    %c0_3 = arith.constant 0 : index
    %3 = vector.load %arg9[%c0_2, %c0_3] : memref<1x32xf32, #tpu.memory_space<vmem>>, vector<1x32xf32>
    %c0_4 = arith.constant 0 : index
    %c0_5 = arith.constant 0 : index
    %4 = vector.load %arg10[%c0_4, %c0_5] : memref<1x32xf32, #tpu.memory_space<vmem>>, vector<1x32xf32>
    %cst = arith.constant dense<0.000000e+00> : vector<60xf32>
    %5 = vector.multi_reduction <add>, %2, %cst [1] : vector<60x32xf32> to vector<60xf32>
    %6 = vector.shape_cast %5 : vector<60xf32> to vector<60x1xf32>
    %cst_6 = arith.constant 3.200000e+01 : f32
    %7 = vector.broadcast %cst_6 : f32 to vector<60x1xf32>
    %8 = arith.divf %6, %7 : vector<60x1xf32>
    %9 = vector.broadcast %8 : vector<60x1xf32> to vector<60x32xf32>
    %10 = arith.subf %2, %9 : vector<60x32xf32>
    %11 = arith.mulf %10, %10 : vector<60x32xf32>
    %cst_7 = arith.constant dense<0.000000e+00> : vector<60xf32>
    %12 = vector.multi_reduction <add>, %11, %cst_7 [1] : vector<60x32xf32> to vector<60xf32>
    %13 = vector.shape_cast %12 : vector<60xf32> to vector<60x1xf32>
    %cst_8 = arith.constant 3.200000e+01 : f32
    %14 = vector.broadcast %cst_8 : f32 to vector<60x1xf32>
    %15 = arith.divf %13, %14 : vector<60x1xf32>
    %16 = vector.broadcast %8 : vector<60x1xf32> to vector<60x32xf32>
    %17 = arith.subf %2, %16 : vector<60x32xf32>
    %cst_9 = arith.constant 9.99999974E-6 : f32
    %18 = vector.broadcast %cst_9 : f32 to vector<60x1xf32>
    %19 = arith.addf %15, %18 : vector<60x1xf32>
    %20 = math.rsqrt %19 : vector<60x1xf32>
    %21 = vector.broadcast %20 : vector<60x1xf32> to vector<60x32xf32>
    %22 = arith.mulf %17, %21 : vector<60x32xf32>
    %23 = vector.broadcast %3 : vector<1x32xf32> to vector<60x32xf32>
    %24 = arith.mulf %22, %23 : vector<60x32xf32>
    %25 = vector.broadcast %4 : vector<1x32xf32> to vector<60x32xf32>
    %26 = arith.addf %24, %25 : vector<60x32xf32>
    %27 = arith.truncf %26 : vector<60x32xf32> to vector<60x32xbf16>
    %c0_10 = arith.constant 0 : index
    %c0_11 = arith.constant 0 : index
    %28 = vector.load %arg3[%c0_10, %c0_11] : memref<32x32xbf16, #tpu.memory_space<vmem>>, vector<32x32xbf16>
    %cst_12 = arith.constant dense<0.000000e+00> : vector<60x32xf32>
    %29 = tpu.matmul %27, %28, %cst_12 {dimension_numbers = #tpu.dot_dimension_numbers<[1], [0], [0], [1], [0, 0, 1, 1], [], []>} : vector<60x32xbf16>, vector<32x32xbf16>, vector<60x32xf32> -> vector<60x32xf32>
    %c0_13 = arith.constant 0 : index
    %c0_14 = arith.constant 0 : index
    %30 = vector.load %arg4[%c0_13, %c0_14] : memref<1x32xf32, #tpu.memory_space<vmem>>, vector<1x32xf32>
    %31 = vector.broadcast %30 : vector<1x32xf32> to vector<60x32xf32>
    %32 = arith.addf %29, %31 : vector<60x32xf32>
    %c0_15 = arith.constant 0 : index
    %c0_16 = arith.constant 0 : index
    %c0_17 = arith.constant 0 : index
    %33 = vector.load %arg2[%c0_15, %c0_16, %c0_17] : memref<1x8x32xbf16, #tpu.memory_space<vmem>>, vector<1x8x32xbf16>
    %34 = vector.shape_cast %33 : vector<1x8x32xbf16> to vector<8x32xbf16>
    %c0_18 = arith.constant 0 : index
    %c0_19 = arith.constant 0 : index
    %35 = vector.load %arg5[%c0_18, %c0_19] : memref<32x64xbf16, #tpu.memory_space<vmem>>, vector<32x64xbf16>
    %cst_20 = arith.constant dense<0.000000e+00> : vector<8x64xf32>
    %36 = tpu.matmul %34, %35, %cst_20 {dimension_numbers = #tpu.dot_dimension_numbers<[1], [0], [0], [1], [0, 0, 1, 1], [], []>} : vector<8x32xbf16>, vector<32x64xbf16>, vector<8x64xf32> -> vector<8x64xf32>
    %c0_21 = arith.constant 0 : index
    %c0_22 = arith.constant 0 : index
    %37 = vector.load %arg6[%c0_21, %c0_22] : memref<1x64xf32, #tpu.memory_space<vmem>>, vector<1x64xf32>
    %38 = vector.broadcast %37 : vector<1x64xf32> to vector<8x64xf32>
    %39 = arith.addf %36, %38 : vector<8x64xf32>
    %c0_23 = arith.constant 0 : index
    %c0_24 = arith.constant 0 : index
    %40 = vector.load %arg7[%c0_23, %c0_24] : memref<32x32xbf16, #tpu.memory_space<vmem>>, vector<32x32xbf16>
    %cst_25 = arith.constant 0.000000e+00 : f32
    %41 = vector.broadcast %cst_25 : f32 to vector<60x32xf32>
    %42 = vector.extract_strided_slice %32 {offsets = [0, 0], sizes = [60, 16], strides = [1, 1]} : vector<60x32xf32> to vector<60x16xf32>
    %43 = vector.extract_strided_slice %39 {offsets = [0, 0], sizes = [8, 16], strides = [1, 1]} : vector<8x64xf32> to vector<8x16xf32>
    %44 = vector.extract_strided_slice %39 {offsets = [0, 32], sizes = [8, 16], strides = [1, 1]} : vector<8x64xf32> to vector<8x16xf32>
    %45 = arith.truncf %42 : vector<60x16xf32> to vector<60x16xbf16>
    %46 = arith.truncf %43 : vector<8x16xf32> to vector<8x16xbf16>
    %cst_26 = arith.constant dense<0.000000e+00> : vector<60x8xf32>
    %47 = tpu.matmul %45, %46, %cst_26 {dimension_numbers = #tpu.dot_dimension_numbers<[1], [1], [0], [0], [0, 0, 1, 0], [], []>} : vector<60x16xbf16>, vector<8x16xbf16>, vector<60x8xf32> -> vector<60x8xf32>
    %cst_27 = arith.constant 2.500000e-01 : f32
    %48 = vector.broadcast %cst_27 : f32 to vector<60x8xf32>
    %49 = arith.mulf %47, %48 : vector<60x8xf32>
    %cst_28 = arith.constant dense<0xFF800000> : vector<60xf32>
    %50 = vector.multi_reduction <maximumf>, %49, %cst_28 [1] : vector<60x8xf32> to vector<60xf32>
    %51 = vector.shape_cast %50 : vector<60xf32> to vector<60x1xf32>
    %52 = vector.broadcast %51 : vector<60x1xf32> to vector<60x8xf32>
    %53 = arith.subf %49, %52 : vector<60x8xf32>
    %54 = math.exp %53 : vector<60x8xf32>
    %cst_29 = arith.constant dense<0.000000e+00> : vector<60xf32>
    %55 = vector.multi_reduction <add>, %54, %cst_29 [1] : vector<60x8xf32> to vector<60xf32>
    %56 = vector.shape_cast %55 : vector<60xf32> to vector<60x1xf32>
    %57 = tpu.reciprocal %56 {approx = true} : vector<60x1xf32> -> vector<60x1xf32>
    %58 = vector.broadcast %57 : vector<60x1xf32> to vector<60x8xf32>
    %59 = arith.mulf %54, %58 : vector<60x8xf32>
    %60 = arith.truncf %59 : vector<60x8xf32> to vector<60x8xbf16>
    %61 = arith.truncf %44 : vector<8x16xf32> to vector<8x16xbf16>
    %cst_30 = arith.constant dense<0.000000e+00> : vector<60x16xf32>
    %62 = tpu.matmul %60, %61, %cst_30 {dimension_numbers = #tpu.dot_dimension_numbers<[1], [0], [0], [1], [0, 0, 1, 1], [], []>} : vector<60x8xbf16>, vector<8x16xbf16>, vector<60x16xf32> -> vector<60x16xf32>
    %63 = arith.truncf %62 : vector<60x16xf32> to vector<60x16xbf16>
    %64 = vector.extract_strided_slice %40 {offsets = [0, 0], sizes = [16, 32], strides = [1, 1]} : vector<32x32xbf16> to vector<16x32xbf16>
    %cst_31 = arith.constant dense<0.000000e+00> : vector<60x32xf32>
    %65 = tpu.matmul %63, %64, %cst_31 {dimension_numbers = #tpu.dot_dimension_numbers<[1], [0], [0], [1], [0, 0, 1, 1], [], []>} : vector<60x16xbf16>, vector<16x32xbf16>, vector<60x32xf32> -> vector<60x32xf32>
    %66 = arith.addf %41, %65 : vector<60x32xf32>
    %67 = vector.extract_strided_slice %32 {offsets = [0, 16], sizes = [60, 16], strides = [1, 1]} : vector<60x32xf32> to vector<60x16xf32>
    %68 = vector.extract_strided_slice %39 {offsets = [0, 16], sizes = [8, 16], strides = [1, 1]} : vector<8x64xf32> to vector<8x16xf32>
    %69 = vector.extract_strided_slice %39 {offsets = [0, 48], sizes = [8, 16], strides = [1, 1]} : vector<8x64xf32> to vector<8x16xf32>
    %70 = arith.truncf %67 : vector<60x16xf32> to vector<60x16xbf16>
    %71 = arith.truncf %68 : vector<8x16xf32> to vector<8x16xbf16>
    %cst_32 = arith.constant dense<0.000000e+00> : vector<60x8xf32>
    %72 = tpu.matmul %70, %71, %cst_32 {dimension_numbers = #tpu.dot_dimension_numbers<[1], [1], [0], [0], [0, 0, 1, 0], [], []>} : vector<60x16xbf16>, vector<8x16xbf16>, vector<60x8xf32> -> vector<60x8xf32>
    %cst_33 = arith.constant 2.500000e-01 : f32
    %73 = vector.broadcast %cst_33 : f32 to vector<60x8xf32>
    %74 = arith.mulf %72, %73 : vector<60x8xf32>
    %cst_34 = arith.constant dense<0xFF800000> : vector<60xf32>
    %75 = vector.multi_reduction <maximumf>, %74, %cst_34 [1] : vector<60x8xf32> to vector<60xf32>
    %76 = vector.shape_cast %75 : vector<60xf32> to vector<60x1xf32>
    %77 = vector.broadcast %76 : vector<60x1xf32> to vector<60x8xf32>
    %78 = arith.subf %74, %77 : vector<60x8xf32>
    %79 = math.exp %78 : vector<60x8xf32>
    %cst_35 = arith.constant dense<0.000000e+00> : vector<60xf32>
    %80 = vector.multi_reduction <add>, %79, %cst_35 [1] : vector<60x8xf32> to vector<60xf32>
    %81 = vector.shape_cast %80 : vector<60xf32> to vector<60x1xf32>
    %82 = tpu.reciprocal %81 {approx = true} : vector<60x1xf32> -> vector<60x1xf32>
    %83 = vector.broadcast %82 : vector<60x1xf32> to vector<60x8xf32>
    %84 = arith.mulf %79, %83 : vector<60x8xf32>
    %85 = arith.truncf %84 : vector<60x8xf32> to vector<60x8xbf16>
    %86 = arith.truncf %69 : vector<8x16xf32> to vector<8x16xbf16>
    %cst_36 = arith.constant dense<0.000000e+00> : vector<60x16xf32>
    %87 = tpu.matmul %85, %86, %cst_36 {dimension_numbers = #tpu.dot_dimension_numbers<[1], [0], [0], [1], [0, 0, 1, 1], [], []>} : vector<60x8xbf16>, vector<8x16xbf16>, vector<60x16xf32> -> vector<60x16xf32>
    %88 = arith.truncf %87 : vector<60x16xf32> to vector<60x16xbf16>
    %89 = vector.extract_strided_slice %40 {offsets = [16, 0], sizes = [16, 32], strides = [1, 1]} : vector<32x32xbf16> to vector<16x32xbf16>
    %cst_37 = arith.constant dense<0.000000e+00> : vector<60x32xf32>
    %90 = tpu.matmul %88, %89, %cst_37 {dimension_numbers = #tpu.dot_dimension_numbers<[1], [0], [0], [1], [0, 0, 1, 1], [], []>} : vector<60x16xbf16>, vector<16x32xbf16>, vector<60x32xf32> -> vector<60x32xf32>
    %91 = arith.addf %66, %90 : vector<60x32xf32>
    %c0_38 = arith.constant 0 : index
    %c0_39 = arith.constant 0 : index
    %92 = vector.load %arg8[%c0_38, %c0_39] : memref<1x32xf32, #tpu.memory_space<vmem>>, vector<1x32xf32>
    %93 = vector.broadcast %92 : vector<1x32xf32> to vector<60x32xf32>
    %94 = arith.addf %91, %93 : vector<60x32xf32>
    %95 = arith.addf %94, %2 : vector<60x32xf32>
    %96 = arith.truncf %95 : vector<60x32xf32> to vector<60x32xbf16>
    %c0_40 = arith.constant 0 : index
    %c0_41 = arith.constant 0 : index
    %c0_42 = arith.constant 0 : index
    %97 = vector.load %arg11[%c0_40, %c0_41, %c0_42] : memref<1x60x32xbf16, #tpu.memory_space<vmem>>, vector<1x60x32xbf16>
    %98 = vector.shape_cast %97 : vector<1x60x32xbf16> to vector<60x32xbf16>
    %99 = vector.shape_cast %96 : vector<60x32xbf16> to vector<1x60x32xbf16>
    tpu.vector_store %arg11[%c0_40, %c0_41, %c0_42], %99 {strides = array<i32>} : memref<1x60x32xbf16, #tpu.memory_space<vmem>>, vector<1x60x32xbf16>,
    return
  }
  func.func @transform_0(%arg0: i32) -> (i32, i32, i32) {
    %c0_i32 = arith.constant 0 : i32
    %c0_i32_0 = arith.constant 0 : i32
    %c0_i32_1 = arith.constant 0 : i32
    return %arg0, %c0_i32, %c0_i32_0 : i32, i32, i32
  }
  func.func @transform_1(%arg0: i32) -> (i32, i32, i32) {
    %c0_i32 = arith.constant 0 : i32
    %c0_i32_0 = arith.constant 0 : i32
    %c0_i32_1 = arith.constant 0 : i32
    return %arg0, %c0_i32, %c0_i32_0 : i32, i32, i32
  }
  func.func @transform_2(%arg0: i32) -> (i32, i32) {
    %c0_i32 = arith.constant 0 : i32
    %c0_i32_0 = arith.constant 0 : i32
    %c0_i32_1 = arith.constant 0 : i32
    return %c0_i32, %c0_i32_0 : i32, i32
  }
  func.func @transform_3(%arg0: i32) -> (i32, i32) {
    %c0_i32 = arith.constant 0 : i32
    %c0_i32_0 = arith.constant 0 : i32
    %c0_i32_1 = arith.constant 0 : i32
    return %c0_i32, %c0_i32_0 : i32, i32
  }
  func.func @transform_4(%arg0: i32) -> (i32, i32) {
    %c0_i32 = arith.constant 0 : i32
    %c0_i32_0 = arith.constant 0 : i32
    %c0_i32_1 = arith.constant 0 : i32
    return %c0_i32, %c0_i32_0 : i32, i32
  }
  func.func @transform_5(%arg0: i32) -> (i32, i32) {
    %c0_i32 = arith.constant 0 : i32
    %c0_i32_0 = arith.constant 0 : i32
    %c0_i32_1 = arith.constant 0 : i32
    return %c0_i32, %c0_i32_0 : i32, i32
  }
  func.func @transform_6(%arg0: i32) -> (i32, i32) {
    %c0_i32 = arith.constant 0 : i32
    %c0_i32_0 = arith.constant 0 : i32
    %c0_i32_1 = arith.constant 0 : i32
    return %c0_i32, %c0_i32_0 : i32, i32
  }
  func.func @transform_7(%arg0: i32) -> (i32, i32) {
    %c0_i32 = arith.constant 0 : i32
    %c0_i32_0 = arith.constant 0 : i32
    %c0_i32_1 = arith.constant 0 : i32
    return %c0_i32, %c0_i32_0 : i32, i32
  }
  func.func @transform_8(%arg0: i32) -> (i32, i32) {
    %c0_i32 = arith.constant 0 : i32
    %c0_i32_0 = arith.constant 0 : i32
    %c0_i32_1 = arith.constant 0 : i32
    return %c0_i32, %c0_i32_0 : i32, i32
  }
  func.func @transform_9(%arg0: i32) -> (i32, i32) {
    %c0_i32 = arith.constant 0 : i32
    %c0_i32_0 = arith.constant 0 : i32
    %c0_i32_1 = arith.constant 0 : i32
    return %c0_i32, %c0_i32_0 : i32, i32
  }
  func.func @transform_10(%arg0: i32) -> (i32, i32, i32) {
    %c0_i32 = arith.constant 0 : i32
    %c0_i32_0 = arith.constant 0 : i32
    %c0_i32_1 = arith.constant 0 : i32
    return %arg0, %c0_i32, %c0_i32_0 : i32, i32, i32
  }
}

module attributes {stable_mosaic.version = 11 : i64} {
  func.func @_self_attn_kernel(%arg0: i32, %arg1: memref<1x60x32xbf16, #tpu.memory_space<vmem>>, %arg2: memref<32x96xbf16, #tpu.memory_space<vmem>>, %arg3: memref<1x96xf32, #tpu.memory_space<vmem>>, %arg4: memref<32x32xbf16, #tpu.memory_space<vmem>>, %arg5: memref<1x32xf32, #tpu.memory_space<vmem>>, %arg6: memref<1x32xf32, #tpu.memory_space<vmem>>, %arg7: memref<1x32xf32, #tpu.memory_space<vmem>>, %arg8: memref<1x60x32xbf16, #tpu.memory_space<vmem>>) attributes {dimension_semantics = [#tpu.dimension_semantics<parallel>], iteration_bounds = array<i64: 1>, scalar_prefetch = 0 : i64, scratch_operands = 0 : i64, tpu.core_type = #tpu.core_type<tc>, window_params = [{transform_indices = @transform_0, window_bounds = array<i64: 1, 60, 32>}, {pipeline_mode = #tpu.pipeline_mode<synchronous>, transform_indices = @transform_1, window_bounds = array<i64: 32, 96>}, {pipeline_mode = #tpu.pipeline_mode<synchronous>, transform_indices = @transform_2, window_bounds = array<i64: 1, 96>}, {pipeline_mode = #tpu.pipeline_mode<synchronous>, transform_indices = @transform_3, window_bounds = array<i64: 32, 32>}, {pipeline_mode = #tpu.pipeline_mode<synchronous>, transform_indices = @transform_4, window_bounds = array<i64: 1, 32>}, {pipeline_mode = #tpu.pipeline_mode<synchronous>, transform_indices = @transform_5, window_bounds = array<i64: 1, 32>}, {pipeline_mode = #tpu.pipeline_mode<synchronous>, transform_indices = @transform_6, window_bounds = array<i64: 1, 32>}, {transform_indices = @transform_7, window_bounds = array<i64: 1, 60, 32>}]} {
    %c0 = arith.constant 0 : index
    %c0_0 = arith.constant 0 : index
    %c0_1 = arith.constant 0 : index
    %0 = vector.load %arg1[%c0, %c0_0, %c0_1] : memref<1x60x32xbf16, #tpu.memory_space<vmem>>, vector<1x60x32xbf16>
    %1 = vector.shape_cast %0 : vector<1x60x32xbf16> to vector<60x32xbf16>
    %2 = arith.extf %1 : vector<60x32xbf16> to vector<60x32xf32>
    %c0_2 = arith.constant 0 : index
    %c0_3 = arith.constant 0 : index
    %3 = vector.load %arg6[%c0_2, %c0_3] : memref<1x32xf32, #tpu.memory_space<vmem>>, vector<1x32xf32>
    %c0_4 = arith.constant 0 : index
    %c0_5 = arith.constant 0 : index
    %4 = vector.load %arg7[%c0_4, %c0_5] : memref<1x32xf32, #tpu.memory_space<vmem>>, vector<1x32xf32>
    %cst = arith.constant dense<0.000000e+00> : vector<60xf32>
    %5 = vector.multi_reduction <add>, %2, %cst [1] : vector<60x32xf32> to vector<60xf32>
    %6 = vector.shape_cast %5 : vector<60xf32> to vector<60x1xf32>
    %cst_6 = arith.constant 3.200000e+01 : f32
    %7 = vector.broadcast %cst_6 : f32 to vector<60x1xf32>
    %8 = arith.divf %6, %7 : vector<60x1xf32>
    %9 = vector.broadcast %8 : vector<60x1xf32> to vector<60x32xf32>
    %10 = arith.subf %2, %9 : vector<60x32xf32>
    %11 = arith.mulf %10, %10 : vector<60x32xf32>
    %cst_7 = arith.constant dense<0.000000e+00> : vector<60xf32>
    %12 = vector.multi_reduction <add>, %11, %cst_7 [1] : vector<60x32xf32> to vector<60xf32>
    %13 = vector.shape_cast %12 : vector<60xf32> to vector<60x1xf32>
    %cst_8 = arith.constant 3.200000e+01 : f32
    %14 = vector.broadcast %cst_8 : f32 to vector<60x1xf32>
    %15 = arith.divf %13, %14 : vector<60x1xf32>
    %16 = vector.broadcast %8 : vector<60x1xf32> to vector<60x32xf32>
    %17 = arith.subf %2, %16 : vector<60x32xf32>
    %cst_9 = arith.constant 9.99999974E-6 : f32
    %18 = vector.broadcast %cst_9 : f32 to vector<60x1xf32>
    %19 = arith.addf %15, %18 : vector<60x1xf32>
    %20 = math.rsqrt %19 : vector<60x1xf32>
    %21 = vector.broadcast %20 : vector<60x1xf32> to vector<60x32xf32>
    %22 = arith.mulf %17, %21 : vector<60x32xf32>
    %23 = vector.broadcast %3 : vector<1x32xf32> to vector<60x32xf32>
    %24 = arith.mulf %22, %23 : vector<60x32xf32>
    %25 = vector.broadcast %4 : vector<1x32xf32> to vector<60x32xf32>
    %26 = arith.addf %24, %25 : vector<60x32xf32>
    %27 = arith.truncf %26 : vector<60x32xf32> to vector<60x32xbf16>
    %c0_10 = arith.constant 0 : index
    %c0_11 = arith.constant 0 : index
    %28 = vector.load %arg2[%c0_10, %c0_11] : memref<32x96xbf16, #tpu.memory_space<vmem>>, vector<32x96xbf16>
    %cst_12 = arith.constant dense<0.000000e+00> : vector<60x96xf32>
    %29 = tpu.matmul %27, %28, %cst_12 {dimension_numbers = #tpu.dot_dimension_numbers<[1], [0], [0], [1], [0, 0, 1, 1], [], []>} : vector<60x32xbf16>, vector<32x96xbf16>, vector<60x96xf32> -> vector<60x96xf32>
    %c0_13 = arith.constant 0 : index
    %c0_14 = arith.constant 0 : index
    %30 = vector.load %arg3[%c0_13, %c0_14] : memref<1x96xf32, #tpu.memory_space<vmem>>, vector<1x96xf32>
    %31 = vector.broadcast %30 : vector<1x96xf32> to vector<60x96xf32>
    %32 = arith.addf %29, %31 : vector<60x96xf32>
    %c0_15 = arith.constant 0 : index
    %c0_16 = arith.constant 0 : index
    %33 = vector.load %arg4[%c0_15, %c0_16] : memref<32x32xbf16, #tpu.memory_space<vmem>>, vector<32x32xbf16>
    %cst_17 = arith.constant 0.000000e+00 : f32
    %34 = vector.broadcast %cst_17 : f32 to vector<60x32xf32>
    %35 = vector.extract_strided_slice %32 {offsets = [0, 0], sizes = [60, 16], strides = [1, 1]} : vector<60x96xf32> to vector<60x16xf32>
    %36 = vector.extract_strided_slice %32 {offsets = [0, 32], sizes = [60, 16], strides = [1, 1]} : vector<60x96xf32> to vector<60x16xf32>
    %37 = vector.extract_strided_slice %32 {offsets = [0, 64], sizes = [60, 16], strides = [1, 1]} : vector<60x96xf32> to vector<60x16xf32>
    %38 = arith.truncf %35 : vector<60x16xf32> to vector<60x16xbf16>
    %39 = arith.truncf %36 : vector<60x16xf32> to vector<60x16xbf16>
    %cst_18 = arith.constant dense<0.000000e+00> : vector<60x60xf32>
    %40 = tpu.matmul %38, %39, %cst_18 {dimension_numbers = #tpu.dot_dimension_numbers<[1], [1], [0], [0], [0, 0, 1, 0], [], []>} : vector<60x16xbf16>, vector<60x16xbf16>, vector<60x60xf32> -> vector<60x60xf32>
    %cst_19 = arith.constant 2.500000e-01 : f32
    %41 = vector.broadcast %cst_19 : f32 to vector<60x60xf32>
    %42 = arith.mulf %40, %41 : vector<60x60xf32>
    %cst_20 = arith.constant dense<0xFF800000> : vector<60xf32>
    %43 = vector.multi_reduction <maximumf>, %42, %cst_20 [1] : vector<60x60xf32> to vector<60xf32>
    %44 = vector.shape_cast %43 : vector<60xf32> to vector<60x1xf32>
    %45 = vector.broadcast %44 : vector<60x1xf32> to vector<60x60xf32>
    %46 = arith.subf %42, %45 : vector<60x60xf32>
    %47 = math.exp %46 : vector<60x60xf32>
    %cst_21 = arith.constant dense<0.000000e+00> : vector<60xf32>
    %48 = vector.multi_reduction <add>, %47, %cst_21 [1] : vector<60x60xf32> to vector<60xf32>
    %49 = vector.shape_cast %48 : vector<60xf32> to vector<60x1xf32>
    %50 = tpu.reciprocal %49 {approx = true} : vector<60x1xf32> -> vector<60x1xf32>
    %51 = vector.broadcast %50 : vector<60x1xf32> to vector<60x60xf32>
    %52 = arith.mulf %47, %51 : vector<60x60xf32>
    %53 = arith.truncf %52 : vector<60x60xf32> to vector<60x60xbf16>
    %54 = arith.truncf %37 : vector<60x16xf32> to vector<60x16xbf16>
    %cst_22 = arith.constant dense<0.000000e+00> : vector<60x16xf32>
    %55 = tpu.matmul %53, %54, %cst_22 {dimension_numbers = #tpu.dot_dimension_numbers<[1], [0], [0], [1], [0, 0, 1, 1], [], []>} : vector<60x60xbf16>, vector<60x16xbf16>, vector<60x16xf32> -> vector<60x16xf32>
    %56 = arith.truncf %55 : vector<60x16xf32> to vector<60x16xbf16>
    %57 = vector.extract_strided_slice %33 {offsets = [0, 0], sizes = [16, 32], strides = [1, 1]} : vector<32x32xbf16> to vector<16x32xbf16>
    %cst_23 = arith.constant dense<0.000000e+00> : vector<60x32xf32>
    %58 = tpu.matmul %56, %57, %cst_23 {dimension_numbers = #tpu.dot_dimension_numbers<[1], [0], [0], [1], [0, 0, 1, 1], [], []>} : vector<60x16xbf16>, vector<16x32xbf16>, vector<60x32xf32> -> vector<60x32xf32>
    %59 = arith.addf %34, %58 : vector<60x32xf32>
    %60 = vector.extract_strided_slice %32 {offsets = [0, 16], sizes = [60, 16], strides = [1, 1]} : vector<60x96xf32> to vector<60x16xf32>
    %61 = vector.extract_strided_slice %32 {offsets = [0, 48], sizes = [60, 16], strides = [1, 1]} : vector<60x96xf32> to vector<60x16xf32>
    %62 = vector.extract_strided_slice %32 {offsets = [0, 80], sizes = [60, 16], strides = [1, 1]} : vector<60x96xf32> to vector<60x16xf32>
    %63 = arith.truncf %60 : vector<60x16xf32> to vector<60x16xbf16>
    %64 = arith.truncf %61 : vector<60x16xf32> to vector<60x16xbf16>
    %cst_24 = arith.constant dense<0.000000e+00> : vector<60x60xf32>
    %65 = tpu.matmul %63, %64, %cst_24 {dimension_numbers = #tpu.dot_dimension_numbers<[1], [1], [0], [0], [0, 0, 1, 0], [], []>} : vector<60x16xbf16>, vector<60x16xbf16>, vector<60x60xf32> -> vector<60x60xf32>
    %cst_25 = arith.constant 2.500000e-01 : f32
    %66 = vector.broadcast %cst_25 : f32 to vector<60x60xf32>
    %67 = arith.mulf %65, %66 : vector<60x60xf32>
    %cst_26 = arith.constant dense<0xFF800000> : vector<60xf32>
    %68 = vector.multi_reduction <maximumf>, %67, %cst_26 [1] : vector<60x60xf32> to vector<60xf32>
    %69 = vector.shape_cast %68 : vector<60xf32> to vector<60x1xf32>
    %70 = vector.broadcast %69 : vector<60x1xf32> to vector<60x60xf32>
    %71 = arith.subf %67, %70 : vector<60x60xf32>
    %72 = math.exp %71 : vector<60x60xf32>
    %cst_27 = arith.constant dense<0.000000e+00> : vector<60xf32>
    %73 = vector.multi_reduction <add>, %72, %cst_27 [1] : vector<60x60xf32> to vector<60xf32>
    %74 = vector.shape_cast %73 : vector<60xf32> to vector<60x1xf32>
    %75 = tpu.reciprocal %74 {approx = true} : vector<60x1xf32> -> vector<60x1xf32>
    %76 = vector.broadcast %75 : vector<60x1xf32> to vector<60x60xf32>
    %77 = arith.mulf %72, %76 : vector<60x60xf32>
    %78 = arith.truncf %77 : vector<60x60xf32> to vector<60x60xbf16>
    %79 = arith.truncf %62 : vector<60x16xf32> to vector<60x16xbf16>
    %cst_28 = arith.constant dense<0.000000e+00> : vector<60x16xf32>
    %80 = tpu.matmul %78, %79, %cst_28 {dimension_numbers = #tpu.dot_dimension_numbers<[1], [0], [0], [1], [0, 0, 1, 1], [], []>} : vector<60x60xbf16>, vector<60x16xbf16>, vector<60x16xf32> -> vector<60x16xf32>
    %81 = arith.truncf %80 : vector<60x16xf32> to vector<60x16xbf16>
    %82 = vector.extract_strided_slice %33 {offsets = [16, 0], sizes = [16, 32], strides = [1, 1]} : vector<32x32xbf16> to vector<16x32xbf16>
    %cst_29 = arith.constant dense<0.000000e+00> : vector<60x32xf32>
    %83 = tpu.matmul %81, %82, %cst_29 {dimension_numbers = #tpu.dot_dimension_numbers<[1], [0], [0], [1], [0, 0, 1, 1], [], []>} : vector<60x16xbf16>, vector<16x32xbf16>, vector<60x32xf32> -> vector<60x32xf32>
    %84 = arith.addf %59, %83 : vector<60x32xf32>
    %c0_30 = arith.constant 0 : index
    %c0_31 = arith.constant 0 : index
    %85 = vector.load %arg5[%c0_30, %c0_31] : memref<1x32xf32, #tpu.memory_space<vmem>>, vector<1x32xf32>
    %86 = vector.broadcast %85 : vector<1x32xf32> to vector<60x32xf32>
    %87 = arith.addf %84, %86 : vector<60x32xf32>
    %88 = arith.addf %87, %2 : vector<60x32xf32>
    %89 = arith.truncf %88 : vector<60x32xf32> to vector<60x32xbf16>
    %c0_32 = arith.constant 0 : index
    %c0_33 = arith.constant 0 : index
    %c0_34 = arith.constant 0 : index
    %90 = vector.load %arg8[%c0_32, %c0_33, %c0_34] : memref<1x60x32xbf16, #tpu.memory_space<vmem>>, vector<1x60x32xbf16>
    %91 = vector.shape_cast %90 : vector<1x60x32xbf16> to vector<60x32xbf16>
    %92 = vector.shape_cast %89 : vector<60x32xbf16> to vector<1x60x32xbf16>
    tpu.vector_store %arg8[%c0_32, %c0_33, %c0_34], %92 {strides = array<i32>} : memref<1x60x32xbf16, #tpu.memory_space<vmem>>, vector<1x60x32xbf16>,
    return
  }
  func.func @transform_0(%arg0: i32) -> (i32, i32, i32) {
    %c0_i32 = arith.constant 0 : i32
    %c0_i32_0 = arith.constant 0 : i32
    %c0_i32_1 = arith.constant 0 : i32
    return %arg0, %c0_i32, %c0_i32_0 : i32, i32, i32
  }
  func.func @transform_1(%arg0: i32) -> (i32, i32) {
    %c0_i32 = arith.constant 0 : i32
    %c0_i32_0 = arith.constant 0 : i32
    %c0_i32_1 = arith.constant 0 : i32
    return %c0_i32, %c0_i32_0 : i32, i32
  }
  func.func @transform_2(%arg0: i32) -> (i32, i32) {
    %c0_i32 = arith.constant 0 : i32
    %c0_i32_0 = arith.constant 0 : i32
    %c0_i32_1 = arith.constant 0 : i32
    return %c0_i32, %c0_i32_0 : i32, i32
  }
  func.func @transform_3(%arg0: i32) -> (i32, i32) {
    %c0_i32 = arith.constant 0 : i32
    %c0_i32_0 = arith.constant 0 : i32
    %c0_i32_1 = arith.constant 0 : i32
    return %c0_i32, %c0_i32_0 : i32, i32
  }
  func.func @transform_4(%arg0: i32) -> (i32, i32) {
    %c0_i32 = arith.constant 0 : i32
    %c0_i32_0 = arith.constant 0 : i32
    %c0_i32_1 = arith.constant 0 : i32
    return %c0_i32, %c0_i32_0 : i32, i32
  }
  func.func @transform_5(%arg0: i32) -> (i32, i32) {
    %c0_i32 = arith.constant 0 : i32
    %c0_i32_0 = arith.constant 0 : i32
    %c0_i32_1 = arith.constant 0 : i32
    return %c0_i32, %c0_i32_0 : i32, i32
  }
  func.func @transform_6(%arg0: i32) -> (i32, i32) {
    %c0_i32 = arith.constant 0 : i32
    %c0_i32_0 = arith.constant 0 : i32
    %c0_i32_1 = arith.constant 0 : i32
    return %c0_i32, %c0_i32_0 : i32, i32
  }
  func.func @transform_7(%arg0: i32) -> (i32, i32, i32) {
    %c0_i32 = arith.constant 0 : i32
    %c0_i32_0 = arith.constant 0 : i32
    %c0_i32_1 = arith.constant 0 : i32
    return %arg0, %c0_i32, %c0_i32_0 : i32, i32, i32
  }
}

module attributes {stable_mosaic.version = 11 : i64} {
  func.func @_mlp_kernel(%arg0: i32, %arg1: memref<60x32xbf16, #tpu.memory_space<vmem>>, %arg2: memref<32x128xbf16, #tpu.memory_space<vmem>>, %arg3: memref<1x128xf32, #tpu.memory_space<vmem>>, %arg4: memref<128x32xbf16, #tpu.memory_space<vmem>>, %arg5: memref<1x32xf32, #tpu.memory_space<vmem>>, %arg6: memref<1x32xf32, #tpu.memory_space<vmem>>, %arg7: memref<1x32xf32, #tpu.memory_space<vmem>>, %arg8: memref<60x32xbf16, #tpu.memory_space<vmem>>) attributes {dimension_semantics = [#tpu.dimension_semantics<parallel>], iteration_bounds = array<i64: 1>, scalar_prefetch = 0 : i64, scratch_operands = 0 : i64, tpu.core_type = #tpu.core_type<tc>, window_params = [{transform_indices = @transform_0, window_bounds = array<i64: 60, 32>}, {pipeline_mode = #tpu.pipeline_mode<synchronous>, transform_indices = @transform_1, window_bounds = array<i64: 32, 128>}, {pipeline_mode = #tpu.pipeline_mode<synchronous>, transform_indices = @transform_2, window_bounds = array<i64: 1, 128>}, {pipeline_mode = #tpu.pipeline_mode<synchronous>, transform_indices = @transform_3, window_bounds = array<i64: 128, 32>}, {pipeline_mode = #tpu.pipeline_mode<synchronous>, transform_indices = @transform_4, window_bounds = array<i64: 1, 32>}, {pipeline_mode = #tpu.pipeline_mode<synchronous>, transform_indices = @transform_5, window_bounds = array<i64: 1, 32>}, {pipeline_mode = #tpu.pipeline_mode<synchronous>, transform_indices = @transform_6, window_bounds = array<i64: 1, 32>}, {transform_indices = @transform_7, window_bounds = array<i64: 60, 32>}]} {
    %c0 = arith.constant 0 : index
    %c0_0 = arith.constant 0 : index
    %0 = vector.load %arg1[%c0, %c0_0] : memref<60x32xbf16, #tpu.memory_space<vmem>>, vector<60x32xbf16>
    %1 = arith.extf %0 : vector<60x32xbf16> to vector<60x32xf32>
    %c0_1 = arith.constant 0 : index
    %c0_2 = arith.constant 0 : index
    %2 = vector.load %arg6[%c0_1, %c0_2] : memref<1x32xf32, #tpu.memory_space<vmem>>, vector<1x32xf32>
    %c0_3 = arith.constant 0 : index
    %c0_4 = arith.constant 0 : index
    %3 = vector.load %arg7[%c0_3, %c0_4] : memref<1x32xf32, #tpu.memory_space<vmem>>, vector<1x32xf32>
    %cst = arith.constant dense<0.000000e+00> : vector<60xf32>
    %4 = vector.multi_reduction <add>, %1, %cst [1] : vector<60x32xf32> to vector<60xf32>
    %5 = vector.shape_cast %4 : vector<60xf32> to vector<60x1xf32>
    %cst_5 = arith.constant 3.200000e+01 : f32
    %6 = vector.broadcast %cst_5 : f32 to vector<60x1xf32>
    %7 = arith.divf %5, %6 : vector<60x1xf32>
    %8 = vector.broadcast %7 : vector<60x1xf32> to vector<60x32xf32>
    %9 = arith.subf %1, %8 : vector<60x32xf32>
    %10 = arith.mulf %9, %9 : vector<60x32xf32>
    %cst_6 = arith.constant dense<0.000000e+00> : vector<60xf32>
    %11 = vector.multi_reduction <add>, %10, %cst_6 [1] : vector<60x32xf32> to vector<60xf32>
    %12 = vector.shape_cast %11 : vector<60xf32> to vector<60x1xf32>
    %cst_7 = arith.constant 3.200000e+01 : f32
    %13 = vector.broadcast %cst_7 : f32 to vector<60x1xf32>
    %14 = arith.divf %12, %13 : vector<60x1xf32>
    %15 = vector.broadcast %7 : vector<60x1xf32> to vector<60x32xf32>
    %16 = arith.subf %1, %15 : vector<60x32xf32>
    %cst_8 = arith.constant 9.99999974E-6 : f32
    %17 = vector.broadcast %cst_8 : f32 to vector<60x1xf32>
    %18 = arith.addf %14, %17 : vector<60x1xf32>
    %19 = math.rsqrt %18 : vector<60x1xf32>
    %20 = vector.broadcast %19 : vector<60x1xf32> to vector<60x32xf32>
    %21 = arith.mulf %16, %20 : vector<60x32xf32>
    %22 = vector.broadcast %2 : vector<1x32xf32> to vector<60x32xf32>
    %23 = arith.mulf %21, %22 : vector<60x32xf32>
    %24 = vector.broadcast %3 : vector<1x32xf32> to vector<60x32xf32>
    %25 = arith.addf %23, %24 : vector<60x32xf32>
    %26 = arith.truncf %25 : vector<60x32xf32> to vector<60x32xbf16>
    %c0_9 = arith.constant 0 : index
    %c0_10 = arith.constant 0 : index
    %27 = vector.load %arg2[%c0_9, %c0_10] : memref<32x128xbf16, #tpu.memory_space<vmem>>, vector<32x128xbf16>
    %cst_11 = arith.constant dense<0.000000e+00> : vector<60x128xf32>
    %28 = tpu.matmul %26, %27, %cst_11 {dimension_numbers = #tpu.dot_dimension_numbers<[1], [0], [0], [1], [0, 0, 1, 1], [], []>} : vector<60x32xbf16>, vector<32x128xbf16>, vector<60x128xf32> -> vector<60x128xf32>
    %c0_12 = arith.constant 0 : index
    %c0_13 = arith.constant 0 : index
    %29 = vector.load %arg3[%c0_12, %c0_13] : memref<1x128xf32, #tpu.memory_space<vmem>>, vector<1x128xf32>
    %30 = vector.broadcast %29 : vector<1x128xf32> to vector<60x128xf32>
    %31 = arith.addf %28, %30 : vector<60x128xf32>
    %32 = arith.mulf %31, %31 : vector<60x128xf32>
    %33 = arith.mulf %31, %32 : vector<60x128xf32>
    %cst_14 = arith.constant 4.471500e-02 : f32
    %34 = vector.broadcast %cst_14 : f32 to vector<60x128xf32>
    %35 = arith.mulf %34, %33 : vector<60x128xf32>
    %36 = arith.addf %31, %35 : vector<60x128xf32>
    %cst_15 = arith.constant 0.797884583 : f32
    %37 = vector.broadcast %cst_15 : f32 to vector<60x128xf32>
    %38 = arith.mulf %37, %36 : vector<60x128xf32>
    %39 = math.tanh %38 : vector<60x128xf32>
    %cst_16 = arith.constant 1.000000e+00 : f32
    %40 = vector.broadcast %cst_16 : f32 to vector<60x128xf32>
    %41 = arith.addf %40, %39 : vector<60x128xf32>
    %cst_17 = arith.constant 5.000000e-01 : f32
    %42 = vector.broadcast %cst_17 : f32 to vector<60x128xf32>
    %43 = arith.mulf %42, %41 : vector<60x128xf32>
    %44 = arith.mulf %31, %43 : vector<60x128xf32>
    %45 = arith.truncf %44 : vector<60x128xf32> to vector<60x128xbf16>
    %c0_18 = arith.constant 0 : index
    %c0_19 = arith.constant 0 : index
    %46 = vector.load %arg4[%c0_18, %c0_19] : memref<128x32xbf16, #tpu.memory_space<vmem>>, vector<128x32xbf16>
    %cst_20 = arith.constant dense<0.000000e+00> : vector<60x32xf32>
    %47 = tpu.matmul %45, %46, %cst_20 {dimension_numbers = #tpu.dot_dimension_numbers<[1], [0], [0], [1], [0, 0, 1, 1], [], []>} : vector<60x128xbf16>, vector<128x32xbf16>, vector<60x32xf32> -> vector<60x32xf32>
    %c0_21 = arith.constant 0 : index
    %c0_22 = arith.constant 0 : index
    %48 = vector.load %arg5[%c0_21, %c0_22] : memref<1x32xf32, #tpu.memory_space<vmem>>, vector<1x32xf32>
    %49 = vector.broadcast %48 : vector<1x32xf32> to vector<60x32xf32>
    %50 = arith.addf %47, %49 : vector<60x32xf32>
    %51 = arith.addf %50, %1 : vector<60x32xf32>
    %52 = arith.truncf %51 : vector<60x32xf32> to vector<60x32xbf16>
    %c0_23 = arith.constant 0 : index
    %c0_24 = arith.constant 0 : index
    %53 = vector.load %arg8[%c0_23, %c0_24] : memref<60x32xbf16, #tpu.memory_space<vmem>>, vector<60x32xbf16>
    tpu.vector_store %arg8[%c0_23, %c0_24], %52 {strides = array<i32>} : memref<60x32xbf16, #tpu.memory_space<vmem>>, vector<60x32xbf16>,
    return
  }
  func.func @transform_0(%arg0: i32) -> (i32, i32) {
    %c0_i32 = arith.constant 0 : i32
    %c0_i32_0 = arith.constant 0 : i32
    return %arg0, %c0_i32 : i32, i32
  }
  func.func @transform_1(%arg0: i32) -> (i32, i32) {
    %c0_i32 = arith.constant 0 : i32
    %c0_i32_0 = arith.constant 0 : i32
    %c0_i32_1 = arith.constant 0 : i32
    return %c0_i32, %c0_i32_0 : i32, i32
  }
  func.func @transform_2(%arg0: i32) -> (i32, i32) {
    %c0_i32 = arith.constant 0 : i32
    %c0_i32_0 = arith.constant 0 : i32
    %c0_i32_1 = arith.constant 0 : i32
    return %c0_i32, %c0_i32_0 : i32, i32
  }
  func.func @transform_3(%arg0: i32) -> (i32, i32) {
    %c0_i32 = arith.constant 0 : i32
    %c0_i32_0 = arith.constant 0 : i32
    %c0_i32_1 = arith.constant 0 : i32
    return %c0_i32, %c0_i32_0 : i32, i32
  }
  func.func @transform_4(%arg0: i32) -> (i32, i32) {
    %c0_i32 = arith.constant 0 : i32
    %c0_i32_0 = arith.constant 0 : i32
    %c0_i32_1 = arith.constant 0 : i32
    return %c0_i32, %c0_i32_0 : i32, i32
  }
  func.func @transform_5(%arg0: i32) -> (i32, i32) {
    %c0_i32 = arith.constant 0 : i32
    %c0_i32_0 = arith.constant 0 : i32
    %c0_i32_1 = arith.constant 0 : i32
    return %c0_i32, %c0_i32_0 : i32, i32
  }
  func.func @transform_6(%arg0: i32) -> (i32, i32) {
    %c0_i32 = arith.constant 0 : i32
    %c0_i32_0 = arith.constant 0 : i32
    %c0_i32_1 = arith.constant 0 : i32
    return %c0_i32, %c0_i32_0 : i32, i32
  }
  func.func @transform_7(%arg0: i32) -> (i32, i32) {
    %c0_i32 = arith.constant 0 : i32
    %c0_i32_0 = arith.constant 0 : i32
    return %arg0, %c0_i32 : i32, i32
  }
}

module attributes {stable_mosaic.version = 11 : i64} {
  func.func @_ln_linear_kernel(%arg0: i32, %arg1: memref<60x32xbf16, #tpu.memory_space<vmem>>, %arg2: memref<32x160xbf16, #tpu.memory_space<vmem>>, %arg3: memref<1x160xf32, #tpu.memory_space<vmem>>, %arg4: memref<1x32xf32, #tpu.memory_space<vmem>>, %arg5: memref<1x32xf32, #tpu.memory_space<vmem>>, %arg6: memref<60x160xf32, #tpu.memory_space<vmem>>) attributes {dimension_semantics = [#tpu.dimension_semantics<parallel>], iteration_bounds = array<i64: 1>, scalar_prefetch = 0 : i64, scratch_operands = 0 : i64, tpu.core_type = #tpu.core_type<tc>, window_params = [{transform_indices = @transform_0, window_bounds = array<i64: 60, 32>}, {pipeline_mode = #tpu.pipeline_mode<synchronous>, transform_indices = @transform_1, window_bounds = array<i64: 32, 160>}, {pipeline_mode = #tpu.pipeline_mode<synchronous>, transform_indices = @transform_2, window_bounds = array<i64: 1, 160>}, {pipeline_mode = #tpu.pipeline_mode<synchronous>, transform_indices = @transform_3, window_bounds = array<i64: 1, 32>}, {pipeline_mode = #tpu.pipeline_mode<synchronous>, transform_indices = @transform_4, window_bounds = array<i64: 1, 32>}, {transform_indices = @transform_5, window_bounds = array<i64: 60, 160>}]} {
    %c0 = arith.constant 0 : index
    %c0_0 = arith.constant 0 : index
    %0 = vector.load %arg1[%c0, %c0_0] : memref<60x32xbf16, #tpu.memory_space<vmem>>, vector<60x32xbf16>
    %1 = arith.extf %0 : vector<60x32xbf16> to vector<60x32xf32>
    %c0_1 = arith.constant 0 : index
    %c0_2 = arith.constant 0 : index
    %2 = vector.load %arg4[%c0_1, %c0_2] : memref<1x32xf32, #tpu.memory_space<vmem>>, vector<1x32xf32>
    %c0_3 = arith.constant 0 : index
    %c0_4 = arith.constant 0 : index
    %3 = vector.load %arg5[%c0_3, %c0_4] : memref<1x32xf32, #tpu.memory_space<vmem>>, vector<1x32xf32>
    %cst = arith.constant dense<0.000000e+00> : vector<60xf32>
    %4 = vector.multi_reduction <add>, %1, %cst [1] : vector<60x32xf32> to vector<60xf32>
    %5 = vector.shape_cast %4 : vector<60xf32> to vector<60x1xf32>
    %cst_5 = arith.constant 3.200000e+01 : f32
    %6 = vector.broadcast %cst_5 : f32 to vector<60x1xf32>
    %7 = arith.divf %5, %6 : vector<60x1xf32>
    %8 = vector.broadcast %7 : vector<60x1xf32> to vector<60x32xf32>
    %9 = arith.subf %1, %8 : vector<60x32xf32>
    %10 = arith.mulf %9, %9 : vector<60x32xf32>
    %cst_6 = arith.constant dense<0.000000e+00> : vector<60xf32>
    %11 = vector.multi_reduction <add>, %10, %cst_6 [1] : vector<60x32xf32> to vector<60xf32>
    %12 = vector.shape_cast %11 : vector<60xf32> to vector<60x1xf32>
    %cst_7 = arith.constant 3.200000e+01 : f32
    %13 = vector.broadcast %cst_7 : f32 to vector<60x1xf32>
    %14 = arith.divf %12, %13 : vector<60x1xf32>
    %15 = vector.broadcast %7 : vector<60x1xf32> to vector<60x32xf32>
    %16 = arith.subf %1, %15 : vector<60x32xf32>
    %cst_8 = arith.constant 9.99999974E-6 : f32
    %17 = vector.broadcast %cst_8 : f32 to vector<60x1xf32>
    %18 = arith.addf %14, %17 : vector<60x1xf32>
    %19 = math.rsqrt %18 : vector<60x1xf32>
    %20 = vector.broadcast %19 : vector<60x1xf32> to vector<60x32xf32>
    %21 = arith.mulf %16, %20 : vector<60x32xf32>
    %22 = vector.broadcast %2 : vector<1x32xf32> to vector<60x32xf32>
    %23 = arith.mulf %21, %22 : vector<60x32xf32>
    %24 = vector.broadcast %3 : vector<1x32xf32> to vector<60x32xf32>
    %25 = arith.addf %23, %24 : vector<60x32xf32>
    %26 = arith.truncf %25 : vector<60x32xf32> to vector<60x32xbf16>
    %c0_9 = arith.constant 0 : index
    %c0_10 = arith.constant 0 : index
    %27 = vector.load %arg2[%c0_9, %c0_10] : memref<32x160xbf16, #tpu.memory_space<vmem>>, vector<32x160xbf16>
    %cst_11 = arith.constant dense<0.000000e+00> : vector<60x160xf32>
    %28 = tpu.matmul %26, %27, %cst_11 {dimension_numbers = #tpu.dot_dimension_numbers<[1], [0], [0], [1], [0, 0, 1, 1], [], []>} : vector<60x32xbf16>, vector<32x160xbf16>, vector<60x160xf32> -> vector<60x160xf32>
    %c0_12 = arith.constant 0 : index
    %c0_13 = arith.constant 0 : index
    %29 = vector.load %arg3[%c0_12, %c0_13] : memref<1x160xf32, #tpu.memory_space<vmem>>, vector<1x160xf32>
    %30 = vector.broadcast %29 : vector<1x160xf32> to vector<60x160xf32>
    %31 = arith.addf %28, %30 : vector<60x160xf32>
    %c0_14 = arith.constant 0 : index
    %c0_15 = arith.constant 0 : index
    %32 = vector.load %arg6[%c0_14, %c0_15] : memref<60x160xf32, #tpu.memory_space<vmem>>, vector<60x160xf32>
    tpu.vector_store %arg6[%c0_14, %c0_15], %31 {strides = array<i32>} : memref<60x160xf32, #tpu.memory_space<vmem>>, vector<60x160xf32>,
    return
  }
  func.func @transform_0(%arg0: i32) -> (i32, i32) {
    %c0_i32 = arith.constant 0 : i32
    %c0_i32_0 = arith.constant 0 : i32
    return %arg0, %c0_i32 : i32, i32
  }
  func.func @transform_1(%arg0: i32) -> (i32, i32) {
    %c0_i32 = arith.constant 0 : i32
    %c0_i32_0 = arith.constant 0 : i32
    %c0_i32_1 = arith.constant 0 : i32
    return %c0_i32, %c0_i32_0 : i32, i32
  }
  func.func @transform_2(%arg0: i32) -> (i32, i32) {
    %c0_i32 = arith.constant 0 : i32
    %c0_i32_0 = arith.constant 0 : i32
    %c0_i32_1 = arith.constant 0 : i32
    return %c0_i32, %c0_i32_0 : i32, i32
  }
  func.func @transform_3(%arg0: i32) -> (i32, i32) {
    %c0_i32 = arith.constant 0 : i32
    %c0_i32_0 = arith.constant 0 : i32
    %c0_i32_1 = arith.constant 0 : i32
    return %c0_i32, %c0_i32_0 : i32, i32
  }
  func.func @transform_4(%arg0: i32) -> (i32, i32) {
    %c0_i32 = arith.constant 0 : i32
    %c0_i32_0 = arith.constant 0 : i32
    %c0_i32_1 = arith.constant 0 : i32
    return %c0_i32, %c0_i32_0 : i32, i32
  }
  func.func @transform_5(%arg0: i32) -> (i32, i32) {
    %c0_i32 = arith.constant 0 : i32
    %c0_i32_0 = arith.constant 0 : i32
    return %arg0, %c0_i32 : i32, i32
  }
}

</mosaic_0001>

<llo_original>
// kernel: _lambda_.11
$region0: #{_lambda_.11}
  #allocation0 [shape = 'u32[]', space=smem, size = 0x4, offset = 0x4, fixed_abs, tag = 'smem constant byte address 0x4 - core index']
  #allocation1 [shape = 'u32[72,128]{1,0:T(1,128)}', space=vmem, size = 0x9000, scoped, tag = 'internal scratch']
  %s0 = inlined_call_operand.vmem [shape: bf16[60,32], index: 0, kind: input, shape index: {}]
  %s1 = inlined_call_operand.vmem [shape: bf16[32,128], index: 1, kind: input, shape index: {}]
  %s2 = inlined_call_operand.vmem [shape: f32[1,128], index: 2, kind: input, shape index: {}]
  %s3 = inlined_call_operand.vmem [shape: bf16[128,32], index: 3, kind: input, shape index: {}]
  %s4 = inlined_call_operand.vmem [shape: f32[1,32], index: 4, kind: input, shape index: {}]
  %s5 = inlined_call_operand.vmem [shape: f32[1,32], index: 5, kind: input, shape index: {}]
  %s6 = inlined_call_operand.vmem [shape: f32[1,32], index: 6, kind: input, shape index: {}]
  %s7 = inlined_call_operand.vmem [shape: bf16[60,32], index: 7, kind: output, shape index: {}]
  %s8 = sld [smem:[#allocation0]]
  $region38: #{_lambda_.11} parent=0
    _
  %s10 = ssub.s32 1, %s8
  %s11 = scalar_select 0, %s10, %s8
  // Predicated region
  $region2: #{_lambda_.11} parent=0 // pred_check
    _
  $region3: #{_lambda_.11} parent=0 // pred_check_branch
    %13 = sbr.rel (0) target = $region5
  $region4: #{_lambda_.11} parent=0 // pred_region
    _
  $region5: #{_lambda_.11} parent=0 // pred_fallthru
    _
  // Predicated region
  $region6: #{_lambda_.11} parent=0 // pred_check
    _
  $region7: #{_lambda_.11} parent=0 // pred_check_branch
    %15 = sbr.rel (0) target = $region9
  $region8: #{_lambda_.11} parent=0 // pred_region
    _
  $region9: #{_lambda_.11} parent=0 // pred_fallthru
    _
  // Predicated region
  $region10: #{_lambda_.11} parent=0 // pred_check
    _
  $region11: #{_lambda_.11} parent=0 // pred_check_branch
    %17 = sbr.rel (0) target = $region13
  $region12: #{_lambda_.11} parent=0 // pred_region
    _
  $region13: #{_lambda_.11} parent=0 // pred_fallthru
    _
  // Predicated region
  $region14: #{_lambda_.11} parent=0 // pred_check
    _
  $region15: #{_lambda_.11} parent=0 // pred_check_branch
    %19 = sbr.rel (0) target = $region17
  $region16: #{_lambda_.11} parent=0 // pred_region
    _
  $region17: #{_lambda_.11} parent=0 // pred_fallthru
    _
  // Predicated region
  $region18: #{_lambda_.11} parent=0 // pred_check
    _
  $region19: #{_lambda_.11} parent=0 // pred_check_branch
    %21 = sbr.rel (0) target = $region21
  $region20: #{_lambda_.11} parent=0 // pred_region
    _
  $region21: #{_lambda_.11} parent=0 // pred_fallthru
    _
  // Predicated region
  $region22: #{_lambda_.11} parent=0 // pred_check
    _
  $region23: #{_lambda_.11} parent=0 // pred_check_branch
    %23 = sbr.rel (0) target = $region25
  $region24: #{_lambda_.11} parent=0 // pred_region
    _
  $region25: #{_lambda_.11} parent=0 // pred_fallthru
    _
  // Predicated region
  $region26: #{_lambda_.11} parent=0 // pred_check
    _
  $region27: #{_lambda_.11} parent=0 // pred_check_branch
    %25 = sbr.rel (0) target = $region29
  $region28: #{_lambda_.11} parent=0 // pred_region
    _
  $region29: #{_lambda_.11} parent=0 // pred_fallthru
    _
  %v27 = vld [vmem:[%s0] sm:$0xf]
  %v28 = vld [vmem:[%s0 + $0x4] sm:$0xf]
  %v29 = vld [vmem:[%s0 + $0x8] sm:$0xf]
  %v30 = vld [vmem:[%s0 + $0xc] sm:$0xf]
  %v31 = vld [vmem:[%s0 + $0x10] sm:$0xf]
  %v32 = vld [vmem:[%s0 + $0x14] sm:$0xf]
  %v33 = vld [vmem:[%s0 + $0x18] sm:$0xf]
  %v34 = vld [vmem:[%s0 + $0x1c] sm:$0x3]
  %v35 = vunpack.c.l.bf16 %v27
  %v36 = vunpack.c.l.bf16 %v28
  %v37 = vunpack.c.l.bf16 %v29
  %v38 = vunpack.c.l.bf16 %v30
  %v39 = vunpack.c.l.bf16 %v31
  %v40 = vunpack.c.l.bf16 %v32
  %v41 = vunpack.c.l.bf16 %v33
  %v42 = vunpack.c.l.bf16 %v34
  %v43 = vld [vmem:[%s5] sm:$0x1]
  %v44 = vld [vmem:[%s6] sm:$0x1]
  %vm45 = vcmask 261120
  %v46 = vsel %vm45, %v35, 0.0
  %47 = vadd.xlane.f32.xlu0 %v46
  %v48 = vpop.xlane.xlu0 %47
  %v49 = vsel %vm45, %v36, 0.0
  %50 = vadd.xlane.f32.xlu0 %v49
  %v51 = vpop.xlane.xlu0 %50
  %v52 = vsel %vm45, %v37, 0.0
  %53 = vadd.xlane.f32.xlu0 %v52
  %v54 = vpop.xlane.xlu0 %53
  %v55 = vsel %vm45, %v38, 0.0
  %56 = vadd.xlane.f32.xlu0 %v55
  %v57 = vpop.xlane.xlu0 %56
  %v58 = vsel %vm45, %v39, 0.0
  %59 = vadd.xlane.f32.xlu0 %v58
  %v60 = vpop.xlane.xlu0 %59
  %v61 = vsel %vm45, %v40, 0.0
  %62 = vadd.xlane.f32.xlu0 %v61
  %v63 = vpop.xlane.xlu0 %62
  %v64 = vsel %vm45, %v41, 0.0
  %65 = vadd.xlane.f32.xlu0 %v64
  %v66 = vpop.xlane.xlu0 %65
  %vm67 = vcmask 257024
  %v68 = vsel %vm67, %v42, 0.0
  %69 = vadd.xlane.f32.xlu0 %v68
  %v70 = vpop.xlane.xlu0 %69
  %v71 = vrcp.pop 32.0
  %v72 = vmul.f32 32.0, %v71
  %v73 = vsub.f32 1.0, %v72
  %v74 = vmul.f32 %v71, %v73
  %v75 = vadd.f32 %v71, %v74
  %vm76 = vweird.f32 %v71
  %v77 = vsel %vm76, %v71, %v75
  %v78 = vmul.f32 %v48, %v77
  %v79 = vmul.f32 %v51, %v77
  %v80 = vmul.f32 %v54, %v77
  %v81 = vmul.f32 %v57, %v77
  %v82 = vmul.f32 %v60, %v77
  %v83 = vmul.f32 %v63, %v77
  %v84 = vmul.f32 %v66, %v77
  %v85 = vmul.f32 %v70, %v77
  %v86 = vsub.f32 %v35, %v78
  %v87 = vsub.f32 %v36, %v79
  %v88 = vsub.f32 %v37, %v80
  %v89 = vsub.f32 %v38, %v81
  %v90 = vsub.f32 %v39, %v82
  %v91 = vsub.f32 %v40, %v83
  %v92 = vsub.f32 %v41, %v84
  %v93 = vsub.f32 %v42, %v85
  %v94 = vmul.f32 %v86, %v86
  %v95 = vmul.f32 %v87, %v87
  %v96 = vmul.f32 %v88, %v88
  %v97 = vmul.f32 %v89, %v89
  %v98 = vmul.f32 %v90, %v90
  %v99 = vmul.f32 %v91, %v91
  %v100 = vmul.f32 %v92, %v92
  %v101 = vmul.f32 %v93, %v93
  %v102 = vsel %vm45, %v94, 0.0
  %103 = vadd.xlane.f32.xlu0 %v102
  %v104 = vpop.xlane.xlu0 %103
  %v105 = vsel %vm45, %v95, 0.0
  %106 = vadd.xlane.f32.xlu0 %v105
  %v107 = vpop.xlane.xlu0 %106
  %v108 = vsel %vm45, %v96, 0.0
  %109 = vadd.xlane.f32.xlu0 %v108
  %v110 = vpop.xlane.xlu0 %109
  %v111 = vsel %vm45, %v97, 0.0
  %112 = vadd.xlane.f32.xlu0 %v111
  %v113 = vpop.xlane.xlu0 %112
  %v114 = vsel %vm45, %v98, 0.0
  %115 = vadd.xlane.f32.xlu0 %v114
  %v116 = vpop.xlane.xlu0 %115
  %v117 = vsel %vm45, %v99, 0.0
  %118 = vadd.xlane.f32.xlu0 %v117
  %v119 = vpop.xlane.xlu0 %118
  %v120 = vsel %vm45, %v100, 0.0
  %121 = vadd.xlane.f32.xlu0 %v120
  %v122 = vpop.xlane.xlu0 %121
  %v123 = vsel %vm67, %v101, 0.0
  %124 = vadd.xlane.f32.xlu0 %v123
  %v125 = vpop.xlane.xlu0 %124
  %v126 = vmul.f32 %v104, %v77
  %v127 = vmul.f32 %v107, %v77
  %v128 = vmul.f32 %v110, %v77
  %v129 = vmul.f32 %v113, %v77
  %v130 = vmul.f32 %v116, %v77
  %v131 = vmul.f32 %v119, %v77
  %v132 = vmul.f32 %v122, %v77
  %v133 = vmul.f32 %v125, %v77
  %v134 = vadd.f32 %v126, 1e-05
  %v135 = vadd.f32 %v127, 1e-05
  %v136 = vadd.f32 %v128, 1e-05
  %v137 = vadd.f32 %v129, 1e-05
  %v138 = vadd.f32 %v130, 1e-05
  %v139 = vadd.f32 %v131, 1e-05
  %v140 = vadd.f32 %v132, 1e-05
  %v141 = vadd.f32 %v133, 1e-05
  %v142 = vrsqrt.pop %v134
  %v143 = vmul.f32 %v142, %v134
  %v144 = vmul.f32 %v143, %v142
  %v145 = vmul.f32 0.5, %v144
  %v146 = vsub.f32 1.5, %v145
  %v147 = vmul.f32 %v142, %v146
  %vm148 = vweird.f32 %v134
  %vm149 = vweird.f32 %v142
  %vm150 = vmor %vm148, %vm149
  %v151 = vsel %vm150, %v142, %v147
  %v152 = vrsqrt.pop %v135
  %v153 = vmul.f32 %v152, %v135
  %v154 = vmul.f32 %v153, %v152
  %v155 = vmul.f32 0.5, %v154
  %v156 = vsub.f32 1.5, %v155
  %v157 = vmul.f32 %v152, %v156
  %vm158 = vweird.f32 %v135
  %vm159 = vweird.f32 %v152
  %vm160 = vmor %vm158, %vm159
  %v161 = vsel %vm160, %v152, %v157
  %v162 = vrsqrt.pop %v136
  %v163 = vmul.f32 %v162, %v136
  %v164 = vmul.f32 %v163, %v162
  %v165 = vmul.f32 0.5, %v164
  %v166 = vsub.f32 1.5, %v165
  %v167 = vmul.f32 %v162, %v166
  %vm168 = vweird.f32 %v136
  %vm169 = vweird.f32 %v162
  %vm170 = vmor %vm168, %vm169
  %v171 = vsel %vm170, %v162, %v167
  %v172 = vrsqrt.pop %v137
  %v173 = vmul.f32 %v172, %v137
  %v174 = vmul.f32 %v173, %v172
  %v175 = vmul.f32 0.5, %v174
  %v176 = vsub.f32 1.5, %v175
  %v177 = vmul.f32 %v172, %v176
  %vm178 = vweird.f32 %v137
  %vm179 = vweird.f32 %v172
  %vm180 = vmor %vm178, %vm179
  %v181 = vsel %vm180, %v172, %v177
  %v182 = vrsqrt.pop %v138
  %v183 = vmul.f32 %v182, %v138
  %v184 = vmul.f32 %v183, %v182
  %v185 = vmul.f32 0.5, %v184
  %v186 = vsub.f32 1.5, %v185
  %v187 = vmul.f32 %v182, %v186
  %vm188 = vweird.f32 %v138
  %vm189 = vweird.f32 %v182
  %vm190 = vmor %vm188, %vm189
  %v191 = vsel %vm190, %v182, %v187
  %v192 = vrsqrt.pop %v139
  %v193 = vmul.f32 %v192, %v139
  %v194 = vmul.f32 %v193, %v192
  %v195 = vmul.f32 0.5, %v194
  %v196 = vsub.f32 1.5, %v195
  %v197 = vmul.f32 %v192, %v196
  %vm198 = vweird.f32 %v139
  %vm199 = vweird.f32 %v192
  %vm200 = vmor %vm198, %vm199
  %v201 = vsel %vm200, %v192, %v197
  %v202 = vrsqrt.pop %v140
  %v203 = vmul.f32 %v202, %v140
  %v204 = vmul.f32 %v203, %v202
  %v205 = vmul.f32 0.5, %v204
  %v206 = vsub.f32 1.5, %v205
  %v207 = vmul.f32 %v202, %v206
  %vm208 = vweird.f32 %v140
  %vm209 = vweird.f32 %v202
  %vm210 = vmor %vm208, %vm209
  %v211 = vsel %vm210, %v202, %v207
  %v212 = vrsqrt.pop %v141
  %v213 = vmul.f32 %v212, %v141
  %v214 = vmul.f32 %v213, %v212
  %v215 = vmul.f32 0.5, %v214
  %v216 = vsub.f32 1.5, %v215
  %v217 = vmul.f32 %v212, %v216
  %vm218 = vweird.f32 %v141
  %vm219 = vweird.f32 %v212
  %vm220 = vmor %vm218, %vm219
  %v221 = vsel %vm220, %v212, %v217
  %v222 = vmul.f32 %v86, %v151
  %v223 = vmul.f32 %v87, %v161
  %v224 = vmul.f32 %v88, %v171
  %v225 = vmul.f32 %v89, %v181
  %v226 = vmul.f32 %v90, %v191
  %v227 = vmul.f32 %v91, %v201
  %v228 = vmul.f32 %v92, %v211
  %v229 = vmul.f32 %v93, %v221
  %v231 = vperm.slane %v43, 0
  %v233 = vmul.f32 %v222, %v231
  %v234 = vmul.f32 %v223, %v231
  %v235 = vmul.f32 %v224, %v231
  %v236 = vmul.f32 %v225, %v231
  %v237 = vmul.f32 %v226, %v231
  %v238 = vmul.f32 %v227, %v231
  %v239 = vmul.f32 %v228, %v231
  %v240 = vmul.f32 %v229, %v231
  %v242 = vperm.slane %v44, 0
  %v244 = vadd.f32 %v233, %v242
  %v245 = vadd.f32 %v234, %v242
  %v246 = vadd.f32 %v235, %v242
  %v247 = vadd.f32 %v236, %v242
  %v248 = vadd.f32 %v237, %v242
  %v249 = vadd.f32 %v238, %v242
  %v250 = vadd.f32 %v239, %v242
  %v251 = vadd.f32 %v240, %v242
  %v252 = vpack.c.bf16 %v245, %v244
  %v253 = vpack.c.bf16 %v247, %v246
  %v254 = vpack.c.bf16 %v249, %v248
  %v255 = vpack.c.bf16 %v251, %v250
  %v256 = vld [vmem:[%s1] sm:$0xf]
  %v257 = vld [vmem:[%s1 + $0x4] sm:$0xf]
  %v258 = vld [vmem:[%s1 + $0x8] sm:$0xf]
  %v259 = vld [vmem:[%s1 + $0xc] sm:$0xf]
  %v260 = vld [vmem:[%s2] sm:$0x1]
  %v262 = vperm.slane %v260, 0
  %v268 = vunpack.c.l.b16 %v256
  %v269 = vunpack.c.l.b16 %v257
  %v270 = vunpack.c.l.b16 %v258
  %v271 = vunpack.c.l.b16 %v259
  %v272 = vpack.c.b16 %v269, %v268
  %v273 = vpack.c.b16 %v271, %v270
  %v277 = vsel %vm45, %v252, 0
  %v280 = vsel %vm45, %v253, 0
  %v283 = vsel %vm45, %v254, 0
  %v286 = vsel %vm45, %v255, 0
  %288 = vmatpush.bf16.msra.mxu0 0
  %289 = vmatpush.bf16.msra.mxu0 0
  %290 = vmatpush.bf16.msra.mxu0 0
  %291 = vmatpush.bf16.msra.mxu0 0
  %292 = vmatpush.bf16.msra.mxu0 0
  %293 = vmatpush.bf16.msra.mxu0 0
  %294 = vmatpush.bf16.msra.mxu0 %v273
  %295 = vmatpush.bf16.msra.mxu0 %v272
  %296 = vmatmul.bf16.gmra.mxu0 %v277
  %v297 = vpop.f32.mrf.mxu0
  %v298 = vadd.f32 %v262, %v297
  %v299 = vpop.f32.mrf.mxu0
  %v300 = vadd.f32 %v262, %v299
  %301 = vmatmul.bf16.gmra.mxu0 %v280
  %v302 = vpop.f32.mrf.mxu0
  %v303 = vadd.f32 %v262, %v302
  %v304 = vpop.f32.mrf.mxu0
  %v305 = vadd.f32 %v262, %v304
  %306 = vmatmul.bf16.gmra.mxu0 %v283
  %v307 = vpop.f32.mrf.mxu0
  %v308 = vadd.f32 %v262, %v307
  %v309 = vpop.f32.mrf.mxu0
  %v310 = vadd.f32 %v262, %v309
  %311 = vmatmul.bf16.gmra.mxu0 %v286
  %v312 = vpop.f32.mrf.mxu0
  %v313 = vadd.f32 %v262, %v312
  %v314 = vpop.f32.mrf.mxu0
  %v315 = vadd.f32 %v262, %v314
  %316 = vdwg.mxu0
  %v317 = vmul.f32 %v298, %v298
  %v318 = vmul.f32 %v300, %v300
  %v319 = vmul.f32 %v303, %v303
  %v320 = vmul.f32 %v305, %v305
  %v321 = vmul.f32 %v308, %v308
  %v322 = vmul.f32 %v310, %v310
  %v323 = vmul.f32 %v313, %v313
  %v324 = vmul.f32 %v315, %v315
  %v325 = vmul.f32 %v298, %v317
  %v326 = vmul.f32 %v300, %v318
  %v327 = vmul.f32 %v303, %v319
  %v328 = vmul.f32 %v305, %v320
  %v329 = vmul.f32 %v308, %v321
  %v330 = vmul.f32 %v310, %v322
  %v331 = vmul.f32 %v313, %v323
  %v332 = vmul.f32 %v315, %v324
  %v333 = vmul.f32 %v325, 0.044715
  %v334 = vmul.f32 %v326, 0.044715
  %v335 = vmul.f32 %v327, 0.044715
  %v336 = vmul.f32 %v328, 0.044715
  %v337 = vmul.f32 %v329, 0.044715
  %v338 = vmul.f32 %v330, 0.044715
  %v339 = vmul.f32 %v331, 0.044715
  %v340 = vmul.f32 %v332, 0.044715
  %v341 = vadd.f32 %v298, %v333
  %v342 = vadd.f32 %v300, %v334
  %v343 = vadd.f32 %v303, %v335
  %v344 = vadd.f32 %v305, %v336
  %v345 = vadd.f32 %v308, %v337
  %v346 = vadd.f32 %v310, %v338
  %v347 = vadd.f32 %v313, %v339
  %v348 = vadd.f32 %v315, %v340
  %v349 = vmul.f32 %v341, 0.7978846
  %v350 = vmul.f32 %v342, 0.7978846
  %v351 = vmul.f32 %v343, 0.7978846
  %v352 = vmul.f32 %v344, 0.7978846
  %v353 = vmul.f32 %v345, 0.7978846
  %v354 = vmul.f32 %v346, 0.7978846
  %v355 = vmul.f32 %v347, 0.7978846
  %v356 = vmul.f32 %v348, 0.7978846
  %v357 = vtanh.pop %v349
  %v358 = vtanh.pop %v350
  %v359 = vtanh.pop %v351
  %v360 = vtanh.pop %v352
  %v361 = vtanh.pop %v353
  %v362 = vtanh.pop %v354
  %v363 = vtanh.pop %v355
  %v364 = vtanh.pop %v356
  %v365 = vadd.f32 %v357, 1.0
  %v366 = vadd.f32 %v358, 1.0
  %v367 = vadd.f32 %v359, 1.0
  %v368 = vadd.f32 %v360, 1.0
  %v369 = vadd.f32 %v361, 1.0
  %v370 = vadd.f32 %v362, 1.0
  %v371 = vadd.f32 %v363, 1.0
  %v372 = vadd.f32 %v364, 1.0
  %v373 = vmul.f32 %v365, 0.5
  %v374 = vmul.f32 %v366, 0.5
  %v375 = vmul.f32 %v367, 0.5
  %v376 = vmul.f32 %v368, 0.5
  %v377 = vmul.f32 %v369, 0.5
  %v378 = vmul.f32 %v370, 0.5
  %v379 = vmul.f32 %v371, 0.5
  %v380 = vmul.f32 %v372, 0.5
  %v381 = vmul.f32 %v298, %v373
  %v382 = vmul.f32 %v300, %v374
  %v383 = vmul.f32 %v303, %v375
  %v384 = vmul.f32 %v305, %v376
  %v385 = vmul.f32 %v308, %v377
  %v386 = vmul.f32 %v310, %v378
  %v387 = vmul.f32 %v313, %v379
  %v388 = vmul.f32 %v315, %v380
  %v389 = vpack.c.bf16 %v382, %v381
  %v390 = vpack.c.bf16 %v384, %v383
  %v391 = vpack.c.bf16 %v386, %v385
  %v392 = vpack.c.bf16 %v388, %v387
  %v393 = vld [vmem:[%s3] sm:$0xf]
  %v394 = vld [vmem:[%s3 + $0x4] sm:$0xf]
  %v395 = vld [vmem:[%s3 + $0x8] sm:$0xf]
  %v396 = vld [vmem:[%s3 + $0xc] sm:$0xf]
  %v397 = vld [vmem:[%s3 + $0x10] sm:$0xf]
  %v398 = vld [vmem:[%s3 + $0x14] sm:$0xf]
  %v399 = vld [vmem:[%s3 + $0x18] sm:$0xf]
  %v400 = vld [vmem:[%s3 + $0x1c] sm:$0xf]
  %v401 = vld [vmem:[%s3 + $0x20] sm:$0xf]
  %v402 = vld [vmem:[%s3 + $0x24] sm:$0xf]
  %v403 = vld [vmem:[%s3 + $0x28] sm:$0xf]
  %v404 = vld [vmem:[%s3 + $0x2c] sm:$0xf]
  %v405 = vld [vmem:[%s3 + $0x30] sm:$0xf]
  %v406 = vld [vmem:[%s3 + $0x34] sm:$0xf]
  %v407 = vld [vmem:[%s3 + $0x38] sm:$0xf]
  %v408 = vld [vmem:[%s3 + $0x3c] sm:$0xf]
  %v409 = vld [vmem:[%s4] sm:$0x1]
  %v411 = vperm.slane %v409, 0
  %v429 = vunpack.c.l.b16 %v393
  %v430 = vunpack.c.l.b16 %v394
  %v431 = vunpack.c.l.b16 %v395
  %v432 = vunpack.c.l.b16 %v396
  %v433 = vunpack.c.l.b16 %v397
  %v434 = vunpack.c.l.b16 %v398
  %v435 = vunpack.c.l.b16 %v399
  %v436 = vunpack.c.l.b16 %v400
  %v437 = vunpack.c.l.b16 %v401
  %v438 = vunpack.c.l.b16 %v402
  %v439 = vunpack.c.l.b16 %v403
  %v440 = vunpack.c.l.b16 %v404
  %v441 = vunpack.c.l.b16 %v405
  %v442 = vunpack.c.l.b16 %v406
  %v443 = vunpack.c.l.b16 %v407
  %v444 = vunpack.c.l.b16 %v408
  %v445 = vpack.c.b16 %v430, %v429
  %v446 = vpack.c.b16 %v432, %v431
  %v447 = vpack.c.b16 %v434, %v433
  %v448 = vpack.c.b16 %v436, %v435
  %v449 = vpack.c.b16 %v438, %v437
  %v450 = vpack.c.b16 %v440, %v439
  %v451 = vpack.c.b16 %v442, %v441
  %v452 = vpack.c.b16 %v444, %v443
  %461 = vmatpush.bf16.msra.mxu0 %v452
  %462 = vmatpush.bf16.msra.mxu0 %v451
  %463 = vmatpush.bf16.msra.mxu0 %v450
  %464 = vmatpush.bf16.msra.mxu0 %v449
  %465 = vmatpush.bf16.msra.mxu0 %v448
  %466 = vmatpush.bf16.msra.mxu0 %v447
  %467 = vmatpush.bf16.msra.mxu0 %v446
  %468 = vmatpush.bf16.msra.mxu0 %v445
  %469 = vmatmul.bf16.gmra.mxu0 %v389
  %v470 = vpop.f32.mrf.mxu0
  %v471 = vadd.f32 %v411, %v470
  %v472 = vpop.f32.mrf.mxu0
  %v473 = vadd.f32 %v411, %v472
  %474 = vmatmul.bf16.gmra.mxu0 %v390
  %v475 = vpop.f32.mrf.mxu0
  %v476 = vadd.f32 %v411, %v475
  %v477 = vpop.f32.mrf.mxu0
  %v478 = vadd.f32 %v411, %v477
  %479 = vmatmul.bf16.gmra.mxu0 %v391
  %v480 = vpop.f32.mrf.mxu0
  %v481 = vadd.f32 %v411, %v480
  %v482 = vpop.f32.mrf.mxu0
  %v483 = vadd.f32 %v411, %v482
  %484 = vmatmul.bf16.gmra.mxu0 %v392
  %v485 = vpop.f32.mrf.mxu0
  %v486 = vadd.f32 %v411, %v485
  %v487 = vpop.f32.mrf.mxu0
  %v488 = vadd.f32 %v411, %v487
  %489 = vdwg.mxu0
  %v490 = vadd.f32 %v471, %v35
  %v491 = vadd.f32 %v473, %v36
  %v492 = vadd.f32 %v476, %v37
  %v493 = vadd.f32 %v478, %v38
  %v494 = vadd.f32 %v481, %v39
  %v495 = vadd.f32 %v483, %v40
  %v496 = vadd.f32 %v486, %v41
  %v497 = vadd.f32 %v488, %v42
  %v498 = vpack.c.bf16 %v490, %v490
  %v499 = vpack.c.bf16 %v491, %v491
  %v500 = vpack.c.bf16 %v492, %v492
  %v501 = vpack.c.bf16 %v493, %v493
  %v502 = vpack.c.bf16 %v494, %v494
  %v503 = vpack.c.bf16 %v495, %v495
  %v504 = vpack.c.bf16 %v496, %v496
  %v505 = vpack.c.bf16 %v497, %v497
  %506 = vst.msk [vmem:[%s7] sm:$0xf] %vm67, %v498
  %507 = vst.msk [vmem:[%s7 + $0x4] sm:$0xf] %vm67, %v499
  %508 = vst.msk [vmem:[%s7 + $0x8] sm:$0xf] %vm67, %v500
  %509 = vst.msk [vmem:[%s7 + $0xc] sm:$0xf] %vm67, %v501
  %510 = vst.msk [vmem:[%s7 + $0x10] sm:$0xf] %vm67, %v502
  %511 = vst.msk [vmem:[%s7 + $0x14] sm:$0xf] %vm67, %v503
  %512 = vst.msk [vmem:[%s7 + $0x18] sm:$0xf] %vm67, %v504
  %vm513 = vcmask 254976
  %514 = vst.msk [vmem:[%s7 + $0x1c] sm:$0x3] %vm513, %v505
  // Predicated region
  $region30: #{_lambda_.11} parent=0 // pred_check
    _
  $region31: #{_lambda_.11} parent=0 // pred_check_branch
    %516 = sbr.rel (0) target = $region33
  $region32: #{_lambda_.11} parent=0 // pred_region
    _
  $region33: #{_lambda_.11} parent=0 // pred_fallthru
    _
  // Predicated region
  $region34: #{_lambda_.11} parent=0 // pred_check
    _
  $region35: #{_lambda_.11} parent=0 // pred_check_branch
    %518 = sbr.rel (0) target = $region37
  $region36: #{_lambda_.11} parent=0 // pred_region
    _
  $region37: #{_lambda_.11} parent=0 // pred_fallthru
    _

// kernel: _lambda_.8
$region0: #{_lambda_.8}
  #allocation0 [shape = 'u32[]', space=smem, size = 0x4, offset = 0x4, fixed_abs, tag = 'smem constant byte address 0x4 - core index']
  #allocation1 [shape = 'u32[72,128]{1,0:T(1,128)}', space=vmem, size = 0x9000, scoped, tag = 'internal scratch']
  %s0 = inlined_call_operand.vmem [shape: bf16[2,4,768], index: 0, kind: input, shape index: {}]
  %s1 = inlined_call_operand.vmem [shape: bf16[2,1,16], index: 1, kind: input, shape index: {}]
  %s2 = inlined_call_operand.vmem [shape: bf16[16,16], index: 2, kind: input, shape index: {}]
  %s3 = inlined_call_operand.vmem [shape: f32[1,16], index: 3, kind: input, shape index: {}]
  %s4 = inlined_call_operand.vmem [shape: bf16[16,16], index: 4, kind: input, shape index: {}]
  %s5 = inlined_call_operand.vmem [shape: f32[1,16], index: 5, kind: input, shape index: {}]
  %s6 = inlined_call_operand.vmem [shape: bf16[16,32], index: 6, kind: input, shape index: {}]
  %s7 = inlined_call_operand.vmem [shape: f32[1,32], index: 7, kind: input, shape index: {}]
  %s8 = inlined_call_operand.vmem [shape: bf16[768,32], index: 8, kind: input, shape index: {}]
  %s9 = inlined_call_operand.vmem [shape: f32[1,32], index: 9, kind: input, shape index: {}]
  %s10 = inlined_call_operand.vmem [shape: f32[1,32], index: 10, kind: input, shape index: {}]
  %s11 = inlined_call_operand.vmem [shape: f32[1,32], index: 11, kind: input, shape index: {}]
  %s12 = inlined_call_operand.vmem [shape: bf16[2,4,32], index: 12, kind: output, shape index: {}]
  %s13 = sld [smem:[#allocation0]]
  $region81: #{_lambda_.8} parent=0
    _
  %s15 = ssub.s32 1, %s13
  %s16 = scalar_select 0, %s15, %s13
  loop: start=0, step=1, limit=4
  $region2: #{_lambda_.8} parent=0 // loop_pre_header
    _
  $region3: #{_lambda_.8} parent=0 // loop_header
    %s18 = sphi 0, %s22
    %p19 = scmp.ge.s32.totalorder %s18, 4
    %s28 = sphi 0, %s30
    %s31 = sphi 0, %s28
    %s32 = sphi 0, %s31
    %s48 = sphi 0, %s32
    %s54 = sphi 0, %s56
    %s57 = sphi 0, %s54
    %s58 = sphi 0, %s57
    %s74 = sphi 0, %s58
    %s78 = sphi 0, %s78
    %s80 = sphi 0, %s78
    %s81 = sphi 0, %s80
    %s95 = sphi 0, %s81
    %s99 = sphi 0, %s99
    %s101 = sphi 0, %s99
    %s102 = sphi 0, %s101
    %s116 = sphi 0, %s102
    %s120 = sphi 0, %s120
    %s122 = sphi 0, %s120
    %s123 = sphi 0, %s122
    %s137 = sphi 0, %s123
    %s141 = sphi 0, %s141
    %s143 = sphi 0, %s141
    %s144 = sphi 0, %s143
    %s158 = sphi 0, %s144
    %s162 = sphi 0, %s162
    %s164 = sphi 0, %s162
    %s165 = sphi 0, %s164
    %s179 = sphi 0, %s165
    %s183 = sphi 0, %s183
    %s185 = sphi 0, %s183
    %s186 = sphi 0, %s185
    %s200 = sphi 0, %s186
    %s204 = sphi 0, %s204
    %s206 = sphi 0, %s204
    %s207 = sphi 0, %s206
    %s221 = sphi 0, %s207
    %s225 = sphi 0, %s225
    %s227 = sphi 0, %s225
    %s228 = sphi 0, %s227
    %s242 = sphi 0, %s228
    %s246 = sphi 0, %s246
    %s248 = sphi 0, %s246
    %s249 = sphi 0, %s248
    %s263 = sphi 0, %s249
    %s267 = sphi 0, %s267
    %s269 = sphi 0, %s267
    %s270 = sphi 0, %s269
    %s284 = sphi 0, %s270
    %s290 = sphi 0, %s292
    %s293 = sphi 0, %s290
    %s294 = sphi 0, %s293
    %s310 = sphi 0, %s294
  $region4: #{_lambda_.8} parent=0 // loop_header_branch
    %21 = sbr.rel (%p19) target = $region8
  $region5: #{_lambda_.8} parent=0 // loop_body
    %s23 = ssub.s32 %s18, 1
    %s24 = ssub.s32 %s18, 2
    %s25 = sadd.s32 %s18, 1
    %s26 = ssub.s32 %s18, %s25
    %p27 = scmp.eq.s32.totalorder %s26, 0
    %s29 = sadd.s32 %s28, 1
    %s30 = scalar_select %p27, %s28, %s29
    %p33 = pneg %p27
    %p34 = scmp.eq.s32.totalorder %s18, 1
    %p35 = por %p33, %p34
    %p36 = scmp.ne.s32.totalorder %s28, %s31
    %p37 = scmp.eq.s32.totalorder %s18, 0
    %p38 = por %p36, %p37
    %p39 = scmp.ne.s32.totalorder %s28, %s31
    %p40 = scmp.eq.s32.totalorder %s23, 1
    %p41 = por %p39, %p40
    %p42 = scmp.ne.s32.totalorder %s31, %s32
    %p43 = scmp.eq.s32.totalorder %s23, 0
    %p44 = por %p42, %p43
    %p45 = scmp.ne.s32.totalorder %s31, %s32
    %p46 = scmp.eq.s32.totalorder %s24, 1
    %p47 = por %p45, %p46
    %p49 = scmp.ne.s32.totalorder %s32, %s48
    %p50 = scmp.eq.s32.totalorder %s24, 0
    %p51 = por %p49, %p50
    %s52 = ssub.s32 %s18, %s25
    %p53 = scmp.eq.s32.totalorder %s52, 0
    %s55 = sadd.s32 %s54, 1
    %s56 = scalar_select %p53, %s54, %s55
    %p59 = pneg %p53
    %p60 = scmp.eq.s32.totalorder %s18, 1
    %p61 = por %p59, %p60
    %p62 = scmp.ne.s32.totalorder %s54, %s57
    %p63 = scmp.eq.s32.totalorder %s18, 0
    %p64 = por %p62, %p63
    %p65 = scmp.ne.s32.totalorder %s54, %s57
    %p66 = scmp.eq.s32.totalorder %s23, 1
    %p67 = por %p65, %p66
    %p68 = scmp.ne.s32.totalorder %s57, %s58
    %p69 = scmp.eq.s32.totalorder %s23, 0
    %p70 = por %p68, %p69
    %p71 = scmp.ne.s32.totalorder %s57, %s58
    %p72 = scmp.eq.s32.totalorder %s24, 1
    %p73 = por %p71, %p72
    %p75 = scmp.ne.s32.totalorder %s58, %s74
    %p76 = scmp.eq.s32.totalorder %s24, 0
    %p77 = por %p75, %p76
    %s79 = sadd.s32 %s78, 1
    %p82 = scmp.eq.s32.totalorder %s18, 1
    %p83 = scmp.ne.s32.totalorder %s78, %s80
    %p84 = scmp.eq.s32.totalorder %s18, 0
    %p85 = por %p83, %p84
    %p86 = scmp.ne.s32.totalorder %s78, %s80
    %p87 = scmp.eq.s32.totalorder %s23, 1
    %p88 = por %p86, %p87
    %p89 = scmp.ne.s32.totalorder %s80, %s81
    %p90 = scmp.eq.s32.totalorder %s23, 0
    %p91 = por %p89, %p90
    %p92 = scmp.ne.s32.totalorder %s80, %s81
    %p93 = scmp.eq.s32.totalorder %s24, 1
    %p94 = por %p92, %p93
    %p96 = scmp.ne.s32.totalorder %s81, %s95
    %p97 = scmp.eq.s32.totalorder %s24, 0
    %p98 = por %p96, %p97
    %s100 = sadd.s32 %s99, 1
    %p103 = scmp.eq.s32.totalorder %s18, 1
    %p104 = scmp.ne.s32.totalorder %s99, %s101
    %p105 = scmp.eq.s32.totalorder %s18, 0
    %p106 = por %p104, %p105
    %p107 = scmp.ne.s32.totalorder %s99, %s101
    %p108 = scmp.eq.s32.totalorder %s23, 1
    %p109 = por %p107, %p108
    %p110 = scmp.ne.s32.totalorder %s101, %s102
    %p111 = scmp.eq.s32.totalorder %s23, 0
    %p112 = por %p110, %p111
    %p113 = scmp.ne.s32.totalorder %s101, %s102
    %p114 = scmp.eq.s32.totalorder %s24, 1
    %p115 = por %p113, %p114
    %p117 = scmp.ne.s32.totalorder %s102, %s116
    %p118 = scmp.eq.s32.totalorder %s24, 0
    %p119 = por %p117, %p118
    %s121 = sadd.s32 %s120, 1
    %p124 = scmp.eq.s32.totalorder %s18, 1
    %p125 = scmp.ne.s32.totalorder %s120, %s122
    %p126 = scmp.eq.s32.totalorder %s18, 0
    %p127 = por %p125, %p126
    %p128 = scmp.ne.s32.totalorder %s120, %s122
    %p129 = scmp.eq.s32.totalorder %s23, 1
    %p130 = por %p128, %p129
    %p131 = scmp.ne.s32.totalorder %s122, %s123
    %p132 = scmp.eq.s32.totalorder %s23, 0
    %p133 = por %p131, %p132
    %p134 = scmp.ne.s32.totalorder %s122, %s123
    %p135 = scmp.eq.s32.totalorder %s24, 1
    %p136 = por %p134, %p135
    %p138 = scmp.ne.s32.totalorder %s123, %s137
    %p139 = scmp.eq.s32.totalorder %s24, 0
    %p140 = por %p138, %p139
    %s142 = sadd.s32 %s141, 1
    %p145 = scmp.eq.s32.totalorder %s18, 1
    %p146 = scmp.ne.s32.totalorder %s141, %s143
    %p147 = scmp.eq.s32.totalorder %s18, 0
    %p148 = por %p146, %p147
    %p149 = scmp.ne.s32.totalorder %s141, %s143
    %p150 = scmp.eq.s32.totalorder %s23, 1
    %p151 = por %p149, %p150
    %p152 = scmp.ne.s32.totalorder %s143, %s144
    %p153 = scmp.eq.s32.totalorder %s23, 0
    %p154 = por %p152, %p153
    %p155 = scmp.ne.s32.totalorder %s143, %s144
    %p156 = scmp.eq.s32.totalorder %s24, 1
    %p157 = por %p155, %p156
    %p159 = scmp.ne.s32.totalorder %s144, %s158
    %p160 = scmp.eq.s32.totalorder %s24, 0
    %p161 = por %p159, %p160
    %s163 = sadd.s32 %s162, 1
    %p166 = scmp.eq.s32.totalorder %s18, 1
    %p167 = scmp.ne.s32.totalorder %s162, %s164
    %p168 = scmp.eq.s32.totalorder %s18, 0
    %p169 = por %p167, %p168
    %p170 = scmp.ne.s32.totalorder %s162, %s164
    %p171 = scmp.eq.s32.totalorder %s23, 1
    %p172 = por %p170, %p171
    %p173 = scmp.ne.s32.totalorder %s164, %s165
    %p174 = scmp.eq.s32.totalorder %s23, 0
    %p175 = por %p173, %p174
    %p176 = scmp.ne.s32.totalorder %s164, %s165
    %p177 = scmp.eq.s32.totalorder %s24, 1
    %p178 = por %p176, %p177
    %p180 = scmp.ne.s32.totalorder %s165, %s179
    %p181 = scmp.eq.s32.totalorder %s24, 0
    %p182 = por %p180, %p181
    %s184 = sadd.s32 %s183, 1
    %p187 = scmp.eq.s32.totalorder %s18, 1
    %p188 = scmp.ne.s32.totalorder %s183, %s185
    %p189 = scmp.eq.s32.totalorder %s18, 0
    %p190 = por %p188, %p189
    %p191 = scmp.ne.s32.totalorder %s183, %s185
    %p192 = scmp.eq.s32.totalorder %s23, 1
    %p193 = por %p191, %p192
    %p194 = scmp.ne.s32.totalorder %s185, %s186
    %p195 = scmp.eq.s32.totalorder %s23, 0
    %p196 = por %p194, %p195
    %p197 = scmp.ne.s32.totalorder %s185, %s186
    %p198 = scmp.eq.s32.totalorder %s24, 1
    %p199 = por %p197, %p198
    %p201 = scmp.ne.s32.totalorder %s186, %s200
    %p202 = scmp.eq.s32.totalorder %s24, 0
    %p203 = por %p201, %p202
    %s205 = sadd.s32 %s204, 1
    %p208 = scmp.eq.s32.totalorder %s18, 1
    %p209 = scmp.ne.s32.totalorder %s204, %s206
    %p210 = scmp.eq.s32.totalorder %s18, 0
    %p211 = por %p209, %p210
    %p212 = scmp.ne.s32.totalorder %s204, %s206
    %p213 = scmp.eq.s32.totalorder %s23, 1
    %p214 = por %p212, %p213
    %p215 = scmp.ne.s32.totalorder %s206, %s207
    %p216 = scmp.eq.s32.totalorder %s23, 0
    %p217 = por %p215, %p216
    %p218 = scmp.ne.s32.totalorder %s206, %s207
    %p219 = scmp.eq.s32.totalorder %s24, 1
    %p220 = por %p218, %p219
    %p222 = scmp.ne.s32.totalorder %s207, %s221
    %p223 = scmp.eq.s32.totalorder %s24, 0
    %p224 = por %p222, %p223
    %s226 = sadd.s32 %s225, 1
    %p229 = scmp.eq.s32.totalorder %s18, 1
    %p230 = scmp.ne.s32.totalorder %s225, %s227
    %p231 = scmp.eq.s32.totalorder %s18, 0
    %p232 = por %p230, %p231
    %p233 = scmp.ne.s32.totalorder %s225, %s227
    %p234 = scmp.eq.s32.totalorder %s23, 1
    %p235 = por %p233, %p234
    %p236 = scmp.ne.s32.totalorder %s227, %s228
    %p237 = scmp.eq.s32.totalorder %s23, 0
    %p238 = por %p236, %p237
    %p239 = scmp.ne.s32.totalorder %s227, %s228
    %p240 = scmp.eq.s32.totalorder %s24, 1
    %p241 = por %p239, %p240
    %p243 = scmp.ne.s32.totalorder %s228, %s242
    %p244 = scmp.eq.s32.totalorder %s24, 0
    %p245 = por %p243, %p244
    %s247 = sadd.s32 %s246, 1
    %p250 = scmp.eq.s32.totalorder %s18, 1
    %p251 = scmp.ne.s32.totalorder %s246, %s248
    %p252 = scmp.eq.s32.totalorder %s18, 0
    %p253 = por %p251, %p252
    %p254 = scmp.ne.s32.totalorder %s246, %s248
    %p255 = scmp.eq.s32.totalorder %s23, 1
    %p256 = por %p254, %p255
    %p257 = scmp.ne.s32.totalorder %s248, %s249
    %p258 = scmp.eq.s32.totalorder %s23, 0
    %p259 = por %p257, %p258
    %p260 = scmp.ne.s32.totalorder %s248, %s249
    %p261 = scmp.eq.s32.totalorder %s24, 1
    %p262 = por %p260, %p261
    %p264 = scmp.ne.s32.totalorder %s249, %s263
    %p265 = scmp.eq.s32.totalorder %s24, 0
    %p266 = por %p264, %p265
    %s268 = sadd.s32 %s267, 1
    %p271 = scmp.eq.s32.totalorder %s18, 1
    %p272 = scmp.ne.s32.totalorder %s267, %s269
    %p273 = scmp.eq.s32.totalorder %s18, 0
    %p274 = por %p272, %p273
    %p275 = scmp.ne.s32.totalorder %s267, %s269
    %p276 = scmp.eq.s32.totalorder %s23, 1
    %p277 = por %p275, %p276
    %p278 = scmp.ne.s32.totalorder %s269, %s270
    %p279 = scmp.eq.s32.totalorder %s23, 0
    %p280 = por %p278, %p279
    %p281 = scmp.ne.s32.totalorder %s269, %s270
    %p282 = scmp.eq.s32.totalorder %s24, 1
    %p283 = por %p281, %p282
    %p285 = scmp.ne.s32.totalorder %s270, %s284
    %p286 = scmp.eq.s32.totalorder %s24, 0
    %p287 = por %p285, %p286
    %s288 = ssub.s32 %s18, %s25
    %p289 = scmp.eq.s32.totalorder %s288, 0
    %s291 = sadd.s32 %s290, 1
    %s292 = scalar_select %p289, %s290, %s291
    %p295 = pneg %p289
    %p296 = scmp.eq.s32.totalorder %s18, 1
    %p297 = por %p295, %p296
    %p298 = scmp.ne.s32.totalorder %s290, %s293
    %p299 = scmp.eq.s32.totalorder %s18, 0
    %p300 = por %p298, %p299
    %p301 = scmp.ne.s32.totalorder %s290, %s293
    %p302 = scmp.eq.s32.totalorder %s23, 1
    %p303 = por %p301, %p302
    %p304 = scmp.ne.s32.totalorder %s293, %s294
    %p305 = scmp.eq.s32.totalorder %s23, 0
    %p306 = por %p304, %p305
    %p307 = scmp.ne.s32.totalorder %s293, %s294
    %p308 = scmp.eq.s32.totalorder %s24, 1
    %p309 = por %p307, %p308
    %p311 = scmp.ne.s32.totalorder %s294, %s310
    %p312 = scmp.eq.s32.totalorder %s24, 0
    %p313 = por %p311, %p312
    %p314 = scmp.le.s32.totalorder 1, %s18
    %p315 = scmp.lt.s32.totalorder %s18, 3
    %p316 = pnand %p314, %p315
    %p317 = pneg %p316
    // Predicated region
    $region9: #{_lambda_.8} parent=5 // pred_check
      _
    $region10: #{_lambda_.8} parent=5 // pred_check_branch
      %319 = sbr.rel (%p316) target = $region12
    $region11: #{_lambda_.8} parent=5 // pred_region
      %s320 = ssub.s32 %s18, 1
      // Predicated region
      $region13: #{_lambda_.8} parent=11 // pred_check
        %p321 = pneg %p91
      $region14: #{_lambda_.8} parent=11 // pred_check_branch
        %323 = sbr.rel (%p321) target = $region16
      $region15: #{_lambda_.8} parent=11 // pred_region
        _
      $region16: #{_lambda_.8} parent=11 // pred_fallthru
        _
      // Predicated region
      $region17: #{_lambda_.8} parent=11 // pred_check
        %p324 = pneg %p112
      $region18: #{_lambda_.8} parent=11 // pred_check_branch
        %326 = sbr.rel (%p324) target = $region20
      $region19: #{_lambda_.8} parent=11 // pred_region
        _
      $region20: #{_lambda_.8} parent=11 // pred_fallthru
        _
      // Predicated region
      $region21: #{_lambda_.8} parent=11 // pred_check
        %p327 = pneg %p133
      $region22: #{_lambda_.8} parent=11 // pred_check_branch
        %329 = sbr.rel (%p327) target = $region24
      $region23: #{_lambda_.8} parent=11 // pred_region
        _
      $region24: #{_lambda_.8} parent=11 // pred_fallthru
        _
      // Predicated region
      $region25: #{_lambda_.8} parent=11 // pred_check
        %p330 = pneg %p154
      $region26: #{_lambda_.8} parent=11 // pred_check_branch
        %332 = sbr.rel (%p330) target = $region28
      $region27: #{_lambda_.8} parent=11 // pred_region
        _
      $region28: #{_lambda_.8} parent=11 // pred_fallthru
        _
      // Predicated region
      $region29: #{_lambda_.8} parent=11 // pred_check
        %p333 = pneg %p175
      $region30: #{_lambda_.8} parent=11 // pred_check_branch
        %335 = sbr.rel (%p333) target = $region32
      $region31: #{_lambda_.8} parent=11 // pred_region
        _
      $region32: #{_lambda_.8} parent=11 // pred_fallthru
        _
      // Predicated region
      $region33: #{_lambda_.8} parent=11 // pred_check
        %p336 = pneg %p196
      $region34: #{_lambda_.8} parent=11 // pred_check_branch
        %338 = sbr.rel (%p336) target = $region36
      $region35: #{_lambda_.8} parent=11 // pred_region
        _
      $region36: #{_lambda_.8} parent=11 // pred_fallthru
        _
      // Predicated region
      $region37: #{_lambda_.8} parent=11 // pred_check
        %p339 = pneg %p217
      $region38: #{_lambda_.8} parent=11 // pred_check_branch
        %341 = sbr.rel (%p339) target = $region40
      $region39: #{_lambda_.8} parent=11 // pred_region
        _
      $region40: #{_lambda_.8} parent=11 // pred_fallthru
        _
      // Predicated region
      $region41: #{_lambda_.8} parent=11 // pred_check
        %p342 = pneg %p238
      $region42: #{_lambda_.8} parent=11 // pred_check_branch
        %344 = sbr.rel (%p342) target = $region44
      $region43: #{_lambda_.8} parent=11 // pred_region
        _
      $region44: #{_lambda_.8} parent=11 // pred_fallthru
        _
      // Predicated region
      $region45: #{_lambda_.8} parent=11 // pred_check
        %p345 = pneg %p259
      $region46: #{_lambda_.8} parent=11 // pred_check_branch
        %347 = sbr.rel (%p345) target = $region48
      $region47: #{_lambda_.8} parent=11 // pred_region
        _
      $region48: #{_lambda_.8} parent=11 // pred_fallthru
        _
      // Predicated region
      $region49: #{_lambda_.8} parent=11 // pred_check
        %p348 = pneg %p280
      $region50: #{_lambda_.8} parent=11 // pred_check_branch
        %350 = sbr.rel (%p348) target = $region52
      $region51: #{_lambda_.8} parent=11 // pred_region
        _
      $region52: #{_lambda_.8} parent=11 // pred_fallthru
        _
    $region12: #{_lambda_.8} parent=5 // pred_fallthru
      _
    %p351 = scmp.lt.s32.totalorder %s18, 2
    // Predicated region
    $region53: #{_lambda_.8} parent=5 // pred_check
      %p352 = pneg %p351
    $region54: #{_lambda_.8} parent=5 // pred_check_branch
      %354 = sbr.rel (%p352) target = $region56
    $region55: #{_lambda_.8} parent=5 // pred_region
      // Predicated region
      $region57: #{_lambda_.8} parent=55 // pred_check
        %p355 = pneg %p38
      $region58: #{_lambda_.8} parent=55 // pred_check_branch
        %357 = sbr.rel (%p355) target = $region60
      $region59: #{_lambda_.8} parent=55 // pred_region
        %p358 = scmp.lt.s32.totalorder %s18, 1
        %s359 = scalar_select %p358, %s18, 1
        %s360 = smul.addr %s359, 6
        %s361 = smul.addr %s360, 2
        %s362 = scalar_lea.vmem %s0, %s361
      $region60: #{_lambda_.8} parent=55 // pred_fallthru
        _
      // Predicated region
      $region61: #{_lambda_.8} parent=55 // pred_check
        %p363 = pneg %p64
      $region62: #{_lambda_.8} parent=55 // pred_check_branch
        %365 = sbr.rel (%p363) target = $region64
      $region63: #{_lambda_.8} parent=55 // pred_region
        %p366 = scmp.lt.s32.totalorder %s18, 1
        %s367 = scalar_select %p366, %s18, 1
        %s368 = scalar_lea.vmem %s1, %s367
      $region64: #{_lambda_.8} parent=55 // pred_fallthru
        _
    $region56: #{_lambda_.8} parent=5 // pred_fallthru
      _
    %p369 = scmp.le.s32.totalorder 1, %s18
    %p370 = scmp.lt.s32.totalorder %s18, 3
    %p371 = pnand %p369, %p370
    %p372 = pneg %p371
    // Predicated region
    $region65: #{_lambda_.8} parent=5 // pred_check
      _
    $region66: #{_lambda_.8} parent=5 // pred_check_branch
      %374 = sbr.rel (%p371) target = $region68
    $region67: #{_lambda_.8} parent=5 // pred_region
      %s375 = ssub.s32 %s18, 1
      %p376 = scmp.lt.s32.totalorder %s23, 1
      %s377 = scalar_select %p376, %s23, 1
      %s378 = smul.addr %s377, 6
      %s379 = smul.addr %s378, 2
      %s380 = scalar_lea.vmem %s0, %s379
      %p381 = pneg %p44
      %p382 = pneg %p41
      %p383 = scmp.lt.s32.totalorder %s23, 1
      %s384 = scalar_select %p383, %s23, 1
      %s385 = scalar_lea.vmem %s1, %s384
      %p386 = pneg %p70
      %p387 = pneg %p67
      %p388 = pneg %p91
      %p389 = pneg %p88
      %p390 = pneg %p112
      %p391 = pneg %p109
      %p392 = pneg %p133
      %p393 = pneg %p130
      %p394 = pneg %p154
      %p395 = pneg %p151
      %p396 = pneg %p175
      %p397 = pneg %p172
      %p398 = pneg %p196
      %p399 = pneg %p193
      %p400 = pneg %p217
      %p401 = pneg %p214
      %p402 = pneg %p238
      %p403 = pneg %p235
      %p404 = pneg %p259
      %p405 = pneg %p256
      %p406 = pneg %p280
      %p407 = pneg %p277
      %p408 = pneg %p306
      %p409 = pneg %p303
      %p410 = scmp.lt.s32.totalorder %s23, 1
      %s411 = scalar_select %p410, %s23, 1
      %s412 = smul.addr %s411, 2
      %s413 = scalar_lea.vmem %s12, %s412
      %p414 = scmp.lt.s32.totalorder %s23, 1
      %s415 = scalar_select %p414, %s23, 1
      %s416 = smul.addr %s415, 6
      %s417 = smul.addr %s416, 2
      %s418 = scalar_lea.vmem %s0, %s417
      %p419 = scmp.lt.s32.totalorder %s23, 1
      %s420 = scalar_select %p419, %s23, 1
      %s421 = scalar_lea.vmem %s1, %s420
      %p422 = scmp.lt.s32.totalorder %s23, 1
      %s423 = scalar_select %p422, %s23, 1
      %s424 = smul.addr %s423, 2
      %s425 = scalar_lea.vmem %s12, %s424
      %v427 = vld [vmem:[%s421] sm:$0x1]
      %v428 = vld [vmem:[%s2] sm:$0xf]
      %v429 = vld [vmem:[%s2 + $0x4] sm:$0xf]
      %v430 = vld [vmem:[%s3] sm:$0x1]
      %v433 = vunpack.c.l.b16 %v428
      %v434 = vunpack.c.l.b16 %v429
      %v435 = vpack.c.b16 %v434, %v433
      %vm437 = vcmask 130048
      %v439 = vsel %vm437, %v427, 0
      %441 = vmatpush.bf16.msra.mxu0 0
      %442 = vmatpush.bf16.msra.mxu0 0
      %443 = vmatpush.bf16.msra.mxu0 0
      %444 = vmatpush.bf16.msra.mxu0 0
      %445 = vmatpush.bf16.msra.mxu0 0
      %446 = vmatpush.bf16.msra.mxu0 0
      %447 = vmatpush.bf16.msra.mxu0 0
      %448 = vmatpush.bf16.msra.mxu0 %v435
      %449 = vmatmul.bf16.gmra.mxu0 %v439
      %v450 = vpop.f32.mrf.mxu0
      %v451 = vadd.f32 %v430, %v450
      %v452 = vpop.f32.mrf.mxu0
      %453 = vdwg.mxu0
      %v454 = vxor.u32 %v451, 2147483648
      %v455 = vmul.f32 %v454, 1.442695
      %v456 = vpow.pop %v455
      %v457 = vadd.f32 %v456, 1.0
      %v458 = vrcp.pop %v457
      %v459 = vmul.f32 %v457, %v458
      %v460 = vsub.f32 1.0, %v459
      %v461 = vmul.f32 %v458, %v460
      %v462 = vadd.f32 %v458, %v461
      %vm463 = vweird.f32 %v457
      %vm464 = vweird.f32 %v458
      %vm465 = vmor %vm463, %vm464
      %v466 = vsel %vm465, %v458, %v462
      %v467 = vand.u32 2147483647, %v457
      %vm468 = vcmp.eq.f32.partialorder %v467, 8.507059e+37
      %v469 = vand.u32 %v457, 2147483648
      %v470 = vor.u32 1.1754944e-38, %v469
      %v471 = vsel %vm468, %v470, %v466
      %v472 = vmul.f32 1.0, %v471
      %v473 = vmul.f32 %v451, %v472
      %v474 = vpack.c.bf16 %v473, %v473
      %v475 = vld [vmem:[%s4] sm:$0xf]
      %v476 = vld [vmem:[%s4 + $0x4] sm:$0xf]
      %v477 = vld [vmem:[%s5] sm:$0x1]
      %v480 = vunpack.c.l.b16 %v475
      %v481 = vunpack.c.l.b16 %v476
      %v482 = vpack.c.b16 %v481, %v480
      %v485 = vsel %vm437, %v474, 0
      %487 = vmatpush.bf16.msra.mxu0 0
      %488 = vmatpush.bf16.msra.mxu0 0
      %489 = vmatpush.bf16.msra.mxu0 0
      %490 = vmatpush.bf16.msra.mxu0 0
      %491 = vmatpush.bf16.msra.mxu0 0
      %492 = vmatpush.bf16.msra.mxu0 0
      %493 = vmatpush.bf16.msra.mxu0 0
      %494 = vmatpush.bf16.msra.mxu0 %v482
      %495 = vmatmul.bf16.gmra.mxu0 %v485
      %v496 = vpop.f32.mrf.mxu0
      %v497 = vadd.f32 %v477, %v496
      %v498 = vpop.f32.mrf.mxu0
      %499 = vdwg.mxu0
      %v500 = vpack.c.bf16 %v497, %v497
      %v501 = vld [vmem:[%s6] sm:$0xf]
      %v502 = vld [vmem:[%s6 + $0x4] sm:$0xf]
      %v503 = vld [vmem:[%s7] sm:$0x1]
      %v506 = vunpack.c.l.b16 %v501
      %v507 = vunpack.c.l.b16 %v502
      %v508 = vpack.c.b16 %v507, %v506
      %v511 = vsel %vm437, %v500, 0
      %513 = vmatpush.bf16.msra.mxu0 0
      %514 = vmatpush.bf16.msra.mxu0 0
      %515 = vmatpush.bf16.msra.mxu0 0
      %516 = vmatpush.bf16.msra.mxu0 0
      %517 = vmatpush.bf16.msra.mxu0 0
      %518 = vmatpush.bf16.msra.mxu0 0
      %519 = vmatpush.bf16.msra.mxu0 0
      %520 = vmatpush.bf16.msra.mxu0 %v508
      %521 = vmatmul.bf16.gmra.mxu0 %v511
      %v522 = vpop.f32.mrf.mxu0
      %v523 = vadd.f32 %v503, %v522
      %v524 = vpop.f32.mrf.mxu0
      %525 = vdwg.mxu0
      %v526 = vld [vmem:[%s418] sm:$0xff]
      %v527 = vld [vmem:[%s418 + $0x8] sm:$0xf]
      %v528 = vld [vmem:[%s8] sm:$0xf]
      %v529 = vld [vmem:[%s8 + $0x4] sm:$0xf]
      %v530 = vld [vmem:[%s8 + $0x8] sm:$0xf]
      %v531 = vld [vmem:[%s8 + $0xc] sm:$0xf]
      %v532 = vld [vmem:[%s8 + $0x10] sm:$0xf]
      %v533 = vld [vmem:[%s8 + $0x14] sm:$0xf]
      %v534 = vld [vmem:[%s8 + $0x18] sm:$0xf]
      %v535 = vld [vmem:[%s8 + $0x1c] sm:$0xf]
      %v536 = vld [vmem:[%s8 + $0x20] sm:$0xf]
      %v537 = vld [vmem:[%s8 + $0x24] sm:$0xf]
      %v538 = vld [vmem:[%s8 + $0x28] sm:$0xf]
      %v539 = vld [vmem:[%s8 + $0x2c] sm:$0xf]
      %v540 = vld [vmem:[%s8 + $0x30] sm:$0xf]
      %v541 = vld [vmem:[%s8 + $0x34] sm:$0xf]
      %v542 = vld [vmem:[%s8 + $0x38] sm:$0xf]
      %v543 = vld [vmem:[%s8 + $0x3c] sm:$0xf]
      %v544 = vld [vmem:[%s8 + $0x40] sm:$0xf]
      %v545 = vld [vmem:[%s8 + $0x44] sm:$0xf]
      %v546 = vld [vmem:[%s8 + $0x48] sm:$0xf]
      %v547 = vld [vmem:[%s8 + $0x4c] sm:$0xf]
      %v548 = vld [vmem:[%s8 + $0x50] sm:$0xf]
      %v549 = vld [vmem:[%s8 + $0x54] sm:$0xf]
      %v550 = vld [vmem:[%s8 + $0x58] sm:$0xf]
      %v551 = vld [vmem:[%s8 + $0x5c] sm:$0xf]
      %v552 = vld [vmem:[%s8 + $0x60] sm:$0xf]
      %v553 = vld [vmem:[%s8 + $0x64] sm:$0xf]
      %v554 = vld [vmem:[%s8 + $0x68] sm:$0xf]
      %v555 = vld [vmem:[%s8 + $0x6c] sm:$0xf]
      %v556 = vld [vmem:[%s8 + $0x70] sm:$0xf]
      %v557 = vld [vmem:[%s8 + $0x74] sm:$0xf]
      %v558 = vld [vmem:[%s8 + $0x78] sm:$0xf]
      %v559 = vld [vmem:[%s8 + $0x7c] sm:$0xf]
      %v560 = vld [vmem:[%s8 + $0x80] sm:$0xf]
      %v561 = vld [vmem:[%s8 + $0x84] sm:$0xf]
      %v562 = vld [vmem:[%s8 + $0x88] sm:$0xf]
      %v563 = vld [vmem:[%s8 + $0x8c] sm:$0xf]
      %v564 = vld [vmem:[%s8 + $0x90] sm:$0xf]
      %v565 = vld [vmem:[%s8 + $0x94] sm:$0xf]
      %v566 = vld [vmem:[%s8 + $0x98] sm:$0xf]
      %v567 = vld [vmem:[%s8 + $0x9c] sm:$0xf]
      %v568 = vld [vmem:[%s8 + $0xa0] sm:$0xf]
      %v569 = vld [vmem:[%s8 + $0xa4] sm:$0xf]
      %v570 = vld [vmem:[%s8 + $0xa8] sm:$0xf]
      %v571 = vld [vmem:[%s8 + $0xac] sm:$0xf]
      %v572 = vld [vmem:[%s8 + $0xb0] sm:$0xf]
      %v573 = vld [vmem:[%s8 + $0xb4] sm:$0xf]
      %v574 = vld [vmem:[%s8 + $0xb8] sm:$0xf]
      %v575 = vld [vmem:[%s8 + $0xbc] sm:$0xf]
      %v576 = vld [vmem:[%s8 + $0xc0] sm:$0xf]
      %v577 = vld [vmem:[%s8 + $0xc4] sm:$0xf]
      %v578 = vld [vmem:[%s8 + $0xc8] sm:$0xf]
      %v579 = vld [vmem:[%s8 + $0xcc] sm:$0xf]
      %v580 = vld [vmem:[%s8 + $0xd0] sm:$0xf]
      %v581 = vld [vmem:[%s8 + $0xd4] sm:$0xf]
      %v582 = vld [vmem:[%s8 + $0xd8] sm:$0xf]
      %v583 = vld [vmem:[%s8 + $0xdc] sm:$0xf]
      %v584 = vld [vmem:[%s8 + $0xe0] sm:$0xf]
      %v585 = vld [vmem:[%s8 + $0xe4] sm:$0xf]
      %v586 = vld [vmem:[%s8 + $0xe8] sm:$0xf]
      %v587 = vld [vmem:[%s8 + $0xec] sm:$0xf]
      %v588 = vld [vmem:[%s8 + $0xf0] sm:$0xf]
      %v589 = vld [vmem:[%s8 + $0xf4] sm:$0xf]
      %v590 = vld [vmem:[%s8 + $0xf8] sm:$0xf]
      %v591 = vld [vmem:[%s8 + $0xfc] sm:$0xf]
      %v592 = vld [vmem:[%s8 + $0x100] sm:$0xf]
      %v593 = vld [vmem:[%s8 + $0x104] sm:$0xf]
      %v594 = vld [vmem:[%s8 + $0x108] sm:$0xf]
      %v595 = vld [vmem:[%s8 + $0x10c] sm:$0xf]
      %v596 = vld [vmem:[%s8 + $0x110] sm:$0xf]
      %v597 = vld [vmem:[%s8 + $0x114] sm:$0xf]
      %v598 = vld [vmem:[%s8 + $0x118] sm:$0xf]
      %v599 = vld [vmem:[%s8 + $0x11c] sm:$0xf]
      %v600 = vld [vmem:[%s8 + $0x120] sm:$0xf]
      %v601 = vld [vmem:[%s8 + $0x124] sm:$0xf]
      %v602 = vld [vmem:[%s8 + $0x128] sm:$0xf]
      %v603 = vld [vmem:[%s8 + $0x12c] sm:$0xf]
      %v604 = vld [vmem:[%s8 + $0x130] sm:$0xf]
      %v605 = vld [vmem:[%s8 + $0x134] sm:$0xf]
      %v606 = vld [vmem:[%s8 + $0x138] sm:$0xf]
      %v607 = vld [vmem:[%s8 + $0x13c] sm:$0xf]
      %v608 = vld [vmem:[%s8 + $0x140] sm:$0xf]
      %v609 = vld [vmem:[%s8 + $0x144] sm:$0xf]
      %v610 = vld [vmem:[%s8 + $0x148] sm:$0xf]
      %v611 = vld [vmem:[%s8 + $0x14c] sm:$0xf]
      %v612 = vld [vmem:[%s8 + $0x150] sm:$0xf]
      %v613 = vld [vmem:[%s8 + $0x154] sm:$0xf]
      %v614 = vld [vmem:[%s8 + $0x158] sm:$0xf]
      %v615 = vld [vmem:[%s8 + $0x15c] sm:$0xf]
      %v616 = vld [vmem:[%s8 + $0x160] sm:$0xf]
      %v617 = vld [vmem:[%s8 + $0x164] sm:$0xf]
      %v618 = vld [vmem:[%s8 + $0x168] sm:$0xf]
      %v619 = vld [vmem:[%s8 + $0x16c] sm:$0xf]
      %v620 = vld [vmem:[%s8 + $0x170] sm:$0xf]
      %v621 = vld [vmem:[%s8 + $0x174] sm:$0xf]
      %v622 = vld [vmem:[%s8 + $0x178] sm:$0xf]
      %v623 = vld [vmem:[%s8 + $0x17c] sm:$0xf]
      %v624 = vld [vmem:[%s9] sm:$0x1]
      %v626 = vperm.slane %v624, 0
      %629 = vst [vmem:[#allocation1] ss:$4 sm:$0xff] %v526
      %s631 = scalar_lea.vmem [#allocation1], 32
      %632 = vst [vmem:[%s631] ss:$4 sm:$0xff] %v527
      %v633 = vld.sshfl [vmem:[#allocation1] sm:$0xff pattern:$0x73625140]
      %v634 = vld.sshfl [vmem:[#allocation1 + $0x8] sm:$0xff pattern:$0x73625140]
      %v635 = vld.sshfl [vmem:[#allocation1 + $0x10] sm:$0xff pattern:$0x73625140]
      %v636 = vld.sshfl [vmem:[#allocation1 + $0x18] sm:$0xff pattern:$0x73625140]
      %v637 = vld.sshfl [vmem:[#allocation1 + $0x20] sm:$0xff pattern:$0x73625140]
      %v638 = vld.sshfl [vmem:[#allocation1 + $0x28] sm:$0xff pattern:$0x73625140]
      %v741 = vunpack.c.l.b16 %v528
      %v742 = vunpack.c.l.b16 %v529
      %v743 = vunpack.c.l.b16 %v530
      %v744 = vunpack.c.l.b16 %v531
      %v745 = vunpack.c.l.b16 %v532
      %v746 = vunpack.c.l.b16 %v533
      %v747 = vunpack.c.l.b16 %v534
      %v748 = vunpack.c.l.b16 %v535
      %v749 = vunpack.c.l.b16 %v536
      %v750 = vunpack.c.l.b16 %v537
      %v751 = vunpack.c.l.b16 %v538
      %v752 = vunpack.c.l.b16 %v539
      %v753 = vunpack.c.l.b16 %v540
      %v754 = vunpack.c.l.b16 %v541
      %v755 = vunpack.c.l.b16 %v542
      %v756 = vunpack.c.l.b16 %v543
      %v757 = vunpack.c.l.b16 %v544
      %v758 = vunpack.c.l.b16 %v545
      %v759 = vunpack.c.l.b16 %v546
      %v760 = vunpack.c.l.b16 %v547
      %v761 = vunpack.c.l.b16 %v548
      %v762 = vunpack.c.l.b16 %v549
      %v763 = vunpack.c.l.b16 %v550
      %v764 = vunpack.c.l.b16 %v551
      %v765 = vunpack.c.l.b16 %v552
      %v766 = vunpack.c.l.b16 %v553
      %v767 = vunpack.c.l.b16 %v554
      %v768 = vunpack.c.l.b16 %v555
      %v769 = vunpack.c.l.b16 %v556
      %v770 = vunpack.c.l.b16 %v557
      %v771 = vunpack.c.l.b16 %v558
      %v772 = vunpack.c.l.b16 %v559
      %v773 = vunpack.c.l.b16 %v560
      %v774 = vunpack.c.l.b16 %v561
      %v775 = vunpack.c.l.b16 %v562
      %v776 = vunpack.c.l.b16 %v563
      %v777 = vunpack.c.l.b16 %v564
      %v778 = vunpack.c.l.b16 %v565
      %v779 = vunpack.c.l.b16 %v566
      %v780 = vunpack.c.l.b16 %v567
      %v781 = vunpack.c.l.b16 %v568
      %v782 = vunpack.c.l.b16 %v569
      %v783 = vunpack.c.l.b16 %v570
      %v784 = vunpack.c.l.b16 %v571
      %v785 = vunpack.c.l.b16 %v572
      %v786 = vunpack.c.l.b16 %v573
      %v787 = vunpack.c.l.b16 %v574
      %v788 = vunpack.c.l.b16 %v575
      %v789 = vunpack.c.l.b16 %v576
      %v790 = vunpack.c.l.b16 %v577
      %v791 = vunpack.c.l.b16 %v578
      %v792 = vunpack.c.l.b16 %v579
      %v793 = vunpack.c.l.b16 %v580
      %v794 = vunpack.c.l.b16 %v581
      %v795 = vunpack.c.l.b16 %v582
      %v796 = vunpack.c.l.b16 %v583
      %v797 = vunpack.c.l.b16 %v584
      %v798 = vunpack.c.l.b16 %v585
      %v799 = vunpack.c.l.b16 %v586
      %v800 = vunpack.c.l.b16 %v587
      %v801 = vunpack.c.l.b16 %v588
      %v802 = vunpack.c.l.b16 %v589
      %v803 = vunpack.c.l.b16 %v590
      %v804 = vunpack.c.l.b16 %v591
      %v805 = vunpack.c.l.b16 %v592
      %v806 = vunpack.c.l.b16 %v593
      %v807 = vunpack.c.l.b16 %v594
      %v808 = vunpack.c.l.b16 %v595
      %v809 = vunpack.c.l.b16 %v596
      %v810 = vunpack.c.l.b16 %v597
      %v811 = vunpack.c.l.b16 %v598
      %v812 = vunpack.c.l.b16 %v599
      %v813 = vunpack.c.l.b16 %v600
      %v814 = vunpack.c.l.b16 %v601
      %v815 = vunpack.c.l.b16 %v602
      %v816 = vunpack.c.l.b16 %v603
      %v817 = vunpack.c.l.b16 %v604
      %v818 = vunpack.c.l.b16 %v605
      %v819 = vunpack.c.l.b16 %v606
      %v820 = vunpack.c.l.b16 %v607
      %v821 = vunpack.c.l.b16 %v608
      %v822 = vunpack.c.l.b16 %v609
      %v823 = vunpack.c.l.b16 %v610
      %v824 = vunpack.c.l.b16 %v611
      %v825 = vunpack.c.l.b16 %v612
      %v826 = vunpack.c.l.b16 %v613
      %v827 = vunpack.c.l.b16 %v614
      %v828 = vunpack.c.l.b16 %v615
      %v829 = vunpack.c.l.b16 %v616
      %v830 = vunpack.c.l.b16 %v617
      %v831 = vunpack.c.l.b16 %v618
      %v832 = vunpack.c.l.b16 %v619
      %v833 = vunpack.c.l.b16 %v620
      %v834 = vunpack.c.l.b16 %v621
      %v835 = vunpack.c.l.b16 %v622
      %v836 = vunpack.c.l.b16 %v623
      %v837 = vpack.c.b16 %v742, %v741
      %v838 = vpack.c.b16 %v744, %v743
      %v839 = vpack.c.b16 %v746, %v745
      %v840 = vpack.c.b16 %v748, %v747
      %v841 = vpack.c.b16 %v750, %v749
      %v842 = vpack.c.b16 %v752, %v751
      %v843 = vpack.c.b16 %v754, %v753
      %v844 = vpack.c.b16 %v756, %v755
      %v845 = vpack.c.b16 %v758, %v757
      %v846 = vpack.c.b16 %v760, %v759
      %v847 = vpack.c.b16 %v762, %v761
      %v848 = vpack.c.b16 %v764, %v763
      %v849 = vpack.c.b16 %v766, %v765
      %v850 = vpack.c.b16 %v768, %v767
      %v851 = vpack.c.b16 %v770, %v769
      %v852 = vpack.c.b16 %v772, %v771
      %v853 = vpack.c.b16 %v774, %v773
      %v854 = vpack.c.b16 %v776, %v775
      %v855 = vpack.c.b16 %v778, %v777
      %v856 = vpack.c.b16 %v780, %v779
      %v857 = vpack.c.b16 %v782, %v781
      %v858 = vpack.c.b16 %v784, %v783
      %v859 = vpack.c.b16 %v786, %v785
      %v860 = vpack.c.b16 %v788, %v787
      %v861 = vpack.c.b16 %v790, %v789
      %v862 = vpack.c.b16 %v792, %v791
      %v863 = vpack.c.b16 %v794, %v793
      %v864 = vpack.c.b16 %v796, %v795
      %v865 = vpack.c.b16 %v798, %v797
      %v866 = vpack.c.b16 %v800, %v799
      %v867 = vpack.c.b16 %v802, %v801
      %v868 = vpack.c.b16 %v804, %v803
      %v869 = vpack.c.b16 %v806, %v805
      %v870 = vpack.c.b16 %v808, %v807
      %v871 = vpack.c.b16 %v810, %v809
      %v872 = vpack.c.b16 %v812, %v811
      %v873 = vpack.c.b16 %v814, %v813
      %v874 = vpack.c.b16 %v816, %v815
      %v875 = vpack.c.b16 %v818, %v817
      %v876 = vpack.c.b16 %v820, %v819
      %v877 = vpack.c.b16 %v822, %v821
      %v878 = vpack.c.b16 %v824, %v823
      %v879 = vpack.c.b16 %v826, %v825
      %v880 = vpack.c.b16 %v828, %v827
      %v881 = vpack.c.b16 %v830, %v829
      %v882 = vpack.c.b16 %v832, %v831
      %v883 = vpack.c.b16 %v834, %v833
      %v884 = vpack.c.b16 %v836, %v835
      %933 = vmatpush.bf16.msra.mxu0 %v844
      %934 = vmatpush.bf16.msra.mxu0 %v843
      %935 = vmatpush.bf16.msra.mxu0 %v842
      %936 = vmatpush.bf16.msra.mxu0 %v841
      %937 = vmatpush.bf16.msra.mxu0 %v840
      %938 = vmatpush.bf16.msra.mxu0 %v839
      %939 = vmatpush.bf16.msra.mxu0 %v838
      %940 = vmatpush.bf16.msra.mxu0 %v837
      %941 = vmatmul.bf16.gmra.mxu0 %v633
      %v942 = vpop.f32.mrf.mxu0
      %v943 = vadd.f32 %v626, %v942
      %v944 = vpop.f32.mrf.mxu0
      %945 = vdwg.mxu0
      %946 = vmatpush.bf16.msra.mxu0 %v852
      %947 = vmatpush.bf16.msra.mxu0 %v851
      %948 = vmatpush.bf16.msra.mxu0 %v850
      %949 = vmatpush.bf16.msra.mxu0 %v849
      %950 = vmatpush.bf16.msra.mxu0 %v848
      %951 = vmatpush.bf16.msra.mxu0 %v847
      %952 = vmatpush.bf16.msra.mxu0 %v846
      %953 = vmatpush.bf16.msra.mxu0 %v845
      %954 = vmatmul.bf16.gmra.mxu0 %v634
      %v955 = vpop.f32.mrf.mxu0
      %v956 = vadd.f32 %v943, %v955
      %v957 = vpop.f32.mrf.mxu0
      %958 = vdwg.mxu0
      %959 = vmatpush.bf16.msra.mxu0 %v860
      %960 = vmatpush.bf16.msra.mxu0 %v859
      %961 = vmatpush.bf16.msra.mxu0 %v858
      %962 = vmatpush.bf16.msra.mxu0 %v857
      %963 = vmatpush.bf16.msra.mxu0 %v856
      %964 = vmatpush.bf16.msra.mxu0 %v855
      %965 = vmatpush.bf16.msra.mxu0 %v854
      %966 = vmatpush.bf16.msra.mxu0 %v853
      %967 = vmatmul.bf16.gmra.mxu0 %v635
      %v968 = vpop.f32.mrf.mxu0
      %v969 = vadd.f32 %v956, %v968
      %v970 = vpop.f32.mrf.mxu0
      %971 = vdwg.mxu0
      %972 = vmatpush.bf16.msra.mxu0 %v868
      %973 = vmatpush.bf16.msra.mxu0 %v867
      %974 = vmatpush.bf16.msra.mxu0 %v866
      %975 = vmatpush.bf16.msra.mxu0 %v865
      %976 = vmatpush.bf16.msra.mxu0 %v864
      %977 = vmatpush.bf16.msra.mxu0 %v863
      %978 = vmatpush.bf16.msra.mxu0 %v862
      %979 = vmatpush.bf16.msra.mxu0 %v861
      %980 = vmatmul.bf16.gmra.mxu0 %v636
      %v981 = vpop.f32.mrf.mxu0
      %v982 = vadd.f32 %v969, %v981
      %v983 = vpop.f32.mrf.mxu0
      %984 = vdwg.mxu0
      %985 = vmatpush.bf16.msra.mxu0 %v876
      %986 = vmatpush.bf16.msra.mxu0 %v875
      %987 = vmatpush.bf16.msra.mxu0 %v874
      %988 = vmatpush.bf16.msra.mxu0 %v873
      %989 = vmatpush.bf16.msra.mxu0 %v872
      %990 = vmatpush.bf16.msra.mxu0 %v871
      %991 = vmatpush.bf16.msra.mxu0 %v870
      %992 = vmatpush.bf16.msra.mxu0 %v869
      %993 = vmatmul.bf16.gmra.mxu0 %v637
      %v994 = vpop.f32.mrf.mxu0
      %v995 = vadd.f32 %v982, %v994
      %v996 = vpop.f32.mrf.mxu0
      %997 = vdwg.mxu0
      %998 = vmatpush.bf16.msra.mxu0 %v884
      %999 = vmatpush.bf16.msra.mxu0 %v883
      %1000 = vmatpush.bf16.msra.mxu0 %v882
      %1001 = vmatpush.bf16.msra.mxu0 %v881
      %1002 = vmatpush.bf16.msra.mxu0 %v880
      %1003 = vmatpush.bf16.msra.mxu0 %v879
      %1004 = vmatpush.bf16.msra.mxu0 %v878
      %1005 = vmatpush.bf16.msra.mxu0 %v877
      %1006 = vmatmul.bf16.gmra.mxu0 %v638
      %v1007 = vpop.f32.mrf.mxu0
      %v1008 = vadd.f32 %v995, %v1007
      %v1009 = vpop.f32.mrf.mxu0
      %1010 = vdwg.mxu0
      %v1011 = vperm.slane %v523, 0
      %v1012 = vadd.f32 %v1008, %v1011
      %v1013 = vld [vmem:[%s10] sm:$0x1]
      %v1014 = vld [vmem:[%s11] sm:$0x1]
      %vm1015 = vcmask 257024
      %v1016 = vsel %vm1015, %v1012, 0.0
      %1017 = vadd.xlane.f32.xlu0 %v1016
      %v1018 = vpop.xlane.xlu0 %1017
      %v1019 = vrcp.pop 32.0
      %v1020 = vmul.f32 32.0, %v1019
      %v1021 = vsub.f32 1.0, %v1020
      %v1022 = vmul.f32 %v1019, %v1021
      %v1023 = vadd.f32 %v1019, %v1022
      %vm1024 = vweird.f32 %v1019
      %v1025 = vsel %vm1024, %v1019, %v1023
      %v1026 = vmul.f32 %v1018, %v1025
      %v1027 = vsub.f32 %v1012, %v1026
      %v1028 = vmul.f32 %v1027, %v1027
      %v1029 = vsel %vm1015, %v1028, 0.0
      %1030 = vadd.xlane.f32.xlu0 %v1029
      %v1031 = vpop.xlane.xlu0 %1030
      %v1032 = vmul.f32 %v1031, %v1025
      %v1033 = vadd.f32 %v1032, 1e-05
      %v1034 = vrsqrt.pop %v1033
      %v1035 = vmul.f32 %v1034, %v1033
      %v1036 = vmul.f32 %v1035, %v1034
      %v1037 = vmul.f32 0.5, %v1036
      %v1038 = vsub.f32 1.5, %v1037
      %v1039 = vmul.f32 %v1034, %v1038
      %vm1040 = vweird.f32 %v1033
      %vm1041 = vweird.f32 %v1034
      %vm1042 = vmor %vm1040, %vm1041
      %v1043 = vsel %vm1042, %v1034, %v1039
      %v1044 = vmul.f32 %v1027, %v1043
      %v1046 = vperm.slane %v1013, 0
      %v1048 = vmul.f32 %v1044, %v1046
      %v1050 = vperm.slane %v1014, 0
      %v1052 = vadd.f32 %v1048, %v1050
      %v1053 = vpack.c.bf16 %v1052, %v1052
      %vm1054 = vcmask 254976
      %1055 = vst.msk [vmem:[%s425] sm:$0x3] %vm1054, %v1053
      %p1056 = scmp.lt.s32.totalorder %s23, 1
      %s1057 = scalar_select %p1056, %s23, 1
      %s1058 = smul.addr %s1057, 2
      %s1059 = scalar_lea.vmem %s12, %s1058
      // Predicated region
      $region69: #{_lambda_.8} parent=67 // pred_check
        %p1060 = pneg %p303
      $region70: #{_lambda_.8} parent=67 // pred_check_branch
        %1062 = sbr.rel (%p1060) target = $region72
      $region71: #{_lambda_.8} parent=67 // pred_region
        _
      $region72: #{_lambda_.8} parent=67 // pred_fallthru
        _
    $region68: #{_lambda_.8} parent=5 // pred_fallthru
      _
    %p1063 = scmp.le.s32.totalorder 2, %s18
    // Predicated region
    $region73: #{_lambda_.8} parent=5 // pred_check
      %p1064 = pneg %p1063
    $region74: #{_lambda_.8} parent=5 // pred_check_branch
      %1066 = sbr.rel (%p1064) target = $region76
    $region75: #{_lambda_.8} parent=5 // pred_region
      %s1067 = ssub.s32 %s18, 2
      // Predicated region
      $region77: #{_lambda_.8} parent=75 // pred_check
        %p1068 = pneg %p309
      $region78: #{_lambda_.8} parent=75 // pred_check_branch
        %1070 = sbr.rel (%p1068) target = $region80
      $region79: #{_lambda_.8} parent=75 // pred_region
        %p1071 = scmp.lt.s32.totalorder %s24, 1
        %s1072 = scalar_select %p1071, %s24, 1
        %s1073 = smul.addr %s1072, 2
        %s1074 = scalar_lea.vmem %s12, %s1073
      $region80: #{_lambda_.8} parent=75 // pred_fallthru
        _
    $region76: #{_lambda_.8} parent=5 // pred_fallthru
      _
  $region6: #{_lambda_.8} parent=0 // loop_footer
    %s22 = sadd.s32 1, %s18
  $region7: #{_lambda_.8} parent=0 // loop_footer_branch
    %17 = sbr.rel target = $region3
  $region8: #{_lambda_.8} parent=0 // loop_exit
    _

// kernel: _lambda_.10
$region0: #{_lambda_.10}
  #allocation0 [shape = 'u32[]', space=smem, size = 0x4, offset = 0x4, fixed_abs, tag = 'smem constant byte address 0x4 - core index']
  #allocation1 [shape = 'u32[72,128]{1,0:T(1,128)}', space=vmem, size = 0x9000, scoped, tag = 'internal scratch']
  %s0 = inlined_call_operand.vmem [shape: bf16[1,60,32], index: 0, kind: input, shape index: {}]
  %s1 = inlined_call_operand.vmem [shape: bf16[32,96], index: 1, kind: input, shape index: {}]
  %s2 = inlined_call_operand.vmem [shape: f32[1,96], index: 2, kind: input, shape index: {}]
  %s3 = inlined_call_operand.vmem [shape: bf16[32,32], index: 3, kind: input, shape index: {}]
  %s4 = inlined_call_operand.vmem [shape: f32[1,32], index: 4, kind: input, shape index: {}]
  %s5 = inlined_call_operand.vmem [shape: f32[1,32], index: 5, kind: input, shape index: {}]
  %s6 = inlined_call_operand.vmem [shape: f32[1,32], index: 6, kind: input, shape index: {}]
  %s7 = inlined_call_operand.vmem [shape: bf16[1,60,32], index: 7, kind: output, shape index: {}]
  %s8 = sld [smem:[#allocation0]]
  $region38: #{_lambda_.10} parent=0
    _
  %s10 = ssub.s32 1, %s8
  %s11 = scalar_select 0, %s10, %s8
  // Predicated region
  $region2: #{_lambda_.10} parent=0 // pred_check
    _
  $region3: #{_lambda_.10} parent=0 // pred_check_branch
    %13 = sbr.rel (0) target = $region5
  $region4: #{_lambda_.10} parent=0 // pred_region
    _
  $region5: #{_lambda_.10} parent=0 // pred_fallthru
    _
  // Predicated region
  $region6: #{_lambda_.10} parent=0 // pred_check
    _
  $region7: #{_lambda_.10} parent=0 // pred_check_branch
    %15 = sbr.rel (0) target = $region9
  $region8: #{_lambda_.10} parent=0 // pred_region
    _
  $region9: #{_lambda_.10} parent=0 // pred_fallthru
    _
  // Predicated region
  $region10: #{_lambda_.10} parent=0 // pred_check
    _
  $region11: #{_lambda_.10} parent=0 // pred_check_branch
    %17 = sbr.rel (0) target = $region13
  $region12: #{_lambda_.10} parent=0 // pred_region
    _
  $region13: #{_lambda_.10} parent=0 // pred_fallthru
    _
  // Predicated region
  $region14: #{_lambda_.10} parent=0 // pred_check
    _
  $region15: #{_lambda_.10} parent=0 // pred_check_branch
    %19 = sbr.rel (0) target = $region17
  $region16: #{_lambda_.10} parent=0 // pred_region
    _
  $region17: #{_lambda_.10} parent=0 // pred_fallthru
    _
  // Predicated region
  $region18: #{_lambda_.10} parent=0 // pred_check
    _
  $region19: #{_lambda_.10} parent=0 // pred_check_branch
    %21 = sbr.rel (0) target = $region21
  $region20: #{_lambda_.10} parent=0 // pred_region
    _
  $region21: #{_lambda_.10} parent=0 // pred_fallthru
    _
  // Predicated region
  $region22: #{_lambda_.10} parent=0 // pred_check
    _
  $region23: #{_lambda_.10} parent=0 // pred_check_branch
    %23 = sbr.rel (0) target = $region25
  $region24: #{_lambda_.10} parent=0 // pred_region
    _
  $region25: #{_lambda_.10} parent=0 // pred_fallthru
    _
  // Predicated region
  $region26: #{_lambda_.10} parent=0 // pred_check
    _
  $region27: #{_lambda_.10} parent=0 // pred_check_branch
    %25 = sbr.rel (0) target = $region29
  $region28: #{_lambda_.10} parent=0 // pred_region
    _
  $region29: #{_lambda_.10} parent=0 // pred_fallthru
    _
  %v27 = vld [vmem:[%s0] sm:$0xf]
  %v28 = vld [vmem:[%s0 + $0x4] sm:$0xf]
  %v29 = vld [vmem:[%s0 + $0x8] sm:$0xf]
  %v30 = vld [vmem:[%s0 + $0xc] sm:$0xf]
  %v31 = vld [vmem:[%s0 + $0x10] sm:$0xf]
  %v32 = vld [vmem:[%s0 + $0x14] sm:$0xf]
  %v33 = vld [vmem:[%s0 + $0x18] sm:$0xf]
  %v34 = vld [vmem:[%s0 + $0x1c] sm:$0x3]
  %v35 = vunpack.c.l.bf16 %v27
  %v36 = vunpack.c.l.bf16 %v28
  %v37 = vunpack.c.l.bf16 %v29
  %v38 = vunpack.c.l.bf16 %v30
  %v39 = vunpack.c.l.bf16 %v31
  %v40 = vunpack.c.l.bf16 %v32
  %v41 = vunpack.c.l.bf16 %v33
  %v42 = vunpack.c.l.bf16 %v34
  %v43 = vld [vmem:[%s5] sm:$0x1]
  %v44 = vld [vmem:[%s6] sm:$0x1]
  %vm45 = vcmask 261120
  %v46 = vsel %vm45, %v35, 0.0
  %47 = vadd.xlane.f32.xlu0 %v46
  %v48 = vpop.xlane.xlu0 %47
  %v49 = vsel %vm45, %v36, 0.0
  %50 = vadd.xlane.f32.xlu0 %v49
  %v51 = vpop.xlane.xlu0 %50
  %v52 = vsel %vm45, %v37, 0.0
  %53 = vadd.xlane.f32.xlu0 %v52
  %v54 = vpop.xlane.xlu0 %53
  %v55 = vsel %vm45, %v38, 0.0
  %56 = vadd.xlane.f32.xlu0 %v55
  %v57 = vpop.xlane.xlu0 %56
  %v58 = vsel %vm45, %v39, 0.0
  %59 = vadd.xlane.f32.xlu0 %v58
  %v60 = vpop.xlane.xlu0 %59
  %v61 = vsel %vm45, %v40, 0.0
  %62 = vadd.xlane.f32.xlu0 %v61
  %v63 = vpop.xlane.xlu0 %62
  %v64 = vsel %vm45, %v41, 0.0
  %65 = vadd.xlane.f32.xlu0 %v64
  %v66 = vpop.xlane.xlu0 %65
  %vm67 = vcmask 257024
  %v68 = vsel %vm67, %v42, 0.0
  %69 = vadd.xlane.f32.xlu0 %v68
  %v70 = vpop.xlane.xlu0 %69
  %v71 = vrcp.pop 32.0
  %v72 = vmul.f32 32.0, %v71
  %v73 = vsub.f32 1.0, %v72
  %v74 = vmul.f32 %v71, %v73
  %v75 = vadd.f32 %v71, %v74
  %vm76 = vweird.f32 %v71
  %v77 = vsel %vm76, %v71, %v75
  %v78 = vmul.f32 %v48, %v77
  %v79 = vmul.f32 %v51, %v77
  %v80 = vmul.f32 %v54, %v77
  %v81 = vmul.f32 %v57, %v77
  %v82 = vmul.f32 %v60, %v77
  %v83 = vmul.f32 %v63, %v77
  %v84 = vmul.f32 %v66, %v77
  %v85 = vmul.f32 %v70, %v77
  %v86 = vsub.f32 %v35, %v78
  %v87 = vsub.f32 %v36, %v79
  %v88 = vsub.f32 %v37, %v80
  %v89 = vsub.f32 %v38, %v81
  %v90 = vsub.f32 %v39, %v82
  %v91 = vsub.f32 %v40, %v83
  %v92 = vsub.f32 %v41, %v84
  %v93 = vsub.f32 %v42, %v85
  %v94 = vmul.f32 %v86, %v86
  %v95 = vmul.f32 %v87, %v87
  %v96 = vmul.f32 %v88, %v88
  %v97 = vmul.f32 %v89, %v89
  %v98 = vmul.f32 %v90, %v90
  %v99 = vmul.f32 %v91, %v91
  %v100 = vmul.f32 %v92, %v92
  %v101 = vmul.f32 %v93, %v93
  %v102 = vsel %vm45, %v94, 0.0
  %103 = vadd.xlane.f32.xlu0 %v102
  %v104 = vpop.xlane.xlu0 %103
  %v105 = vsel %vm45, %v95, 0.0
  %106 = vadd.xlane.f32.xlu0 %v105
  %v107 = vpop.xlane.xlu0 %106
  %v108 = vsel %vm45, %v96, 0.0
  %109 = vadd.xlane.f32.xlu0 %v108
  %v110 = vpop.xlane.xlu0 %109
  %v111 = vsel %vm45, %v97, 0.0
  %112 = vadd.xlane.f32.xlu0 %v111
  %v113 = vpop.xlane.xlu0 %112
  %v114 = vsel %vm45, %v98, 0.0
  %115 = vadd.xlane.f32.xlu0 %v114
  %v116 = vpop.xlane.xlu0 %115
  %v117 = vsel %vm45, %v99, 0.0
  %118 = vadd.xlane.f32.xlu0 %v117
  %v119 = vpop.xlane.xlu0 %118
  %v120 = vsel %vm45, %v100, 0.0
  %121 = vadd.xlane.f32.xlu0 %v120
  %v122 = vpop.xlane.xlu0 %121
  %v123 = vsel %vm67, %v101, 0.0
  %124 = vadd.xlane.f32.xlu0 %v123
  %v125 = vpop.xlane.xlu0 %124
  %v126 = vmul.f32 %v104, %v77
  %v127 = vmul.f32 %v107, %v77
  %v128 = vmul.f32 %v110, %v77
  %v129 = vmul.f32 %v113, %v77
  %v130 = vmul.f32 %v116, %v77
  %v131 = vmul.f32 %v119, %v77
  %v132 = vmul.f32 %v122, %v77
  %v133 = vmul.f32 %v125, %v77
  %v134 = vadd.f32 %v126, 1e-05
  %v135 = vadd.f32 %v127, 1e-05
  %v136 = vadd.f32 %v128, 1e-05
  %v137 = vadd.f32 %v129, 1e-05
  %v138 = vadd.f32 %v130, 1e-05
  %v139 = vadd.f32 %v131, 1e-05
  %v140 = vadd.f32 %v132, 1e-05
  %v141 = vadd.f32 %v133, 1e-05
  %v142 = vrsqrt.pop %v134
  %v143 = vmul.f32 %v142, %v134
  %v144 = vmul.f32 %v143, %v142
  %v145 = vmul.f32 0.5, %v144
  %v146 = vsub.f32 1.5, %v145
  %v147 = vmul.f32 %v142, %v146
  %vm148 = vweird.f32 %v134
  %vm149 = vweird.f32 %v142
  %vm150 = vmor %vm148, %vm149
  %v151 = vsel %vm150, %v142, %v147
  %v152 = vrsqrt.pop %v135
  %v153 = vmul.f32 %v152, %v135
  %v154 = vmul.f32 %v153, %v152
  %v155 = vmul.f32 0.5, %v154
  %v156 = vsub.f32 1.5, %v155
  %v157 = vmul.f32 %v152, %v156
  %vm158 = vweird.f32 %v135
  %vm159 = vweird.f32 %v152
  %vm160 = vmor %vm158, %vm159
  %v161 = vsel %vm160, %v152, %v157
  %v162 = vrsqrt.pop %v136
  %v163 = vmul.f32 %v162, %v136
  %v164 = vmul.f32 %v163, %v162
  %v165 = vmul.f32 0.5, %v164
  %v166 = vsub.f32 1.5, %v165
  %v167 = vmul.f32 %v162, %v166
  %vm168 = vweird.f32 %v136
  %vm169 = vweird.f32 %v162
  %vm170 = vmor %vm168, %vm169
  %v171 = vsel %vm170, %v162, %v167
  %v172 = vrsqrt.pop %v137
  %v173 = vmul.f32 %v172, %v137
  %v174 = vmul.f32 %v173, %v172
  %v175 = vmul.f32 0.5, %v174
  %v176 = vsub.f32 1.5, %v175
  %v177 = vmul.f32 %v172, %v176
  %vm178 = vweird.f32 %v137
  %vm179 = vweird.f32 %v172
  %vm180 = vmor %vm178, %vm179
  %v181 = vsel %vm180, %v172, %v177
  %v182 = vrsqrt.pop %v138
  %v183 = vmul.f32 %v182, %v138
  %v184 = vmul.f32 %v183, %v182
  %v185 = vmul.f32 0.5, %v184
  %v186 = vsub.f32 1.5, %v185
  %v187 = vmul.f32 %v182, %v186
  %vm188 = vweird.f32 %v138
  %vm189 = vweird.f32 %v182
  %vm190 = vmor %vm188, %vm189
  %v191 = vsel %vm190, %v182, %v187
  %v192 = vrsqrt.pop %v139
  %v193 = vmul.f32 %v192, %v139
  %v194 = vmul.f32 %v193, %v192
  %v195 = vmul.f32 0.5, %v194
  %v196 = vsub.f32 1.5, %v195
  %v197 = vmul.f32 %v192, %v196
  %vm198 = vweird.f32 %v139
  %vm199 = vweird.f32 %v192
  %vm200 = vmor %vm198, %vm199
  %v201 = vsel %vm200, %v192, %v197
  %v202 = vrsqrt.pop %v140
  %v203 = vmul.f32 %v202, %v140
  %v204 = vmul.f32 %v203, %v202
  %v205 = vmul.f32 0.5, %v204
  %v206 = vsub.f32 1.5, %v205
  %v207 = vmul.f32 %v202, %v206
  %vm208 = vweird.f32 %v140
  %vm209 = vweird.f32 %v202
  %vm210 = vmor %vm208, %vm209
  %v211 = vsel %vm210, %v202, %v207
  %v212 = vrsqrt.pop %v141
  %v213 = vmul.f32 %v212, %v141
  %v214 = vmul.f32 %v213, %v212
  %v215 = vmul.f32 0.5, %v214
  %v216 = vsub.f32 1.5, %v215
  %v217 = vmul.f32 %v212, %v216
  %vm218 = vweird.f32 %v141
  %vm219 = vweird.f32 %v212
  %vm220 = vmor %vm218, %vm219
  %v221 = vsel %vm220, %v212, %v217
  %v222 = vmul.f32 %v86, %v151
  %v223 = vmul.f32 %v87, %v161
  %v224 = vmul.f32 %v88, %v171
  %v225 = vmul.f32 %v89, %v181
  %v226 = vmul.f32 %v90, %v191
  %v227 = vmul.f32 %v91, %v201
  %v228 = vmul.f32 %v92, %v211
  %v229 = vmul.f32 %v93, %v221
  %v231 = vperm.slane %v43, 0
  %v233 = vmul.f32 %v222, %v231
  %v234 = vmul.f32 %v223, %v231
  %v235 = vmul.f32 %v224, %v231
  %v236 = vmul.f32 %v225, %v231
  %v237 = vmul.f32 %v226, %v231
  %v238 = vmul.f32 %v227, %v231
  %v239 = vmul.f32 %v228, %v231
  %v240 = vmul.f32 %v229, %v231
  %v242 = vperm.slane %v44, 0
  %v244 = vadd.f32 %v233, %v242
  %v245 = vadd.f32 %v234, %v242
  %v246 = vadd.f32 %v235, %v242
  %v247 = vadd.f32 %v236, %v242
  %v248 = vadd.f32 %v237, %v242
  %v249 = vadd.f32 %v238, %v242
  %v250 = vadd.f32 %v239, %v242
  %v251 = vadd.f32 %v240, %v242
  %v252 = vpack.c.bf16 %v245, %v244
  %v253 = vpack.c.bf16 %v247, %v246
  %v254 = vpack.c.bf16 %v249, %v248
  %v255 = vpack.c.bf16 %v251, %v250
  %v256 = vld [vmem:[%s1] sm:$0xf]
  %v257 = vld [vmem:[%s1 + $0x4] sm:$0xf]
  %v258 = vld [vmem:[%s1 + $0x8] sm:$0xf]
  %v259 = vld [vmem:[%s1 + $0xc] sm:$0xf]
  %v260 = vld [vmem:[%s2] sm:$0x1]
  %v262 = vperm.slane %v260, 0
  %v268 = vunpack.c.l.b16 %v256
  %v269 = vunpack.c.l.b16 %v257
  %v270 = vunpack.c.l.b16 %v258
  %v271 = vunpack.c.l.b16 %v259
  %v272 = vpack.c.b16 %v269, %v268
  %v273 = vpack.c.b16 %v271, %v270
  %v277 = vsel %vm45, %v252, 0
  %v280 = vsel %vm45, %v253, 0
  %v283 = vsel %vm45, %v254, 0
  %v286 = vsel %vm45, %v255, 0
  %288 = vmatpush.bf16.msra.mxu0 0
  %289 = vmatpush.bf16.msra.mxu0 0
  %290 = vmatpush.bf16.msra.mxu0 0
  %291 = vmatpush.bf16.msra.mxu0 0
  %292 = vmatpush.bf16.msra.mxu0 0
  %293 = vmatpush.bf16.msra.mxu0 0
  %294 = vmatpush.bf16.msra.mxu0 %v273
  %295 = vmatpush.bf16.msra.mxu0 %v272
  %296 = vmatmul.bf16.gmra.mxu0 %v277
  %v297 = vpop.f32.mrf.mxu0
  %v298 = vadd.f32 %v262, %v297
  %v299 = vpop.f32.mrf.mxu0
  %v300 = vadd.f32 %v262, %v299
  %301 = vmatmul.bf16.gmra.mxu0 %v280
  %v302 = vpop.f32.mrf.mxu0
  %v303 = vadd.f32 %v262, %v302
  %v304 = vpop.f32.mrf.mxu0
  %v305 = vadd.f32 %v262, %v304
  %306 = vmatmul.bf16.gmra.mxu0 %v283
  %v307 = vpop.f32.mrf.mxu0
  %v308 = vadd.f32 %v262, %v307
  %v309 = vpop.f32.mrf.mxu0
  %v310 = vadd.f32 %v262, %v309
  %311 = vmatmul.bf16.gmra.mxu0 %v286
  %v312 = vpop.f32.mrf.mxu0
  %v313 = vadd.f32 %v262, %v312
  %v314 = vpop.f32.mrf.mxu0
  %v315 = vadd.f32 %v262, %v314
  %316 = vdwg.mxu0
  %v317 = vld [vmem:[%s3] sm:$0xf]
  %v318 = vld [vmem:[%s3 + $0x4] sm:$0xf]
  %v319 = vld [vmem:[%s3 + $0x8] sm:$0xf]
  %v320 = vld [vmem:[%s3 + $0xc] sm:$0xf]
  %v321 = vpack.c.bf16 %v300, %v298
  %v322 = vpack.c.bf16 %v305, %v303
  %v323 = vpack.c.bf16 %v310, %v308
  %v324 = vpack.c.bf16 %v315, %v313
  %329 = vrot.lane.b32.xlu0 %v321, 96
  %v330 = vpop.permute.xlu0 %329
  %331 = vrot.lane.b32.xlu0 %v322, 96
  %v332 = vpop.permute.xlu0 %331
  %333 = vrot.lane.b32.xlu0 %v323, 96
  %v334 = vpop.permute.xlu0 %333
  %335 = vrot.lane.b32.xlu0 %v324, 96
  %v336 = vpop.permute.xlu0 %335
  %vm337 = vcmask 130048
  %v339 = vsel %vm337, %v321, 0
  %v342 = vsel %vm337, %v322, 0
  %v345 = vsel %vm337, %v323, 0
  %v348 = vsel %vm337, %v324, 0
  %v351 = vsel %vm337, %v330, 0
  %v354 = vsel %vm337, %v332, 0
  %v357 = vsel %vm337, %v334, 0
  %v360 = vsel %vm337, %v336, 0
  %362 = vmatpush.bf16.xpose.msra.mxu0 0
  %363 = vmatpush.bf16.xpose.msra.mxu0 0
  %364 = vmatpush.bf16.xpose.msra.mxu0 0
  %365 = vmatpush.bf16.xpose.msra.mxu0 0
  %366 = vmatpush.bf16.xpose.msra.mxu0 %v360
  %367 = vmatpush.bf16.xpose.msra.mxu0 %v357
  %368 = vmatpush.bf16.xpose.msra.mxu0 %v354
  %369 = vmatpush.bf16.xpose.msra.mxu0 %v351
  %370 = vmatmul.bf16.gmra.mxu0 %v339
  %v371 = vpop.f32.mrf.mxu0
  %v372 = vadd.f32 0.0, %v371
  %v373 = vpop.f32.mrf.mxu0
  %v374 = vadd.f32 0.0, %v373
  %375 = vmatmul.bf16.gmra.mxu0 %v342
  %v376 = vpop.f32.mrf.mxu0
  %v377 = vadd.f32 0.0, %v376
  %v378 = vpop.f32.mrf.mxu0
  %v379 = vadd.f32 0.0, %v378
  %380 = vmatmul.bf16.gmra.mxu0 %v345
  %v381 = vpop.f32.mrf.mxu0
  %v382 = vadd.f32 0.0, %v381
  %v383 = vpop.f32.mrf.mxu0
  %v384 = vadd.f32 0.0, %v383
  %385 = vmatmul.bf16.gmra.mxu0 %v348
  %v386 = vpop.f32.mrf.mxu0
  %v387 = vadd.f32 0.0, %v386
  %v388 = vpop.f32.mrf.mxu0
  %v389 = vadd.f32 0.0, %v388
  %390 = vdwg.mxu0
  %v391 = vmul.f32 %v372, 0.25
  %v392 = vmul.f32 %v374, 0.25
  %v393 = vmul.f32 %v377, 0.25
  %v394 = vmul.f32 %v379, 0.25
  %v395 = vmul.f32 %v382, 0.25
  %v396 = vmul.f32 %v384, 0.25
  %v397 = vmul.f32 %v387, 0.25
  %v398 = vmul.f32 %v389, 0.25
  %vm399 = vcmask 490496
  %v400 = vsel %vm399, %v391, -inf
  %401 = vmax.xlane.f32.xlu0 %v400
  %v402 = vpop.xlane.xlu0 %401
  %v403 = vsel %vm399, %v392, -inf
  %404 = vmax.xlane.f32.xlu0 %v403
  %v405 = vpop.xlane.xlu0 %404
  %v406 = vsel %vm399, %v393, -inf
  %407 = vmax.xlane.f32.xlu0 %v406
  %v408 = vpop.xlane.xlu0 %407
  %v409 = vsel %vm399, %v394, -inf
  %410 = vmax.xlane.f32.xlu0 %v409
  %v411 = vpop.xlane.xlu0 %410
  %v412 = vsel %vm399, %v395, -inf
  %413 = vmax.xlane.f32.xlu0 %v412
  %v414 = vpop.xlane.xlu0 %413
  %v415 = vsel %vm399, %v396, -inf
  %416 = vmax.xlane.f32.xlu0 %v415
  %v417 = vpop.xlane.xlu0 %416
  %v418 = vsel %vm399, %v397, -inf
  %419 = vmax.xlane.f32.xlu0 %v418
  %v420 = vpop.xlane.xlu0 %419
  %vm421 = vcmask 486400
  %v422 = vsel %vm421, %v398, -inf
  %423 = vmax.xlane.f32.xlu0 %v422
  %v424 = vpop.xlane.xlu0 %423
  %v425 = vsub.f32 %v391, %v402
  %v426 = vsub.f32 %v392, %v405
  %v427 = vsub.f32 %v393, %v408
  %v428 = vsub.f32 %v394, %v411
  %v429 = vsub.f32 %v395, %v414
  %v430 = vsub.f32 %v396, %v417
  %v431 = vsub.f32 %v397, %v420
  %v432 = vsub.f32 %v398, %v424
  %v433 = vmul.f32 %v425, 1.442695
  %v434 = vpow.pop %v433
  %v435 = vmul.f32 %v426, 1.442695
  %v436 = vpow.pop %v435
  %v437 = vmul.f32 %v427, 1.442695
  %v438 = vpow.pop %v437
  %v439 = vmul.f32 %v428, 1.442695
  %v440 = vpow.pop %v439
  %v441 = vmul.f32 %v429, 1.442695
  %v442 = vpow.pop %v441
  %v443 = vmul.f32 %v430, 1.442695
  %v444 = vpow.pop %v443
  %v445 = vmul.f32 %v431, 1.442695
  %v446 = vpow.pop %v445
  %v447 = vmul.f32 %v432, 1.442695
  %v448 = vpow.pop %v447
  %v449 = vsel %vm399, %v434, 0.0
  %450 = vadd.xlane.f32.xlu0 %v449
  %v451 = vpop.xlane.xlu0 %450
  %v452 = vsel %vm399, %v436, 0.0
  %453 = vadd.xlane.f32.xlu0 %v452
  %v454 = vpop.xlane.xlu0 %453
  %v455 = vsel %vm399, %v438, 0.0
  %456 = vadd.xlane.f32.xlu0 %v455
  %v457 = vpop.xlane.xlu0 %456
  %v458 = vsel %vm399, %v440, 0.0
  %459 = vadd.xlane.f32.xlu0 %v458
  %v460 = vpop.xlane.xlu0 %459
  %v461 = vsel %vm399, %v442, 0.0
  %462 = vadd.xlane.f32.xlu0 %v461
  %v463 = vpop.xlane.xlu0 %462
  %v464 = vsel %vm399, %v444, 0.0
  %465 = vadd.xlane.f32.xlu0 %v464
  %v466 = vpop.xlane.xlu0 %465
  %v467 = vsel %vm399, %v446, 0.0
  %468 = vadd.xlane.f32.xlu0 %v467
  %v469 = vpop.xlane.xlu0 %468
  %v470 = vsel %vm421, %v448, 0.0
  %471 = vadd.xlane.f32.xlu0 %v470
  %v472 = vpop.xlane.xlu0 %471
  %v473 = vrcp.pop %v451
  %v474 = vrcp.pop %v454
  %v475 = vrcp.pop %v457
  %v476 = vrcp.pop %v460
  %v477 = vrcp.pop %v463
  %v478 = vrcp.pop %v466
  %v479 = vrcp.pop %v469
  %v480 = vrcp.pop %v472
  %v481 = vmul.f32 %v434, %v473
  %v482 = vmul.f32 %v436, %v474
  %v483 = vmul.f32 %v438, %v475
  %v484 = vmul.f32 %v440, %v476
  %v485 = vmul.f32 %v442, %v477
  %v486 = vmul.f32 %v444, %v478
  %v487 = vmul.f32 %v446, %v479
  %v488 = vmul.f32 %v448, %v480
  %v489 = vpack.c.bf16 %v482, %v481
  %v490 = vpack.c.bf16 %v484, %v483
  %v491 = vpack.c.bf16 %v486, %v485
  %v492 = vpack.c.bf16 %v488, %v487
  %493 = vrot.lane.b32.xlu0 %v321, 64
  %v494 = vpop.permute.xlu0 %493
  %495 = vrot.lane.b32.xlu0 %v322, 64
  %v496 = vpop.permute.xlu0 %495
  %497 = vrot.lane.b32.xlu0 %v323, 64
  %v498 = vpop.permute.xlu0 %497
  %499 = vrot.lane.b32.xlu0 %v324, 64
  %v500 = vpop.permute.xlu0 %499
  %v505 = vsel %vm399, %v489, 0
  %v508 = vsel %vm399, %v490, 0
  %v511 = vsel %vm399, %v491, 0
  %v514 = vsel %vm399, %v492, 0
  %vm516 = vcmask 1045504
  %v518 = vsel %vm516, %v500, 0
  %520 = vmatpush.bf16.msra.mxu0 0
  %521 = vmatpush.bf16.msra.mxu0 0
  %522 = vmatpush.bf16.msra.mxu0 0
  %523 = vmatpush.bf16.msra.mxu0 0
  %524 = vmatpush.bf16.msra.mxu0 %v518
  %525 = vmatpush.bf16.msra.mxu0 %v498
  %526 = vmatpush.bf16.msra.mxu0 %v496
  %527 = vmatpush.bf16.msra.mxu0 %v494
  %528 = vmatmul.bf16.gmra.mxu0 %v505
  %v529 = vpop.f32.mrf.mxu0
  %v530 = vadd.f32 0.0, %v529
  %v531 = vpop.f32.mrf.mxu0
  %v532 = vadd.f32 0.0, %v531
  %533 = vmatmul.bf16.gmra.mxu0 %v508
  %v534 = vpop.f32.mrf.mxu0
  %v535 = vadd.f32 0.0, %v534
  %v536 = vpop.f32.mrf.mxu0
  %v537 = vadd.f32 0.0, %v536
  %538 = vmatmul.bf16.gmra.mxu0 %v511
  %v539 = vpop.f32.mrf.mxu0
  %v540 = vadd.f32 0.0, %v539
  %v541 = vpop.f32.mrf.mxu0
  %v542 = vadd.f32 0.0, %v541
  %543 = vmatmul.bf16.gmra.mxu0 %v514
  %v544 = vpop.f32.mrf.mxu0
  %v545 = vadd.f32 0.0, %v544
  %v546 = vpop.f32.mrf.mxu0
  %v547 = vadd.f32 0.0, %v546
  %548 = vdwg.mxu0
  %v549 = vpack.c.bf16 %v532, %v530
  %v550 = vpack.c.bf16 %v537, %v535
  %v551 = vpack.c.bf16 %v542, %v540
  %v552 = vpack.c.bf16 %v547, %v545
  %553 = vrot.lane.b32.xlu0 %v321, 112
  %v554 = vpop.permute.xlu0 %553
  %555 = vrot.lane.b32.xlu0 %v322, 112
  %v556 = vpop.permute.xlu0 %555
  %557 = vrot.lane.b32.xlu0 %v323, 112
  %v558 = vpop.permute.xlu0 %557
  %559 = vrot.lane.b32.xlu0 %v324, 112
  %v560 = vpop.permute.xlu0 %559
  %561 = vrot.lane.b32.xlu0 %v321, 80
  %v562 = vpop.permute.xlu0 %561
  %563 = vrot.lane.b32.xlu0 %v322, 80
  %v564 = vpop.permute.xlu0 %563
  %565 = vrot.lane.b32.xlu0 %v323, 80
  %v566 = vpop.permute.xlu0 %565
  %567 = vrot.lane.b32.xlu0 %v324, 80
  %v568 = vpop.permute.xlu0 %567
  %v570 = vsel %vm337, %v554, 0
  %v573 = vsel %vm337, %v556, 0
  %v576 = vsel %vm337, %v558, 0
  %v579 = vsel %vm337, %v560, 0
  %v582 = vsel %vm337, %v562, 0
  %v585 = vsel %vm337, %v564, 0
  %v588 = vsel %vm337, %v566, 0
  %v591 = vsel %vm337, %v568, 0
  %593 = vmatpush.bf16.xpose.msra.mxu0 0
  %594 = vmatpush.bf16.xpose.msra.mxu0 0
  %595 = vmatpush.bf16.xpose.msra.mxu0 0
  %596 = vmatpush.bf16.xpose.msra.mxu0 0
  %597 = vmatpush.bf16.xpose.msra.mxu0 %v591
  %598 = vmatpush.bf16.xpose.msra.mxu0 %v588
  %599 = vmatpush.bf16.xpose.msra.mxu0 %v585
  %600 = vmatpush.bf16.xpose.msra.mxu0 %v582
  %601 = vmatmul.bf16.gmra.mxu0 %v570
  %v602 = vpop.f32.mrf.mxu0
  %v603 = vadd.f32 0.0, %v602
  %v604 = vpop.f32.mrf.mxu0
  %v605 = vadd.f32 0.0, %v604
  %606 = vmatmul.bf16.gmra.mxu0 %v573
  %v607 = vpop.f32.mrf.mxu0
  %v608 = vadd.f32 0.0, %v607
  %v609 = vpop.f32.mrf.mxu0
  %v610 = vadd.f32 0.0, %v609
  %611 = vmatmul.bf16.gmra.mxu0 %v576
  %v612 = vpop.f32.mrf.mxu0
  %v613 = vadd.f32 0.0, %v612
  %v614 = vpop.f32.mrf.mxu0
  %v615 = vadd.f32 0.0, %v614
  %616 = vmatmul.bf16.gmra.mxu0 %v579
  %v617 = vpop.f32.mrf.mxu0
  %v618 = vadd.f32 0.0, %v617
  %v619 = vpop.f32.mrf.mxu0
  %v620 = vadd.f32 0.0, %v619
  %621 = vdwg.mxu0
  %v622 = vmul.f32 %v603, 0.25
  %v623 = vmul.f32 %v605, 0.25
  %v624 = vmul.f32 %v608, 0.25
  %v625 = vmul.f32 %v610, 0.25
  %v626 = vmul.f32 %v613, 0.25
  %v627 = vmul.f32 %v615, 0.25
  %v628 = vmul.f32 %v618, 0.25
  %v629 = vmul.f32 %v620, 0.25
  %v630 = vsel %vm399, %v622, -inf
  %631 = vmax.xlane.f32.xlu0 %v630
  %v632 = vpop.xlane.xlu0 %631
  %v633 = vsel %vm399, %v623, -inf
  %634 = vmax.xlane.f32.xlu0 %v633
  %v635 = vpop.xlane.xlu0 %634
  %v636 = vsel %vm399, %v624, -inf
  %637 = vmax.xlane.f32.xlu0 %v636
  %v638 = vpop.xlane.xlu0 %637
  %v639 = vsel %vm399, %v625, -inf
  %640 = vmax.xlane.f32.xlu0 %v639
  %v641 = vpop.xlane.xlu0 %640
  %v642 = vsel %vm399, %v626, -inf
  %643 = vmax.xlane.f32.xlu0 %v642
  %v644 = vpop.xlane.xlu0 %643
  %v645 = vsel %vm399, %v627, -inf
  %646 = vmax.xlane.f32.xlu0 %v645
  %v647 = vpop.xlane.xlu0 %646
  %v648 = vsel %vm399, %v628, -inf
  %649 = vmax.xlane.f32.xlu0 %v648
  %v650 = vpop.xlane.xlu0 %649
  %v651 = vsel %vm421, %v629, -inf
  %652 = vmax.xlane.f32.xlu0 %v651
  %v653 = vpop.xlane.xlu0 %652
  %v654 = vsub.f32 %v622, %v632
  %v655 = vsub.f32 %v623, %v635
  %v656 = vsub.f32 %v624, %v638
  %v657 = vsub.f32 %v625, %v641
  %v658 = vsub.f32 %v626, %v644
  %v659 = vsub.f32 %v627, %v647
  %v660 = vsub.f32 %v628, %v650
  %v661 = vsub.f32 %v629, %v653
  %v662 = vmul.f32 %v654, 1.442695
  %v663 = vpow.pop %v662
  %v664 = vmul.f32 %v655, 1.442695
  %v665 = vpow.pop %v664
  %v666 = vmul.f32 %v656, 1.442695
  %v667 = vpow.pop %v666
  %v668 = vmul.f32 %v657, 1.442695
  %v669 = vpow.pop %v668
  %v670 = vmul.f32 %v658, 1.442695
  %v671 = vpow.pop %v670
  %v672 = vmul.f32 %v659, 1.442695
  %v673 = vpow.pop %v672
  %v674 = vmul.f32 %v660, 1.442695
  %v675 = vpow.pop %v674
  %v676 = vmul.f32 %v661, 1.442695
  %v677 = vpow.pop %v676
  %v678 = vsel %vm399, %v663, 0.0
  %679 = vadd.xlane.f32.xlu0 %v678
  %v680 = vpop.xlane.xlu0 %679
  %v681 = vsel %vm399, %v665, 0.0
  %682 = vadd.xlane.f32.xlu0 %v681
  %v683 = vpop.xlane.xlu0 %682
  %v684 = vsel %vm399, %v667, 0.0
  %685 = vadd.xlane.f32.xlu0 %v684
  %v686 = vpop.xlane.xlu0 %685
  %v687 = vsel %vm399, %v669, 0.0
  %688 = vadd.xlane.f32.xlu0 %v687
  %v689 = vpop.xlane.xlu0 %688
  %v690 = vsel %vm399, %v671, 0.0
  %691 = vadd.xlane.f32.xlu0 %v690
  %v692 = vpop.xlane.xlu0 %691
  %v693 = vsel %vm399, %v673, 0.0
  %694 = vadd.xlane.f32.xlu0 %v693
  %v695 = vpop.xlane.xlu0 %694
  %v696 = vsel %vm399, %v675, 0.0
  %697 = vadd.xlane.f32.xlu0 %v696
  %v698 = vpop.xlane.xlu0 %697
  %v699 = vsel %vm421, %v677, 0.0
  %700 = vadd.xlane.f32.xlu0 %v699
  %v701 = vpop.xlane.xlu0 %700
  %v702 = vrcp.pop %v680
  %v703 = vrcp.pop %v683
  %v704 = vrcp.pop %v686
  %v705 = vrcp.pop %v689
  %v706 = vrcp.pop %v692
  %v707 = vrcp.pop %v695
  %v708 = vrcp.pop %v698
  %v709 = vrcp.pop %v701
  %v710 = vmul.f32 %v663, %v702
  %v711 = vmul.f32 %v665, %v703
  %v712 = vmul.f32 %v667, %v704
  %v713 = vmul.f32 %v669, %v705
  %v714 = vmul.f32 %v671, %v706
  %v715 = vmul.f32 %v673, %v707
  %v716 = vmul.f32 %v675, %v708
  %v717 = vmul.f32 %v677, %v709
  %v718 = vpack.c.bf16 %v711, %v710
  %v719 = vpack.c.bf16 %v713, %v712
  %v720 = vpack.c.bf16 %v715, %v714
  %v721 = vpack.c.bf16 %v717, %v716
  %722 = vrot.lane.b32.xlu0 %v321, 48
  %v723 = vpop.permute.xlu0 %722
  %724 = vrot.lane.b32.xlu0 %v322, 48
  %v725 = vpop.permute.xlu0 %724
  %726 = vrot.lane.b32.xlu0 %v323, 48
  %v727 = vpop.permute.xlu0 %726
  %728 = vrot.lane.b32.xlu0 %v324, 48
  %v729 = vpop.permute.xlu0 %728
  %v734 = vsel %vm399, %v718, 0
  %v737 = vsel %vm399, %v719, 0
  %v740 = vsel %vm399, %v720, 0
  %v743 = vsel %vm399, %v721, 0
  %v746 = vsel %vm516, %v729, 0
  %748 = vmatpush.bf16.msra.mxu0 0
  %749 = vmatpush.bf16.msra.mxu0 0
  %750 = vmatpush.bf16.msra.mxu0 0
  %751 = vmatpush.bf16.msra.mxu0 0
  %752 = vmatpush.bf16.msra.mxu0 %v746
  %753 = vmatpush.bf16.msra.mxu0 %v727
  %754 = vmatpush.bf16.msra.mxu0 %v725
  %755 = vmatpush.bf16.msra.mxu0 %v723
  %756 = vmatmul.bf16.gmra.mxu0 %v734
  %v757 = vpop.f32.mrf.mxu0
  %v758 = vadd.f32 0.0, %v757
  %v759 = vpop.f32.mrf.mxu0
  %v760 = vadd.f32 0.0, %v759
  %761 = vmatmul.bf16.gmra.mxu0 %v737
  %v762 = vpop.f32.mrf.mxu0
  %v763 = vadd.f32 0.0, %v762
  %v764 = vpop.f32.mrf.mxu0
  %v765 = vadd.f32 0.0, %v764
  %766 = vmatmul.bf16.gmra.mxu0 %v740
  %v767 = vpop.f32.mrf.mxu0
  %v768 = vadd.f32 0.0, %v767
  %v769 = vpop.f32.mrf.mxu0
  %v770 = vadd.f32 0.0, %v769
  %771 = vmatmul.bf16.gmra.mxu0 %v743
  %v772 = vpop.f32.mrf.mxu0
  %v773 = vadd.f32 0.0, %v772
  %v774 = vpop.f32.mrf.mxu0
  %v775 = vadd.f32 0.0, %v774
  %776 = vdwg.mxu0
  %v777 = vpack.c.bf16 %v760, %v758
  %v778 = vpack.c.bf16 %v765, %v763
  %v779 = vpack.c.bf16 %v770, %v768
  %v780 = vpack.c.bf16 %v775, %v773
  %v783 = vunpack.c.l.b16 %v319
  %v784 = vunpack.c.l.b16 %v320
  %v785 = vpack.c.b16 %v784, %v783
  %v788 = vsel %vm337, %v777, 0
  %v791 = vsel %vm337, %v778, 0
  %v794 = vsel %vm337, %v779, 0
  %v797 = vsel %vm337, %v780, 0
  %799 = vmatpush.bf16.msra.mxu0 0
  %800 = vmatpush.bf16.msra.mxu0 0
  %801 = vmatpush.bf16.msra.mxu0 0
  %802 = vmatpush.bf16.msra.mxu0 0
  %803 = vmatpush.bf16.msra.mxu0 0
  %804 = vmatpush.bf16.msra.mxu0 0
  %805 = vmatpush.bf16.msra.mxu0 0
  %806 = vmatpush.bf16.msra.mxu0 %v785
  %807 = vmatmul.bf16.gmra.mxu0 %v788
  %v808 = vpop.f32.mrf.mxu0
  %v809 = vadd.f32 0.0, %v808
  %v810 = vpop.f32.mrf.mxu0
  %v811 = vadd.f32 0.0, %v810
  %812 = vmatmul.bf16.gmra.mxu0 %v791
  %v813 = vpop.f32.mrf.mxu0
  %v814 = vadd.f32 0.0, %v813
  %v815 = vpop.f32.mrf.mxu0
  %v816 = vadd.f32 0.0, %v815
  %817 = vmatmul.bf16.gmra.mxu0 %v794
  %v818 = vpop.f32.mrf.mxu0
  %v819 = vadd.f32 0.0, %v818
  %v820 = vpop.f32.mrf.mxu0
  %v821 = vadd.f32 0.0, %v820
  %822 = vmatmul.bf16.gmra.mxu0 %v797
  %v823 = vpop.f32.mrf.mxu0
  %v824 = vadd.f32 0.0, %v823
  %v825 = vpop.f32.mrf.mxu0
  %v826 = vadd.f32 0.0, %v825
  %827 = vdwg.mxu0
  %v830 = vunpack.c.l.b16 %v317
  %v831 = vunpack.c.l.b16 %v318
  %v832 = vpack.c.b16 %v831, %v830
  %v835 = vsel %vm337, %v549, 0
  %v838 = vsel %vm337, %v550, 0
  %v841 = vsel %vm337, %v551, 0
  %v844 = vsel %vm337, %v552, 0
  %846 = vmatpush.bf16.msra.mxu0 0
  %847 = vmatpush.bf16.msra.mxu0 0
  %848 = vmatpush.bf16.msra.mxu0 0
  %849 = vmatpush.bf16.msra.mxu0 0
  %850 = vmatpush.bf16.msra.mxu0 0
  %851 = vmatpush.bf16.msra.mxu0 0
  %852 = vmatpush.bf16.msra.mxu0 0
  %853 = vmatpush.bf16.msra.mxu0 %v832
  %854 = vmatmul.bf16.gmra.mxu0 %v835
  %v855 = vpop.f32.mrf.mxu0
  %v856 = vadd.f32 %v809, %v855
  %v857 = vpop.f32.mrf.mxu0
  %v858 = vadd.f32 %v811, %v857
  %859 = vmatmul.bf16.gmra.mxu0 %v838
  %v860 = vpop.f32.mrf.mxu0
  %v861 = vadd.f32 %v814, %v860
  %v862 = vpop.f32.mrf.mxu0
  %v863 = vadd.f32 %v816, %v862
  %864 = vmatmul.bf16.gmra.mxu0 %v841
  %v865 = vpop.f32.mrf.mxu0
  %v866 = vadd.f32 %v819, %v865
  %v867 = vpop.f32.mrf.mxu0
  %v868 = vadd.f32 %v821, %v867
  %869 = vmatmul.bf16.gmra.mxu0 %v844
  %v870 = vpop.f32.mrf.mxu0
  %v871 = vadd.f32 %v824, %v870
  %v872 = vpop.f32.mrf.mxu0
  %v873 = vadd.f32 %v826, %v872
  %874 = vdwg.mxu0
  %v875 = vld [vmem:[%s4] sm:$0x1]
  %v877 = vperm.slane %v875, 0
  %v879 = vadd.f32 %v856, %v877
  %v880 = vadd.f32 %v858, %v877
  %v881 = vadd.f32 %v861, %v877
  %v882 = vadd.f32 %v863, %v877
  %v883 = vadd.f32 %v866, %v877
  %v884 = vadd.f32 %v868, %v877
  %v885 = vadd.f32 %v871, %v877
  %v886 = vadd.f32 %v873, %v877
  %v887 = vadd.f32 %v879, %v35
  %v888 = vadd.f32 %v880, %v36
  %v889 = vadd.f32 %v881, %v37
  %v890 = vadd.f32 %v882, %v38
  %v891 = vadd.f32 %v883, %v39
  %v892 = vadd.f32 %v884, %v40
  %v893 = vadd.f32 %v885, %v41
  %v894 = vadd.f32 %v886, %v42
  %v895 = vpack.c.bf16 %v887, %v887
  %v896 = vpack.c.bf16 %v888, %v888
  %v897 = vpack.c.bf16 %v889, %v889
  %v898 = vpack.c.bf16 %v890, %v890
  %v899 = vpack.c.bf16 %v891, %v891
  %v900 = vpack.c.bf16 %v892, %v892
  %v901 = vpack.c.bf16 %v893, %v893
  %v902 = vpack.c.bf16 %v894, %v894
  %903 = vst.msk [vmem:[%s7] sm:$0xf] %vm67, %v895
  %904 = vst.msk [vmem:[%s7 + $0x4] sm:$0xf] %vm67, %v896
  %905 = vst.msk [vmem:[%s7 + $0x8] sm:$0xf] %vm67, %v897
  %906 = vst.msk [vmem:[%s7 + $0xc] sm:$0xf] %vm67, %v898
  %907 = vst.msk [vmem:[%s7 + $0x10] sm:$0xf] %vm67, %v899
  %908 = vst.msk [vmem:[%s7 + $0x14] sm:$0xf] %vm67, %v900
  %909 = vst.msk [vmem:[%s7 + $0x18] sm:$0xf] %vm67, %v901
  %vm910 = vcmask 254976
  %911 = vst.msk [vmem:[%s7 + $0x1c] sm:$0x3] %vm910, %v902
  // Predicated region
  $region30: #{_lambda_.10} parent=0 // pred_check
    _
  $region31: #{_lambda_.10} parent=0 // pred_check_branch
    %913 = sbr.rel (0) target = $region33
  $region32: #{_lambda_.10} parent=0 // pred_region
    _
  $region33: #{_lambda_.10} parent=0 // pred_fallthru
    _
  // Predicated region
  $region34: #{_lambda_.10} parent=0 // pred_check
    _
  $region35: #{_lambda_.10} parent=0 // pred_check_branch
    %915 = sbr.rel (0) target = $region37
  $region36: #{_lambda_.10} parent=0 // pred_region
    _
  $region37: #{_lambda_.10} parent=0 // pred_fallthru
    _

// kernel: _lambda_.9
$region0: #{_lambda_.9}
  #allocation0 [shape = 'u32[]', space=smem, size = 0x4, offset = 0x4, fixed_abs, tag = 'smem constant byte address 0x4 - core index']
  #allocation1 [shape = 'u32[72,128]{1,0:T(1,128)}', space=vmem, size = 0x9000, scoped, tag = 'internal scratch']
  %s0 = inlined_call_operand.vmem [shape: bf16[1,60,32], index: 0, kind: input, shape index: {}]
  %s1 = inlined_call_operand.vmem [shape: bf16[1,8,32], index: 1, kind: input, shape index: {}]
  %s2 = inlined_call_operand.vmem [shape: bf16[32,32], index: 2, kind: input, shape index: {}]
  %s3 = inlined_call_operand.vmem [shape: f32[1,32], index: 3, kind: input, shape index: {}]
  %s4 = inlined_call_operand.vmem [shape: bf16[32,64], index: 4, kind: input, shape index: {}]
  %s5 = inlined_call_operand.vmem [shape: f32[1,64], index: 5, kind: input, shape index: {}]
  %s6 = inlined_call_operand.vmem [shape: bf16[32,32], index: 6, kind: input, shape index: {}]
  %s7 = inlined_call_operand.vmem [shape: f32[1,32], index: 7, kind: input, shape index: {}]
  %s8 = inlined_call_operand.vmem [shape: f32[1,32], index: 8, kind: input, shape index: {}]
  %s9 = inlined_call_operand.vmem [shape: f32[1,32], index: 9, kind: input, shape index: {}]
  %s10 = inlined_call_operand.vmem [shape: bf16[1,60,32], index: 10, kind: output, shape index: {}]
  %s11 = sld [smem:[#allocation0]]
  $region50: #{_lambda_.9} parent=0
    _
  %s13 = ssub.s32 1, %s11
  %s14 = scalar_select 0, %s13, %s11
  // Predicated region
  $region2: #{_lambda_.9} parent=0 // pred_check
    _
  $region3: #{_lambda_.9} parent=0 // pred_check_branch
    %16 = sbr.rel (0) target = $region5
  $region4: #{_lambda_.9} parent=0 // pred_region
    _
  $region5: #{_lambda_.9} parent=0 // pred_fallthru
    _
  // Predicated region
  $region6: #{_lambda_.9} parent=0 // pred_check
    _
  $region7: #{_lambda_.9} parent=0 // pred_check_branch
    %18 = sbr.rel (0) target = $region9
  $region8: #{_lambda_.9} parent=0 // pred_region
    _
  $region9: #{_lambda_.9} parent=0 // pred_fallthru
    _
  // Predicated region
  $region10: #{_lambda_.9} parent=0 // pred_check
    _
  $region11: #{_lambda_.9} parent=0 // pred_check_branch
    %20 = sbr.rel (0) target = $region13
  $region12: #{_lambda_.9} parent=0 // pred_region
    _
  $region13: #{_lambda_.9} parent=0 // pred_fallthru
    _
  // Predicated region
  $region14: #{_lambda_.9} parent=0 // pred_check
    _
  $region15: #{_lambda_.9} parent=0 // pred_check_branch
    %22 = sbr.rel (0) target = $region17
  $region16: #{_lambda_.9} parent=0 // pred_region
    _
  $region17: #{_lambda_.9} parent=0 // pred_fallthru
    _
  // Predicated region
  $region18: #{_lambda_.9} parent=0 // pred_check
    _
  $region19: #{_lambda_.9} parent=0 // pred_check_branch
    %24 = sbr.rel (0) target = $region21
  $region20: #{_lambda_.9} parent=0 // pred_region
    _
  $region21: #{_lambda_.9} parent=0 // pred_fallthru
    _
  // Predicated region
  $region22: #{_lambda_.9} parent=0 // pred_check
    _
  $region23: #{_lambda_.9} parent=0 // pred_check_branch
    %26 = sbr.rel (0) target = $region25
  $region24: #{_lambda_.9} parent=0 // pred_region
    _
  $region25: #{_lambda_.9} parent=0 // pred_fallthru
    _
  // Predicated region
  $region26: #{_lambda_.9} parent=0 // pred_check
    _
  $region27: #{_lambda_.9} parent=0 // pred_check_branch
    %28 = sbr.rel (0) target = $region29
  $region28: #{_lambda_.9} parent=0 // pred_region
    _
  $region29: #{_lambda_.9} parent=0 // pred_fallthru
    _
  // Predicated region
  $region30: #{_lambda_.9} parent=0 // pred_check
    _
  $region31: #{_lambda_.9} parent=0 // pred_check_branch
    %30 = sbr.rel (0) target = $region33
  $region32: #{_lambda_.9} parent=0 // pred_region
    _
  $region33: #{_lambda_.9} parent=0 // pred_fallthru
    _
  // Predicated region
  $region34: #{_lambda_.9} parent=0 // pred_check
    _
  $region35: #{_lambda_.9} parent=0 // pred_check_branch
    %32 = sbr.rel (0) target = $region37
  $region36: #{_lambda_.9} parent=0 // pred_region
    _
  $region37: #{_lambda_.9} parent=0 // pred_fallthru
    _
  // Predicated region
  $region38: #{_lambda_.9} parent=0 // pred_check
    _
  $region39: #{_lambda_.9} parent=0 // pred_check_branch
    %34 = sbr.rel (0) target = $region41
  $region40: #{_lambda_.9} parent=0 // pred_region
    _
  $region41: #{_lambda_.9} parent=0 // pred_fallthru
    _
  %v36 = vld [vmem:[%s0] sm:$0xf]
  %v37 = vld [vmem:[%s0 + $0x4] sm:$0xf]
  %v38 = vld [vmem:[%s0 + $0x8] sm:$0xf]
  %v39 = vld [vmem:[%s0 + $0xc] sm:$0xf]
  %v40 = vld [vmem:[%s0 + $0x10] sm:$0xf]
  %v41 = vld [vmem:[%s0 + $0x14] sm:$0xf]
  %v42 = vld [vmem:[%s0 + $0x18] sm:$0xf]
  %v43 = vld [vmem:[%s0 + $0x1c] sm:$0x3]
  %v44 = vunpack.c.l.bf16 %v36
  %v45 = vunpack.c.l.bf16 %v37
  %v46 = vunpack.c.l.bf16 %v38
  %v47 = vunpack.c.l.bf16 %v39
  %v48 = vunpack.c.l.bf16 %v40
  %v49 = vunpack.c.l.bf16 %v41
  %v50 = vunpack.c.l.bf16 %v42
  %v51 = vunpack.c.l.bf16 %v43
  %v52 = vld [vmem:[%s8] sm:$0x1]
  %v53 = vld [vmem:[%s9] sm:$0x1]
  %vm54 = vcmask 261120
  %v55 = vsel %vm54, %v44, 0.0
  %56 = vadd.xlane.f32.xlu0 %v55
  %v57 = vpop.xlane.xlu0 %56
  %v58 = vsel %vm54, %v45, 0.0
  %59 = vadd.xlane.f32.xlu0 %v58
  %v60 = vpop.xlane.xlu0 %59
  %v61 = vsel %vm54, %v46, 0.0
  %62 = vadd.xlane.f32.xlu0 %v61
  %v63 = vpop.xlane.xlu0 %62
  %v64 = vsel %vm54, %v47, 0.0
  %65 = vadd.xlane.f32.xlu0 %v64
  %v66 = vpop.xlane.xlu0 %65
  %v67 = vsel %vm54, %v48, 0.0
  %68 = vadd.xlane.f32.xlu0 %v67
  %v69 = vpop.xlane.xlu0 %68
  %v70 = vsel %vm54, %v49, 0.0
  %71 = vadd.xlane.f32.xlu0 %v70
  %v72 = vpop.xlane.xlu0 %71
  %v73 = vsel %vm54, %v50, 0.0
  %74 = vadd.xlane.f32.xlu0 %v73
  %v75 = vpop.xlane.xlu0 %74
  %vm76 = vcmask 257024
  %v77 = vsel %vm76, %v51, 0.0
  %78 = vadd.xlane.f32.xlu0 %v77
  %v79 = vpop.xlane.xlu0 %78
  %v80 = vrcp.pop 32.0
  %v81 = vmul.f32 32.0, %v80
  %v82 = vsub.f32 1.0, %v81
  %v83 = vmul.f32 %v80, %v82
  %v84 = vadd.f32 %v80, %v83
  %vm85 = vweird.f32 %v80
  %v86 = vsel %vm85, %v80, %v84
  %v87 = vmul.f32 %v57, %v86
  %v88 = vmul.f32 %v60, %v86
  %v89 = vmul.f32 %v63, %v86
  %v90 = vmul.f32 %v66, %v86
  %v91 = vmul.f32 %v69, %v86
  %v92 = vmul.f32 %v72, %v86
  %v93 = vmul.f32 %v75, %v86
  %v94 = vmul.f32 %v79, %v86
  %v95 = vsub.f32 %v44, %v87
  %v96 = vsub.f32 %v45, %v88
  %v97 = vsub.f32 %v46, %v89
  %v98 = vsub.f32 %v47, %v90
  %v99 = vsub.f32 %v48, %v91
  %v100 = vsub.f32 %v49, %v92
  %v101 = vsub.f32 %v50, %v93
  %v102 = vsub.f32 %v51, %v94
  %v103 = vmul.f32 %v95, %v95
  %v104 = vmul.f32 %v96, %v96
  %v105 = vmul.f32 %v97, %v97
  %v106 = vmul.f32 %v98, %v98
  %v107 = vmul.f32 %v99, %v99
  %v108 = vmul.f32 %v100, %v100
  %v109 = vmul.f32 %v101, %v101
  %v110 = vmul.f32 %v102, %v102
  %v111 = vsel %vm54, %v103, 0.0
  %112 = vadd.xlane.f32.xlu0 %v111
  %v113 = vpop.xlane.xlu0 %112
  %v114 = vsel %vm54, %v104, 0.0
  %115 = vadd.xlane.f32.xlu0 %v114
  %v116 = vpop.xlane.xlu0 %115
  %v117 = vsel %vm54, %v105, 0.0
  %118 = vadd.xlane.f32.xlu0 %v117
  %v119 = vpop.xlane.xlu0 %118
  %v120 = vsel %vm54, %v106, 0.0
  %121 = vadd.xlane.f32.xlu0 %v120
  %v122 = vpop.xlane.xlu0 %121
  %v123 = vsel %vm54, %v107, 0.0
  %124 = vadd.xlane.f32.xlu0 %v123
  %v125 = vpop.xlane.xlu0 %124
  %v126 = vsel %vm54, %v108, 0.0
  %127 = vadd.xlane.f32.xlu0 %v126
  %v128 = vpop.xlane.xlu0 %127
  %v129 = vsel %vm54, %v109, 0.0
  %130 = vadd.xlane.f32.xlu0 %v129
  %v131 = vpop.xlane.xlu0 %130
  %v132 = vsel %vm76, %v110, 0.0
  %133 = vadd.xlane.f32.xlu0 %v132
  %v134 = vpop.xlane.xlu0 %133
  %v135 = vmul.f32 %v113, %v86
  %v136 = vmul.f32 %v116, %v86
  %v137 = vmul.f32 %v119, %v86
  %v138 = vmul.f32 %v122, %v86
  %v139 = vmul.f32 %v125, %v86
  %v140 = vmul.f32 %v128, %v86
  %v141 = vmul.f32 %v131, %v86
  %v142 = vmul.f32 %v134, %v86
  %v143 = vadd.f32 %v135, 1e-05
  %v144 = vadd.f32 %v136, 1e-05
  %v145 = vadd.f32 %v137, 1e-05
  %v146 = vadd.f32 %v138, 1e-05
  %v147 = vadd.f32 %v139, 1e-05
  %v148 = vadd.f32 %v140, 1e-05
  %v149 = vadd.f32 %v141, 1e-05
  %v150 = vadd.f32 %v142, 1e-05
  %v151 = vrsqrt.pop %v143
  %v152 = vmul.f32 %v151, %v143
  %v153 = vmul.f32 %v152, %v151
  %v154 = vmul.f32 0.5, %v153
  %v155 = vsub.f32 1.5, %v154
  %v156 = vmul.f32 %v151, %v155
  %vm157 = vweird.f32 %v143
  %vm158 = vweird.f32 %v151
  %vm159 = vmor %vm157, %vm158
  %v160 = vsel %vm159, %v151, %v156
  %v161 = vrsqrt.pop %v144
  %v162 = vmul.f32 %v161, %v144
  %v163 = vmul.f32 %v162, %v161
  %v164 = vmul.f32 0.5, %v163
  %v165 = vsub.f32 1.5, %v164
  %v166 = vmul.f32 %v161, %v165
  %vm167 = vweird.f32 %v144
  %vm168 = vweird.f32 %v161
  %vm169 = vmor %vm167, %vm168
  %v170 = vsel %vm169, %v161, %v166
  %v171 = vrsqrt.pop %v145
  %v172 = vmul.f32 %v171, %v145
  %v173 = vmul.f32 %v172, %v171
  %v174 = vmul.f32 0.5, %v173
  %v175 = vsub.f32 1.5, %v174
  %v176 = vmul.f32 %v171, %v175
  %vm177 = vweird.f32 %v145
  %vm178 = vweird.f32 %v171
  %vm179 = vmor %vm177, %vm178
  %v180 = vsel %vm179, %v171, %v176
  %v181 = vrsqrt.pop %v146
  %v182 = vmul.f32 %v181, %v146
  %v183 = vmul.f32 %v182, %v181
  %v184 = vmul.f32 0.5, %v183
  %v185 = vsub.f32 1.5, %v184
  %v186 = vmul.f32 %v181, %v185
  %vm187 = vweird.f32 %v146
  %vm188 = vweird.f32 %v181
  %vm189 = vmor %vm187, %vm188
  %v190 = vsel %vm189, %v181, %v186
  %v191 = vrsqrt.pop %v147
  %v192 = vmul.f32 %v191, %v147
  %v193 = vmul.f32 %v192, %v191
  %v194 = vmul.f32 0.5, %v193
  %v195 = vsub.f32 1.5, %v194
  %v196 = vmul.f32 %v191, %v195
  %vm197 = vweird.f32 %v147
  %vm198 = vweird.f32 %v191
  %vm199 = vmor %vm197, %vm198
  %v200 = vsel %vm199, %v191, %v196
  %v201 = vrsqrt.pop %v148
  %v202 = vmul.f32 %v201, %v148
  %v203 = vmul.f32 %v202, %v201
  %v204 = vmul.f32 0.5, %v203
  %v205 = vsub.f32 1.5, %v204
  %v206 = vmul.f32 %v201, %v205
  %vm207 = vweird.f32 %v148
  %vm208 = vweird.f32 %v201
  %vm209 = vmor %vm207, %vm208
  %v210 = vsel %vm209, %v201, %v206
  %v211 = vrsqrt.pop %v149
  %v212 = vmul.f32 %v211, %v149
  %v213 = vmul.f32 %v212, %v211
  %v214 = vmul.f32 0.5, %v213
  %v215 = vsub.f32 1.5, %v214
  %v216 = vmul.f32 %v211, %v215
  %vm217 = vweird.f32 %v149
  %vm218 = vweird.f32 %v211
  %vm219 = vmor %vm217, %vm218
  %v220 = vsel %vm219, %v211, %v216
  %v221 = vrsqrt.pop %v150
  %v222 = vmul.f32 %v221, %v150
  %v223 = vmul.f32 %v222, %v221
  %v224 = vmul.f32 0.5, %v223
  %v225 = vsub.f32 1.5, %v224
  %v226 = vmul.f32 %v221, %v225
  %vm227 = vweird.f32 %v150
  %vm228 = vweird.f32 %v221
  %vm229 = vmor %vm227, %vm228
  %v230 = vsel %vm229, %v221, %v226
  %v231 = vmul.f32 %v95, %v160
  %v232 = vmul.f32 %v96, %v170
  %v233 = vmul.f32 %v97, %v180
  %v234 = vmul.f32 %v98, %v190
  %v235 = vmul.f32 %v99, %v200
  %v236 = vmul.f32 %v100, %v210
  %v237 = vmul.f32 %v101, %v220
  %v238 = vmul.f32 %v102, %v230
  %v240 = vperm.slane %v52, 0
  %v242 = vmul.f32 %v231, %v240
  %v243 = vmul.f32 %v232, %v240
  %v244 = vmul.f32 %v233, %v240
  %v245 = vmul.f32 %v234, %v240
  %v246 = vmul.f32 %v235, %v240
  %v247 = vmul.f32 %v236, %v240
  %v248 = vmul.f32 %v237, %v240
  %v249 = vmul.f32 %v238, %v240
  %v251 = vperm.slane %v53, 0
  %v253 = vadd.f32 %v242, %v251
  %v254 = vadd.f32 %v243, %v251
  %v255 = vadd.f32 %v244, %v251
  %v256 = vadd.f32 %v245, %v251
  %v257 = vadd.f32 %v246, %v251
  %v258 = vadd.f32 %v247, %v251
  %v259 = vadd.f32 %v248, %v251
  %v260 = vadd.f32 %v249, %v251
  %v261 = vpack.c.bf16 %v254, %v253
  %v262 = vpack.c.bf16 %v256, %v255
  %v263 = vpack.c.bf16 %v258, %v257
  %v264 = vpack.c.bf16 %v260, %v259
  %v265 = vld [vmem:[%s2] sm:$0xf]
  %v266 = vld [vmem:[%s2 + $0x4] sm:$0xf]
  %v267 = vld [vmem:[%s2 + $0x8] sm:$0xf]
  %v268 = vld [vmem:[%s2 + $0xc] sm:$0xf]
  %v269 = vld [vmem:[%s3] sm:$0x1]
  %v271 = vperm.slane %v269, 0
  %v277 = vunpack.c.l.b16 %v265
  %v278 = vunpack.c.l.b16 %v266
  %v279 = vunpack.c.l.b16 %v267
  %v280 = vunpack.c.l.b16 %v268
  %v281 = vpack.c.b16 %v278, %v277
  %v282 = vpack.c.b16 %v280, %v279
  %v286 = vsel %vm54, %v261, 0
  %v289 = vsel %vm54, %v262, 0
  %v292 = vsel %vm54, %v263, 0
  %v295 = vsel %vm54, %v264, 0
  %297 = vmatpush.bf16.msra.mxu0 0
  %298 = vmatpush.bf16.msra.mxu0 0
  %299 = vmatpush.bf16.msra.mxu0 0
  %300 = vmatpush.bf16.msra.mxu0 0
  %301 = vmatpush.bf16.msra.mxu0 0
  %302 = vmatpush.bf16.msra.mxu0 0
  %303 = vmatpush.bf16.msra.mxu0 %v282
  %304 = vmatpush.bf16.msra.mxu0 %v281
  %305 = vmatmul.bf16.gmra.mxu0 %v286
  %v306 = vpop.f32.mrf.mxu0
  %v307 = vadd.f32 %v271, %v306
  %v308 = vpop.f32.mrf.mxu0
  %v309 = vadd.f32 %v271, %v308
  %310 = vmatmul.bf16.gmra.mxu0 %v289
  %v311 = vpop.f32.mrf.mxu0
  %v312 = vadd.f32 %v271, %v311
  %v313 = vpop.f32.mrf.mxu0
  %v314 = vadd.f32 %v271, %v313
  %315 = vmatmul.bf16.gmra.mxu0 %v292
  %v316 = vpop.f32.mrf.mxu0
  %v317 = vadd.f32 %v271, %v316
  %v318 = vpop.f32.mrf.mxu0
  %v319 = vadd.f32 %v271, %v318
  %320 = vmatmul.bf16.gmra.mxu0 %v295
  %v321 = vpop.f32.mrf.mxu0
  %v322 = vadd.f32 %v271, %v321
  %v323 = vpop.f32.mrf.mxu0
  %v324 = vadd.f32 %v271, %v323
  %325 = vdwg.mxu0
  %v326 = vld [vmem:[%s1] sm:$0xf]
  %v327 = vld [vmem:[%s4] sm:$0xf]
  %v328 = vld [vmem:[%s4 + $0x4] sm:$0xf]
  %v329 = vld [vmem:[%s4 + $0x8] sm:$0xf]
  %v330 = vld [vmem:[%s4 + $0xc] sm:$0xf]
  %v331 = vld [vmem:[%s5] sm:$0x1]
  %v333 = vperm.slane %v331, 0
  %v339 = vunpack.c.l.b16 %v327
  %v340 = vunpack.c.l.b16 %v328
  %v341 = vunpack.c.l.b16 %v329
  %v342 = vunpack.c.l.b16 %v330
  %v343 = vpack.c.b16 %v340, %v339
  %v344 = vpack.c.b16 %v342, %v341
  %v348 = vsel %vm54, %v326, 0
  %350 = vmatpush.bf16.msra.mxu0 0
  %351 = vmatpush.bf16.msra.mxu0 0
  %352 = vmatpush.bf16.msra.mxu0 0
  %353 = vmatpush.bf16.msra.mxu0 0
  %354 = vmatpush.bf16.msra.mxu0 0
  %355 = vmatpush.bf16.msra.mxu0 0
  %356 = vmatpush.bf16.msra.mxu0 %v344
  %357 = vmatpush.bf16.msra.mxu0 %v343
  %358 = vmatmul.bf16.gmra.mxu0 %v348
  %v359 = vpop.f32.mrf.mxu0
  %v360 = vadd.f32 %v333, %v359
  %v361 = vpop.f32.mrf.mxu0
  %362 = vdwg.mxu0
  %v363 = vld [vmem:[%s6] sm:$0xf]
  %v364 = vld [vmem:[%s6 + $0x4] sm:$0xf]
  %v365 = vld [vmem:[%s6 + $0x8] sm:$0xf]
  %v366 = vld [vmem:[%s6 + $0xc] sm:$0xf]
  %v367 = vpack.c.bf16 %v309, %v307
  %v368 = vpack.c.bf16 %v314, %v312
  %v369 = vpack.c.bf16 %v319, %v317
  %v370 = vpack.c.bf16 %v324, %v322
  %v371 = vpack.c.bf16 %v360, %v360
  %vm372 = vcmask 130048
  %v374 = vsel %vm372, %v367, 0
  %v377 = vsel %vm372, %v368, 0
  %v380 = vsel %vm372, %v369, 0
  %v383 = vsel %vm372, %v370, 0
  %v386 = vsel %vm372, %v371, 0
  %388 = vmatpush.bf16.xpose.msra.mxu0 0
  %389 = vmatpush.bf16.xpose.msra.mxu0 0
  %390 = vmatpush.bf16.xpose.msra.mxu0 0
  %391 = vmatpush.bf16.xpose.msra.mxu0 0
  %392 = vmatpush.bf16.xpose.msra.mxu0 0
  %393 = vmatpush.bf16.xpose.msra.mxu0 0
  %394 = vmatpush.bf16.xpose.msra.mxu0 0
  %395 = vmatpush.bf16.xpose.msra.mxu0 %v386
  %396 = vmatmul.bf16.gmra.mxu0 %v374
  %v397 = vpop.f32.mrf.mxu0
  %v398 = vadd.f32 0.0, %v397
  %v399 = vpop.f32.mrf.mxu0
  %v400 = vadd.f32 0.0, %v399
  %401 = vmatmul.bf16.gmra.mxu0 %v377
  %v402 = vpop.f32.mrf.mxu0
  %v403 = vadd.f32 0.0, %v402
  %v404 = vpop.f32.mrf.mxu0
  %v405 = vadd.f32 0.0, %v404
  %406 = vmatmul.bf16.gmra.mxu0 %v380
  %v407 = vpop.f32.mrf.mxu0
  %v408 = vadd.f32 0.0, %v407
  %v409 = vpop.f32.mrf.mxu0
  %v410 = vadd.f32 0.0, %v409
  %411 = vmatmul.bf16.gmra.mxu0 %v383
  %v412 = vpop.f32.mrf.mxu0
  %v413 = vadd.f32 0.0, %v412
  %v414 = vpop.f32.mrf.mxu0
  %v415 = vadd.f32 0.0, %v414
  %416 = vdwg.mxu0
  %v417 = vmul.f32 %v398, 0.25
  %v418 = vmul.f32 %v400, 0.25
  %v419 = vmul.f32 %v403, 0.25
  %v420 = vmul.f32 %v405, 0.25
  %v421 = vmul.f32 %v408, 0.25
  %v422 = vmul.f32 %v410, 0.25
  %v423 = vmul.f32 %v413, 0.25
  %v424 = vmul.f32 %v415, 0.25
  %vm425 = vcmask 64512
  %v426 = vsel %vm425, %v417, -inf
  %427 = vmax.xlane.f32.xlu0 %v426
  %v428 = vpop.xlane.xlu0 %427
  %v429 = vsel %vm425, %v418, -inf
  %430 = vmax.xlane.f32.xlu0 %v429
  %v431 = vpop.xlane.xlu0 %430
  %v432 = vsel %vm425, %v419, -inf
  %433 = vmax.xlane.f32.xlu0 %v432
  %v434 = vpop.xlane.xlu0 %433
  %v435 = vsel %vm425, %v420, -inf
  %436 = vmax.xlane.f32.xlu0 %v435
  %v437 = vpop.xlane.xlu0 %436
  %v438 = vsel %vm425, %v421, -inf
  %439 = vmax.xlane.f32.xlu0 %v438
  %v440 = vpop.xlane.xlu0 %439
  %v441 = vsel %vm425, %v422, -inf
  %442 = vmax.xlane.f32.xlu0 %v441
  %v443 = vpop.xlane.xlu0 %442
  %v444 = vsel %vm425, %v423, -inf
  %445 = vmax.xlane.f32.xlu0 %v444
  %v446 = vpop.xlane.xlu0 %445
  %vm447 = vcmask 60416
  %v448 = vsel %vm447, %v424, -inf
  %449 = vmax.xlane.f32.xlu0 %v448
  %v450 = vpop.xlane.xlu0 %449
  %v451 = vsub.f32 %v417, %v428
  %v452 = vsub.f32 %v418, %v431
  %v453 = vsub.f32 %v419, %v434
  %v454 = vsub.f32 %v420, %v437
  %v455 = vsub.f32 %v421, %v440
  %v456 = vsub.f32 %v422, %v443
  %v457 = vsub.f32 %v423, %v446
  %v458 = vsub.f32 %v424, %v450
  %v459 = vmul.f32 %v451, 1.442695
  %v460 = vpow.pop %v459
  %v461 = vmul.f32 %v452, 1.442695
  %v462 = vpow.pop %v461
  %v463 = vmul.f32 %v453, 1.442695
  %v464 = vpow.pop %v463
  %v465 = vmul.f32 %v454, 1.442695
  %v466 = vpow.pop %v465
  %v467 = vmul.f32 %v455, 1.442695
  %v468 = vpow.pop %v467
  %v469 = vmul.f32 %v456, 1.442695
  %v470 = vpow.pop %v469
  %v471 = vmul.f32 %v457, 1.442695
  %v472 = vpow.pop %v471
  %v473 = vmul.f32 %v458, 1.442695
  %v474 = vpow.pop %v473
  %v475 = vsel %vm425, %v460, 0.0
  %476 = vadd.xlane.f32.xlu0 %v475
  %v477 = vpop.xlane.xlu0 %476
  %v478 = vsel %vm425, %v462, 0.0
  %479 = vadd.xlane.f32.xlu0 %v478
  %v480 = vpop.xlane.xlu0 %479
  %v481 = vsel %vm425, %v464, 0.0
  %482 = vadd.xlane.f32.xlu0 %v481
  %v483 = vpop.xlane.xlu0 %482
  %v484 = vsel %vm425, %v466, 0.0
  %485 = vadd.xlane.f32.xlu0 %v484
  %v486 = vpop.xlane.xlu0 %485
  %v487 = vsel %vm425, %v468, 0.0
  %488 = vadd.xlane.f32.xlu0 %v487
  %v489 = vpop.xlane.xlu0 %488
  %v490 = vsel %vm425, %v470, 0.0
  %491 = vadd.xlane.f32.xlu0 %v490
  %v492 = vpop.xlane.xlu0 %491
  %v493 = vsel %vm425, %v472, 0.0
  %494 = vadd.xlane.f32.xlu0 %v493
  %v495 = vpop.xlane.xlu0 %494
  %v496 = vsel %vm447, %v474, 0.0
  %497 = vadd.xlane.f32.xlu0 %v496
  %v498 = vpop.xlane.xlu0 %497
  %v499 = vrcp.pop %v477
  %v500 = vrcp.pop %v480
  %v501 = vrcp.pop %v483
  %v502 = vrcp.pop %v486
  %v503 = vrcp.pop %v489
  %v504 = vrcp.pop %v492
  %v505 = vrcp.pop %v495
  %v506 = vrcp.pop %v498
  %v507 = vmul.f32 %v460, %v499
  %v508 = vmul.f32 %v462, %v500
  %v509 = vmul.f32 %v464, %v501
  %v510 = vmul.f32 %v466, %v502
  %v511 = vmul.f32 %v468, %v503
  %v512 = vmul.f32 %v470, %v504
  %v513 = vmul.f32 %v472, %v505
  %v514 = vmul.f32 %v474, %v506
  %v515 = vpack.c.bf16 %v508, %v507
  %v516 = vpack.c.bf16 %v510, %v509
  %v517 = vpack.c.bf16 %v512, %v511
  %v518 = vpack.c.bf16 %v514, %v513
  %520 = vrot.lane.b32.xlu0 %v371, 96
  %v521 = vpop.permute.xlu0 %520
  %v523 = vsel %vm425, %v515, 0
  %v526 = vsel %vm425, %v516, 0
  %v529 = vsel %vm425, %v517, 0
  %v532 = vsel %vm425, %v518, 0
  %vm534 = vcmask 1043456
  %v536 = vsel %vm534, %v521, 0
  %538 = vmatpush.bf16.msra.mxu0 0
  %539 = vmatpush.bf16.msra.mxu0 0
  %540 = vmatpush.bf16.msra.mxu0 0
  %541 = vmatpush.bf16.msra.mxu0 0
  %542 = vmatpush.bf16.msra.mxu0 0
  %543 = vmatpush.bf16.msra.mxu0 0
  %544 = vmatpush.bf16.msra.mxu0 0
  %545 = vmatpush.bf16.msra.mxu0 %v536
  %546 = vmatmul.bf16.gmra.mxu0 %v523
  %v547 = vpop.f32.mrf.mxu0
  %v548 = vadd.f32 0.0, %v547
  %v549 = vpop.f32.mrf.mxu0
  %v550 = vadd.f32 0.0, %v549
  %551 = vmatmul.bf16.gmra.mxu0 %v526
  %v552 = vpop.f32.mrf.mxu0
  %v553 = vadd.f32 0.0, %v552
  %v554 = vpop.f32.mrf.mxu0
  %v555 = vadd.f32 0.0, %v554
  %556 = vmatmul.bf16.gmra.mxu0 %v529
  %v557 = vpop.f32.mrf.mxu0
  %v558 = vadd.f32 0.0, %v557
  %v559 = vpop.f32.mrf.mxu0
  %v560 = vadd.f32 0.0, %v559
  %561 = vmatmul.bf16.gmra.mxu0 %v532
  %v562 = vpop.f32.mrf.mxu0
  %v563 = vadd.f32 0.0, %v562
  %v564 = vpop.f32.mrf.mxu0
  %v565 = vadd.f32 0.0, %v564
  %566 = vdwg.mxu0
  %v567 = vpack.c.bf16 %v550, %v548
  %v568 = vpack.c.bf16 %v555, %v553
  %v569 = vpack.c.bf16 %v560, %v558
  %v570 = vpack.c.bf16 %v565, %v563
  %575 = vrot.lane.b32.xlu0 %v367, 112
  %v576 = vpop.permute.xlu0 %575
  %577 = vrot.lane.b32.xlu0 %v368, 112
  %v578 = vpop.permute.xlu0 %577
  %579 = vrot.lane.b32.xlu0 %v369, 112
  %v580 = vpop.permute.xlu0 %579
  %581 = vrot.lane.b32.xlu0 %v370, 112
  %v582 = vpop.permute.xlu0 %581
  %583 = vrot.lane.b32.xlu0 %v371, 112
  %v584 = vpop.permute.xlu0 %583
  %v586 = vsel %vm372, %v576, 0
  %v589 = vsel %vm372, %v578, 0
  %v592 = vsel %vm372, %v580, 0
  %v595 = vsel %vm372, %v582, 0
  %v598 = vsel %vm372, %v584, 0
  %600 = vmatpush.bf16.xpose.msra.mxu0 0
  %601 = vmatpush.bf16.xpose.msra.mxu0 0
  %602 = vmatpush.bf16.xpose.msra.mxu0 0
  %603 = vmatpush.bf16.xpose.msra.mxu0 0
  %604 = vmatpush.bf16.xpose.msra.mxu0 0
  %605 = vmatpush.bf16.xpose.msra.mxu0 0
  %606 = vmatpush.bf16.xpose.msra.mxu0 0
  %607 = vmatpush.bf16.xpose.msra.mxu0 %v598
  %608 = vmatmul.bf16.gmra.mxu0 %v586
  %v609 = vpop.f32.mrf.mxu0
  %v610 = vadd.f32 0.0, %v609
  %v611 = vpop.f32.mrf.mxu0
  %v612 = vadd.f32 0.0, %v611
  %613 = vmatmul.bf16.gmra.mxu0 %v589
  %v614 = vpop.f32.mrf.mxu0
  %v615 = vadd.f32 0.0, %v614
  %v616 = vpop.f32.mrf.mxu0
  %v617 = vadd.f32 0.0, %v616
  %618 = vmatmul.bf16.gmra.mxu0 %v592
  %v619 = vpop.f32.mrf.mxu0
  %v620 = vadd.f32 0.0, %v619
  %v621 = vpop.f32.mrf.mxu0
  %v622 = vadd.f32 0.0, %v621
  %623 = vmatmul.bf16.gmra.mxu0 %v595
  %v624 = vpop.f32.mrf.mxu0
  %v625 = vadd.f32 0.0, %v624
  %v626 = vpop.f32.mrf.mxu0
  %v627 = vadd.f32 0.0, %v626
  %628 = vdwg.mxu0
  %v629 = vmul.f32 %v610, 0.25
  %v630 = vmul.f32 %v612, 0.25
  %v631 = vmul.f32 %v615, 0.25
  %v632 = vmul.f32 %v617, 0.25
  %v633 = vmul.f32 %v620, 0.25
  %v634 = vmul.f32 %v622, 0.25
  %v635 = vmul.f32 %v625, 0.25
  %v636 = vmul.f32 %v627, 0.25
  %v637 = vsel %vm425, %v629, -inf
  %638 = vmax.xlane.f32.xlu0 %v637
  %v639 = vpop.xlane.xlu0 %638
  %v640 = vsel %vm425, %v630, -inf
  %641 = vmax.xlane.f32.xlu0 %v640
  %v642 = vpop.xlane.xlu0 %641
  %v643 = vsel %vm425, %v631, -inf
  %644 = vmax.xlane.f32.xlu0 %v643
  %v645 = vpop.xlane.xlu0 %644
  %v646 = vsel %vm425, %v632, -inf
  %647 = vmax.xlane.f32.xlu0 %v646
  %v648 = vpop.xlane.xlu0 %647
  %v649 = vsel %vm425, %v633, -inf
  %650 = vmax.xlane.f32.xlu0 %v649
  %v651 = vpop.xlane.xlu0 %650
  %v652 = vsel %vm425, %v634, -inf
  %653 = vmax.xlane.f32.xlu0 %v652
  %v654 = vpop.xlane.xlu0 %653
  %v655 = vsel %vm425, %v635, -inf
  %656 = vmax.xlane.f32.xlu0 %v655
  %v657 = vpop.xlane.xlu0 %656
  %v658 = vsel %vm447, %v636, -inf
  %659 = vmax.xlane.f32.xlu0 %v658
  %v660 = vpop.xlane.xlu0 %659
  %v661 = vsub.f32 %v629, %v639
  %v662 = vsub.f32 %v630, %v642
  %v663 = vsub.f32 %v631, %v645
  %v664 = vsub.f32 %v632, %v648
  %v665 = vsub.f32 %v633, %v651
  %v666 = vsub.f32 %v634, %v654
  %v667 = vsub.f32 %v635, %v657
  %v668 = vsub.f32 %v636, %v660
  %v669 = vmul.f32 %v661, 1.442695
  %v670 = vpow.pop %v669
  %v671 = vmul.f32 %v662, 1.442695
  %v672 = vpow.pop %v671
  %v673 = vmul.f32 %v663, 1.442695
  %v674 = vpow.pop %v673
  %v675 = vmul.f32 %v664, 1.442695
  %v676 = vpow.pop %v675
  %v677 = vmul.f32 %v665, 1.442695
  %v678 = vpow.pop %v677
  %v679 = vmul.f32 %v666, 1.442695
  %v680 = vpow.pop %v679
  %v681 = vmul.f32 %v667, 1.442695
  %v682 = vpow.pop %v681
  %v683 = vmul.f32 %v668, 1.442695
  %v684 = vpow.pop %v683
  %v685 = vsel %vm425, %v670, 0.0
  %686 = vadd.xlane.f32.xlu0 %v685
  %v687 = vpop.xlane.xlu0 %686
  %v688 = vsel %vm425, %v672, 0.0
  %689 = vadd.xlane.f32.xlu0 %v688
  %v690 = vpop.xlane.xlu0 %689
  %v691 = vsel %vm425, %v674, 0.0
  %692 = vadd.xlane.f32.xlu0 %v691
  %v693 = vpop.xlane.xlu0 %692
  %v694 = vsel %vm425, %v676, 0.0
  %695 = vadd.xlane.f32.xlu0 %v694
  %v696 = vpop.xlane.xlu0 %695
  %v697 = vsel %vm425, %v678, 0.0
  %698 = vadd.xlane.f32.xlu0 %v697
  %v699 = vpop.xlane.xlu0 %698
  %v700 = vsel %vm425, %v680, 0.0
  %701 = vadd.xlane.f32.xlu0 %v700
  %v702 = vpop.xlane.xlu0 %701
  %v703 = vsel %vm425, %v682, 0.0
  %704 = vadd.xlane.f32.xlu0 %v703
  %v705 = vpop.xlane.xlu0 %704
  %v706 = vsel %vm447, %v684, 0.0
  %707 = vadd.xlane.f32.xlu0 %v706
  %v708 = vpop.xlane.xlu0 %707
  %v709 = vrcp.pop %v687
  %v710 = vrcp.pop %v690
  %v711 = vrcp.pop %v693
  %v712 = vrcp.pop %v696
  %v713 = vrcp.pop %v699
  %v714 = vrcp.pop %v702
  %v715 = vrcp.pop %v705
  %v716 = vrcp.pop %v708
  %v717 = vmul.f32 %v670, %v709
  %v718 = vmul.f32 %v672, %v710
  %v719 = vmul.f32 %v674, %v711
  %v720 = vmul.f32 %v676, %v712
  %v721 = vmul.f32 %v678, %v713
  %v722 = vmul.f32 %v680, %v714
  %v723 = vmul.f32 %v682, %v715
  %v724 = vmul.f32 %v684, %v716
  %v725 = vpack.c.bf16 %v718, %v717
  %v726 = vpack.c.bf16 %v720, %v719
  %v727 = vpack.c.bf16 %v722, %v721
  %v728 = vpack.c.bf16 %v724, %v723
  %729 = vrot.lane.b32.xlu0 %v371, 80
  %v730 = vpop.permute.xlu0 %729
  %v732 = vsel %vm425, %v725, 0
  %v735 = vsel %vm425, %v726, 0
  %v738 = vsel %vm425, %v727, 0
  %v741 = vsel %vm425, %v728, 0
  %v744 = vsel %vm534, %v730, 0
  %746 = vmatpush.bf16.msra.mxu0 0
  %747 = vmatpush.bf16.msra.mxu0 0
  %748 = vmatpush.bf16.msra.mxu0 0
  %749 = vmatpush.bf16.msra.mxu0 0
  %750 = vmatpush.bf16.msra.mxu0 0
  %751 = vmatpush.bf16.msra.mxu0 0
  %752 = vmatpush.bf16.msra.mxu0 0
  %753 = vmatpush.bf16.msra.mxu0 %v744
  %754 = vmatmul.bf16.gmra.mxu0 %v732
  %v755 = vpop.f32.mrf.mxu0
  %v756 = vadd.f32 0.0, %v755
  %v757 = vpop.f32.mrf.mxu0
  %v758 = vadd.f32 0.0, %v757
  %759 = vmatmul.bf16.gmra.mxu0 %v735
  %v760 = vpop.f32.mrf.mxu0
  %v761 = vadd.f32 0.0, %v760
  %v762 = vpop.f32.mrf.mxu0
  %v763 = vadd.f32 0.0, %v762
  %764 = vmatmul.bf16.gmra.mxu0 %v738
  %v765 = vpop.f32.mrf.mxu0
  %v766 = vadd.f32 0.0, %v765
  %v767 = vpop.f32.mrf.mxu0
  %v768 = vadd.f32 0.0, %v767
  %769 = vmatmul.bf16.gmra.mxu0 %v741
  %v770 = vpop.f32.mrf.mxu0
  %v771 = vadd.f32 0.0, %v770
  %v772 = vpop.f32.mrf.mxu0
  %v773 = vadd.f32 0.0, %v772
  %774 = vdwg.mxu0
  %v775 = vpack.c.bf16 %v758, %v756
  %v776 = vpack.c.bf16 %v763, %v761
  %v777 = vpack.c.bf16 %v768, %v766
  %v778 = vpack.c.bf16 %v773, %v771
  %v781 = vunpack.c.l.b16 %v365
  %v782 = vunpack.c.l.b16 %v366
  %v783 = vpack.c.b16 %v782, %v781
  %v786 = vsel %vm372, %v775, 0
  %v789 = vsel %vm372, %v776, 0
  %v792 = vsel %vm372, %v777, 0
  %v795 = vsel %vm372, %v778, 0
  %797 = vmatpush.bf16.msra.mxu0 0
  %798 = vmatpush.bf16.msra.mxu0 0
  %799 = vmatpush.bf16.msra.mxu0 0
  %800 = vmatpush.bf16.msra.mxu0 0
  %801 = vmatpush.bf16.msra.mxu0 0
  %802 = vmatpush.bf16.msra.mxu0 0
  %803 = vmatpush.bf16.msra.mxu0 0
  %804 = vmatpush.bf16.msra.mxu0 %v783
  %805 = vmatmul.bf16.gmra.mxu0 %v786
  %v806 = vpop.f32.mrf.mxu0
  %v807 = vadd.f32 0.0, %v806
  %v808 = vpop.f32.mrf.mxu0
  %v809 = vadd.f32 0.0, %v808
  %810 = vmatmul.bf16.gmra.mxu0 %v789
  %v811 = vpop.f32.mrf.mxu0
  %v812 = vadd.f32 0.0, %v811
  %v813 = vpop.f32.mrf.mxu0
  %v814 = vadd.f32 0.0, %v813
  %815 = vmatmul.bf16.gmra.mxu0 %v792
  %v816 = vpop.f32.mrf.mxu0
  %v817 = vadd.f32 0.0, %v816
  %v818 = vpop.f32.mrf.mxu0
  %v819 = vadd.f32 0.0, %v818
  %820 = vmatmul.bf16.gmra.mxu0 %v795
  %v821 = vpop.f32.mrf.mxu0
  %v822 = vadd.f32 0.0, %v821
  %v823 = vpop.f32.mrf.mxu0
  %v824 = vadd.f32 0.0, %v823
  %825 = vdwg.mxu0
  %v828 = vunpack.c.l.b16 %v363
  %v829 = vunpack.c.l.b16 %v364
  %v830 = vpack.c.b16 %v829, %v828
  %v833 = vsel %vm372, %v567, 0
  %v836 = vsel %vm372, %v568, 0
  %v839 = vsel %vm372, %v569, 0
  %v842 = vsel %vm372, %v570, 0
  %844 = vmatpush.bf16.msra.mxu0 0
  %845 = vmatpush.bf16.msra.mxu0 0
  %846 = vmatpush.bf16.msra.mxu0 0
  %847 = vmatpush.bf16.msra.mxu0 0
  %848 = vmatpush.bf16.msra.mxu0 0
  %849 = vmatpush.bf16.msra.mxu0 0
  %850 = vmatpush.bf16.msra.mxu0 0
  %851 = vmatpush.bf16.msra.mxu0 %v830
  %852 = vmatmul.bf16.gmra.mxu0 %v833
  %v853 = vpop.f32.mrf.mxu0
  %v854 = vadd.f32 %v807, %v853
  %v855 = vpop.f32.mrf.mxu0
  %v856 = vadd.f32 %v809, %v855
  %857 = vmatmul.bf16.gmra.mxu0 %v836
  %v858 = vpop.f32.mrf.mxu0
  %v859 = vadd.f32 %v812, %v858
  %v860 = vpop.f32.mrf.mxu0
  %v861 = vadd.f32 %v814, %v860
  %862 = vmatmul.bf16.gmra.mxu0 %v839
  %v863 = vpop.f32.mrf.mxu0
  %v864 = vadd.f32 %v817, %v863
  %v865 = vpop.f32.mrf.mxu0
  %v866 = vadd.f32 %v819, %v865
  %867 = vmatmul.bf16.gmra.mxu0 %v842
  %v868 = vpop.f32.mrf.mxu0
  %v869 = vadd.f32 %v822, %v868
  %v870 = vpop.f32.mrf.mxu0
  %v871 = vadd.f32 %v824, %v870
  %872 = vdwg.mxu0
  %v873 = vld [vmem:[%s7] sm:$0x1]
  %v875 = vperm.slane %v873, 0
  %v877 = vadd.f32 %v854, %v875
  %v878 = vadd.f32 %v856, %v875
  %v879 = vadd.f32 %v859, %v875
  %v880 = vadd.f32 %v861, %v875
  %v881 = vadd.f32 %v864, %v875
  %v882 = vadd.f32 %v866, %v875
  %v883 = vadd.f32 %v869, %v875
  %v884 = vadd.f32 %v871, %v875
  %v885 = vadd.f32 %v877, %v44
  %v886 = vadd.f32 %v878, %v45
  %v887 = vadd.f32 %v879, %v46
  %v888 = vadd.f32 %v880, %v47
  %v889 = vadd.f32 %v881, %v48
  %v890 = vadd.f32 %v882, %v49
  %v891 = vadd.f32 %v883, %v50
  %v892 = vadd.f32 %v884, %v51
  %v893 = vpack.c.bf16 %v885, %v885
  %v894 = vpack.c.bf16 %v886, %v886
  %v895 = vpack.c.bf16 %v887, %v887
  %v896 = vpack.c.bf16 %v888, %v888
  %v897 = vpack.c.bf16 %v889, %v889
  %v898 = vpack.c.bf16 %v890, %v890
  %v899 = vpack.c.bf16 %v891, %v891
  %v900 = vpack.c.bf16 %v892, %v892
  %901 = vst.msk [vmem:[%s10] sm:$0xf] %vm76, %v893
  %902 = vst.msk [vmem:[%s10 + $0x4] sm:$0xf] %vm76, %v894
  %903 = vst.msk [vmem:[%s10 + $0x8] sm:$0xf] %vm76, %v895
  %904 = vst.msk [vmem:[%s10 + $0xc] sm:$0xf] %vm76, %v896
  %905 = vst.msk [vmem:[%s10 + $0x10] sm:$0xf] %vm76, %v897
  %906 = vst.msk [vmem:[%s10 + $0x14] sm:$0xf] %vm76, %v898
  %907 = vst.msk [vmem:[%s10 + $0x18] sm:$0xf] %vm76, %v899
  %vm908 = vcmask 254976
  %909 = vst.msk [vmem:[%s10 + $0x1c] sm:$0x3] %vm908, %v900
  // Predicated region
  $region42: #{_lambda_.9} parent=0 // pred_check
    _
  $region43: #{_lambda_.9} parent=0 // pred_check_branch
    %911 = sbr.rel (0) target = $region45
  $region44: #{_lambda_.9} parent=0 // pred_region
    _
  $region45: #{_lambda_.9} parent=0 // pred_fallthru
    _
  // Predicated region
  $region46: #{_lambda_.9} parent=0 // pred_check
    _
  $region47: #{_lambda_.9} parent=0 // pred_check_branch
    %913 = sbr.rel (0) target = $region49
  $region48: #{_lambda_.9} parent=0 // pred_region
    _
  $region49: #{_lambda_.9} parent=0 // pred_fallthru
    _

// kernel: _lambda_.12
$region0: #{_lambda_.12}
  #allocation0 [shape = 'u32[]', space=smem, size = 0x4, offset = 0x4, fixed_abs, tag = 'smem constant byte address 0x4 - core index']
  #allocation1 [shape = 'u32[72,128]{1,0:T(1,128)}', space=vmem, size = 0x9000, scoped, tag = 'internal scratch']
  %s0 = inlined_call_operand.vmem [shape: bf16[1,60,32], index: 0, kind: input, shape index: {}]
  %s1 = inlined_call_operand.vmem [shape: bf16[1,8,32], index: 1, kind: input, shape index: {}]
  %s2 = inlined_call_operand.vmem [shape: bf16[32,32], index: 2, kind: input, shape index: {}]
  %s3 = inlined_call_operand.vmem [shape: f32[1,32], index: 3, kind: input, shape index: {}]
  %s4 = inlined_call_operand.vmem [shape: bf16[32,64], index: 4, kind: input, shape index: {}]
  %s5 = inlined_call_operand.vmem [shape: f32[1,64], index: 5, kind: input, shape index: {}]
  %s6 = inlined_call_operand.vmem [shape: bf16[32,32], index: 6, kind: input, shape index: {}]
  %s7 = inlined_call_operand.vmem [shape: f32[1,32], index: 7, kind: input, shape index: {}]
  %s8 = inlined_call_operand.hbm [shape: f32[1,32], index: 8, kind: input, shape index: {}]
  %s9 = inlined_call_operand.hbm [shape: f32[1,32], index: 9, kind: input, shape index: {}]
  %s10 = inlined_call_operand.vmem [shape: bf16[1,60,32], index: 10, kind: output, shape index: {}]
  %s11 = sld [smem:[#allocation0]]
  $region58: #{_lambda_.12} parent=0
    _
  %s13 = ssub.s32 1, %s11
  %s14 = scalar_select 0, %s13, %s11
  $region1: #{_lambda_.12} parent=0
    #allocation2 [shape = 'u8[512]{0}', space=vmem, size = 0x400, scoped, tag = 'input window, operand 8, single buffered']
    #allocation3 [shape = 's32[1]{0}', space=sflag, size = 0x4, scoped, tag = 'scoped memory for _lambda_.12']
    #allocation4 [shape = 'u8[512]{0}', space=vmem, size = 0x400, scoped, tag = 'input window, operand 9, single buffered']
    #allocation5 [shape = 's32[1]{0}', space=sflag, size = 0x4, scoped, tag = 'scoped memory for _lambda_.12']
    %15 = vsyncpa [#allocation3], 0
    %16 = vsyncpa [#allocation5], 0
    // Predicated region
    $region2: #{_lambda_.12} parent=1 // pred_check
      _
    $region3: #{_lambda_.12} parent=1 // pred_check_branch
      %18 = sbr.rel (0) target = $region5
    $region4: #{_lambda_.12} parent=1 // pred_region
      _
    $region5: #{_lambda_.12} parent=1 // pred_fallthru
      _
    // Predicated region
    $region6: #{_lambda_.12} parent=1 // pred_check
      _
    $region7: #{_lambda_.12} parent=1 // pred_check_branch
      %20 = sbr.rel (0) target = $region9
    $region8: #{_lambda_.12} parent=1 // pred_region
      _
    $region9: #{_lambda_.12} parent=1 // pred_fallthru
      _
    // Predicated region
    $region10: #{_lambda_.12} parent=1 // pred_check
      _
    $region11: #{_lambda_.12} parent=1 // pred_check_branch
      %22 = sbr.rel (0) target = $region13
    $region12: #{_lambda_.12} parent=1 // pred_region
      _
    $region13: #{_lambda_.12} parent=1 // pred_fallthru
      _
    // Predicated region
    $region14: #{_lambda_.12} parent=1 // pred_check
      _
    $region15: #{_lambda_.12} parent=1 // pred_check_branch
      %24 = sbr.rel (0) target = $region17
    $region16: #{_lambda_.12} parent=1 // pred_region
      _
    $region17: #{_lambda_.12} parent=1 // pred_fallthru
      _
    // Predicated region
    $region18: #{_lambda_.12} parent=1 // pred_check
      _
    $region19: #{_lambda_.12} parent=1 // pred_check_branch
      %26 = sbr.rel (0) target = $region21
    $region20: #{_lambda_.12} parent=1 // pred_region
      _
    $region21: #{_lambda_.12} parent=1 // pred_fallthru
      _
    // Predicated region
    $region22: #{_lambda_.12} parent=1 // pred_check
      _
    $region23: #{_lambda_.12} parent=1 // pred_check_branch
      %28 = sbr.rel (0) target = $region25
    $region24: #{_lambda_.12} parent=1 // pred_region
      _
    $region25: #{_lambda_.12} parent=1 // pred_fallthru
      _
    // Predicated region
    $region26: #{_lambda_.12} parent=1 // pred_check
      _
    $region27: #{_lambda_.12} parent=1 // pred_check_branch
      %30 = sbr.rel (0) target = $region29
    $region28: #{_lambda_.12} parent=1 // pred_region
      _
    $region29: #{_lambda_.12} parent=1 // pred_fallthru
      _
    // Predicated region
    $region30: #{_lambda_.12} parent=1 // pred_check
      _
    $region31: #{_lambda_.12} parent=1 // pred_check_branch
      %32 = sbr.rel (0) target = $region33
    $region32: #{_lambda_.12} parent=1 // pred_region
      _
    $region33: #{_lambda_.12} parent=1 // pred_fallthru
      _
    // Predicated region
    $region34: #{_lambda_.12} parent=1 // pred_check
      _
    $region35: #{_lambda_.12} parent=1 // pred_check_branch
      %34 = sbr.rel (0) target = $region37
    $region36: #{_lambda_.12} parent=1 // pred_region
      %36 = vsyncadd [#allocation3], 0
      %s38 = sshll.u32 %s8, 4
      %s39 = int_to_ptr.hbm [resolvable:$true] %s38
      %s40 = sshll.u32 [#allocation2], 4
      %s41 = int_to_ptr.vmem [resolvable:$true] %s40
      %43 = dma.hbm_to_vmem [thread:$0]  %s39, 16, %s41, [#allocation3]
    $region37: #{_lambda_.12} parent=1 // pred_fallthru
      _
    // Predicated region
    $region38: #{_lambda_.12} parent=1 // pred_check
      _
    $region39: #{_lambda_.12} parent=1 // pred_check_branch
      %45 = sbr.rel (0) target = $region41
    $region40: #{_lambda_.12} parent=1 // pred_region
      %47 = vsyncadd [#allocation5], 0
      %s49 = sshll.u32 %s9, 4
      %s50 = int_to_ptr.hbm [resolvable:$true] %s49
      %s51 = sshll.u32 [#allocation4], 4
      %s52 = int_to_ptr.vmem [resolvable:$true] %s51
      %54 = dma.hbm_to_vmem [thread:$0]  %s50, 16, %s52, [#allocation5]
    $region41: #{_lambda_.12} parent=1 // pred_fallthru
      _
    // Predicated region
    $region42: #{_lambda_.12} parent=1 // pred_check
      _
    $region43: #{_lambda_.12} parent=1 // pred_check_branch
      %56 = sbr.rel (0) target = $region45
    $region44: #{_lambda_.12} parent=1 // pred_region
      %58 = dma.done [#allocation3], 16
    $region45: #{_lambda_.12} parent=1 // pred_fallthru
      _
    // Predicated region
    $region46: #{_lambda_.12} parent=1 // pred_check
      _
    $region47: #{_lambda_.12} parent=1 // pred_check_branch
      %60 = sbr.rel (0) target = $region49
    $region48: #{_lambda_.12} parent=1 // pred_region
      %62 = dma.done [#allocation5], 16
    $region49: #{_lambda_.12} parent=1 // pred_fallthru
      _
    %v64 = vld [vmem:[%s0] sm:$0xf]
    %v65 = vld [vmem:[%s0 + $0x4] sm:$0xf]
    %v66 = vld [vmem:[%s0 + $0x8] sm:$0xf]
    %v67 = vld [vmem:[%s0 + $0xc] sm:$0xf]
    %v68 = vld [vmem:[%s0 + $0x10] sm:$0xf]
    %v69 = vld [vmem:[%s0 + $0x14] sm:$0xf]
    %v70 = vld [vmem:[%s0 + $0x18] sm:$0xf]
    %v71 = vld [vmem:[%s0 + $0x1c] sm:$0x3]
    %v72 = vunpack.c.l.bf16 %v64
    %v73 = vunpack.c.l.bf16 %v65
    %v74 = vunpack.c.l.bf16 %v66
    %v75 = vunpack.c.l.bf16 %v67
    %v76 = vunpack.c.l.bf16 %v68
    %v77 = vunpack.c.l.bf16 %v69
    %v78 = vunpack.c.l.bf16 %v70
    %v79 = vunpack.c.l.bf16 %v71
    %v80 = vld [vmem:[#allocation2] sm:$0x1]
    %v81 = vld [vmem:[#allocation4] sm:$0x1]
    %vm82 = vcmask 261120
    %v83 = vsel %vm82, %v72, 0.0
    %84 = vadd.xlane.f32.xlu0 %v83
    %v85 = vpop.xlane.xlu0 %84
    %v86 = vsel %vm82, %v73, 0.0
    %87 = vadd.xlane.f32.xlu0 %v86
    %v88 = vpop.xlane.xlu0 %87
    %v89 = vsel %vm82, %v74, 0.0
    %90 = vadd.xlane.f32.xlu0 %v89
    %v91 = vpop.xlane.xlu0 %90
    %v92 = vsel %vm82, %v75, 0.0
    %93 = vadd.xlane.f32.xlu0 %v92
    %v94 = vpop.xlane.xlu0 %93
    %v95 = vsel %vm82, %v76, 0.0
    %96 = vadd.xlane.f32.xlu0 %v95
    %v97 = vpop.xlane.xlu0 %96
    %v98 = vsel %vm82, %v77, 0.0
    %99 = vadd.xlane.f32.xlu0 %v98
    %v100 = vpop.xlane.xlu0 %99
    %v101 = vsel %vm82, %v78, 0.0
    %102 = vadd.xlane.f32.xlu0 %v101
    %v103 = vpop.xlane.xlu0 %102
    %vm104 = vcmask 257024
    %v105 = vsel %vm104, %v79, 0.0
    %106 = vadd.xlane.f32.xlu0 %v105
    %v107 = vpop.xlane.xlu0 %106
    %v108 = vrcp.pop 32.0
    %v109 = vmul.f32 32.0, %v108
    %v110 = vsub.f32 1.0, %v109
    %v111 = vmul.f32 %v108, %v110
    %v112 = vadd.f32 %v108, %v111
    %vm113 = vweird.f32 %v108
    %v114 = vsel %vm113, %v108, %v112
    %v115 = vmul.f32 %v85, %v114
    %v116 = vmul.f32 %v88, %v114
    %v117 = vmul.f32 %v91, %v114
    %v118 = vmul.f32 %v94, %v114
    %v119 = vmul.f32 %v97, %v114
    %v120 = vmul.f32 %v100, %v114
    %v121 = vmul.f32 %v103, %v114
    %v122 = vmul.f32 %v107, %v114
    %v123 = vsub.f32 %v72, %v115
    %v124 = vsub.f32 %v73, %v116
    %v125 = vsub.f32 %v74, %v117
    %v126 = vsub.f32 %v75, %v118
    %v127 = vsub.f32 %v76, %v119
    %v128 = vsub.f32 %v77, %v120
    %v129 = vsub.f32 %v78, %v121
    %v130 = vsub.f32 %v79, %v122
    %v131 = vmul.f32 %v123, %v123
    %v132 = vmul.f32 %v124, %v124
    %v133 = vmul.f32 %v125, %v125
    %v134 = vmul.f32 %v126, %v126
    %v135 = vmul.f32 %v127, %v127
    %v136 = vmul.f32 %v128, %v128
    %v137 = vmul.f32 %v129, %v129
    %v138 = vmul.f32 %v130, %v130
    %v139 = vsel %vm82, %v131, 0.0
    %140 = vadd.xlane.f32.xlu0 %v139
    %v141 = vpop.xlane.xlu0 %140
    %v142 = vsel %vm82, %v132, 0.0
    %143 = vadd.xlane.f32.xlu0 %v142
    %v144 = vpop.xlane.xlu0 %143
    %v145 = vsel %vm82, %v133, 0.0
    %146 = vadd.xlane.f32.xlu0 %v145
    %v147 = vpop.xlane.xlu0 %146
    %v148 = vsel %vm82, %v134, 0.0
    %149 = vadd.xlane.f32.xlu0 %v148
    %v150 = vpop.xlane.xlu0 %149
    %v151 = vsel %vm82, %v135, 0.0
    %152 = vadd.xlane.f32.xlu0 %v151
    %v153 = vpop.xlane.xlu0 %152
    %v154 = vsel %vm82, %v136, 0.0
    %155 = vadd.xlane.f32.xlu0 %v154
    %v156 = vpop.xlane.xlu0 %155
    %v157 = vsel %vm82, %v137, 0.0
    %158 = vadd.xlane.f32.xlu0 %v157
    %v159 = vpop.xlane.xlu0 %158
    %v160 = vsel %vm104, %v138, 0.0
    %161 = vadd.xlane.f32.xlu0 %v160
    %v162 = vpop.xlane.xlu0 %161
    %v163 = vmul.f32 %v141, %v114
    %v164 = vmul.f32 %v144, %v114
    %v165 = vmul.f32 %v147, %v114
    %v166 = vmul.f32 %v150, %v114
    %v167 = vmul.f32 %v153, %v114
    %v168 = vmul.f32 %v156, %v114
    %v169 = vmul.f32 %v159, %v114
    %v170 = vmul.f32 %v162, %v114
    %v171 = vadd.f32 %v163, 1e-05
    %v172 = vadd.f32 %v164, 1e-05
    %v173 = vadd.f32 %v165, 1e-05
    %v174 = vadd.f32 %v166, 1e-05
    %v175 = vadd.f32 %v167, 1e-05
    %v176 = vadd.f32 %v168, 1e-05
    %v177 = vadd.f32 %v169, 1e-05
    %v178 = vadd.f32 %v170, 1e-05
    %v179 = vrsqrt.pop %v171
    %v180 = vmul.f32 %v179, %v171
    %v181 = vmul.f32 %v180, %v179
    %v182 = vmul.f32 0.5, %v181
    %v183 = vsub.f32 1.5, %v182
    %v184 = vmul.f32 %v179, %v183
    %vm185 = vweird.f32 %v171
    %vm186 = vweird.f32 %v179
    %vm187 = vmor %vm185, %vm186
    %v188 = vsel %vm187, %v179, %v184
    %v189 = vrsqrt.pop %v172
    %v190 = vmul.f32 %v189, %v172
    %v191 = vmul.f32 %v190, %v189
    %v192 = vmul.f32 0.5, %v191
    %v193 = vsub.f32 1.5, %v192
    %v194 = vmul.f32 %v189, %v193
    %vm195 = vweird.f32 %v172
    %vm196 = vweird.f32 %v189
    %vm197 = vmor %vm195, %vm196
    %v198 = vsel %vm197, %v189, %v194
    %v199 = vrsqrt.pop %v173
    %v200 = vmul.f32 %v199, %v173
    %v201 = vmul.f32 %v200, %v199
    %v202 = vmul.f32 0.5, %v201
    %v203 = vsub.f32 1.5, %v202
    %v204 = vmul.f32 %v199, %v203
    %vm205 = vweird.f32 %v173
    %vm206 = vweird.f32 %v199
    %vm207 = vmor %vm205, %vm206
    %v208 = vsel %vm207, %v199, %v204
    %v209 = vrsqrt.pop %v174
    %v210 = vmul.f32 %v209, %v174
    %v211 = vmul.f32 %v210, %v209
    %v212 = vmul.f32 0.5, %v211
    %v213 = vsub.f32 1.5, %v212
    %v214 = vmul.f32 %v209, %v213
    %vm215 = vweird.f32 %v174
    %vm216 = vweird.f32 %v209
    %vm217 = vmor %vm215, %vm216
    %v218 = vsel %vm217, %v209, %v214
    %v219 = vrsqrt.pop %v175
    %v220 = vmul.f32 %v219, %v175
    %v221 = vmul.f32 %v220, %v219
    %v222 = vmul.f32 0.5, %v221
    %v223 = vsub.f32 1.5, %v222
    %v224 = vmul.f32 %v219, %v223
    %vm225 = vweird.f32 %v175
    %vm226 = vweird.f32 %v219
    %vm227 = vmor %vm225, %vm226
    %v228 = vsel %vm227, %v219, %v224
    %v229 = vrsqrt.pop %v176
    %v230 = vmul.f32 %v229, %v176
    %v231 = vmul.f32 %v230, %v229
    %v232 = vmul.f32 0.5, %v231
    %v233 = vsub.f32 1.5, %v232
    %v234 = vmul.f32 %v229, %v233
    %vm235 = vweird.f32 %v176
    %vm236 = vweird.f32 %v229
    %vm237 = vmor %vm235, %vm236
    %v238 = vsel %vm237, %v229, %v234
    %v239 = vrsqrt.pop %v177
    %v240 = vmul.f32 %v239, %v177
    %v241 = vmul.f32 %v240, %v239
    %v242 = vmul.f32 0.5, %v241
    %v243 = vsub.f32 1.5, %v242
    %v244 = vmul.f32 %v239, %v243
    %vm245 = vweird.f32 %v177
    %vm246 = vweird.f32 %v239
    %vm247 = vmor %vm245, %vm246
    %v248 = vsel %vm247, %v239, %v244
    %v249 = vrsqrt.pop %v178
    %v250 = vmul.f32 %v249, %v178
    %v251 = vmul.f32 %v250, %v249
    %v252 = vmul.f32 0.5, %v251
    %v253 = vsub.f32 1.5, %v252
    %v254 = vmul.f32 %v249, %v253
    %vm255 = vweird.f32 %v178
    %vm256 = vweird.f32 %v249
    %vm257 = vmor %vm255, %vm256
    %v258 = vsel %vm257, %v249, %v254
    %v259 = vmul.f32 %v123, %v188
    %v260 = vmul.f32 %v124, %v198
    %v261 = vmul.f32 %v125, %v208
    %v262 = vmul.f32 %v126, %v218
    %v263 = vmul.f32 %v127, %v228
    %v264 = vmul.f32 %v128, %v238
    %v265 = vmul.f32 %v129, %v248
    %v266 = vmul.f32 %v130, %v258
    %v268 = vperm.slane %v80, 0
    %v270 = vmul.f32 %v259, %v268
    %v271 = vmul.f32 %v260, %v268
    %v272 = vmul.f32 %v261, %v268
    %v273 = vmul.f32 %v262, %v268
    %v274 = vmul.f32 %v263, %v268
    %v275 = vmul.f32 %v264, %v268
    %v276 = vmul.f32 %v265, %v268
    %v277 = vmul.f32 %v266, %v268
    %v279 = vperm.slane %v81, 0
    %v281 = vadd.f32 %v270, %v279
    %v282 = vadd.f32 %v271, %v279
    %v283 = vadd.f32 %v272, %v279
    %v284 = vadd.f32 %v273, %v279
    %v285 = vadd.f32 %v274, %v279
    %v286 = vadd.f32 %v275, %v279
    %v287 = vadd.f32 %v276, %v279
    %v288 = vadd.f32 %v277, %v279
    %v289 = vpack.c.bf16 %v282, %v281
    %v290 = vpack.c.bf16 %v284, %v283
    %v291 = vpack.c.bf16 %v286, %v285
    %v292 = vpack.c.bf16 %v288, %v287
    %v293 = vld [vmem:[%s2] sm:$0xf]
    %v294 = vld [vmem:[%s2 + $0x4] sm:$0xf]
    %v295 = vld [vmem:[%s2 + $0x8] sm:$0xf]
    %v296 = vld [vmem:[%s2 + $0xc] sm:$0xf]
    %v297 = vld [vmem:[%s3] sm:$0x1]
    %v299 = vperm.slane %v297, 0
    %v305 = vunpack.c.l.b16 %v293
    %v306 = vunpack.c.l.b16 %v294
    %v307 = vunpack.c.l.b16 %v295
    %v308 = vunpack.c.l.b16 %v296
    %v309 = vpack.c.b16 %v306, %v305
    %v310 = vpack.c.b16 %v308, %v307
    %v314 = vsel %vm82, %v289, 0
    %v317 = vsel %vm82, %v290, 0
    %v320 = vsel %vm82, %v291, 0
    %v323 = vsel %vm82, %v292, 0
    %325 = vmatpush.bf16.msra.mxu0 0
    %326 = vmatpush.bf16.msra.mxu0 0
    %327 = vmatpush.bf16.msra.mxu0 0
    %328 = vmatpush.bf16.msra.mxu0 0
    %329 = vmatpush.bf16.msra.mxu0 0
    %330 = vmatpush.bf16.msra.mxu0 0
    %331 = vmatpush.bf16.msra.mxu0 %v310
    %332 = vmatpush.bf16.msra.mxu0 %v309
    %333 = vmatmul.bf16.gmra.mxu0 %v314
    %v334 = vpop.f32.mrf.mxu0
    %v335 = vadd.f32 %v299, %v334
    %v336 = vpop.f32.mrf.mxu0
    %v337 = vadd.f32 %v299, %v336
    %338 = vmatmul.bf16.gmra.mxu0 %v317
    %v339 = vpop.f32.mrf.mxu0
    %v340 = vadd.f32 %v299, %v339
    %v341 = vpop.f32.mrf.mxu0
    %v342 = vadd.f32 %v299, %v341
    %343 = vmatmul.bf16.gmra.mxu0 %v320
    %v344 = vpop.f32.mrf.mxu0
    %v345 = vadd.f32 %v299, %v344
    %v346 = vpop.f32.mrf.mxu0
    %v347 = vadd.f32 %v299, %v346
    %348 = vmatmul.bf16.gmra.mxu0 %v323
    %v349 = vpop.f32.mrf.mxu0
    %v350 = vadd.f32 %v299, %v349
    %v351 = vpop.f32.mrf.mxu0
    %v352 = vadd.f32 %v299, %v351
    %353 = vdwg.mxu0
    %v354 = vld [vmem:[%s1] sm:$0xf]
    %v355 = vld [vmem:[%s4] sm:$0xf]
    %v356 = vld [vmem:[%s4 + $0x4] sm:$0xf]
    %v357 = vld [vmem:[%s4 + $0x8] sm:$0xf]
    %v358 = vld [vmem:[%s4 + $0xc] sm:$0xf]
    %v359 = vld [vmem:[%s5] sm:$0x1]
    %v361 = vperm.slane %v359, 0
    %v367 = vunpack.c.l.b16 %v355
    %v368 = vunpack.c.l.b16 %v356
    %v369 = vunpack.c.l.b16 %v357
    %v370 = vunpack.c.l.b16 %v358
    %v371 = vpack.c.b16 %v368, %v367
    %v372 = vpack.c.b16 %v370, %v369
    %v376 = vsel %vm82, %v354, 0
    %378 = vmatpush.bf16.msra.mxu0 0
    %379 = vmatpush.bf16.msra.mxu0 0
    %380 = vmatpush.bf16.msra.mxu0 0
    %381 = vmatpush.bf16.msra.mxu0 0
    %382 = vmatpush.bf16.msra.mxu0 0
    %383 = vmatpush.bf16.msra.mxu0 0
    %384 = vmatpush.bf16.msra.mxu0 %v372
    %385 = vmatpush.bf16.msra.mxu0 %v371
    %386 = vmatmul.bf16.gmra.mxu0 %v376
    %v387 = vpop.f32.mrf.mxu0
    %v388 = vadd.f32 %v361, %v387
    %v389 = vpop.f32.mrf.mxu0
    %390 = vdwg.mxu0
    %v391 = vld [vmem:[%s6] sm:$0xf]
    %v392 = vld [vmem:[%s6 + $0x4] sm:$0xf]
    %v393 = vld [vmem:[%s6 + $0x8] sm:$0xf]
    %v394 = vld [vmem:[%s6 + $0xc] sm:$0xf]
    %v395 = vpack.c.bf16 %v337, %v335
    %v396 = vpack.c.bf16 %v342, %v340
    %v397 = vpack.c.bf16 %v347, %v345
    %v398 = vpack.c.bf16 %v352, %v350
    %v399 = vpack.c.bf16 %v388, %v388
    %vm400 = vcmask 130048
    %v402 = vsel %vm400, %v395, 0
    %v405 = vsel %vm400, %v396, 0
    %v408 = vsel %vm400, %v397, 0
    %v411 = vsel %vm400, %v398, 0
    %v414 = vsel %vm400, %v399, 0
    %416 = vmatpush.bf16.xpose.msra.mxu0 0
    %417 = vmatpush.bf16.xpose.msra.mxu0 0
    %418 = vmatpush.bf16.xpose.msra.mxu0 0
    %419 = vmatpush.bf16.xpose.msra.mxu0 0
    %420 = vmatpush.bf16.xpose.msra.mxu0 0
    %421 = vmatpush.bf16.xpose.msra.mxu0 0
    %422 = vmatpush.bf16.xpose.msra.mxu0 0
    %423 = vmatpush.bf16.xpose.msra.mxu0 %v414
    %424 = vmatmul.bf16.gmra.mxu0 %v402
    %v425 = vpop.f32.mrf.mxu0
    %v426 = vadd.f32 0.0, %v425
    %v427 = vpop.f32.mrf.mxu0
    %v428 = vadd.f32 0.0, %v427
    %429 = vmatmul.bf16.gmra.mxu0 %v405
    %v430 = vpop.f32.mrf.mxu0
    %v431 = vadd.f32 0.0, %v430
    %v432 = vpop.f32.mrf.mxu0
    %v433 = vadd.f32 0.0, %v432
    %434 = vmatmul.bf16.gmra.mxu0 %v408
    %v435 = vpop.f32.mrf.mxu0
    %v436 = vadd.f32 0.0, %v435
    %v437 = vpop.f32.mrf.mxu0
    %v438 = vadd.f32 0.0, %v437
    %439 = vmatmul.bf16.gmra.mxu0 %v411
    %v440 = vpop.f32.mrf.mxu0
    %v441 = vadd.f32 0.0, %v440
    %v442 = vpop.f32.mrf.mxu0
    %v443 = vadd.f32 0.0, %v442
    %444 = vdwg.mxu0
    %v445 = vmul.f32 %v426, 0.25
    %v446 = vmul.f32 %v428, 0.25
    %v447 = vmul.f32 %v431, 0.25
    %v448 = vmul.f32 %v433, 0.25
    %v449 = vmul.f32 %v436, 0.25
    %v450 = vmul.f32 %v438, 0.25
    %v451 = vmul.f32 %v441, 0.25
    %v452 = vmul.f32 %v443, 0.25
    %vm453 = vcmask 64512
    %v454 = vsel %vm453, %v445, -inf
    %455 = vmax.xlane.f32.xlu0 %v454
    %v456 = vpop.xlane.xlu0 %455
    %v457 = vsel %vm453, %v446, -inf
    %458 = vmax.xlane.f32.xlu0 %v457
    %v459 = vpop.xlane.xlu0 %458
    %v460 = vsel %vm453, %v447, -inf
    %461 = vmax.xlane.f32.xlu0 %v460
    %v462 = vpop.xlane.xlu0 %461
    %v463 = vsel %vm453, %v448, -inf
    %464 = vmax.xlane.f32.xlu0 %v463
    %v465 = vpop.xlane.xlu0 %464
    %v466 = vsel %vm453, %v449, -inf
    %467 = vmax.xlane.f32.xlu0 %v466
    %v468 = vpop.xlane.xlu0 %467
    %v469 = vsel %vm453, %v450, -inf
    %470 = vmax.xlane.f32.xlu0 %v469
    %v471 = vpop.xlane.xlu0 %470
    %v472 = vsel %vm453, %v451, -inf
    %473 = vmax.xlane.f32.xlu0 %v472
    %v474 = vpop.xlane.xlu0 %473
    %vm475 = vcmask 60416
    %v476 = vsel %vm475, %v452, -inf
    %477 = vmax.xlane.f32.xlu0 %v476
    %v478 = vpop.xlane.xlu0 %477
    %v479 = vsub.f32 %v445, %v456
    %v480 = vsub.f32 %v446, %v459
    %v481 = vsub.f32 %v447, %v462
    %v482 = vsub.f32 %v448, %v465
    %v483 = vsub.f32 %v449, %v468
    %v484 = vsub.f32 %v450, %v471
    %v485 = vsub.f32 %v451, %v474
    %v486 = vsub.f32 %v452, %v478
    %v487 = vmul.f32 %v479, 1.442695
    %v488 = vpow.pop %v487
    %v489 = vmul.f32 %v480, 1.442695
    %v490 = vpow.pop %v489
    %v491 = vmul.f32 %v481, 1.442695
    %v492 = vpow.pop %v491
    %v493 = vmul.f32 %v482, 1.442695
    %v494 = vpow.pop %v493
    %v495 = vmul.f32 %v483, 1.442695
    %v496 = vpow.pop %v495
    %v497 = vmul.f32 %v484, 1.442695
    %v498 = vpow.pop %v497
    %v499 = vmul.f32 %v485, 1.442695
    %v500 = vpow.pop %v499
    %v501 = vmul.f32 %v486, 1.442695
    %v502 = vpow.pop %v501
    %v503 = vsel %vm453, %v488, 0.0
    %504 = vadd.xlane.f32.xlu0 %v503
    %v505 = vpop.xlane.xlu0 %504
    %v506 = vsel %vm453, %v490, 0.0
    %507 = vadd.xlane.f32.xlu0 %v506
    %v508 = vpop.xlane.xlu0 %507
    %v509 = vsel %vm453, %v492, 0.0
    %510 = vadd.xlane.f32.xlu0 %v509
    %v511 = vpop.xlane.xlu0 %510
    %v512 = vsel %vm453, %v494, 0.0
    %513 = vadd.xlane.f32.xlu0 %v512
    %v514 = vpop.xlane.xlu0 %513
    %v515 = vsel %vm453, %v496, 0.0
    %516 = vadd.xlane.f32.xlu0 %v515
    %v517 = vpop.xlane.xlu0 %516
    %v518 = vsel %vm453, %v498, 0.0
    %519 = vadd.xlane.f32.xlu0 %v518
    %v520 = vpop.xlane.xlu0 %519
    %v521 = vsel %vm453, %v500, 0.0
    %522 = vadd.xlane.f32.xlu0 %v521
    %v523 = vpop.xlane.xlu0 %522
    %v524 = vsel %vm475, %v502, 0.0
    %525 = vadd.xlane.f32.xlu0 %v524
    %v526 = vpop.xlane.xlu0 %525
    %v527 = vrcp.pop %v505
    %v528 = vrcp.pop %v508
    %v529 = vrcp.pop %v511
    %v530 = vrcp.pop %v514
    %v531 = vrcp.pop %v517
    %v532 = vrcp.pop %v520
    %v533 = vrcp.pop %v523
    %v534 = vrcp.pop %v526
    %v535 = vmul.f32 %v488, %v527
    %v536 = vmul.f32 %v490, %v528
    %v537 = vmul.f32 %v492, %v529
    %v538 = vmul.f32 %v494, %v530
    %v539 = vmul.f32 %v496, %v531
    %v540 = vmul.f32 %v498, %v532
    %v541 = vmul.f32 %v500, %v533
    %v542 = vmul.f32 %v502, %v534
    %v543 = vpack.c.bf16 %v536, %v535
    %v544 = vpack.c.bf16 %v538, %v537
    %v545 = vpack.c.bf16 %v540, %v539
    %v546 = vpack.c.bf16 %v542, %v541
    %548 = vrot.lane.b32.xlu0 %v399, 96
    %v549 = vpop.permute.xlu0 %548
    %v551 = vsel %vm453, %v543, 0
    %v554 = vsel %vm453, %v544, 0
    %v557 = vsel %vm453, %v545, 0
    %v560 = vsel %vm453, %v546, 0
    %vm562 = vcmask 1043456
    %v564 = vsel %vm562, %v549, 0
    %566 = vmatpush.bf16.msra.mxu0 0
    %567 = vmatpush.bf16.msra.mxu0 0
    %568 = vmatpush.bf16.msra.mxu0 0
    %569 = vmatpush.bf16.msra.mxu0 0
    %570 = vmatpush.bf16.msra.mxu0 0
    %571 = vmatpush.bf16.msra.mxu0 0
    %572 = vmatpush.bf16.msra.mxu0 0
    %573 = vmatpush.bf16.msra.mxu0 %v564
    %574 = vmatmul.bf16.gmra.mxu0 %v551
    %v575 = vpop.f32.mrf.mxu0
    %v576 = vadd.f32 0.0, %v575
    %v577 = vpop.f32.mrf.mxu0
    %v578 = vadd.f32 0.0, %v577
    %579 = vmatmul.bf16.gmra.mxu0 %v554
    %v580 = vpop.f32.mrf.mxu0
    %v581 = vadd.f32 0.0, %v580
    %v582 = vpop.f32.mrf.mxu0
    %v583 = vadd.f32 0.0, %v582
    %584 = vmatmul.bf16.gmra.mxu0 %v557
    %v585 = vpop.f32.mrf.mxu0
    %v586 = vadd.f32 0.0, %v585
    %v587 = vpop.f32.mrf.mxu0
    %v588 = vadd.f32 0.0, %v587
    %589 = vmatmul.bf16.gmra.mxu0 %v560
    %v590 = vpop.f32.mrf.mxu0
    %v591 = vadd.f32 0.0, %v590
    %v592 = vpop.f32.mrf.mxu0
    %v593 = vadd.f32 0.0, %v592
    %594 = vdwg.mxu0
    %v595 = vpack.c.bf16 %v578, %v576
    %v596 = vpack.c.bf16 %v583, %v581
    %v597 = vpack.c.bf16 %v588, %v586
    %v598 = vpack.c.bf16 %v593, %v591
    %603 = vrot.lane.b32.xlu0 %v395, 112
    %v604 = vpop.permute.xlu0 %603
    %605 = vrot.lane.b32.xlu0 %v396, 112
    %v606 = vpop.permute.xlu0 %605
    %607 = vrot.lane.b32.xlu0 %v397, 112
    %v608 = vpop.permute.xlu0 %607
    %609 = vrot.lane.b32.xlu0 %v398, 112
    %v610 = vpop.permute.xlu0 %609
    %611 = vrot.lane.b32.xlu0 %v399, 112
    %v612 = vpop.permute.xlu0 %611
    %v614 = vsel %vm400, %v604, 0
    %v617 = vsel %vm400, %v606, 0
    %v620 = vsel %vm400, %v608, 0
    %v623 = vsel %vm400, %v610, 0
    %v626 = vsel %vm400, %v612, 0
    %628 = vmatpush.bf16.xpose.msra.mxu0 0
    %629 = vmatpush.bf16.xpose.msra.mxu0 0
    %630 = vmatpush.bf16.xpose.msra.mxu0 0
    %631 = vmatpush.bf16.xpose.msra.mxu0 0
    %632 = vmatpush.bf16.xpose.msra.mxu0 0
    %633 = vmatpush.bf16.xpose.msra.mxu0 0
    %634 = vmatpush.bf16.xpose.msra.mxu0 0
    %635 = vmatpush.bf16.xpose.msra.mxu0 %v626
    %636 = vmatmul.bf16.gmra.mxu0 %v614
    %v637 = vpop.f32.mrf.mxu0
    %v638 = vadd.f32 0.0, %v637
    %v639 = vpop.f32.mrf.mxu0
    %v640 = vadd.f32 0.0, %v639
    %641 = vmatmul.bf16.gmra.mxu0 %v617
    %v642 = vpop.f32.mrf.mxu0
    %v643 = vadd.f32 0.0, %v642
    %v644 = vpop.f32.mrf.mxu0
    %v645 = vadd.f32 0.0, %v644
    %646 = vmatmul.bf16.gmra.mxu0 %v620
    %v647 = vpop.f32.mrf.mxu0
    %v648 = vadd.f32 0.0, %v647
    %v649 = vpop.f32.mrf.mxu0
    %v650 = vadd.f32 0.0, %v649
    %651 = vmatmul.bf16.gmra.mxu0 %v623
    %v652 = vpop.f32.mrf.mxu0
    %v653 = vadd.f32 0.0, %v652
    %v654 = vpop.f32.mrf.mxu0
    %v655 = vadd.f32 0.0, %v654
    %656 = vdwg.mxu0
    %v657 = vmul.f32 %v638, 0.25
    %v658 = vmul.f32 %v640, 0.25
    %v659 = vmul.f32 %v643, 0.25
    %v660 = vmul.f32 %v645, 0.25
    %v661 = vmul.f32 %v648, 0.25
    %v662 = vmul.f32 %v650, 0.25
    %v663 = vmul.f32 %v653, 0.25
    %v664 = vmul.f32 %v655, 0.25
    %v665 = vsel %vm453, %v657, -inf
    %666 = vmax.xlane.f32.xlu0 %v665
    %v667 = vpop.xlane.xlu0 %666
    %v668 = vsel %vm453, %v658, -inf
    %669 = vmax.xlane.f32.xlu0 %v668
    %v670 = vpop.xlane.xlu0 %669
    %v671 = vsel %vm453, %v659, -inf
    %672 = vmax.xlane.f32.xlu0 %v671
    %v673 = vpop.xlane.xlu0 %672
    %v674 = vsel %vm453, %v660, -inf
    %675 = vmax.xlane.f32.xlu0 %v674
    %v676 = vpop.xlane.xlu0 %675
    %v677 = vsel %vm453, %v661, -inf
    %678 = vmax.xlane.f32.xlu0 %v677
    %v679 = vpop.xlane.xlu0 %678
    %v680 = vsel %vm453, %v662, -inf
    %681 = vmax.xlane.f32.xlu0 %v680
    %v682 = vpop.xlane.xlu0 %681
    %v683 = vsel %vm453, %v663, -inf
    %684 = vmax.xlane.f32.xlu0 %v683
    %v685 = vpop.xlane.xlu0 %684
    %v686 = vsel %vm475, %v664, -inf
    %687 = vmax.xlane.f32.xlu0 %v686
    %v688 = vpop.xlane.xlu0 %687
    %v689 = vsub.f32 %v657, %v667
    %v690 = vsub.f32 %v658, %v670
    %v691 = vsub.f32 %v659, %v673
    %v692 = vsub.f32 %v660, %v676
    %v693 = vsub.f32 %v661, %v679
    %v694 = vsub.f32 %v662, %v682
    %v695 = vsub.f32 %v663, %v685
    %v696 = vsub.f32 %v664, %v688
    %v697 = vmul.f32 %v689, 1.442695
    %v698 = vpow.pop %v697
    %v699 = vmul.f32 %v690, 1.442695
    %v700 = vpow.pop %v699
    %v701 = vmul.f32 %v691, 1.442695
    %v702 = vpow.pop %v701
    %v703 = vmul.f32 %v692, 1.442695
    %v704 = vpow.pop %v703
    %v705 = vmul.f32 %v693, 1.442695
    %v706 = vpow.pop %v705
    %v707 = vmul.f32 %v694, 1.442695
    %v708 = vpow.pop %v707
    %v709 = vmul.f32 %v695, 1.442695
    %v710 = vpow.pop %v709
    %v711 = vmul.f32 %v696, 1.442695
    %v712 = vpow.pop %v711
    %v713 = vsel %vm453, %v698, 0.0
    %714 = vadd.xlane.f32.xlu0 %v713
    %v715 = vpop.xlane.xlu0 %714
    %v716 = vsel %vm453, %v700, 0.0
    %717 = vadd.xlane.f32.xlu0 %v716
    %v718 = vpop.xlane.xlu0 %717
    %v719 = vsel %vm453, %v702, 0.0
    %720 = vadd.xlane.f32.xlu0 %v719
    %v721 = vpop.xlane.xlu0 %720
    %v722 = vsel %vm453, %v704, 0.0
    %723 = vadd.xlane.f32.xlu0 %v722
    %v724 = vpop.xlane.xlu0 %723
    %v725 = vsel %vm453, %v706, 0.0
    %726 = vadd.xlane.f32.xlu0 %v725
    %v727 = vpop.xlane.xlu0 %726
    %v728 = vsel %vm453, %v708, 0.0
    %729 = vadd.xlane.f32.xlu0 %v728
    %v730 = vpop.xlane.xlu0 %729
    %v731 = vsel %vm453, %v710, 0.0
    %732 = vadd.xlane.f32.xlu0 %v731
    %v733 = vpop.xlane.xlu0 %732
    %v734 = vsel %vm475, %v712, 0.0
    %735 = vadd.xlane.f32.xlu0 %v734
    %v736 = vpop.xlane.xlu0 %735
    %v737 = vrcp.pop %v715
    %v738 = vrcp.pop %v718
    %v739 = vrcp.pop %v721
    %v740 = vrcp.pop %v724
    %v741 = vrcp.pop %v727
    %v742 = vrcp.pop %v730
    %v743 = vrcp.pop %v733
    %v744 = vrcp.pop %v736
    %v745 = vmul.f32 %v698, %v737
    %v746 = vmul.f32 %v700, %v738
    %v747 = vmul.f32 %v702, %v739
    %v748 = vmul.f32 %v704, %v740
    %v749 = vmul.f32 %v706, %v741
    %v750 = vmul.f32 %v708, %v742
    %v751 = vmul.f32 %v710, %v743
    %v752 = vmul.f32 %v712, %v744
    %v753 = vpack.c.bf16 %v746, %v745
    %v754 = vpack.c.bf16 %v748, %v747
    %v755 = vpack.c.bf16 %v750, %v749
    %v756 = vpack.c.bf16 %v752, %v751
    %757 = vrot.lane.b32.xlu0 %v399, 80
    %v758 = vpop.permute.xlu0 %757
    %v760 = vsel %vm453, %v753, 0
    %v763 = vsel %vm453, %v754, 0
    %v766 = vsel %vm453, %v755, 0
    %v769 = vsel %vm453, %v756, 0
    %v772 = vsel %vm562, %v758, 0
    %774 = vmatpush.bf16.msra.mxu0 0
    %775 = vmatpush.bf16.msra.mxu0 0
    %776 = vmatpush.bf16.msra.mxu0 0
    %777 = vmatpush.bf16.msra.mxu0 0
    %778 = vmatpush.bf16.msra.mxu0 0
    %779 = vmatpush.bf16.msra.mxu0 0
    %780 = vmatpush.bf16.msra.mxu0 0
    %781 = vmatpush.bf16.msra.mxu0 %v772
    %782 = vmatmul.bf16.gmra.mxu0 %v760
    %v783 = vpop.f32.mrf.mxu0
    %v784 = vadd.f32 0.0, %v783
    %v785 = vpop.f32.mrf.mxu0
    %v786 = vadd.f32 0.0, %v785
    %787 = vmatmul.bf16.gmra.mxu0 %v763
    %v788 = vpop.f32.mrf.mxu0
    %v789 = vadd.f32 0.0, %v788
    %v790 = vpop.f32.mrf.mxu0
    %v791 = vadd.f32 0.0, %v790
    %792 = vmatmul.bf16.gmra.mxu0 %v766
    %v793 = vpop.f32.mrf.mxu0
    %v794 = vadd.f32 0.0, %v793
    %v795 = vpop.f32.mrf.mxu0
    %v796 = vadd.f32 0.0, %v795
    %797 = vmatmul.bf16.gmra.mxu0 %v769
    %v798 = vpop.f32.mrf.mxu0
    %v799 = vadd.f32 0.0, %v798
    %v800 = vpop.f32.mrf.mxu0
    %v801 = vadd.f32 0.0, %v800
    %802 = vdwg.mxu0
    %v803 = vpack.c.bf16 %v786, %v784
    %v804 = vpack.c.bf16 %v791, %v789
    %v805 = vpack.c.bf16 %v796, %v794
    %v806 = vpack.c.bf16 %v801, %v799
    %v809 = vunpack.c.l.b16 %v393
    %v810 = vunpack.c.l.b16 %v394
    %v811 = vpack.c.b16 %v810, %v809
    %v814 = vsel %vm400, %v803, 0
    %v817 = vsel %vm400, %v804, 0
    %v820 = vsel %vm400, %v805, 0
    %v823 = vsel %vm400, %v806, 0
    %825 = vmatpush.bf16.msra.mxu0 0
    %826 = vmatpush.bf16.msra.mxu0 0
    %827 = vmatpush.bf16.msra.mxu0 0
    %828 = vmatpush.bf16.msra.mxu0 0
    %829 = vmatpush.bf16.msra.mxu0 0
    %830 = vmatpush.bf16.msra.mxu0 0
    %831 = vmatpush.bf16.msra.mxu0 0
    %832 = vmatpush.bf16.msra.mxu0 %v811
    %833 = vmatmul.bf16.gmra.mxu0 %v814
    %v834 = vpop.f32.mrf.mxu0
    %v835 = vadd.f32 0.0, %v834
    %v836 = vpop.f32.mrf.mxu0
    %v837 = vadd.f32 0.0, %v836
    %838 = vmatmul.bf16.gmra.mxu0 %v817
    %v839 = vpop.f32.mrf.mxu0
    %v840 = vadd.f32 0.0, %v839
    %v841 = vpop.f32.mrf.mxu0
    %v842 = vadd.f32 0.0, %v841
    %843 = vmatmul.bf16.gmra.mxu0 %v820
    %v844 = vpop.f32.mrf.mxu0
    %v845 = vadd.f32 0.0, %v844
    %v846 = vpop.f32.mrf.mxu0
    %v847 = vadd.f32 0.0, %v846
    %848 = vmatmul.bf16.gmra.mxu0 %v823
    %v849 = vpop.f32.mrf.mxu0
    %v850 = vadd.f32 0.0, %v849
    %v851 = vpop.f32.mrf.mxu0
    %v852 = vadd.f32 0.0, %v851
    %853 = vdwg.mxu0
    %v856 = vunpack.c.l.b16 %v391
    %v857 = vunpack.c.l.b16 %v392
    %v858 = vpack.c.b16 %v857, %v856
    %v861 = vsel %vm400, %v595, 0
    %v864 = vsel %vm400, %v596, 0
    %v867 = vsel %vm400, %v597, 0
    %v870 = vsel %vm400, %v598, 0
    %872 = vmatpush.bf16.msra.mxu0 0
    %873 = vmatpush.bf16.msra.mxu0 0
    %874 = vmatpush.bf16.msra.mxu0 0
    %875 = vmatpush.bf16.msra.mxu0 0
    %876 = vmatpush.bf16.msra.mxu0 0
    %877 = vmatpush.bf16.msra.mxu0 0
    %878 = vmatpush.bf16.msra.mxu0 0
    %879 = vmatpush.bf16.msra.mxu0 %v858
    %880 = vmatmul.bf16.gmra.mxu0 %v861
    %v881 = vpop.f32.mrf.mxu0
    %v882 = vadd.f32 %v835, %v881
    %v883 = vpop.f32.mrf.mxu0
    %v884 = vadd.f32 %v837, %v883
    %885 = vmatmul.bf16.gmra.mxu0 %v864
    %v886 = vpop.f32.mrf.mxu0
    %v887 = vadd.f32 %v840, %v886
    %v888 = vpop.f32.mrf.mxu0
    %v889 = vadd.f32 %v842, %v888
    %890 = vmatmul.bf16.gmra.mxu0 %v867
    %v891 = vpop.f32.mrf.mxu0
    %v892 = vadd.f32 %v845, %v891
    %v893 = vpop.f32.mrf.mxu0
    %v894 = vadd.f32 %v847, %v893
    %895 = vmatmul.bf16.gmra.mxu0 %v870
    %v896 = vpop.f32.mrf.mxu0
    %v897 = vadd.f32 %v850, %v896
    %v898 = vpop.f32.mrf.mxu0
    %v899 = vadd.f32 %v852, %v898
    %900 = vdwg.mxu0
    %v901 = vld [vmem:[%s7] sm:$0x1]
    %v903 = vperm.slane %v901, 0
    %v905 = vadd.f32 %v882, %v903
    %v906 = vadd.f32 %v884, %v903
    %v907 = vadd.f32 %v887, %v903
    %v908 = vadd.f32 %v889, %v903
    %v909 = vadd.f32 %v892, %v903
    %v910 = vadd.f32 %v894, %v903
    %v911 = vadd.f32 %v897, %v903
    %v912 = vadd.f32 %v899, %v903
    %v913 = vadd.f32 %v905, %v72
    %v914 = vadd.f32 %v906, %v73
    %v915 = vadd.f32 %v907, %v74
    %v916 = vadd.f32 %v908, %v75
    %v917 = vadd.f32 %v909, %v76
    %v918 = vadd.f32 %v910, %v77
    %v919 = vadd.f32 %v911, %v78
    %v920 = vadd.f32 %v912, %v79
    %v921 = vpack.c.bf16 %v913, %v913
    %v922 = vpack.c.bf16 %v914, %v914
    %v923 = vpack.c.bf16 %v915, %v915
    %v924 = vpack.c.bf16 %v916, %v916
    %v925 = vpack.c.bf16 %v917, %v917
    %v926 = vpack.c.bf16 %v918, %v918
    %v927 = vpack.c.bf16 %v919, %v919
    %v928 = vpack.c.bf16 %v920, %v920
    %929 = vst.msk [vmem:[%s10] sm:$0xf] %vm104, %v921
    %930 = vst.msk [vmem:[%s10 + $0x4] sm:$0xf] %vm104, %v922
    %931 = vst.msk [vmem:[%s10 + $0x8] sm:$0xf] %vm104, %v923
    %932 = vst.msk [vmem:[%s10 + $0xc] sm:$0xf] %vm104, %v924
    %933 = vst.msk [vmem:[%s10 + $0x10] sm:$0xf] %vm104, %v925
    %934 = vst.msk [vmem:[%s10 + $0x14] sm:$0xf] %vm104, %v926
    %935 = vst.msk [vmem:[%s10 + $0x18] sm:$0xf] %vm104, %v927
    %vm936 = vcmask 254976
    %937 = vst.msk [vmem:[%s10 + $0x1c] sm:$0x3] %vm936, %v928
    // Predicated region
    $region50: #{_lambda_.12} parent=1 // pred_check
      _
    $region51: #{_lambda_.12} parent=1 // pred_check_branch
      %939 = sbr.rel (0) target = $region53
    $region52: #{_lambda_.12} parent=1 // pred_region
      _
    $region53: #{_lambda_.12} parent=1 // pred_fallthru
      _
    // Predicated region
    $region54: #{_lambda_.12} parent=1 // pred_check
      _
    $region55: #{_lambda_.12} parent=1 // pred_check_branch
      %941 = sbr.rel (0) target = $region57
    $region56: #{_lambda_.12} parent=1 // pred_region
      _
    $region57: #{_lambda_.12} parent=1 // pred_fallthru
      _
    %942 = vsyncpa [#allocation3], 1
    %943 = vsyncpa [#allocation5], 1

// kernel: _lambda_.13
$region0: #{_lambda_.13}
  #allocation0 [shape = 'u32[]', space=smem, size = 0x4, offset = 0x4, fixed_abs, tag = 'smem constant byte address 0x4 - core index']
  #allocation1 [shape = 'u32[72,128]{1,0:T(1,128)}', space=vmem, size = 0x9000, scoped, tag = 'internal scratch']
  %s0 = inlined_call_operand.vmem [shape: bf16[1,60,32], index: 0, kind: input, shape index: {}]
  %s1 = inlined_call_operand.vmem [shape: bf16[32,96], index: 1, kind: input, shape index: {}]
  %s2 = inlined_call_operand.vmem [shape: f32[1,96], index: 2, kind: input, shape index: {}]
  %s3 = inlined_call_operand.vmem [shape: bf16[32,32], index: 3, kind: input, shape index: {}]
  %s4 = inlined_call_operand.hbm [shape: f32[1,32], index: 4, kind: input, shape index: {}]
  %s5 = inlined_call_operand.hbm [shape: f32[1,32], index: 5, kind: input, shape index: {}]
  %s6 = inlined_call_operand.hbm [shape: f32[1,32], index: 6, kind: input, shape index: {}]
  %s7 = inlined_call_operand.vmem [shape: bf16[1,60,32], index: 7, kind: output, shape index: {}]
  %s8 = sld [smem:[#allocation0]]
  $region50: #{_lambda_.13} parent=0
    _
  %s10 = ssub.s32 1, %s8
  %s11 = scalar_select 0, %s10, %s8
  $region1: #{_lambda_.13} parent=0
    #allocation2 [shape = 'u8[512]{0}', space=vmem, size = 0x400, scoped, tag = 'input window, operand 4, single buffered']
    #allocation3 [shape = 's32[1]{0}', space=sflag, size = 0x4, scoped, tag = 'scoped memory for _lambda_.13']
    #allocation4 [shape = 'u8[512]{0}', space=vmem, size = 0x400, scoped, tag = 'input window, operand 5, single buffered']
    #allocation5 [shape = 's32[1]{0}', space=sflag, size = 0x4, scoped, tag = 'scoped memory for _lambda_.13']
    #allocation6 [shape = 'u8[512]{0}', space=vmem, size = 0x400, scoped, tag = 'input window, operand 6, single buffered']
    %12 = vsyncpa [#allocation3], 0
    %13 = vsyncpa [#allocation5], 0
    // Predicated region
    $region2: #{_lambda_.13} parent=1 // pred_check
      _
    $region3: #{_lambda_.13} parent=1 // pred_check_branch
      %15 = sbr.rel (0) target = $region5
    $region4: #{_lambda_.13} parent=1 // pred_region
      _
    $region5: #{_lambda_.13} parent=1 // pred_fallthru
      _
    // Predicated region
    $region6: #{_lambda_.13} parent=1 // pred_check
      _
    $region7: #{_lambda_.13} parent=1 // pred_check_branch
      %17 = sbr.rel (0) target = $region9
    $region8: #{_lambda_.13} parent=1 // pred_region
      _
    $region9: #{_lambda_.13} parent=1 // pred_fallthru
      _
    // Predicated region
    $region10: #{_lambda_.13} parent=1 // pred_check
      _
    $region11: #{_lambda_.13} parent=1 // pred_check_branch
      %19 = sbr.rel (0) target = $region13
    $region12: #{_lambda_.13} parent=1 // pred_region
      _
    $region13: #{_lambda_.13} parent=1 // pred_fallthru
      _
    // Predicated region
    $region14: #{_lambda_.13} parent=1 // pred_check
      _
    $region15: #{_lambda_.13} parent=1 // pred_check_branch
      %21 = sbr.rel (0) target = $region17
    $region16: #{_lambda_.13} parent=1 // pred_region
      _
    $region17: #{_lambda_.13} parent=1 // pred_fallthru
      _
    // Predicated region
    $region18: #{_lambda_.13} parent=1 // pred_check
      _
    $region19: #{_lambda_.13} parent=1 // pred_check_branch
      %23 = sbr.rel (0) target = $region21
    $region20: #{_lambda_.13} parent=1 // pred_region
      %25 = vsyncadd [#allocation3], 0
      %s27 = sshll.u32 %s4, 4
      %s28 = int_to_ptr.hbm [resolvable:$true] %s27
      %s29 = sshll.u32 [#allocation2], 4
      %s30 = int_to_ptr.vmem [resolvable:$true] %s29
      %32 = dma.hbm_to_vmem [thread:$0]  %s28, 16, %s30, [#allocation3]
    $region21: #{_lambda_.13} parent=1 // pred_fallthru
      _
    // Predicated region
    $region22: #{_lambda_.13} parent=1 // pred_check
      _
    $region23: #{_lambda_.13} parent=1 // pred_check_branch
      %34 = sbr.rel (0) target = $region25
    $region24: #{_lambda_.13} parent=1 // pred_region
      %36 = vsyncadd [#allocation5], 0
      %s38 = sshll.u32 %s5, 4
      %s39 = int_to_ptr.hbm [resolvable:$true] %s38
      %s40 = sshll.u32 [#allocation4], 4
      %s41 = int_to_ptr.vmem [resolvable:$true] %s40
      %43 = dma.hbm_to_vmem [thread:$0]  %s39, 16, %s41, [#allocation5]
    $region25: #{_lambda_.13} parent=1 // pred_fallthru
      _
    // Predicated region
    $region26: #{_lambda_.13} parent=1 // pred_check
      _
    $region27: #{_lambda_.13} parent=1 // pred_check_branch
      %45 = sbr.rel (0) target = $region29
    $region28: #{_lambda_.13} parent=1 // pred_region
      %47 = vsyncadd [#allocation5], 0
      %s49 = sshll.u32 %s6, 4
      %s50 = int_to_ptr.hbm [resolvable:$true] %s49
      %s51 = sshll.u32 [#allocation6], 4
      %s52 = int_to_ptr.vmem [resolvable:$true] %s51
      %54 = dma.hbm_to_vmem [thread:$0]  %s50, 16, %s52, [#allocation5]
    $region29: #{_lambda_.13} parent=1 // pred_fallthru
      _
    // Predicated region
    $region30: #{_lambda_.13} parent=1 // pred_check
      _
    $region31: #{_lambda_.13} parent=1 // pred_check_branch
      %56 = sbr.rel (0) target = $region33
    $region32: #{_lambda_.13} parent=1 // pred_region
      %58 = dma.done [#allocation3], 16
    $region33: #{_lambda_.13} parent=1 // pred_fallthru
      _
    // Predicated region
    $region34: #{_lambda_.13} parent=1 // pred_check
      _
    $region35: #{_lambda_.13} parent=1 // pred_check_branch
      %60 = sbr.rel (0) target = $region37
    $region36: #{_lambda_.13} parent=1 // pred_region
      %62 = dma.done [#allocation5], 16
    $region37: #{_lambda_.13} parent=1 // pred_fallthru
      _
    // Predicated region
    $region38: #{_lambda_.13} parent=1 // pred_check
      _
    $region39: #{_lambda_.13} parent=1 // pred_check_branch
      %64 = sbr.rel (0) target = $region41
    $region40: #{_lambda_.13} parent=1 // pred_region
      %66 = dma.done [#allocation5], 16
    $region41: #{_lambda_.13} parent=1 // pred_fallthru
      _
    %v68 = vld [vmem:[%s0] sm:$0xf]
    %v69 = vld [vmem:[%s0 + $0x4] sm:$0xf]
    %v70 = vld [vmem:[%s0 + $0x8] sm:$0xf]
    %v71 = vld [vmem:[%s0 + $0xc] sm:$0xf]
    %v72 = vld [vmem:[%s0 + $0x10] sm:$0xf]
    %v73 = vld [vmem:[%s0 + $0x14] sm:$0xf]
    %v74 = vld [vmem:[%s0 + $0x18] sm:$0xf]
    %v75 = vld [vmem:[%s0 + $0x1c] sm:$0x3]
    %v76 = vunpack.c.l.bf16 %v68
    %v77 = vunpack.c.l.bf16 %v69
    %v78 = vunpack.c.l.bf16 %v70
    %v79 = vunpack.c.l.bf16 %v71
    %v80 = vunpack.c.l.bf16 %v72
    %v81 = vunpack.c.l.bf16 %v73
    %v82 = vunpack.c.l.bf16 %v74
    %v83 = vunpack.c.l.bf16 %v75
    %v84 = vld [vmem:[#allocation4] sm:$0x1]
    %v85 = vld [vmem:[#allocation6] sm:$0x1]
    %vm86 = vcmask 261120
    %v87 = vsel %vm86, %v76, 0.0
    %88 = vadd.xlane.f32.xlu0 %v87
    %v89 = vpop.xlane.xlu0 %88
    %v90 = vsel %vm86, %v77, 0.0
    %91 = vadd.xlane.f32.xlu0 %v90
    %v92 = vpop.xlane.xlu0 %91
    %v93 = vsel %vm86, %v78, 0.0
    %94 = vadd.xlane.f32.xlu0 %v93
    %v95 = vpop.xlane.xlu0 %94
    %v96 = vsel %vm86, %v79, 0.0
    %97 = vadd.xlane.f32.xlu0 %v96
    %v98 = vpop.xlane.xlu0 %97
    %v99 = vsel %vm86, %v80, 0.0
    %100 = vadd.xlane.f32.xlu0 %v99
    %v101 = vpop.xlane.xlu0 %100
    %v102 = vsel %vm86, %v81, 0.0
    %103 = vadd.xlane.f32.xlu0 %v102
    %v104 = vpop.xlane.xlu0 %103
    %v105 = vsel %vm86, %v82, 0.0
    %106 = vadd.xlane.f32.xlu0 %v105
    %v107 = vpop.xlane.xlu0 %106
    %vm108 = vcmask 257024
    %v109 = vsel %vm108, %v83, 0.0
    %110 = vadd.xlane.f32.xlu0 %v109
    %v111 = vpop.xlane.xlu0 %110
    %v112 = vrcp.pop 32.0
    %v113 = vmul.f32 32.0, %v112
    %v114 = vsub.f32 1.0, %v113
    %v115 = vmul.f32 %v112, %v114
    %v116 = vadd.f32 %v112, %v115
    %vm117 = vweird.f32 %v112
    %v118 = vsel %vm117, %v112, %v116
    %v119 = vmul.f32 %v89, %v118
    %v120 = vmul.f32 %v92, %v118
    %v121 = vmul.f32 %v95, %v118
    %v122 = vmul.f32 %v98, %v118
    %v123 = vmul.f32 %v101, %v118
    %v124 = vmul.f32 %v104, %v118
    %v125 = vmul.f32 %v107, %v118
    %v126 = vmul.f32 %v111, %v118
    %v127 = vsub.f32 %v76, %v119
    %v128 = vsub.f32 %v77, %v120
    %v129 = vsub.f32 %v78, %v121
    %v130 = vsub.f32 %v79, %v122
    %v131 = vsub.f32 %v80, %v123
    %v132 = vsub.f32 %v81, %v124
    %v133 = vsub.f32 %v82, %v125
    %v134 = vsub.f32 %v83, %v126
    %v135 = vmul.f32 %v127, %v127
    %v136 = vmul.f32 %v128, %v128
    %v137 = vmul.f32 %v129, %v129
    %v138 = vmul.f32 %v130, %v130
    %v139 = vmul.f32 %v131, %v131
    %v140 = vmul.f32 %v132, %v132
    %v141 = vmul.f32 %v133, %v133
    %v142 = vmul.f32 %v134, %v134
    %v143 = vsel %vm86, %v135, 0.0
    %144 = vadd.xlane.f32.xlu0 %v143
    %v145 = vpop.xlane.xlu0 %144
    %v146 = vsel %vm86, %v136, 0.0
    %147 = vadd.xlane.f32.xlu0 %v146
    %v148 = vpop.xlane.xlu0 %147
    %v149 = vsel %vm86, %v137, 0.0
    %150 = vadd.xlane.f32.xlu0 %v149
    %v151 = vpop.xlane.xlu0 %150
    %v152 = vsel %vm86, %v138, 0.0
    %153 = vadd.xlane.f32.xlu0 %v152
    %v154 = vpop.xlane.xlu0 %153
    %v155 = vsel %vm86, %v139, 0.0
    %156 = vadd.xlane.f32.xlu0 %v155
    %v157 = vpop.xlane.xlu0 %156
    %v158 = vsel %vm86, %v140, 0.0
    %159 = vadd.xlane.f32.xlu0 %v158
    %v160 = vpop.xlane.xlu0 %159
    %v161 = vsel %vm86, %v141, 0.0
    %162 = vadd.xlane.f32.xlu0 %v161
    %v163 = vpop.xlane.xlu0 %162
    %v164 = vsel %vm108, %v142, 0.0
    %165 = vadd.xlane.f32.xlu0 %v164
    %v166 = vpop.xlane.xlu0 %165
    %v167 = vmul.f32 %v145, %v118
    %v168 = vmul.f32 %v148, %v118
    %v169 = vmul.f32 %v151, %v118
    %v170 = vmul.f32 %v154, %v118
    %v171 = vmul.f32 %v157, %v118
    %v172 = vmul.f32 %v160, %v118
    %v173 = vmul.f32 %v163, %v118
    %v174 = vmul.f32 %v166, %v118
    %v175 = vadd.f32 %v167, 1e-05
    %v176 = vadd.f32 %v168, 1e-05
    %v177 = vadd.f32 %v169, 1e-05
    %v178 = vadd.f32 %v170, 1e-05
    %v179 = vadd.f32 %v171, 1e-05
    %v180 = vadd.f32 %v172, 1e-05
    %v181 = vadd.f32 %v173, 1e-05
    %v182 = vadd.f32 %v174, 1e-05
    %v183 = vrsqrt.pop %v175
    %v184 = vmul.f32 %v183, %v175
    %v185 = vmul.f32 %v184, %v183
    %v186 = vmul.f32 0.5, %v185
    %v187 = vsub.f32 1.5, %v186
    %v188 = vmul.f32 %v183, %v187
    %vm189 = vweird.f32 %v175
    %vm190 = vweird.f32 %v183
    %vm191 = vmor %vm189, %vm190
    %v192 = vsel %vm191, %v183, %v188
    %v193 = vrsqrt.pop %v176
    %v194 = vmul.f32 %v193, %v176
    %v195 = vmul.f32 %v194, %v193
    %v196 = vmul.f32 0.5, %v195
    %v197 = vsub.f32 1.5, %v196
    %v198 = vmul.f32 %v193, %v197
    %vm199 = vweird.f32 %v176
    %vm200 = vweird.f32 %v193
    %vm201 = vmor %vm199, %vm200
    %v202 = vsel %vm201, %v193, %v198
    %v203 = vrsqrt.pop %v177
    %v204 = vmul.f32 %v203, %v177
    %v205 = vmul.f32 %v204, %v203
    %v206 = vmul.f32 0.5, %v205
    %v207 = vsub.f32 1.5, %v206
    %v208 = vmul.f32 %v203, %v207
    %vm209 = vweird.f32 %v177
    %vm210 = vweird.f32 %v203
    %vm211 = vmor %vm209, %vm210
    %v212 = vsel %vm211, %v203, %v208
    %v213 = vrsqrt.pop %v178
    %v214 = vmul.f32 %v213, %v178
    %v215 = vmul.f32 %v214, %v213
    %v216 = vmul.f32 0.5, %v215
    %v217 = vsub.f32 1.5, %v216
    %v218 = vmul.f32 %v213, %v217
    %vm219 = vweird.f32 %v178
    %vm220 = vweird.f32 %v213
    %vm221 = vmor %vm219, %vm220
    %v222 = vsel %vm221, %v213, %v218
    %v223 = vrsqrt.pop %v179
    %v224 = vmul.f32 %v223, %v179
    %v225 = vmul.f32 %v224, %v223
    %v226 = vmul.f32 0.5, %v225
    %v227 = vsub.f32 1.5, %v226
    %v228 = vmul.f32 %v223, %v227
    %vm229 = vweird.f32 %v179
    %vm230 = vweird.f32 %v223
    %vm231 = vmor %vm229, %vm230
    %v232 = vsel %vm231, %v223, %v228
    %v233 = vrsqrt.pop %v180
    %v234 = vmul.f32 %v233, %v180
    %v235 = vmul.f32 %v234, %v233
    %v236 = vmul.f32 0.5, %v235
    %v237 = vsub.f32 1.5, %v236
    %v238 = vmul.f32 %v233, %v237
    %vm239 = vweird.f32 %v180
    %vm240 = vweird.f32 %v233
    %vm241 = vmor %vm239, %vm240
    %v242 = vsel %vm241, %v233, %v238
    %v243 = vrsqrt.pop %v181
    %v244 = vmul.f32 %v243, %v181
    %v245 = vmul.f32 %v244, %v243
    %v246 = vmul.f32 0.5, %v245
    %v247 = vsub.f32 1.5, %v246
    %v248 = vmul.f32 %v243, %v247
    %vm249 = vweird.f32 %v181
    %vm250 = vweird.f32 %v243
    %vm251 = vmor %vm249, %vm250
    %v252 = vsel %vm251, %v243, %v248
    %v253 = vrsqrt.pop %v182
    %v254 = vmul.f32 %v253, %v182
    %v255 = vmul.f32 %v254, %v253
    %v256 = vmul.f32 0.5, %v255
    %v257 = vsub.f32 1.5, %v256
    %v258 = vmul.f32 %v253, %v257
    %vm259 = vweird.f32 %v182
    %vm260 = vweird.f32 %v253
    %vm261 = vmor %vm259, %vm260
    %v262 = vsel %vm261, %v253, %v258
    %v263 = vmul.f32 %v127, %v192
    %v264 = vmul.f32 %v128, %v202
    %v265 = vmul.f32 %v129, %v212
    %v266 = vmul.f32 %v130, %v222
    %v267 = vmul.f32 %v131, %v232
    %v268 = vmul.f32 %v132, %v242
    %v269 = vmul.f32 %v133, %v252
    %v270 = vmul.f32 %v134, %v262
    %v272 = vperm.slane %v84, 0
    %v274 = vmul.f32 %v263, %v272
    %v275 = vmul.f32 %v264, %v272
    %v276 = vmul.f32 %v265, %v272
    %v277 = vmul.f32 %v266, %v272
    %v278 = vmul.f32 %v267, %v272
    %v279 = vmul.f32 %v268, %v272
    %v280 = vmul.f32 %v269, %v272
    %v281 = vmul.f32 %v270, %v272
    %v283 = vperm.slane %v85, 0
    %v285 = vadd.f32 %v274, %v283
    %v286 = vadd.f32 %v275, %v283
    %v287 = vadd.f32 %v276, %v283
    %v288 = vadd.f32 %v277, %v283
    %v289 = vadd.f32 %v278, %v283
    %v290 = vadd.f32 %v279, %v283
    %v291 = vadd.f32 %v280, %v283
    %v292 = vadd.f32 %v281, %v283
    %v293 = vpack.c.bf16 %v286, %v285
    %v294 = vpack.c.bf16 %v288, %v287
    %v295 = vpack.c.bf16 %v290, %v289
    %v296 = vpack.c.bf16 %v292, %v291
    %v297 = vld [vmem:[%s1] sm:$0xf]
    %v298 = vld [vmem:[%s1 + $0x4] sm:$0xf]
    %v299 = vld [vmem:[%s1 + $0x8] sm:$0xf]
    %v300 = vld [vmem:[%s1 + $0xc] sm:$0xf]
    %v301 = vld [vmem:[%s2] sm:$0x1]
    %v303 = vperm.slane %v301, 0
    %v309 = vunpack.c.l.b16 %v297
    %v310 = vunpack.c.l.b16 %v298
    %v311 = vunpack.c.l.b16 %v299
    %v312 = vunpack.c.l.b16 %v300
    %v313 = vpack.c.b16 %v310, %v309
    %v314 = vpack.c.b16 %v312, %v311
    %v318 = vsel %vm86, %v293, 0
    %v321 = vsel %vm86, %v294, 0
    %v324 = vsel %vm86, %v295, 0
    %v327 = vsel %vm86, %v296, 0
    %329 = vmatpush.bf16.msra.mxu0 0
    %330 = vmatpush.bf16.msra.mxu0 0
    %331 = vmatpush.bf16.msra.mxu0 0
    %332 = vmatpush.bf16.msra.mxu0 0
    %333 = vmatpush.bf16.msra.mxu0 0
    %334 = vmatpush.bf16.msra.mxu0 0
    %335 = vmatpush.bf16.msra.mxu0 %v314
    %336 = vmatpush.bf16.msra.mxu0 %v313
    %337 = vmatmul.bf16.gmra.mxu0 %v318
    %v338 = vpop.f32.mrf.mxu0
    %v339 = vadd.f32 %v303, %v338
    %v340 = vpop.f32.mrf.mxu0
    %v341 = vadd.f32 %v303, %v340
    %342 = vmatmul.bf16.gmra.mxu0 %v321
    %v343 = vpop.f32.mrf.mxu0
    %v344 = vadd.f32 %v303, %v343
    %v345 = vpop.f32.mrf.mxu0
    %v346 = vadd.f32 %v303, %v345
    %347 = vmatmul.bf16.gmra.mxu0 %v324
    %v348 = vpop.f32.mrf.mxu0
    %v349 = vadd.f32 %v303, %v348
    %v350 = vpop.f32.mrf.mxu0
    %v351 = vadd.f32 %v303, %v350
    %352 = vmatmul.bf16.gmra.mxu0 %v327
    %v353 = vpop.f32.mrf.mxu0
    %v354 = vadd.f32 %v303, %v353
    %v355 = vpop.f32.mrf.mxu0
    %v356 = vadd.f32 %v303, %v355
    %357 = vdwg.mxu0
    %v358 = vld [vmem:[%s3] sm:$0xf]
    %v359 = vld [vmem:[%s3 + $0x4] sm:$0xf]
    %v360 = vld [vmem:[%s3 + $0x8] sm:$0xf]
    %v361 = vld [vmem:[%s3 + $0xc] sm:$0xf]
    %v362 = vpack.c.bf16 %v341, %v339
    %v363 = vpack.c.bf16 %v346, %v344
    %v364 = vpack.c.bf16 %v351, %v349
    %v365 = vpack.c.bf16 %v356, %v354
    %370 = vrot.lane.b32.xlu0 %v362, 96
    %v371 = vpop.permute.xlu0 %370
    %372 = vrot.lane.b32.xlu0 %v363, 96
    %v373 = vpop.permute.xlu0 %372
    %374 = vrot.lane.b32.xlu0 %v364, 96
    %v375 = vpop.permute.xlu0 %374
    %376 = vrot.lane.b32.xlu0 %v365, 96
    %v377 = vpop.permute.xlu0 %376
    %vm378 = vcmask 130048
    %v380 = vsel %vm378, %v362, 0
    %v383 = vsel %vm378, %v363, 0
    %v386 = vsel %vm378, %v364, 0
    %v389 = vsel %vm378, %v365, 0
    %v392 = vsel %vm378, %v371, 0
    %v395 = vsel %vm378, %v373, 0
    %v398 = vsel %vm378, %v375, 0
    %v401 = vsel %vm378, %v377, 0
    %403 = vmatpush.bf16.xpose.msra.mxu0 0
    %404 = vmatpush.bf16.xpose.msra.mxu0 0
    %405 = vmatpush.bf16.xpose.msra.mxu0 0
    %406 = vmatpush.bf16.xpose.msra.mxu0 0
    %407 = vmatpush.bf16.xpose.msra.mxu0 %v401
    %408 = vmatpush.bf16.xpose.msra.mxu0 %v398
    %409 = vmatpush.bf16.xpose.msra.mxu0 %v395
    %410 = vmatpush.bf16.xpose.msra.mxu0 %v392
    %411 = vmatmul.bf16.gmra.mxu0 %v380
    %v412 = vpop.f32.mrf.mxu0
    %v413 = vadd.f32 0.0, %v412
    %v414 = vpop.f32.mrf.mxu0
    %v415 = vadd.f32 0.0, %v414
    %416 = vmatmul.bf16.gmra.mxu0 %v383
    %v417 = vpop.f32.mrf.mxu0
    %v418 = vadd.f32 0.0, %v417
    %v419 = vpop.f32.mrf.mxu0
    %v420 = vadd.f32 0.0, %v419
    %421 = vmatmul.bf16.gmra.mxu0 %v386
    %v422 = vpop.f32.mrf.mxu0
    %v423 = vadd.f32 0.0, %v422
    %v424 = vpop.f32.mrf.mxu0
    %v425 = vadd.f32 0.0, %v424
    %426 = vmatmul.bf16.gmra.mxu0 %v389
    %v427 = vpop.f32.mrf.mxu0
    %v428 = vadd.f32 0.0, %v427
    %v429 = vpop.f32.mrf.mxu0
    %v430 = vadd.f32 0.0, %v429
    %431 = vdwg.mxu0
    %v432 = vmul.f32 %v413, 0.25
    %v433 = vmul.f32 %v415, 0.25
    %v434 = vmul.f32 %v418, 0.25
    %v435 = vmul.f32 %v420, 0.25
    %v436 = vmul.f32 %v423, 0.25
    %v437 = vmul.f32 %v425, 0.25
    %v438 = vmul.f32 %v428, 0.25
    %v439 = vmul.f32 %v430, 0.25
    %vm440 = vcmask 490496
    %v441 = vsel %vm440, %v432, -inf
    %442 = vmax.xlane.f32.xlu0 %v441
    %v443 = vpop.xlane.xlu0 %442
    %v444 = vsel %vm440, %v433, -inf
    %445 = vmax.xlane.f32.xlu0 %v444
    %v446 = vpop.xlane.xlu0 %445
    %v447 = vsel %vm440, %v434, -inf
    %448 = vmax.xlane.f32.xlu0 %v447
    %v449 = vpop.xlane.xlu0 %448
    %v450 = vsel %vm440, %v435, -inf
    %451 = vmax.xlane.f32.xlu0 %v450
    %v452 = vpop.xlane.xlu0 %451
    %v453 = vsel %vm440, %v436, -inf
    %454 = vmax.xlane.f32.xlu0 %v453
    %v455 = vpop.xlane.xlu0 %454
    %v456 = vsel %vm440, %v437, -inf
    %457 = vmax.xlane.f32.xlu0 %v456
    %v458 = vpop.xlane.xlu0 %457
    %v459 = vsel %vm440, %v438, -inf
    %460 = vmax.xlane.f32.xlu0 %v459
    %v461 = vpop.xlane.xlu0 %460
    %vm462 = vcmask 486400
    %v463 = vsel %vm462, %v439, -inf
    %464 = vmax.xlane.f32.xlu0 %v463
    %v465 = vpop.xlane.xlu0 %464
    %v466 = vsub.f32 %v432, %v443
    %v467 = vsub.f32 %v433, %v446
    %v468 = vsub.f32 %v434, %v449
    %v469 = vsub.f32 %v435, %v452
    %v470 = vsub.f32 %v436, %v455
    %v471 = vsub.f32 %v437, %v458
    %v472 = vsub.f32 %v438, %v461
    %v473 = vsub.f32 %v439, %v465
    %v474 = vmul.f32 %v466, 1.442695
    %v475 = vpow.pop %v474
    %v476 = vmul.f32 %v467, 1.442695
    %v477 = vpow.pop %v476
    %v478 = vmul.f32 %v468, 1.442695
    %v479 = vpow.pop %v478
    %v480 = vmul.f32 %v469, 1.442695
    %v481 = vpow.pop %v480
    %v482 = vmul.f32 %v470, 1.442695
    %v483 = vpow.pop %v482
    %v484 = vmul.f32 %v471, 1.442695
    %v485 = vpow.pop %v484
    %v486 = vmul.f32 %v472, 1.442695
    %v487 = vpow.pop %v486
    %v488 = vmul.f32 %v473, 1.442695
    %v489 = vpow.pop %v488
    %v490 = vsel %vm440, %v475, 0.0
    %491 = vadd.xlane.f32.xlu0 %v490
    %v492 = vpop.xlane.xlu0 %491
    %v493 = vsel %vm440, %v477, 0.0
    %494 = vadd.xlane.f32.xlu0 %v493
    %v495 = vpop.xlane.xlu0 %494
    %v496 = vsel %vm440, %v479, 0.0
    %497 = vadd.xlane.f32.xlu0 %v496
    %v498 = vpop.xlane.xlu0 %497
    %v499 = vsel %vm440, %v481, 0.0
    %500 = vadd.xlane.f32.xlu0 %v499
    %v501 = vpop.xlane.xlu0 %500
    %v502 = vsel %vm440, %v483, 0.0
    %503 = vadd.xlane.f32.xlu0 %v502
    %v504 = vpop.xlane.xlu0 %503
    %v505 = vsel %vm440, %v485, 0.0
    %506 = vadd.xlane.f32.xlu0 %v505
    %v507 = vpop.xlane.xlu0 %506
    %v508 = vsel %vm440, %v487, 0.0
    %509 = vadd.xlane.f32.xlu0 %v508
    %v510 = vpop.xlane.xlu0 %509
    %v511 = vsel %vm462, %v489, 0.0
    %512 = vadd.xlane.f32.xlu0 %v511
    %v513 = vpop.xlane.xlu0 %512
    %v514 = vrcp.pop %v492
    %v515 = vrcp.pop %v495
    %v516 = vrcp.pop %v498
    %v517 = vrcp.pop %v501
    %v518 = vrcp.pop %v504
    %v519 = vrcp.pop %v507
    %v520 = vrcp.pop %v510
    %v521 = vrcp.pop %v513
    %v522 = vmul.f32 %v475, %v514
    %v523 = vmul.f32 %v477, %v515
    %v524 = vmul.f32 %v479, %v516
    %v525 = vmul.f32 %v481, %v517
    %v526 = vmul.f32 %v483, %v518
    %v527 = vmul.f32 %v485, %v519
    %v528 = vmul.f32 %v487, %v520
    %v529 = vmul.f32 %v489, %v521
    %v530 = vpack.c.bf16 %v523, %v522
    %v531 = vpack.c.bf16 %v525, %v524
    %v532 = vpack.c.bf16 %v527, %v526
    %v533 = vpack.c.bf16 %v529, %v528
    %534 = vrot.lane.b32.xlu0 %v362, 64
    %v535 = vpop.permute.xlu0 %534
    %536 = vrot.lane.b32.xlu0 %v363, 64
    %v537 = vpop.permute.xlu0 %536
    %538 = vrot.lane.b32.xlu0 %v364, 64
    %v539 = vpop.permute.xlu0 %538
    %540 = vrot.lane.b32.xlu0 %v365, 64
    %v541 = vpop.permute.xlu0 %540
    %v546 = vsel %vm440, %v530, 0
    %v549 = vsel %vm440, %v531, 0
    %v552 = vsel %vm440, %v532, 0
    %v555 = vsel %vm440, %v533, 0
    %vm557 = vcmask 1045504
    %v559 = vsel %vm557, %v541, 0
    %561 = vmatpush.bf16.msra.mxu0 0
    %562 = vmatpush.bf16.msra.mxu0 0
    %563 = vmatpush.bf16.msra.mxu0 0
    %564 = vmatpush.bf16.msra.mxu0 0
    %565 = vmatpush.bf16.msra.mxu0 %v559
    %566 = vmatpush.bf16.msra.mxu0 %v539
    %567 = vmatpush.bf16.msra.mxu0 %v537
    %568 = vmatpush.bf16.msra.mxu0 %v535
    %569 = vmatmul.bf16.gmra.mxu0 %v546
    %v570 = vpop.f32.mrf.mxu0
    %v571 = vadd.f32 0.0, %v570
    %v572 = vpop.f32.mrf.mxu0
    %v573 = vadd.f32 0.0, %v572
    %574 = vmatmul.bf16.gmra.mxu0 %v549
    %v575 = vpop.f32.mrf.mxu0
    %v576 = vadd.f32 0.0, %v575
    %v577 = vpop.f32.mrf.mxu0
    %v578 = vadd.f32 0.0, %v577
    %579 = vmatmul.bf16.gmra.mxu0 %v552
    %v580 = vpop.f32.mrf.mxu0
    %v581 = vadd.f32 0.0, %v580
    %v582 = vpop.f32.mrf.mxu0
    %v583 = vadd.f32 0.0, %v582
    %584 = vmatmul.bf16.gmra.mxu0 %v555
    %v585 = vpop.f32.mrf.mxu0
    %v586 = vadd.f32 0.0, %v585
    %v587 = vpop.f32.mrf.mxu0
    %v588 = vadd.f32 0.0, %v587
    %589 = vdwg.mxu0
    %v590 = vpack.c.bf16 %v573, %v571
    %v591 = vpack.c.bf16 %v578, %v576
    %v592 = vpack.c.bf16 %v583, %v581
    %v593 = vpack.c.bf16 %v588, %v586
    %594 = vrot.lane.b32.xlu0 %v362, 112
    %v595 = vpop.permute.xlu0 %594
    %596 = vrot.lane.b32.xlu0 %v363, 112
    %v597 = vpop.permute.xlu0 %596
    %598 = vrot.lane.b32.xlu0 %v364, 112
    %v599 = vpop.permute.xlu0 %598
    %600 = vrot.lane.b32.xlu0 %v365, 112
    %v601 = vpop.permute.xlu0 %600
    %602 = vrot.lane.b32.xlu0 %v362, 80
    %v603 = vpop.permute.xlu0 %602
    %604 = vrot.lane.b32.xlu0 %v363, 80
    %v605 = vpop.permute.xlu0 %604
    %606 = vrot.lane.b32.xlu0 %v364, 80
    %v607 = vpop.permute.xlu0 %606
    %608 = vrot.lane.b32.xlu0 %v365, 80
    %v609 = vpop.permute.xlu0 %608
    %v611 = vsel %vm378, %v595, 0
    %v614 = vsel %vm378, %v597, 0
    %v617 = vsel %vm378, %v599, 0
    %v620 = vsel %vm378, %v601, 0
    %v623 = vsel %vm378, %v603, 0
    %v626 = vsel %vm378, %v605, 0
    %v629 = vsel %vm378, %v607, 0
    %v632 = vsel %vm378, %v609, 0
    %634 = vmatpush.bf16.xpose.msra.mxu0 0
    %635 = vmatpush.bf16.xpose.msra.mxu0 0
    %636 = vmatpush.bf16.xpose.msra.mxu0 0
    %637 = vmatpush.bf16.xpose.msra.mxu0 0
    %638 = vmatpush.bf16.xpose.msra.mxu0 %v632
    %639 = vmatpush.bf16.xpose.msra.mxu0 %v629
    %640 = vmatpush.bf16.xpose.msra.mxu0 %v626
    %641 = vmatpush.bf16.xpose.msra.mxu0 %v623
    %642 = vmatmul.bf16.gmra.mxu0 %v611
    %v643 = vpop.f32.mrf.mxu0
    %v644 = vadd.f32 0.0, %v643
    %v645 = vpop.f32.mrf.mxu0
    %v646 = vadd.f32 0.0, %v645
    %647 = vmatmul.bf16.gmra.mxu0 %v614
    %v648 = vpop.f32.mrf.mxu0
    %v649 = vadd.f32 0.0, %v648
    %v650 = vpop.f32.mrf.mxu0
    %v651 = vadd.f32 0.0, %v650
    %652 = vmatmul.bf16.gmra.mxu0 %v617
    %v653 = vpop.f32.mrf.mxu0
    %v654 = vadd.f32 0.0, %v653
    %v655 = vpop.f32.mrf.mxu0
    %v656 = vadd.f32 0.0, %v655
    %657 = vmatmul.bf16.gmra.mxu0 %v620
    %v658 = vpop.f32.mrf.mxu0
    %v659 = vadd.f32 0.0, %v658
    %v660 = vpop.f32.mrf.mxu0
    %v661 = vadd.f32 0.0, %v660
    %662 = vdwg.mxu0
    %v663 = vmul.f32 %v644, 0.25
    %v664 = vmul.f32 %v646, 0.25
    %v665 = vmul.f32 %v649, 0.25
    %v666 = vmul.f32 %v651, 0.25
    %v667 = vmul.f32 %v654, 0.25
    %v668 = vmul.f32 %v656, 0.25
    %v669 = vmul.f32 %v659, 0.25
    %v670 = vmul.f32 %v661, 0.25
    %v671 = vsel %vm440, %v663, -inf
    %672 = vmax.xlane.f32.xlu0 %v671
    %v673 = vpop.xlane.xlu0 %672
    %v674 = vsel %vm440, %v664, -inf
    %675 = vmax.xlane.f32.xlu0 %v674
    %v676 = vpop.xlane.xlu0 %675
    %v677 = vsel %vm440, %v665, -inf
    %678 = vmax.xlane.f32.xlu0 %v677
    %v679 = vpop.xlane.xlu0 %678
    %v680 = vsel %vm440, %v666, -inf
    %681 = vmax.xlane.f32.xlu0 %v680
    %v682 = vpop.xlane.xlu0 %681
    %v683 = vsel %vm440, %v667, -inf
    %684 = vmax.xlane.f32.xlu0 %v683
    %v685 = vpop.xlane.xlu0 %684
    %v686 = vsel %vm440, %v668, -inf
    %687 = vmax.xlane.f32.xlu0 %v686
    %v688 = vpop.xlane.xlu0 %687
    %v689 = vsel %vm440, %v669, -inf
    %690 = vmax.xlane.f32.xlu0 %v689
    %v691 = vpop.xlane.xlu0 %690
    %v692 = vsel %vm462, %v670, -inf
    %693 = vmax.xlane.f32.xlu0 %v692
    %v694 = vpop.xlane.xlu0 %693
    %v695 = vsub.f32 %v663, %v673
    %v696 = vsub.f32 %v664, %v676
    %v697 = vsub.f32 %v665, %v679
    %v698 = vsub.f32 %v666, %v682
    %v699 = vsub.f32 %v667, %v685
    %v700 = vsub.f32 %v668, %v688
    %v701 = vsub.f32 %v669, %v691
    %v702 = vsub.f32 %v670, %v694
    %v703 = vmul.f32 %v695, 1.442695
    %v704 = vpow.pop %v703
    %v705 = vmul.f32 %v696, 1.442695
    %v706 = vpow.pop %v705
    %v707 = vmul.f32 %v697, 1.442695
    %v708 = vpow.pop %v707
    %v709 = vmul.f32 %v698, 1.442695
    %v710 = vpow.pop %v709
    %v711 = vmul.f32 %v699, 1.442695
    %v712 = vpow.pop %v711
    %v713 = vmul.f32 %v700, 1.442695
    %v714 = vpow.pop %v713
    %v715 = vmul.f32 %v701, 1.442695
    %v716 = vpow.pop %v715
    %v717 = vmul.f32 %v702, 1.442695
    %v718 = vpow.pop %v717
    %v719 = vsel %vm440, %v704, 0.0
    %720 = vadd.xlane.f32.xlu0 %v719
    %v721 = vpop.xlane.xlu0 %720
    %v722 = vsel %vm440, %v706, 0.0
    %723 = vadd.xlane.f32.xlu0 %v722
    %v724 = vpop.xlane.xlu0 %723
    %v725 = vsel %vm440, %v708, 0.0
    %726 = vadd.xlane.f32.xlu0 %v725
    %v727 = vpop.xlane.xlu0 %726
    %v728 = vsel %vm440, %v710, 0.0
    %729 = vadd.xlane.f32.xlu0 %v728
    %v730 = vpop.xlane.xlu0 %729
    %v731 = vsel %vm440, %v712, 0.0
    %732 = vadd.xlane.f32.xlu0 %v731
    %v733 = vpop.xlane.xlu0 %732
    %v734 = vsel %vm440, %v714, 0.0
    %735 = vadd.xlane.f32.xlu0 %v734
    %v736 = vpop.xlane.xlu0 %735
    %v737 = vsel %vm440, %v716, 0.0
    %738 = vadd.xlane.f32.xlu0 %v737
    %v739 = vpop.xlane.xlu0 %738
    %v740 = vsel %vm462, %v718, 0.0
    %741 = vadd.xlane.f32.xlu0 %v740
    %v742 = vpop.xlane.xlu0 %741
    %v743 = vrcp.pop %v721
    %v744 = vrcp.pop %v724
    %v745 = vrcp.pop %v727
    %v746 = vrcp.pop %v730
    %v747 = vrcp.pop %v733
    %v748 = vrcp.pop %v736
    %v749 = vrcp.pop %v739
    %v750 = vrcp.pop %v742
    %v751 = vmul.f32 %v704, %v743
    %v752 = vmul.f32 %v706, %v744
    %v753 = vmul.f32 %v708, %v745
    %v754 = vmul.f32 %v710, %v746
    %v755 = vmul.f32 %v712, %v747
    %v756 = vmul.f32 %v714, %v748
    %v757 = vmul.f32 %v716, %v749
    %v758 = vmul.f32 %v718, %v750
    %v759 = vpack.c.bf16 %v752, %v751
    %v760 = vpack.c.bf16 %v754, %v753
    %v761 = vpack.c.bf16 %v756, %v755
    %v762 = vpack.c.bf16 %v758, %v757
    %763 = vrot.lane.b32.xlu0 %v362, 48
    %v764 = vpop.permute.xlu0 %763
    %765 = vrot.lane.b32.xlu0 %v363, 48
    %v766 = vpop.permute.xlu0 %765
    %767 = vrot.lane.b32.xlu0 %v364, 48
    %v768 = vpop.permute.xlu0 %767
    %769 = vrot.lane.b32.xlu0 %v365, 48
    %v770 = vpop.permute.xlu0 %769
    %v775 = vsel %vm440, %v759, 0
    %v778 = vsel %vm440, %v760, 0
    %v781 = vsel %vm440, %v761, 0
    %v784 = vsel %vm440, %v762, 0
    %v787 = vsel %vm557, %v770, 0
    %789 = vmatpush.bf16.msra.mxu0 0
    %790 = vmatpush.bf16.msra.mxu0 0
    %791 = vmatpush.bf16.msra.mxu0 0
    %792 = vmatpush.bf16.msra.mxu0 0
    %793 = vmatpush.bf16.msra.mxu0 %v787
    %794 = vmatpush.bf16.msra.mxu0 %v768
    %795 = vmatpush.bf16.msra.mxu0 %v766
    %796 = vmatpush.bf16.msra.mxu0 %v764
    %797 = vmatmul.bf16.gmra.mxu0 %v775
    %v798 = vpop.f32.mrf.mxu0
    %v799 = vadd.f32 0.0, %v798
    %v800 = vpop.f32.mrf.mxu0
    %v801 = vadd.f32 0.0, %v800
    %802 = vmatmul.bf16.gmra.mxu0 %v778
    %v803 = vpop.f32.mrf.mxu0
    %v804 = vadd.f32 0.0, %v803
    %v805 = vpop.f32.mrf.mxu0
    %v806 = vadd.f32 0.0, %v805
    %807 = vmatmul.bf16.gmra.mxu0 %v781
    %v808 = vpop.f32.mrf.mxu0
    %v809 = vadd.f32 0.0, %v808
    %v810 = vpop.f32.mrf.mxu0
    %v811 = vadd.f32 0.0, %v810
    %812 = vmatmul.bf16.gmra.mxu0 %v784
    %v813 = vpop.f32.mrf.mxu0
    %v814 = vadd.f32 0.0, %v813
    %v815 = vpop.f32.mrf.mxu0
    %v816 = vadd.f32 0.0, %v815
    %817 = vdwg.mxu0
    %v818 = vpack.c.bf16 %v801, %v799
    %v819 = vpack.c.bf16 %v806, %v804
    %v820 = vpack.c.bf16 %v811, %v809
    %v821 = vpack.c.bf16 %v816, %v814
    %v824 = vunpack.c.l.b16 %v360
    %v825 = vunpack.c.l.b16 %v361
    %v826 = vpack.c.b16 %v825, %v824
    %v829 = vsel %vm378, %v818, 0
    %v832 = vsel %vm378, %v819, 0
    %v835 = vsel %vm378, %v820, 0
    %v838 = vsel %vm378, %v821, 0
    %840 = vmatpush.bf16.msra.mxu0 0
    %841 = vmatpush.bf16.msra.mxu0 0
    %842 = vmatpush.bf16.msra.mxu0 0
    %843 = vmatpush.bf16.msra.mxu0 0
    %844 = vmatpush.bf16.msra.mxu0 0
    %845 = vmatpush.bf16.msra.mxu0 0
    %846 = vmatpush.bf16.msra.mxu0 0
    %847 = vmatpush.bf16.msra.mxu0 %v826
    %848 = vmatmul.bf16.gmra.mxu0 %v829
    %v849 = vpop.f32.mrf.mxu0
    %v850 = vadd.f32 0.0, %v849
    %v851 = vpop.f32.mrf.mxu0
    %v852 = vadd.f32 0.0, %v851
    %853 = vmatmul.bf16.gmra.mxu0 %v832
    %v854 = vpop.f32.mrf.mxu0
    %v855 = vadd.f32 0.0, %v854
    %v856 = vpop.f32.mrf.mxu0
    %v857 = vadd.f32 0.0, %v856
    %858 = vmatmul.bf16.gmra.mxu0 %v835
    %v859 = vpop.f32.mrf.mxu0
    %v860 = vadd.f32 0.0, %v859
    %v861 = vpop.f32.mrf.mxu0
    %v862 = vadd.f32 0.0, %v861
    %863 = vmatmul.bf16.gmra.mxu0 %v838
    %v864 = vpop.f32.mrf.mxu0
    %v865 = vadd.f32 0.0, %v864
    %v866 = vpop.f32.mrf.mxu0
    %v867 = vadd.f32 0.0, %v866
    %868 = vdwg.mxu0
    %v871 = vunpack.c.l.b16 %v358
    %v872 = vunpack.c.l.b16 %v359
    %v873 = vpack.c.b16 %v872, %v871
    %v876 = vsel %vm378, %v590, 0
    %v879 = vsel %vm378, %v591, 0
    %v882 = vsel %vm378, %v592, 0
    %v885 = vsel %vm378, %v593, 0
    %887 = vmatpush.bf16.msra.mxu0 0
    %888 = vmatpush.bf16.msra.mxu0 0
    %889 = vmatpush.bf16.msra.mxu0 0
    %890 = vmatpush.bf16.msra.mxu0 0
    %891 = vmatpush.bf16.msra.mxu0 0
    %892 = vmatpush.bf16.msra.mxu0 0
    %893 = vmatpush.bf16.msra.mxu0 0
    %894 = vmatpush.bf16.msra.mxu0 %v873
    %895 = vmatmul.bf16.gmra.mxu0 %v876
    %v896 = vpop.f32.mrf.mxu0
    %v897 = vadd.f32 %v850, %v896
    %v898 = vpop.f32.mrf.mxu0
    %v899 = vadd.f32 %v852, %v898
    %900 = vmatmul.bf16.gmra.mxu0 %v879
    %v901 = vpop.f32.mrf.mxu0
    %v902 = vadd.f32 %v855, %v901
    %v903 = vpop.f32.mrf.mxu0
    %v904 = vadd.f32 %v857, %v903
    %905 = vmatmul.bf16.gmra.mxu0 %v882
    %v906 = vpop.f32.mrf.mxu0
    %v907 = vadd.f32 %v860, %v906
    %v908 = vpop.f32.mrf.mxu0
    %v909 = vadd.f32 %v862, %v908
    %910 = vmatmul.bf16.gmra.mxu0 %v885
    %v911 = vpop.f32.mrf.mxu0
    %v912 = vadd.f32 %v865, %v911
    %v913 = vpop.f32.mrf.mxu0
    %v914 = vadd.f32 %v867, %v913
    %915 = vdwg.mxu0
    %v916 = vld [vmem:[#allocation2] sm:$0x1]
    %v918 = vperm.slane %v916, 0
    %v920 = vadd.f32 %v897, %v918
    %v921 = vadd.f32 %v899, %v918
    %v922 = vadd.f32 %v902, %v918
    %v923 = vadd.f32 %v904, %v918
    %v924 = vadd.f32 %v907, %v918
    %v925 = vadd.f32 %v909, %v918
    %v926 = vadd.f32 %v912, %v918
    %v927 = vadd.f32 %v914, %v918
    %v928 = vadd.f32 %v920, %v76
    %v929 = vadd.f32 %v921, %v77
    %v930 = vadd.f32 %v922, %v78
    %v931 = vadd.f32 %v923, %v79
    %v932 = vadd.f32 %v924, %v80
    %v933 = vadd.f32 %v925, %v81
    %v934 = vadd.f32 %v926, %v82
    %v935 = vadd.f32 %v927, %v83
    %v936 = vpack.c.bf16 %v928, %v928
    %v937 = vpack.c.bf16 %v929, %v929
    %v938 = vpack.c.bf16 %v930, %v930
    %v939 = vpack.c.bf16 %v931, %v931
    %v940 = vpack.c.bf16 %v932, %v932
    %v941 = vpack.c.bf16 %v933, %v933
    %v942 = vpack.c.bf16 %v934, %v934
    %v943 = vpack.c.bf16 %v935, %v935
    %944 = vst.msk [vmem:[%s7] sm:$0xf] %vm108, %v936
    %945 = vst.msk [vmem:[%s7 + $0x4] sm:$0xf] %vm108, %v937
    %946 = vst.msk [vmem:[%s7 + $0x8] sm:$0xf] %vm108, %v938
    %947 = vst.msk [vmem:[%s7 + $0xc] sm:$0xf] %vm108, %v939
    %948 = vst.msk [vmem:[%s7 + $0x10] sm:$0xf] %vm108, %v940
    %949 = vst.msk [vmem:[%s7 + $0x14] sm:$0xf] %vm108, %v941
    %950 = vst.msk [vmem:[%s7 + $0x18] sm:$0xf] %vm108, %v942
    %vm951 = vcmask 254976
    %952 = vst.msk [vmem:[%s7 + $0x1c] sm:$0x3] %vm951, %v943
    // Predicated region
    $region42: #{_lambda_.13} parent=1 // pred_check
      _
    $region43: #{_lambda_.13} parent=1 // pred_check_branch
      %954 = sbr.rel (0) target = $region45
    $region44: #{_lambda_.13} parent=1 // pred_region
      _
    $region45: #{_lambda_.13} parent=1 // pred_fallthru
      _
    // Predicated region
    $region46: #{_lambda_.13} parent=1 // pred_check
      _
    $region47: #{_lambda_.13} parent=1 // pred_check_branch
      %956 = sbr.rel (0) target = $region49
    $region48: #{_lambda_.13} parent=1 // pred_region
      _
    $region49: #{_lambda_.13} parent=1 // pred_fallthru
      _
    %957 = vsyncpa [#allocation3], 1
    %958 = vsyncpa [#allocation5], 1

// kernel: _lambda_.15
$region0: #{_lambda_.15}
  #allocation0 [shape = 'u32[]', space=smem, size = 0x4, offset = 0x4, fixed_abs, tag = 'smem constant byte address 0x4 - core index']
  #allocation1 [shape = 'u32[72,128]{1,0:T(1,128)}', space=vmem, size = 0x9000, scoped, tag = 'internal scratch']
  %s0 = inlined_call_operand.vmem [shape: bf16[60,32], index: 0, kind: input, shape index: {}]
  %s1 = inlined_call_operand.vmem [shape: bf16[32,160], index: 1, kind: input, shape index: {}]
  %s2 = inlined_call_operand.vmem [shape: f32[1,160], index: 2, kind: input, shape index: {}]
  %s3 = inlined_call_operand.vmem [shape: f32[1,32], index: 3, kind: input, shape index: {}]
  %s4 = inlined_call_operand.hbm [shape: f32[1,32], index: 4, kind: input, shape index: {}]
  %s5 = inlined_call_operand.vmem [shape: f32[60,160], index: 5, kind: output, shape index: {}]
  %s6 = sld [smem:[#allocation0]]
  $region34: #{_lambda_.15} parent=0
    _
  %s8 = ssub.s32 1, %s6
  %s9 = scalar_select 0, %s8, %s6
  $region1: #{_lambda_.15} parent=0
    #allocation2 [shape = 'u8[512]{0}', space=vmem, size = 0x400, scoped, tag = 'input window, operand 4, single buffered']
    #allocation3 [shape = 's32[1]{0}', space=sflag, size = 0x4, scoped, tag = 'scoped memory for _lambda_.15']
    %10 = vsyncpa [#allocation3], 0
    // Predicated region
    $region2: #{_lambda_.15} parent=1 // pred_check
      _
    $region3: #{_lambda_.15} parent=1 // pred_check_branch
      %12 = sbr.rel (0) target = $region5
    $region4: #{_lambda_.15} parent=1 // pred_region
      _
    $region5: #{_lambda_.15} parent=1 // pred_fallthru
      _
    // Predicated region
    $region6: #{_lambda_.15} parent=1 // pred_check
      _
    $region7: #{_lambda_.15} parent=1 // pred_check_branch
      %14 = sbr.rel (0) target = $region9
    $region8: #{_lambda_.15} parent=1 // pred_region
      _
    $region9: #{_lambda_.15} parent=1 // pred_fallthru
      _
    // Predicated region
    $region10: #{_lambda_.15} parent=1 // pred_check
      _
    $region11: #{_lambda_.15} parent=1 // pred_check_branch
      %16 = sbr.rel (0) target = $region13
    $region12: #{_lambda_.15} parent=1 // pred_region
      _
    $region13: #{_lambda_.15} parent=1 // pred_fallthru
      _
    // Predicated region
    $region14: #{_lambda_.15} parent=1 // pred_check
      _
    $region15: #{_lambda_.15} parent=1 // pred_check_branch
      %18 = sbr.rel (0) target = $region17
    $region16: #{_lambda_.15} parent=1 // pred_region
      _
    $region17: #{_lambda_.15} parent=1 // pred_fallthru
      _
    // Predicated region
    $region18: #{_lambda_.15} parent=1 // pred_check
      _
    $region19: #{_lambda_.15} parent=1 // pred_check_branch
      %20 = sbr.rel (0) target = $region21
    $region20: #{_lambda_.15} parent=1 // pred_region
      %22 = vsyncadd [#allocation3], 0
      %s24 = sshll.u32 %s4, 4
      %s25 = int_to_ptr.hbm [resolvable:$true] %s24
      %s26 = sshll.u32 [#allocation2], 4
      %s27 = int_to_ptr.vmem [resolvable:$true] %s26
      %29 = dma.hbm_to_vmem [thread:$0]  %s25, 16, %s27, [#allocation3]
    $region21: #{_lambda_.15} parent=1 // pred_fallthru
      _
    // Predicated region
    $region22: #{_lambda_.15} parent=1 // pred_check
      _
    $region23: #{_lambda_.15} parent=1 // pred_check_branch
      %31 = sbr.rel (0) target = $region25
    $region24: #{_lambda_.15} parent=1 // pred_region
      %33 = dma.done [#allocation3], 16
    $region25: #{_lambda_.15} parent=1 // pred_fallthru
      _
    %v35 = vld [vmem:[%s0] sm:$0xf]
    %v36 = vld [vmem:[%s0 + $0x4] sm:$0xf]
    %v37 = vld [vmem:[%s0 + $0x8] sm:$0xf]
    %v38 = vld [vmem:[%s0 + $0xc] sm:$0xf]
    %v39 = vld [vmem:[%s0 + $0x10] sm:$0xf]
    %v40 = vld [vmem:[%s0 + $0x14] sm:$0xf]
    %v41 = vld [vmem:[%s0 + $0x18] sm:$0xf]
    %v42 = vld [vmem:[%s0 + $0x1c] sm:$0x3]
    %v43 = vunpack.c.l.bf16 %v35
    %v44 = vunpack.c.l.bf16 %v36
    %v45 = vunpack.c.l.bf16 %v37
    %v46 = vunpack.c.l.bf16 %v38
    %v47 = vunpack.c.l.bf16 %v39
    %v48 = vunpack.c.l.bf16 %v40
    %v49 = vunpack.c.l.bf16 %v41
    %v50 = vunpack.c.l.bf16 %v42
    %v51 = vld [vmem:[%s3] sm:$0x1]
    %v52 = vld [vmem:[#allocation2] sm:$0x1]
    %vm53 = vcmask 261120
    %v54 = vsel %vm53, %v43, 0.0
    %55 = vadd.xlane.f32.xlu0 %v54
    %v56 = vpop.xlane.xlu0 %55
    %v57 = vsel %vm53, %v44, 0.0
    %58 = vadd.xlane.f32.xlu0 %v57
    %v59 = vpop.xlane.xlu0 %58
    %v60 = vsel %vm53, %v45, 0.0
    %61 = vadd.xlane.f32.xlu0 %v60
    %v62 = vpop.xlane.xlu0 %61
    %v63 = vsel %vm53, %v46, 0.0
    %64 = vadd.xlane.f32.xlu0 %v63
    %v65 = vpop.xlane.xlu0 %64
    %v66 = vsel %vm53, %v47, 0.0
    %67 = vadd.xlane.f32.xlu0 %v66
    %v68 = vpop.xlane.xlu0 %67
    %v69 = vsel %vm53, %v48, 0.0
    %70 = vadd.xlane.f32.xlu0 %v69
    %v71 = vpop.xlane.xlu0 %70
    %v72 = vsel %vm53, %v49, 0.0
    %73 = vadd.xlane.f32.xlu0 %v72
    %v74 = vpop.xlane.xlu0 %73
    %vm75 = vcmask 257024
    %v76 = vsel %vm75, %v50, 0.0
    %77 = vadd.xlane.f32.xlu0 %v76
    %v78 = vpop.xlane.xlu0 %77
    %v79 = vrcp.pop 32.0
    %v80 = vmul.f32 32.0, %v79
    %v81 = vsub.f32 1.0, %v80
    %v82 = vmul.f32 %v79, %v81
    %v83 = vadd.f32 %v79, %v82
    %vm84 = vweird.f32 %v79
    %v85 = vsel %vm84, %v79, %v83
    %v86 = vmul.f32 %v56, %v85
    %v87 = vmul.f32 %v59, %v85
    %v88 = vmul.f32 %v62, %v85
    %v89 = vmul.f32 %v65, %v85
    %v90 = vmul.f32 %v68, %v85
    %v91 = vmul.f32 %v71, %v85
    %v92 = vmul.f32 %v74, %v85
    %v93 = vmul.f32 %v78, %v85
    %v94 = vsub.f32 %v43, %v86
    %v95 = vsub.f32 %v44, %v87
    %v96 = vsub.f32 %v45, %v88
    %v97 = vsub.f32 %v46, %v89
    %v98 = vsub.f32 %v47, %v90
    %v99 = vsub.f32 %v48, %v91
    %v100 = vsub.f32 %v49, %v92
    %v101 = vsub.f32 %v50, %v93
    %v102 = vmul.f32 %v94, %v94
    %v103 = vmul.f32 %v95, %v95
    %v104 = vmul.f32 %v96, %v96
    %v105 = vmul.f32 %v97, %v97
    %v106 = vmul.f32 %v98, %v98
    %v107 = vmul.f32 %v99, %v99
    %v108 = vmul.f32 %v100, %v100
    %v109 = vmul.f32 %v101, %v101
    %v110 = vsel %vm53, %v102, 0.0
    %111 = vadd.xlane.f32.xlu0 %v110
    %v112 = vpop.xlane.xlu0 %111
    %v113 = vsel %vm53, %v103, 0.0
    %114 = vadd.xlane.f32.xlu0 %v113
    %v115 = vpop.xlane.xlu0 %114
    %v116 = vsel %vm53, %v104, 0.0
    %117 = vadd.xlane.f32.xlu0 %v116
    %v118 = vpop.xlane.xlu0 %117
    %v119 = vsel %vm53, %v105, 0.0
    %120 = vadd.xlane.f32.xlu0 %v119
    %v121 = vpop.xlane.xlu0 %120
    %v122 = vsel %vm53, %v106, 0.0
    %123 = vadd.xlane.f32.xlu0 %v122
    %v124 = vpop.xlane.xlu0 %123
    %v125 = vsel %vm53, %v107, 0.0
    %126 = vadd.xlane.f32.xlu0 %v125
    %v127 = vpop.xlane.xlu0 %126
    %v128 = vsel %vm53, %v108, 0.0
    %129 = vadd.xlane.f32.xlu0 %v128
    %v130 = vpop.xlane.xlu0 %129
    %v131 = vsel %vm75, %v109, 0.0
    %132 = vadd.xlane.f32.xlu0 %v131
    %v133 = vpop.xlane.xlu0 %132
    %v134 = vmul.f32 %v112, %v85
    %v135 = vmul.f32 %v115, %v85
    %v136 = vmul.f32 %v118, %v85
    %v137 = vmul.f32 %v121, %v85
    %v138 = vmul.f32 %v124, %v85
    %v139 = vmul.f32 %v127, %v85
    %v140 = vmul.f32 %v130, %v85
    %v141 = vmul.f32 %v133, %v85
    %v142 = vadd.f32 %v134, 1e-05
    %v143 = vadd.f32 %v135, 1e-05
    %v144 = vadd.f32 %v136, 1e-05
    %v145 = vadd.f32 %v137, 1e-05
    %v146 = vadd.f32 %v138, 1e-05
    %v147 = vadd.f32 %v139, 1e-05
    %v148 = vadd.f32 %v140, 1e-05
    %v149 = vadd.f32 %v141, 1e-05
    %v150 = vrsqrt.pop %v142
    %v151 = vmul.f32 %v150, %v142
    %v152 = vmul.f32 %v151, %v150
    %v153 = vmul.f32 0.5, %v152
    %v154 = vsub.f32 1.5, %v153
    %v155 = vmul.f32 %v150, %v154
    %vm156 = vweird.f32 %v142
    %vm157 = vweird.f32 %v150
    %vm158 = vmor %vm156, %vm157
    %v159 = vsel %vm158, %v150, %v155
    %v160 = vrsqrt.pop %v143
    %v161 = vmul.f32 %v160, %v143
    %v162 = vmul.f32 %v161, %v160
    %v163 = vmul.f32 0.5, %v162
    %v164 = vsub.f32 1.5, %v163
    %v165 = vmul.f32 %v160, %v164
    %vm166 = vweird.f32 %v143
    %vm167 = vweird.f32 %v160
    %vm168 = vmor %vm166, %vm167
    %v169 = vsel %vm168, %v160, %v165
    %v170 = vrsqrt.pop %v144
    %v171 = vmul.f32 %v170, %v144
    %v172 = vmul.f32 %v171, %v170
    %v173 = vmul.f32 0.5, %v172
    %v174 = vsub.f32 1.5, %v173
    %v175 = vmul.f32 %v170, %v174
    %vm176 = vweird.f32 %v144
    %vm177 = vweird.f32 %v170
    %vm178 = vmor %vm176, %vm177
    %v179 = vsel %vm178, %v170, %v175
    %v180 = vrsqrt.pop %v145
    %v181 = vmul.f32 %v180, %v145
    %v182 = vmul.f32 %v181, %v180
    %v183 = vmul.f32 0.5, %v182
    %v184 = vsub.f32 1.5, %v183
    %v185 = vmul.f32 %v180, %v184
    %vm186 = vweird.f32 %v145
    %vm187 = vweird.f32 %v180
    %vm188 = vmor %vm186, %vm187
    %v189 = vsel %vm188, %v180, %v185
    %v190 = vrsqrt.pop %v146
    %v191 = vmul.f32 %v190, %v146
    %v192 = vmul.f32 %v191, %v190
    %v193 = vmul.f32 0.5, %v192
    %v194 = vsub.f32 1.5, %v193
    %v195 = vmul.f32 %v190, %v194
    %vm196 = vweird.f32 %v146
    %vm197 = vweird.f32 %v190
    %vm198 = vmor %vm196, %vm197
    %v199 = vsel %vm198, %v190, %v195
    %v200 = vrsqrt.pop %v147
    %v201 = vmul.f32 %v200, %v147
    %v202 = vmul.f32 %v201, %v200
    %v203 = vmul.f32 0.5, %v202
    %v204 = vsub.f32 1.5, %v203
    %v205 = vmul.f32 %v200, %v204
    %vm206 = vweird.f32 %v147
    %vm207 = vweird.f32 %v200
    %vm208 = vmor %vm206, %vm207
    %v209 = vsel %vm208, %v200, %v205
    %v210 = vrsqrt.pop %v148
    %v211 = vmul.f32 %v210, %v148
    %v212 = vmul.f32 %v211, %v210
    %v213 = vmul.f32 0.5, %v212
    %v214 = vsub.f32 1.5, %v213
    %v215 = vmul.f32 %v210, %v214
    %vm216 = vweird.f32 %v148
    %vm217 = vweird.f32 %v210
    %vm218 = vmor %vm216, %vm217
    %v219 = vsel %vm218, %v210, %v215
    %v220 = vrsqrt.pop %v149
    %v221 = vmul.f32 %v220, %v149
    %v222 = vmul.f32 %v221, %v220
    %v223 = vmul.f32 0.5, %v222
    %v224 = vsub.f32 1.5, %v223
    %v225 = vmul.f32 %v220, %v224
    %vm226 = vweird.f32 %v149
    %vm227 = vweird.f32 %v220
    %vm228 = vmor %vm226, %vm227
    %v229 = vsel %vm228, %v220, %v225
    %v230 = vmul.f32 %v94, %v159
    %v231 = vmul.f32 %v95, %v169
    %v232 = vmul.f32 %v96, %v179
    %v233 = vmul.f32 %v97, %v189
    %v234 = vmul.f32 %v98, %v199
    %v235 = vmul.f32 %v99, %v209
    %v236 = vmul.f32 %v100, %v219
    %v237 = vmul.f32 %v101, %v229
    %v239 = vperm.slane %v51, 0
    %v241 = vmul.f32 %v230, %v239
    %v242 = vmul.f32 %v231, %v239
    %v243 = vmul.f32 %v232, %v239
    %v244 = vmul.f32 %v233, %v239
    %v245 = vmul.f32 %v234, %v239
    %v246 = vmul.f32 %v235, %v239
    %v247 = vmul.f32 %v236, %v239
    %v248 = vmul.f32 %v237, %v239
    %v250 = vperm.slane %v52, 0
    %v252 = vadd.f32 %v241, %v250
    %v253 = vadd.f32 %v242, %v250
    %v254 = vadd.f32 %v243, %v250
    %v255 = vadd.f32 %v244, %v250
    %v256 = vadd.f32 %v245, %v250
    %v257 = vadd.f32 %v246, %v250
    %v258 = vadd.f32 %v247, %v250
    %v259 = vadd.f32 %v248, %v250
    %v260 = vpack.c.bf16 %v253, %v252
    %v261 = vpack.c.bf16 %v255, %v254
    %v262 = vpack.c.bf16 %v257, %v256
    %v263 = vpack.c.bf16 %v259, %v258
    %v264 = vld [vmem:[%s1] sm:$0xff]
    %v265 = vld [vmem:[%s1 + $0x8] sm:$0xff]
    %v266 = vld [vmem:[%s1 + $0x10] sm:$0xff]
    %v267 = vld [vmem:[%s1 + $0x18] sm:$0xff]
    %v268 = vld [vmem:[%s2] sm:$0x3]
    %v270 = vperm.slane %v268, 0
    %v271 = vperm.slane %v268, 1
    %v278 = vunpack.c.l.b16 %v264
    %v279 = vunpack.c.h.b16 %v264
    %v280 = vunpack.c.l.b16 %v265
    %v281 = vunpack.c.h.b16 %v265
    %v282 = vunpack.c.l.b16 %v266
    %v283 = vunpack.c.h.b16 %v266
    %v284 = vunpack.c.l.b16 %v267
    %v285 = vunpack.c.h.b16 %v267
    %v286 = vpack.c.b16 %v280, %v278
    %v287 = vpack.c.b16 %v281, %v279
    %v288 = vpack.c.b16 %v284, %v282
    %v289 = vpack.c.b16 %v285, %v283
    %v295 = vsel %vm53, %v260, 0
    %v298 = vsel %vm53, %v261, 0
    %v301 = vsel %vm53, %v262, 0
    %v304 = vsel %vm53, %v263, 0
    %306 = vmatpush.bf16.msra.mxu0 0
    %307 = vmatpush.bf16.msra.mxu0 0
    %308 = vmatpush.bf16.msra.mxu0 0
    %309 = vmatpush.bf16.msra.mxu0 0
    %310 = vmatpush.bf16.msra.mxu0 0
    %311 = vmatpush.bf16.msra.mxu0 0
    %312 = vmatpush.bf16.msra.mxu0 %v288
    %313 = vmatpush.bf16.msra.mxu0 %v286
    %314 = vmatmul.bf16.gmra.mxu0 %v295
    %v315 = vpop.f32.mrf.mxu0
    %v316 = vadd.f32 %v270, %v315
    %v317 = vpop.f32.mrf.mxu0
    %v318 = vadd.f32 %v270, %v317
    %319 = vmatmul.bf16.gmra.mxu0 %v298
    %v320 = vpop.f32.mrf.mxu0
    %v321 = vadd.f32 %v270, %v320
    %v322 = vpop.f32.mrf.mxu0
    %v323 = vadd.f32 %v270, %v322
    %324 = vmatmul.bf16.gmra.mxu0 %v301
    %v325 = vpop.f32.mrf.mxu0
    %v326 = vadd.f32 %v270, %v325
    %v327 = vpop.f32.mrf.mxu0
    %v328 = vadd.f32 %v270, %v327
    %329 = vmatmul.bf16.gmra.mxu0 %v304
    %v330 = vpop.f32.mrf.mxu0
    %v331 = vadd.f32 %v270, %v330
    %v332 = vpop.f32.mrf.mxu0
    %v333 = vadd.f32 %v270, %v332
    %334 = vdwg.mxu0
    %335 = vmatpush.bf16.msra.mxu0 0
    %336 = vmatpush.bf16.msra.mxu0 0
    %337 = vmatpush.bf16.msra.mxu0 0
    %338 = vmatpush.bf16.msra.mxu0 0
    %339 = vmatpush.bf16.msra.mxu0 0
    %340 = vmatpush.bf16.msra.mxu0 0
    %341 = vmatpush.bf16.msra.mxu0 %v289
    %342 = vmatpush.bf16.msra.mxu0 %v287
    %343 = vmatmul.bf16.gmra.mxu0 %v295
    %v344 = vpop.f32.mrf.mxu0
    %v345 = vadd.f32 %v271, %v344
    %v346 = vpop.f32.mrf.mxu0
    %v347 = vadd.f32 %v271, %v346
    %348 = vmatmul.bf16.gmra.mxu0 %v298
    %v349 = vpop.f32.mrf.mxu0
    %v350 = vadd.f32 %v271, %v349
    %v351 = vpop.f32.mrf.mxu0
    %v352 = vadd.f32 %v271, %v351
    %353 = vmatmul.bf16.gmra.mxu0 %v301
    %v354 = vpop.f32.mrf.mxu0
    %v355 = vadd.f32 %v271, %v354
    %v356 = vpop.f32.mrf.mxu0
    %v357 = vadd.f32 %v271, %v356
    %358 = vmatmul.bf16.gmra.mxu0 %v304
    %v359 = vpop.f32.mrf.mxu0
    %v360 = vadd.f32 %v271, %v359
    %v361 = vpop.f32.mrf.mxu0
    %v362 = vadd.f32 %v271, %v361
    %363 = vdwg.mxu0
    %364 = vst [vmem:[%s5] sm:$0xff] %v316
    %365 = vst.msk [vmem:[%s5 + $0x8] sm:$0xff] %vm53, %v345
    %366 = vst [vmem:[%s5 + $0x10] sm:$0xff] %v318
    %367 = vst.msk [vmem:[%s5 + $0x18] sm:$0xff] %vm53, %v347
    %368 = vst [vmem:[%s5 + $0x20] sm:$0xff] %v321
    %369 = vst.msk [vmem:[%s5 + $0x28] sm:$0xff] %vm53, %v350
    %370 = vst [vmem:[%s5 + $0x30] sm:$0xff] %v323
    %371 = vst.msk [vmem:[%s5 + $0x38] sm:$0xff] %vm53, %v352
    %372 = vst [vmem:[%s5 + $0x40] sm:$0xff] %v326
    %373 = vst.msk [vmem:[%s5 + $0x48] sm:$0xff] %vm53, %v355
    %374 = vst [vmem:[%s5 + $0x50] sm:$0xff] %v328
    %375 = vst.msk [vmem:[%s5 + $0x58] sm:$0xff] %vm53, %v357
    %376 = vst [vmem:[%s5 + $0x60] sm:$0xff] %v331
    %377 = vst.msk [vmem:[%s5 + $0x68] sm:$0xff] %vm53, %v360
    %378 = vst [vmem:[%s5 + $0x70] sm:$0xf] %v333
    %379 = vst.msk [vmem:[%s5 + $0x78] sm:$0xf] %vm75, %v362
    // Predicated region
    $region26: #{_lambda_.15} parent=1 // pred_check
      _
    $region27: #{_lambda_.15} parent=1 // pred_check_branch
      %381 = sbr.rel (0) target = $region29
    $region28: #{_lambda_.15} parent=1 // pred_region
      _
    $region29: #{_lambda_.15} parent=1 // pred_fallthru
      _
    // Predicated region
    $region30: #{_lambda_.15} parent=1 // pred_check
      _
    $region31: #{_lambda_.15} parent=1 // pred_check_branch
      %383 = sbr.rel (0) target = $region33
    $region32: #{_lambda_.15} parent=1 // pred_region
      _
    $region33: #{_lambda_.15} parent=1 // pred_fallthru
      _
    %384 = vsyncpa [#allocation3], 1

// kernel: _lambda_.14
$region0: #{_lambda_.14}
  #allocation0 [shape = 'u32[]', space=smem, size = 0x4, offset = 0x4, fixed_abs, tag = 'smem constant byte address 0x4 - core index']
  #allocation1 [shape = 'u32[72,128]{1,0:T(1,128)}', space=vmem, size = 0x9000, scoped, tag = 'internal scratch']
  %s0 = inlined_call_operand.vmem [shape: bf16[60,32], index: 0, kind: input, shape index: {}]
  %s1 = inlined_call_operand.vmem [shape: bf16[32,128], index: 1, kind: input, shape index: {}]
  %s2 = inlined_call_operand.hbm [shape: f32[1,128], index: 2, kind: input, shape index: {}]
  %s3 = inlined_call_operand.vmem [shape: bf16[128,32], index: 3, kind: input, shape index: {}]
  %s4 = inlined_call_operand.hbm [shape: f32[1,32], index: 4, kind: input, shape index: {}]
  %s5 = inlined_call_operand.hbm [shape: f32[1,32], index: 5, kind: input, shape index: {}]
  %s6 = inlined_call_operand.hbm [shape: f32[1,32], index: 6, kind: input, shape index: {}]
  %s7 = inlined_call_operand.vmem [shape: bf16[60,32], index: 7, kind: output, shape index: {}]
  %s8 = sld [smem:[#allocation0]]
  $region54: #{_lambda_.14} parent=0
    _
  %s10 = ssub.s32 1, %s8
  %s11 = scalar_select 0, %s10, %s8
  $region1: #{_lambda_.14} parent=0
    #allocation2 [shape = 'u8[512]{0}', space=vmem, size = 0x400, scoped, tag = 'input window, operand 2, single buffered']
    #allocation3 [shape = 's32[1]{0}', space=sflag, size = 0x4, scoped, tag = 'scoped memory for _lambda_.14']
    #allocation4 [shape = 'u8[512]{0}', space=vmem, size = 0x400, scoped, tag = 'input window, operand 4, single buffered']
    #allocation5 [shape = 's32[1]{0}', space=sflag, size = 0x4, scoped, tag = 'scoped memory for _lambda_.14']
    #allocation6 [shape = 'u8[512]{0}', space=vmem, size = 0x400, scoped, tag = 'input window, operand 5, single buffered']
    #allocation7 [shape = 'u8[512]{0}', space=vmem, size = 0x400, scoped, tag = 'input window, operand 6, single buffered']
    #allocation8 [shape = 's32[1]{0}', space=sflag, size = 0x4, scoped, tag = 'scoped memory for _lambda_.14']
    %12 = vsyncpa [#allocation3], 0
    %13 = vsyncpa [#allocation5], 0
    %14 = vsyncpa [#allocation8], 0
    // Predicated region
    $region2: #{_lambda_.14} parent=1 // pred_check
      _
    $region3: #{_lambda_.14} parent=1 // pred_check_branch
      %16 = sbr.rel (0) target = $region5
    $region4: #{_lambda_.14} parent=1 // pred_region
      _
    $region5: #{_lambda_.14} parent=1 // pred_fallthru
      _
    // Predicated region
    $region6: #{_lambda_.14} parent=1 // pred_check
      _
    $region7: #{_lambda_.14} parent=1 // pred_check_branch
      %18 = sbr.rel (0) target = $region9
    $region8: #{_lambda_.14} parent=1 // pred_region
      _
    $region9: #{_lambda_.14} parent=1 // pred_fallthru
      _
    // Predicated region
    $region10: #{_lambda_.14} parent=1 // pred_check
      _
    $region11: #{_lambda_.14} parent=1 // pred_check_branch
      %20 = sbr.rel (0) target = $region13
    $region12: #{_lambda_.14} parent=1 // pred_region
      %22 = vsyncadd [#allocation3], 0
      %s24 = sshll.u32 %s2, 4
      %s25 = int_to_ptr.hbm [resolvable:$true] %s24
      %s26 = sshll.u32 [#allocation2], 4
      %s27 = int_to_ptr.vmem [resolvable:$true] %s26
      %29 = dma.hbm_to_vmem [thread:$0]  %s25, 16, %s27, [#allocation3]
    $region13: #{_lambda_.14} parent=1 // pred_fallthru
      _
    // Predicated region
    $region14: #{_lambda_.14} parent=1 // pred_check
      _
    $region15: #{_lambda_.14} parent=1 // pred_check_branch
      %31 = sbr.rel (0) target = $region17
    $region16: #{_lambda_.14} parent=1 // pred_region
      _
    $region17: #{_lambda_.14} parent=1 // pred_fallthru
      _
    // Predicated region
    $region18: #{_lambda_.14} parent=1 // pred_check
      _
    $region19: #{_lambda_.14} parent=1 // pred_check_branch
      %33 = sbr.rel (0) target = $region21
    $region20: #{_lambda_.14} parent=1 // pred_region
      %35 = vsyncadd [#allocation5], 0
      %s37 = sshll.u32 %s4, 4
      %s38 = int_to_ptr.hbm [resolvable:$true] %s37
      %s39 = sshll.u32 [#allocation4], 4
      %s40 = int_to_ptr.vmem [resolvable:$true] %s39
      %42 = dma.hbm_to_vmem [thread:$0]  %s38, 16, %s40, [#allocation5]
    $region21: #{_lambda_.14} parent=1 // pred_fallthru
      _
    // Predicated region
    $region22: #{_lambda_.14} parent=1 // pred_check
      _
    $region23: #{_lambda_.14} parent=1 // pred_check_branch
      %44 = sbr.rel (0) target = $region25
    $region24: #{_lambda_.14} parent=1 // pred_region
      %46 = vsyncadd [#allocation5], 0
      %s48 = sshll.u32 %s5, 4
      %s49 = int_to_ptr.hbm [resolvable:$true] %s48
      %s50 = sshll.u32 [#allocation6], 4
      %s51 = int_to_ptr.vmem [resolvable:$true] %s50
      %53 = dma.hbm_to_vmem [thread:$0]  %s49, 16, %s51, [#allocation5]
    $region25: #{_lambda_.14} parent=1 // pred_fallthru
      _
    // Predicated region
    $region26: #{_lambda_.14} parent=1 // pred_check
      _
    $region27: #{_lambda_.14} parent=1 // pred_check_branch
      %55 = sbr.rel (0) target = $region29
    $region28: #{_lambda_.14} parent=1 // pred_region
      %57 = vsyncadd [#allocation8], 0
      %s59 = sshll.u32 %s6, 4
      %s60 = int_to_ptr.hbm [resolvable:$true] %s59
      %s61 = sshll.u32 [#allocation7], 4
      %s62 = int_to_ptr.vmem [resolvable:$true] %s61
      %64 = dma.hbm_to_vmem [thread:$0]  %s60, 16, %s62, [#allocation8]
    $region29: #{_lambda_.14} parent=1 // pred_fallthru
      _
    // Predicated region
    $region30: #{_lambda_.14} parent=1 // pred_check
      _
    $region31: #{_lambda_.14} parent=1 // pred_check_branch
      %66 = sbr.rel (0) target = $region33
    $region32: #{_lambda_.14} parent=1 // pred_region
      %68 = dma.done [#allocation3], 16
    $region33: #{_lambda_.14} parent=1 // pred_fallthru
      _
    // Predicated region
    $region34: #{_lambda_.14} parent=1 // pred_check
      _
    $region35: #{_lambda_.14} parent=1 // pred_check_branch
      %70 = sbr.rel (0) target = $region37
    $region36: #{_lambda_.14} parent=1 // pred_region
      %72 = dma.done [#allocation5], 16
    $region37: #{_lambda_.14} parent=1 // pred_fallthru
      _
    // Predicated region
    $region38: #{_lambda_.14} parent=1 // pred_check
      _
    $region39: #{_lambda_.14} parent=1 // pred_check_branch
      %74 = sbr.rel (0) target = $region41
    $region40: #{_lambda_.14} parent=1 // pred_region
      %76 = dma.done [#allocation5], 16
    $region41: #{_lambda_.14} parent=1 // pred_fallthru
      _
    // Predicated region
    $region42: #{_lambda_.14} parent=1 // pred_check
      _
    $region43: #{_lambda_.14} parent=1 // pred_check_branch
      %78 = sbr.rel (0) target = $region45
    $region44: #{_lambda_.14} parent=1 // pred_region
      %80 = dma.done [#allocation8], 16
    $region45: #{_lambda_.14} parent=1 // pred_fallthru
      _
    %v82 = vld [vmem:[%s0] sm:$0xf]
    %v83 = vld [vmem:[%s0 + $0x4] sm:$0xf]
    %v84 = vld [vmem:[%s0 + $0x8] sm:$0xf]
    %v85 = vld [vmem:[%s0 + $0xc] sm:$0xf]
    %v86 = vld [vmem:[%s0 + $0x10] sm:$0xf]
    %v87 = vld [vmem:[%s0 + $0x14] sm:$0xf]
    %v88 = vld [vmem:[%s0 + $0x18] sm:$0xf]
    %v89 = vld [vmem:[%s0 + $0x1c] sm:$0x3]
    %v90 = vunpack.c.l.bf16 %v82
    %v91 = vunpack.c.l.bf16 %v83
    %v92 = vunpack.c.l.bf16 %v84
    %v93 = vunpack.c.l.bf16 %v85
    %v94 = vunpack.c.l.bf16 %v86
    %v95 = vunpack.c.l.bf16 %v87
    %v96 = vunpack.c.l.bf16 %v88
    %v97 = vunpack.c.l.bf16 %v89
    %v98 = vld [vmem:[#allocation6] sm:$0x1]
    %v99 = vld [vmem:[#allocation7] sm:$0x1]
    %vm100 = vcmask 261120
    %v101 = vsel %vm100, %v90, 0.0
    %102 = vadd.xlane.f32.xlu0 %v101
    %v103 = vpop.xlane.xlu0 %102
    %v104 = vsel %vm100, %v91, 0.0
    %105 = vadd.xlane.f32.xlu0 %v104
    %v106 = vpop.xlane.xlu0 %105
    %v107 = vsel %vm100, %v92, 0.0
    %108 = vadd.xlane.f32.xlu0 %v107
    %v109 = vpop.xlane.xlu0 %108
    %v110 = vsel %vm100, %v93, 0.0
    %111 = vadd.xlane.f32.xlu0 %v110
    %v112 = vpop.xlane.xlu0 %111
    %v113 = vsel %vm100, %v94, 0.0
    %114 = vadd.xlane.f32.xlu0 %v113
    %v115 = vpop.xlane.xlu0 %114
    %v116 = vsel %vm100, %v95, 0.0
    %117 = vadd.xlane.f32.xlu0 %v116
    %v118 = vpop.xlane.xlu0 %117
    %v119 = vsel %vm100, %v96, 0.0
    %120 = vadd.xlane.f32.xlu0 %v119
    %v121 = vpop.xlane.xlu0 %120
    %vm122 = vcmask 257024
    %v123 = vsel %vm122, %v97, 0.0
    %124 = vadd.xlane.f32.xlu0 %v123
    %v125 = vpop.xlane.xlu0 %124
    %v126 = vrcp.pop 32.0
    %v127 = vmul.f32 32.0, %v126
    %v128 = vsub.f32 1.0, %v127
    %v129 = vmul.f32 %v126, %v128
    %v130 = vadd.f32 %v126, %v129
    %vm131 = vweird.f32 %v126
    %v132 = vsel %vm131, %v126, %v130
    %v133 = vmul.f32 %v103, %v132
    %v134 = vmul.f32 %v106, %v132
    %v135 = vmul.f32 %v109, %v132
    %v136 = vmul.f32 %v112, %v132
    %v137 = vmul.f32 %v115, %v132
    %v138 = vmul.f32 %v118, %v132
    %v139 = vmul.f32 %v121, %v132
    %v140 = vmul.f32 %v125, %v132
    %v141 = vsub.f32 %v90, %v133
    %v142 = vsub.f32 %v91, %v134
    %v143 = vsub.f32 %v92, %v135
    %v144 = vsub.f32 %v93, %v136
    %v145 = vsub.f32 %v94, %v137
    %v146 = vsub.f32 %v95, %v138
    %v147 = vsub.f32 %v96, %v139
    %v148 = vsub.f32 %v97, %v140
    %v149 = vmul.f32 %v141, %v141
    %v150 = vmul.f32 %v142, %v142
    %v151 = vmul.f32 %v143, %v143
    %v152 = vmul.f32 %v144, %v144
    %v153 = vmul.f32 %v145, %v145
    %v154 = vmul.f32 %v146, %v146
    %v155 = vmul.f32 %v147, %v147
    %v156 = vmul.f32 %v148, %v148
    %v157 = vsel %vm100, %v149, 0.0
    %158 = vadd.xlane.f32.xlu0 %v157
    %v159 = vpop.xlane.xlu0 %158
    %v160 = vsel %vm100, %v150, 0.0
    %161 = vadd.xlane.f32.xlu0 %v160
    %v162 = vpop.xlane.xlu0 %161
    %v163 = vsel %vm100, %v151, 0.0
    %164 = vadd.xlane.f32.xlu0 %v163
    %v165 = vpop.xlane.xlu0 %164
    %v166 = vsel %vm100, %v152, 0.0
    %167 = vadd.xlane.f32.xlu0 %v166
    %v168 = vpop.xlane.xlu0 %167
    %v169 = vsel %vm100, %v153, 0.0
    %170 = vadd.xlane.f32.xlu0 %v169
    %v171 = vpop.xlane.xlu0 %170
    %v172 = vsel %vm100, %v154, 0.0
    %173 = vadd.xlane.f32.xlu0 %v172
    %v174 = vpop.xlane.xlu0 %173
    %v175 = vsel %vm100, %v155, 0.0
    %176 = vadd.xlane.f32.xlu0 %v175
    %v177 = vpop.xlane.xlu0 %176
    %v178 = vsel %vm122, %v156, 0.0
    %179 = vadd.xlane.f32.xlu0 %v178
    %v180 = vpop.xlane.xlu0 %179
    %v181 = vmul.f32 %v159, %v132
    %v182 = vmul.f32 %v162, %v132
    %v183 = vmul.f32 %v165, %v132
    %v184 = vmul.f32 %v168, %v132
    %v185 = vmul.f32 %v171, %v132
    %v186 = vmul.f32 %v174, %v132
    %v187 = vmul.f32 %v177, %v132
    %v188 = vmul.f32 %v180, %v132
    %v189 = vadd.f32 %v181, 1e-05
    %v190 = vadd.f32 %v182, 1e-05
    %v191 = vadd.f32 %v183, 1e-05
    %v192 = vadd.f32 %v184, 1e-05
    %v193 = vadd.f32 %v185, 1e-05
    %v194 = vadd.f32 %v186, 1e-05
    %v195 = vadd.f32 %v187, 1e-05
    %v196 = vadd.f32 %v188, 1e-05
    %v197 = vrsqrt.pop %v189
    %v198 = vmul.f32 %v197, %v189
    %v199 = vmul.f32 %v198, %v197
    %v200 = vmul.f32 0.5, %v199
    %v201 = vsub.f32 1.5, %v200
    %v202 = vmul.f32 %v197, %v201
    %vm203 = vweird.f32 %v189
    %vm204 = vweird.f32 %v197
    %vm205 = vmor %vm203, %vm204
    %v206 = vsel %vm205, %v197, %v202
    %v207 = vrsqrt.pop %v190
    %v208 = vmul.f32 %v207, %v190
    %v209 = vmul.f32 %v208, %v207
    %v210 = vmul.f32 0.5, %v209
    %v211 = vsub.f32 1.5, %v210
    %v212 = vmul.f32 %v207, %v211
    %vm213 = vweird.f32 %v190
    %vm214 = vweird.f32 %v207
    %vm215 = vmor %vm213, %vm214
    %v216 = vsel %vm215, %v207, %v212
    %v217 = vrsqrt.pop %v191
    %v218 = vmul.f32 %v217, %v191
    %v219 = vmul.f32 %v218, %v217
    %v220 = vmul.f32 0.5, %v219
    %v221 = vsub.f32 1.5, %v220
    %v222 = vmul.f32 %v217, %v221
    %vm223 = vweird.f32 %v191
    %vm224 = vweird.f32 %v217
    %vm225 = vmor %vm223, %vm224
    %v226 = vsel %vm225, %v217, %v222
    %v227 = vrsqrt.pop %v192
    %v228 = vmul.f32 %v227, %v192
    %v229 = vmul.f32 %v228, %v227
    %v230 = vmul.f32 0.5, %v229
    %v231 = vsub.f32 1.5, %v230
    %v232 = vmul.f32 %v227, %v231
    %vm233 = vweird.f32 %v192
    %vm234 = vweird.f32 %v227
    %vm235 = vmor %vm233, %vm234
    %v236 = vsel %vm235, %v227, %v232
    %v237 = vrsqrt.pop %v193
    %v238 = vmul.f32 %v237, %v193
    %v239 = vmul.f32 %v238, %v237
    %v240 = vmul.f32 0.5, %v239
    %v241 = vsub.f32 1.5, %v240
    %v242 = vmul.f32 %v237, %v241
    %vm243 = vweird.f32 %v193
    %vm244 = vweird.f32 %v237
    %vm245 = vmor %vm243, %vm244
    %v246 = vsel %vm245, %v237, %v242
    %v247 = vrsqrt.pop %v194
    %v248 = vmul.f32 %v247, %v194
    %v249 = vmul.f32 %v248, %v247
    %v250 = vmul.f32 0.5, %v249
    %v251 = vsub.f32 1.5, %v250
    %v252 = vmul.f32 %v247, %v251
    %vm253 = vweird.f32 %v194
    %vm254 = vweird.f32 %v247
    %vm255 = vmor %vm253, %vm254
    %v256 = vsel %vm255, %v247, %v252
    %v257 = vrsqrt.pop %v195
    %v258 = vmul.f32 %v257, %v195
    %v259 = vmul.f32 %v258, %v257
    %v260 = vmul.f32 0.5, %v259
    %v261 = vsub.f32 1.5, %v260
    %v262 = vmul.f32 %v257, %v261
    %vm263 = vweird.f32 %v195
    %vm264 = vweird.f32 %v257
    %vm265 = vmor %vm263, %vm264
    %v266 = vsel %vm265, %v257, %v262
    %v267 = vrsqrt.pop %v196
    %v268 = vmul.f32 %v267, %v196
    %v269 = vmul.f32 %v268, %v267
    %v270 = vmul.f32 0.5, %v269
    %v271 = vsub.f32 1.5, %v270
    %v272 = vmul.f32 %v267, %v271
    %vm273 = vweird.f32 %v196
    %vm274 = vweird.f32 %v267
    %vm275 = vmor %vm273, %vm274
    %v276 = vsel %vm275, %v267, %v272
    %v277 = vmul.f32 %v141, %v206
    %v278 = vmul.f32 %v142, %v216
    %v279 = vmul.f32 %v143, %v226
    %v280 = vmul.f32 %v144, %v236
    %v281 = vmul.f32 %v145, %v246
    %v282 = vmul.f32 %v146, %v256
    %v283 = vmul.f32 %v147, %v266
    %v284 = vmul.f32 %v148, %v276
    %v286 = vperm.slane %v98, 0
    %v288 = vmul.f32 %v277, %v286
    %v289 = vmul.f32 %v278, %v286
    %v290 = vmul.f32 %v279, %v286
    %v291 = vmul.f32 %v280, %v286
    %v292 = vmul.f32 %v281, %v286
    %v293 = vmul.f32 %v282, %v286
    %v294 = vmul.f32 %v283, %v286
    %v295 = vmul.f32 %v284, %v286
    %v297 = vperm.slane %v99, 0
    %v299 = vadd.f32 %v288, %v297
    %v300 = vadd.f32 %v289, %v297
    %v301 = vadd.f32 %v290, %v297
    %v302 = vadd.f32 %v291, %v297
    %v303 = vadd.f32 %v292, %v297
    %v304 = vadd.f32 %v293, %v297
    %v305 = vadd.f32 %v294, %v297
    %v306 = vadd.f32 %v295, %v297
    %v307 = vpack.c.bf16 %v300, %v299
    %v308 = vpack.c.bf16 %v302, %v301
    %v309 = vpack.c.bf16 %v304, %v303
    %v310 = vpack.c.bf16 %v306, %v305
    %v311 = vld [vmem:[%s1] sm:$0xf]
    %v312 = vld [vmem:[%s1 + $0x4] sm:$0xf]
    %v313 = vld [vmem:[%s1 + $0x8] sm:$0xf]
    %v314 = vld [vmem:[%s1 + $0xc] sm:$0xf]
    %v315 = vld [vmem:[#allocation2] sm:$0x1]
    %v317 = vperm.slane %v315, 0
    %v323 = vunpack.c.l.b16 %v311
    %v324 = vunpack.c.l.b16 %v312
    %v325 = vunpack.c.l.b16 %v313
    %v326 = vunpack.c.l.b16 %v314
    %v327 = vpack.c.b16 %v324, %v323
    %v328 = vpack.c.b16 %v326, %v325
    %v332 = vsel %vm100, %v307, 0
    %v335 = vsel %vm100, %v308, 0
    %v338 = vsel %vm100, %v309, 0
    %v341 = vsel %vm100, %v310, 0
    %343 = vmatpush.bf16.msra.mxu0 0
    %344 = vmatpush.bf16.msra.mxu0 0
    %345 = vmatpush.bf16.msra.mxu0 0
    %346 = vmatpush.bf16.msra.mxu0 0
    %347 = vmatpush.bf16.msra.mxu0 0
    %348 = vmatpush.bf16.msra.mxu0 0
    %349 = vmatpush.bf16.msra.mxu0 %v328
    %350 = vmatpush.bf16.msra.mxu0 %v327
    %351 = vmatmul.bf16.gmra.mxu0 %v332
    %v352 = vpop.f32.mrf.mxu0
    %v353 = vadd.f32 %v317, %v352
    %v354 = vpop.f32.mrf.mxu0
    %v355 = vadd.f32 %v317, %v354
    %356 = vmatmul.bf16.gmra.mxu0 %v335
    %v357 = vpop.f32.mrf.mxu0
    %v358 = vadd.f32 %v317, %v357
    %v359 = vpop.f32.mrf.mxu0
    %v360 = vadd.f32 %v317, %v359
    %361 = vmatmul.bf16.gmra.mxu0 %v338
    %v362 = vpop.f32.mrf.mxu0
    %v363 = vadd.f32 %v317, %v362
    %v364 = vpop.f32.mrf.mxu0
    %v365 = vadd.f32 %v317, %v364
    %366 = vmatmul.bf16.gmra.mxu0 %v341
    %v367 = vpop.f32.mrf.mxu0
    %v368 = vadd.f32 %v317, %v367
    %v369 = vpop.f32.mrf.mxu0
    %v370 = vadd.f32 %v317, %v369
    %371 = vdwg.mxu0
    %v372 = vmul.f32 %v353, %v353
    %v373 = vmul.f32 %v355, %v355
    %v374 = vmul.f32 %v358, %v358
    %v375 = vmul.f32 %v360, %v360
    %v376 = vmul.f32 %v363, %v363
    %v377 = vmul.f32 %v365, %v365
    %v378 = vmul.f32 %v368, %v368
    %v379 = vmul.f32 %v370, %v370
    %v380 = vmul.f32 %v353, %v372
    %v381 = vmul.f32 %v355, %v373
    %v382 = vmul.f32 %v358, %v374
    %v383 = vmul.f32 %v360, %v375
    %v384 = vmul.f32 %v363, %v376
    %v385 = vmul.f32 %v365, %v377
    %v386 = vmul.f32 %v368, %v378
    %v387 = vmul.f32 %v370, %v379
    %v388 = vmul.f32 %v380, 0.044715
    %v389 = vmul.f32 %v381, 0.044715
    %v390 = vmul.f32 %v382, 0.044715
    %v391 = vmul.f32 %v383, 0.044715
    %v392 = vmul.f32 %v384, 0.044715
    %v393 = vmul.f32 %v385, 0.044715
    %v394 = vmul.f32 %v386, 0.044715
    %v395 = vmul.f32 %v387, 0.044715
    %v396 = vadd.f32 %v353, %v388
    %v397 = vadd.f32 %v355, %v389
    %v398 = vadd.f32 %v358, %v390
    %v399 = vadd.f32 %v360, %v391
    %v400 = vadd.f32 %v363, %v392
    %v401 = vadd.f32 %v365, %v393
    %v402 = vadd.f32 %v368, %v394
    %v403 = vadd.f32 %v370, %v395
    %v404 = vmul.f32 %v396, 0.7978846
    %v405 = vmul.f32 %v397, 0.7978846
    %v406 = vmul.f32 %v398, 0.7978846
    %v407 = vmul.f32 %v399, 0.7978846
    %v408 = vmul.f32 %v400, 0.7978846
    %v409 = vmul.f32 %v401, 0.7978846
    %v410 = vmul.f32 %v402, 0.7978846
    %v411 = vmul.f32 %v403, 0.7978846
    %v412 = vtanh.pop %v404
    %v413 = vtanh.pop %v405
    %v414 = vtanh.pop %v406
    %v415 = vtanh.pop %v407
    %v416 = vtanh.pop %v408
    %v417 = vtanh.pop %v409
    %v418 = vtanh.pop %v410
    %v419 = vtanh.pop %v411
    %v420 = vadd.f32 %v412, 1.0
    %v421 = vadd.f32 %v413, 1.0
    %v422 = vadd.f32 %v414, 1.0
    %v423 = vadd.f32 %v415, 1.0
    %v424 = vadd.f32 %v416, 1.0
    %v425 = vadd.f32 %v417, 1.0
    %v426 = vadd.f32 %v418, 1.0
    %v427 = vadd.f32 %v419, 1.0
    %v428 = vmul.f32 %v420, 0.5
    %v429 = vmul.f32 %v421, 0.5
    %v430 = vmul.f32 %v422, 0.5
    %v431 = vmul.f32 %v423, 0.5
    %v432 = vmul.f32 %v424, 0.5
    %v433 = vmul.f32 %v425, 0.5
    %v434 = vmul.f32 %v426, 0.5
    %v435 = vmul.f32 %v427, 0.5
    %v436 = vmul.f32 %v353, %v428
    %v437 = vmul.f32 %v355, %v429
    %v438 = vmul.f32 %v358, %v430
    %v439 = vmul.f32 %v360, %v431
    %v440 = vmul.f32 %v363, %v432
    %v441 = vmul.f32 %v365, %v433
    %v442 = vmul.f32 %v368, %v434
    %v443 = vmul.f32 %v370, %v435
    %v444 = vpack.c.bf16 %v437, %v436
    %v445 = vpack.c.bf16 %v439, %v438
    %v446 = vpack.c.bf16 %v441, %v440
    %v447 = vpack.c.bf16 %v443, %v442
    %v448 = vld [vmem:[%s3] sm:$0xf]
    %v449 = vld [vmem:[%s3 + $0x4] sm:$0xf]
    %v450 = vld [vmem:[%s3 + $0x8] sm:$0xf]
    %v451 = vld [vmem:[%s3 + $0xc] sm:$0xf]
    %v452 = vld [vmem:[%s3 + $0x10] sm:$0xf]
    %v453 = vld [vmem:[%s3 + $0x14] sm:$0xf]
    %v454 = vld [vmem:[%s3 + $0x18] sm:$0xf]
    %v455 = vld [vmem:[%s3 + $0x1c] sm:$0xf]
    %v456 = vld [vmem:[%s3 + $0x20] sm:$0xf]
    %v457 = vld [vmem:[%s3 + $0x24] sm:$0xf]
    %v458 = vld [vmem:[%s3 + $0x28] sm:$0xf]
    %v459 = vld [vmem:[%s3 + $0x2c] sm:$0xf]
    %v460 = vld [vmem:[%s3 + $0x30] sm:$0xf]
    %v461 = vld [vmem:[%s3 + $0x34] sm:$0xf]
    %v462 = vld [vmem:[%s3 + $0x38] sm:$0xf]
    %v463 = vld [vmem:[%s3 + $0x3c] sm:$0xf]
    %v464 = vld [vmem:[#allocation4] sm:$0x1]
    %v466 = vperm.slane %v464, 0
    %v484 = vunpack.c.l.b16 %v448
    %v485 = vunpack.c.l.b16 %v449
    %v486 = vunpack.c.l.b16 %v450
    %v487 = vunpack.c.l.b16 %v451
    %v488 = vunpack.c.l.b16 %v452
    %v489 = vunpack.c.l.b16 %v453
    %v490 = vunpack.c.l.b16 %v454
    %v491 = vunpack.c.l.b16 %v455
    %v492 = vunpack.c.l.b16 %v456
    %v493 = vunpack.c.l.b16 %v457
    %v494 = vunpack.c.l.b16 %v458
    %v495 = vunpack.c.l.b16 %v459
    %v496 = vunpack.c.l.b16 %v460
    %v497 = vunpack.c.l.b16 %v461
    %v498 = vunpack.c.l.b16 %v462
    %v499 = vunpack.c.l.b16 %v463
    %v500 = vpack.c.b16 %v485, %v484
    %v501 = vpack.c.b16 %v487, %v486
    %v502 = vpack.c.b16 %v489, %v488
    %v503 = vpack.c.b16 %v491, %v490
    %v504 = vpack.c.b16 %v493, %v492
    %v505 = vpack.c.b16 %v495, %v494
    %v506 = vpack.c.b16 %v497, %v496
    %v507 = vpack.c.b16 %v499, %v498
    %516 = vmatpush.bf16.msra.mxu0 %v507
    %517 = vmatpush.bf16.msra.mxu0 %v506
    %518 = vmatpush.bf16.msra.mxu0 %v505
    %519 = vmatpush.bf16.msra.mxu0 %v504
    %520 = vmatpush.bf16.msra.mxu0 %v503
    %521 = vmatpush.bf16.msra.mxu0 %v502
    %522 = vmatpush.bf16.msra.mxu0 %v501
    %523 = vmatpush.bf16.msra.mxu0 %v500
    %524 = vmatmul.bf16.gmra.mxu0 %v444
    %v525 = vpop.f32.mrf.mxu0
    %v526 = vadd.f32 %v466, %v525
    %v527 = vpop.f32.mrf.mxu0
    %v528 = vadd.f32 %v466, %v527
    %529 = vmatmul.bf16.gmra.mxu0 %v445
    %v530 = vpop.f32.mrf.mxu0
    %v531 = vadd.f32 %v466, %v530
    %v532 = vpop.f32.mrf.mxu0
    %v533 = vadd.f32 %v466, %v532
    %534 = vmatmul.bf16.gmra.mxu0 %v446
    %v535 = vpop.f32.mrf.mxu0
    %v536 = vadd.f32 %v466, %v535
    %v537 = vpop.f32.mrf.mxu0
    %v538 = vadd.f32 %v466, %v537
    %539 = vmatmul.bf16.gmra.mxu0 %v447
    %v540 = vpop.f32.mrf.mxu0
    %v541 = vadd.f32 %v466, %v540
    %v542 = vpop.f32.mrf.mxu0
    %v543 = vadd.f32 %v466, %v542
    %544 = vdwg.mxu0
    %v545 = vadd.f32 %v526, %v90
    %v546 = vadd.f32 %v528, %v91
    %v547 = vadd.f32 %v531, %v92
    %v548 = vadd.f32 %v533, %v93
    %v549 = vadd.f32 %v536, %v94
    %v550 = vadd.f32 %v538, %v95
    %v551 = vadd.f32 %v541, %v96
    %v552 = vadd.f32 %v543, %v97
    %v553 = vpack.c.bf16 %v545, %v545
    %v554 = vpack.c.bf16 %v546, %v546
    %v555 = vpack.c.bf16 %v547, %v547
    %v556 = vpack.c.bf16 %v548, %v548
    %v557 = vpack.c.bf16 %v549, %v549
    %v558 = vpack.c.bf16 %v550, %v550
    %v559 = vpack.c.bf16 %v551, %v551
    %v560 = vpack.c.bf16 %v552, %v552
    %561 = vst.msk [vmem:[%s7] sm:$0xf] %vm122, %v553
    %562 = vst.msk [vmem:[%s7 + $0x4] sm:$0xf] %vm122, %v554
    %563 = vst.msk [vmem:[%s7 + $0x8] sm:$0xf] %vm122, %v555
    %564 = vst.msk [vmem:[%s7 + $0xc] sm:$0xf] %vm122, %v556
    %565 = vst.msk [vmem:[%s7 + $0x10] sm:$0xf] %vm122, %v557
    %566 = vst.msk [vmem:[%s7 + $0x14] sm:$0xf] %vm122, %v558
    %567 = vst.msk [vmem:[%s7 + $0x18] sm:$0xf] %vm122, %v559
    %vm568 = vcmask 254976
    %569 = vst.msk [vmem:[%s7 + $0x1c] sm:$0x3] %vm568, %v560
    // Predicated region
    $region46: #{_lambda_.14} parent=1 // pred_check
      _
    $region47: #{_lambda_.14} parent=1 // pred_check_branch
      %571 = sbr.rel (0) target = $region49
    $region48: #{_lambda_.14} parent=1 // pred_region
      _
    $region49: #{_lambda_.14} parent=1 // pred_fallthru
      _
    // Predicated region
    $region50: #{_lambda_.14} parent=1 // pred_check
      _
    $region51: #{_lambda_.14} parent=1 // pred_check_branch
      %573 = sbr.rel (0) target = $region53
    $region52: #{_lambda_.14} parent=1 // pred_region
      _
    $region53: #{_lambda_.14} parent=1 // pred_fallthru
      _
    %574 = vsyncpa [#allocation3], 1
    %575 = vsyncpa [#allocation5], 1
    %576 = vsyncpa [#allocation8], 1

</llo_original>
